<compile_context>
chip_gen: v7x
topology: tpu7x:2x2x1
jax: 0.10.0
libtpu: 0.0.40
codegen_flags: <defaults>
</compile_context>

<pallas_src>
import jax
import jax.numpy as jnp
from jax import lax
from jax.experimental import pallas as pl
from jax.experimental.pallas import tpu as pltpu

EPS = 1e-5      # nn.BatchNorm3d default eps
LANES = 128     # TPU lane width


# ---------------------------------------------------------------------------
# Pass A: implicit-GEMM 3x3x3 conv (stride 1, padding 1) + BN partial stats.
# ---------------------------------------------------------------------------
def _conv_stats_kernel(x0_ref, x1_ref, x2_ref, w_ref, out_ref, stats_ref):
    """x{kd}_ref: (H+2, W+2, Cp) bf16 = depth slice d+kd of the padded input.
    w_ref: (3, 3, 3, Cp, Cp) bf16 (kd, kh, kw, Cin, Cout).
    out_ref: (H, W, Cp) f32 conv output for output depth slice d.
    stats_ref: (8, Cp) f32: row 0 = channel sum, row 1 = channel sum-of-squares
    of this tile (rows 2..7 are zero filler for (8,128) tiling)."""
    H, W, Cp = out_ref.shape
    acc = jnp.zeros((H * W, Cp), jnp.float32)
    for kd, x_ref in enumerate((x0_ref, x1_ref, x2_ref)):
        slab = x_ref[...]                                     # (H+2, W+2, Cp)
        for kh in range(3):
            for kw in range(3):
                patch = slab[kh:kh + H, kw:kw + W, :].reshape(H * W, Cp)
                acc = acc + jnp.dot(patch, w_ref[kd, kh, kw, :, :],
                                    preferred_element_type=jnp.float32)
    out_ref[...] = acc.reshape(H, W, Cp)
    csum = jnp.sum(acc, axis=0, keepdims=True)                # (1, Cp)
    csq = jnp.sum(acc * acc, axis=0, keepdims=True)           # (1, Cp)
    rows = lax.broadcasted_iota(jnp.int32, (8, Cp), 0)
    stats_ref[...] = jnp.where(rows == 0, csum,
                               jnp.where(rows == 1, csq, 0.0))


def _conv3x3x3_stats(x_pad, w_gemm):
    """x_pad: (N, D+2, H+2, W+2, Cp) bf16 (spatial zero-padding already done).
    w_gemm: (3, 3, 3, Cp, Cp) bf16.
    Returns conv (N, D, H, W, Cp) f32 and per-tile stats (N, D, 8, Cp) f32."""
    N, Dp, Hp, Wp, Cp = x_pad.shape
    D, H, W = Dp - 2, Hp - 2, Wp - 2

    def x_spec(kd):
        return pl.BlockSpec((None, None, Hp, Wp, Cp),
                            lambda n, d, kd=kd: (n, d + kd, 0, 0, 0))

    w_spec = pl.BlockSpec((3, 3, 3, Cp, Cp), lambda n, d: (0, 0, 0, 0, 0))
    out_spec = pl.BlockSpec((None, None, H, W, Cp), lambda n, d: (n, d, 0, 0, 0))
    stats_spec = pl.BlockSpec((None, None, 8, Cp), lambda n, d: (n, d, 0, 0))

    flops = 2 * N * D * H * W * 27 * Cp * Cp
    bytes_accessed = (3 * x_pad.size * 2 + w_gemm.size * 2
                      + N * D * H * W * Cp * 4 + N * D * 8 * Cp * 4)

    return pl.pallas_call(
        _conv_stats_kernel,
        out_shape=(jax.ShapeDtypeStruct((N, D, H, W, Cp), jnp.float32),
                   jax.ShapeDtypeStruct((N, D, 8, Cp), jnp.float32)),
        grid=(N, D),
        in_specs=[x_spec(0), x_spec(1), x_spec(2), w_spec],
        out_specs=(out_spec, stats_spec),
        compiler_params=pltpu.CompilerParams(
            dimension_semantics=("parallel", "parallel")),
        cost_estimate=pl.CostEstimate(flops=flops, transcendentals=0,
                                      bytes_accessed=bytes_accessed),
    )(x_pad, x_pad, x_pad, w_gemm)


# ---------------------------------------------------------------------------
# Pass B: folded BN (scale/shift) + ReLU (+ residual) elementwise kernels.
# ---------------------------------------------------------------------------
def _bn_relu_kernel(x_ref, scale_ref, shift_ref, o_ref):
    y = x_ref[...] * scale_ref[...] + shift_ref[...]
    o_ref[...] = jnp.maximum(y, 0.0).astype(o_ref.dtype)


def _bn_add_relu_kernel(x_ref, id_ref, scale_ref, shift_ref, o_ref):
    y = x_ref[...] * scale_ref[...] + shift_ref[...] + id_ref[...]
    o_ref[...] = jnp.maximum(y, 0.0).astype(o_ref.dtype)


def _row_tile(p):
    for t in (512, 256, 128, 64, 32, 16, 8):
        if p % t == 0:
            return t
    return p


def _bn_relu(conv_flat, scale, shift, out_dtype):
    P, Cp = conv_flat.shape
    tp = _row_tile(P)
    row_spec = pl.BlockSpec((tp, Cp), lambda i: (i, 0))
    vec_spec = pl.BlockSpec((1, Cp), lambda i: (0, 0))
    return pl.pallas_call(
        _bn_relu_kernel,
        out_shape=jax.ShapeDtypeStruct((P, Cp), out_dtype),
        grid=(P // tp,),
        in_specs=[row_spec, vec_spec, vec_spec],
        out_specs=row_spec,
        compiler_params=pltpu.CompilerParams(dimension_semantics=("parallel",)),
    )(conv_flat, scale.reshape(1, Cp), shift.reshape(1, Cp))


def _bn_add_relu(conv_flat, identity_flat, scale, shift):
    P, Cp = conv_flat.shape
    tp = _row_tile(P)
    row_spec = pl.BlockSpec((tp, Cp), lambda i: (i, 0))
    vec_spec = pl.BlockSpec((1, Cp), lambda i: (0, 0))
    return pl.pallas_call(
        _bn_add_relu_kernel,
        out_shape=jax.ShapeDtypeStruct((P, Cp), jnp.float32),
        grid=(P // tp,),
        in_specs=[row_spec, row_spec, vec_spec, vec_spec],
        out_specs=row_spec,
        compiler_params=pltpu.CompilerParams(dimension_semantics=("parallel",)),
    )(conv_flat, identity_flat, scale.reshape(1, Cp), shift.reshape(1, Cp))


# ---------------------------------------------------------------------------
# Host-side glue.
# ---------------------------------------------------------------------------
def _bn_scale_shift(stats, gamma_p, beta_p, count):
    """Reduce per-tile (sum, sumsq) into one per-channel scale/shift pair."""
    csum = jnp.sum(stats[:, :, 0, :], axis=(0, 1))
    csq = jnp.sum(stats[:, :, 1, :], axis=(0, 1))
    mean = csum / count
    var = jnp.maximum(csq / count - mean * mean, 0.0)   # biased (training-mode)
    scale = gamma_p * lax.rsqrt(var + EPS)
    shift = beta_p - mean * scale
    return scale, shift


def _prep_weight(w_oidhw, cp):
    """PyTorch Conv3d weight (Cout, Cin, 3, 3, 3) -> (3, 3, 3, Cp, Cp) bf16."""
    cout, cin = w_oidhw.shape[0], w_oidhw.shape[1]
    wt = jnp.transpose(w_oidhw, (2, 3, 4, 1, 0))        # (kd, kh, kw, Cin, Cout)
    wt = jnp.pad(wt, ((0, 0), (0, 0), (0, 0), (0, cp - cin), (0, cp - cout)))
    return wt.astype(jnp.bfloat16)


def basic_block_forward(x_ncdhw, params):
    """Pallas BasicBlock forward pass (stride=1, downsample=None)."""
    N, C, D, H, W = x_ncdhw.shape
    Cp = ((C + LANES - 1) // LANES) * LANES
    count = N * D * H * W

    x = jnp.transpose(x_ncdhw, (0, 2, 3, 4, 1))                     # NDHWC f32
    x = jnp.pad(x, ((0, 0), (0, 0), (0, 0), (0, 0), (0, Cp - C)))   # lane pad
    identity = x.reshape(count, Cp)                                 # f32 residual

    g1 = jnp.pad(params["g1"], (0, Cp - C))
    b1 = jnp.pad(params["b1"], (0, Cp - C))
    g2 = jnp.pad(params["g2"], (0, Cp - C))
    b2 = jnp.pad(params["b2"], (0, Cp - C))
    w1 = _prep_weight(params["w1"], Cp)
    w2 = _prep_weight(params["w2"], Cp)

    # conv1 (implicit GEMM, bf16 operands, f32 accum) + BN1 partial stats
    x_pad = jnp.pad(x, ((0, 0), (1, 1), (1, 1), (1, 1), (0, 0))).astype(jnp.bfloat16)
    conv1, stats1 = _conv3x3x3_stats(x_pad, w1)
    scale1, shift1 = _bn_scale_shift(stats1, g1, b1, count)
    # BN1 + ReLU, emitted directly in bf16 (conv2's GEMM input dtype)
    y1 = _bn_relu(conv1.reshape(count, Cp), scale1, shift1, jnp.bfloat16)

    # conv2 + BN2 partial stats
    y1_pad = jnp.pad(y1.reshape(N, D, H, W, Cp),
                     ((0, 0), (1, 1), (1, 1), (1, 1), (0, 0)))
    conv2, stats2 = _conv3x3x3_stats(y1_pad, w2)
    scale2, shift2 = _bn_scale_shift(stats2, g2, b2, count)
    # BN2 + residual add (f32 identity) + ReLU
    out = _bn_add_relu(conv2.reshape(count, Cp), identity, scale2, shift2)

    out = out.reshape(N, D, H, W, Cp)[..., :C]
    return jnp.transpose(out, (0, 4, 1, 2, 3))                      # NCDHW


# ---------------------------------------------------------------------------
# Pure-JAX reference mirroring the PyTorch module (training-mode BN, f32).
# ---------------------------------------------------------------------------
def _reference_forward(x, params):
    dn = ("NCDHW", "OIDHW", "NCDHW")

    def conv(z, w):
        return lax.conv_general_dilated(z, w, (1, 1, 1), [(1, 1)] * 3,
                                        dimension_numbers=dn)

    def bn(z, g, b):
        mean = jnp.mean(z, axis=(0, 2, 3, 4), keepdims=True)
        var = jnp.mean((z - mean) ** 2, axis=(0, 2, 3, 4), keepdims=True)
        return ((z - mean) * lax.rsqrt(var + EPS) * g.reshape(1, -1, 1, 1, 1)
                + b.reshape(1, -1, 1, 1, 1))

    out = jnp.maximum(bn(conv(x, params["w1"]), params["g1"], params["b1"]), 0.0)
    out = bn(conv(out, params["w2"]), params["g2"], params["b2"]) + x
    return jnp.maximum(out, 0.0)


if __name__ == "__main__":
    key = jax.random.PRNGKey(0)
    k_x, k_w1, k_w2, k_g1, k_b1, k_g2, k_b2 = jax.random.split(key, 7)

    # BasicBlock(inplanes=4, planes=4, stride=1, downsample=None)
    N, C, D, H, W = 2, 4, 8, 8, 8
    x = jax.random.normal(k_x, (N, C, D, H, W), jnp.float32)

    params = {
        "w1": 0.1 * jax.random.normal(k_w1, (C, C, 3, 3, 3), jnp.float32),
        "w2": 0.1 * jax.random.normal(k_w2, (C, C, 3, 3, 3), jnp.float32),
        "g1": 1.0 + 0.1 * jax.random.normal(k_g1, (C,), jnp.float32),
        "b1": 0.1 * jax.random.normal(k_b1, (C,), jnp.float32),
        "g2": 1.0 + 0.1 * jax.random.normal(k_g2, (C,), jnp.float32),
        "b2": 0.1 * jax.random.normal(k_b2, (C,), jnp.float32),
    }

    out = jax.jit(basic_block_forward)(x, params)
    out = jax.block_until_ready(out)

    ref = _reference_forward(x, params)
    assert out.shape == ref.shape == (N, C, D, H, W)
    max_err = float(jnp.max(jnp.abs(out - ref)))
    # bf16 MXU operands (as required for TPU throughput) bound the error well
    # below 5e-2 for these magnitudes; the f32 reference is exact-precision.
    assert max_err < 5e-2, max_err

    print("KERNEL_OK")
</pallas_src>

<mosaic_0001>
module attributes {stable_mosaic.version = 11 : i64} {
  func.func @_conv_stats_kernel(%arg0: i32, %arg1: i32, %arg2: memref<1x1x10x10x128xbf16, #tpu.memory_space<vmem>>, %arg3: memref<1x1x10x10x128xbf16, #tpu.memory_space<vmem>>, %arg4: memref<1x1x10x10x128xbf16, #tpu.memory_space<vmem>>, %arg5: memref<3x3x3x128x128xbf16, #tpu.memory_space<vmem>>, %arg6: memref<1x1x8x8x128xf32, #tpu.memory_space<vmem>>, %arg7: memref<1x1x8x128xf32, #tpu.memory_space<vmem>>) attributes {dimension_semantics = [#tpu.dimension_semantics<parallel>, #tpu.dimension_semantics<parallel>], iteration_bounds = array<i64: 2, 8>, scalar_prefetch = 0 : i64, scratch_operands = 0 : i64, tpu.core_type = #tpu.core_type<tc>, window_params = [{transform_indices = @transform_0, window_bounds = array<i64: 1, 1, 10, 10, 128>}, {transform_indices = @transform_1, window_bounds = array<i64: 1, 1, 10, 10, 128>}, {transform_indices = @transform_2, window_bounds = array<i64: 1, 1, 10, 10, 128>}, {pipeline_mode = #tpu.pipeline_mode<synchronous>, transform_indices = @transform_3, window_bounds = array<i64: 3, 3, 3, 128, 128>}, {transform_indices = @transform_4, window_bounds = array<i64: 1, 1, 8, 8, 128>}, {transform_indices = @transform_5, window_bounds = array<i64: 1, 1, 8, 128>}]} {
    %cst = arith.constant 0.000000e+00 : f32
    %0 = vector.broadcast %cst : f32 to vector<64x128xf32>
    %c0 = arith.constant 0 : index
    %c0_0 = arith.constant 0 : index
    %c0_1 = arith.constant 0 : index
    %c0_2 = arith.constant 0 : index
    %c0_3 = arith.constant 0 : index
    %1 = vector.load %arg2[%c0, %c0_0, %c0_1, %c0_2, %c0_3] : memref<1x1x10x10x128xbf16, #tpu.memory_space<vmem>>, vector<1x1x10x10x128xbf16>
    %2 = vector.shape_cast %1 : vector<1x1x10x10x128xbf16> to vector<10x10x128xbf16>
    %3 = vector.extract_strided_slice %2 {offsets = [0, 0, 0], sizes = [8, 8, 128], strides = [1, 1, 1]} : vector<10x10x128xbf16> to vector<8x8x128xbf16>
    %4 = vector.shape_cast %3 : vector<8x8x128xbf16> to vector<64x128xbf16>
    %c0_4 = arith.constant 0 : index
    %c0_5 = arith.constant 0 : index
    %c0_6 = arith.constant 0 : index
    %c0_7 = arith.constant 0 : index
    %c0_8 = arith.constant 0 : index
    %5 = vector.load %arg5[%c0_4, %c0_5, %c0_6, %c0_7, %c0_8] : memref<3x3x3x128x128xbf16, #tpu.memory_space<vmem>>, vector<1x1x1x128x128xbf16>
    %6 = vector.shape_cast %5 : vector<1x1x1x128x128xbf16> to vector<128x128xbf16>
    %cst_9 = arith.constant dense<0.000000e+00> : vector<64x128xf32>
    %7 = tpu.matmul %4, %6, %cst_9 {dimension_numbers = #tpu.dot_dimension_numbers<[1], [0], [0], [1], [0, 0, 1, 1], [], []>} : vector<64x128xbf16>, vector<128x128xbf16>, vector<64x128xf32> -> vector<64x128xf32>
    %8 = arith.addf %0, %7 : vector<64x128xf32>
    %9 = vector.extract_strided_slice %2 {offsets = [0, 1, 0], sizes = [8, 8, 128], strides = [1, 1, 1]} : vector<10x10x128xbf16> to vector<8x8x128xbf16>
    %10 = vector.shape_cast %9 : vector<8x8x128xbf16> to vector<64x128xbf16>
    %c0_10 = arith.constant 0 : index
    %c0_11 = arith.constant 0 : index
    %c1 = arith.constant 1 : index
    %c0_12 = arith.constant 0 : index
    %c0_13 = arith.constant 0 : index
    %11 = vector.load %arg5[%c0_10, %c0_11, %c1, %c0_12, %c0_13] : memref<3x3x3x128x128xbf16, #tpu.memory_space<vmem>>, vector<1x1x1x128x128xbf16>
    %12 = vector.shape_cast %11 : vector<1x1x1x128x128xbf16> to vector<128x128xbf16>
    %cst_14 = arith.constant dense<0.000000e+00> : vector<64x128xf32>
    %13 = tpu.matmul %10, %12, %cst_14 {dimension_numbers = #tpu.dot_dimension_numbers<[1], [0], [0], [1], [0, 0, 1, 1], [], []>} : vector<64x128xbf16>, vector<128x128xbf16>, vector<64x128xf32> -> vector<64x128xf32>
    %14 = arith.addf %8, %13 : vector<64x128xf32>
    %15 = vector.extract_strided_slice %2 {offsets = [0, 2, 0], sizes = [8, 8, 128], strides = [1, 1, 1]} : vector<10x10x128xbf16> to vector<8x8x128xbf16>
    %16 = vector.shape_cast %15 : vector<8x8x128xbf16> to vector<64x128xbf16>
    %c0_15 = arith.constant 0 : index
    %c0_16 = arith.constant 0 : index
    %c2 = arith.constant 2 : index
    %c0_17 = arith.constant 0 : index
    %c0_18 = arith.constant 0 : index
    %17 = vector.load %arg5[%c0_15, %c0_16, %c2, %c0_17, %c0_18] : memref<3x3x3x128x128xbf16, #tpu.memory_space<vmem>>, vector<1x1x1x128x128xbf16>
    %18 = vector.shape_cast %17 : vector<1x1x1x128x128xbf16> to vector<128x128xbf16>
    %cst_19 = arith.constant dense<0.000000e+00> : vector<64x128xf32>
    %19 = tpu.matmul %16, %18, %cst_19 {dimension_numbers = #tpu.dot_dimension_numbers<[1], [0], [0], [1], [0, 0, 1, 1], [], []>} : vector<64x128xbf16>, vector<128x128xbf16>, vector<64x128xf32> -> vector<64x128xf32>
    %20 = arith.addf %14, %19 : vector<64x128xf32>
    %21 = vector.extract_strided_slice %2 {offsets = [1, 0, 0], sizes = [8, 8, 128], strides = [1, 1, 1]} : vector<10x10x128xbf16> to vector<8x8x128xbf16>
    %22 = vector.shape_cast %21 : vector<8x8x128xbf16> to vector<64x128xbf16>
    %c0_20 = arith.constant 0 : index
    %c1_21 = arith.constant 1 : index
    %c0_22 = arith.constant 0 : index
    %c0_23 = arith.constant 0 : index
    %c0_24 = arith.constant 0 : index
    %23 = vector.load %arg5[%c0_20, %c1_21, %c0_22, %c0_23, %c0_24] : memref<3x3x3x128x128xbf16, #tpu.memory_space<vmem>>, vector<1x1x1x128x128xbf16>
    %24 = vector.shape_cast %23 : vector<1x1x1x128x128xbf16> to vector<128x128xbf16>
    %cst_25 = arith.constant dense<0.000000e+00> : vector<64x128xf32>
    %25 = tpu.matmul %22, %24, %cst_25 {dimension_numbers = #tpu.dot_dimension_numbers<[1], [0], [0], [1], [0, 0, 1, 1], [], []>} : vector<64x128xbf16>, vector<128x128xbf16>, vector<64x128xf32> -> vector<64x128xf32>
    %26 = arith.addf %20, %25 : vector<64x128xf32>
    %27 = vector.extract_strided_slice %2 {offsets = [1, 1, 0], sizes = [8, 8, 128], strides = [1, 1, 1]} : vector<10x10x128xbf16> to vector<8x8x128xbf16>
    %28 = vector.shape_cast %27 : vector<8x8x128xbf16> to vector<64x128xbf16>
    %c0_26 = arith.constant 0 : index
    %c1_27 = arith.constant 1 : index
    %c1_28 = arith.constant 1 : index
    %c0_29 = arith.constant 0 : index
    %c0_30 = arith.constant 0 : index
    %29 = vector.load %arg5[%c0_26, %c1_27, %c1_28, %c0_29, %c0_30] : memref<3x3x3x128x128xbf16, #tpu.memory_space<vmem>>, vector<1x1x1x128x128xbf16>
    %30 = vector.shape_cast %29 : vector<1x1x1x128x128xbf16> to vector<128x128xbf16>
    %cst_31 = arith.constant dense<0.000000e+00> : vector<64x128xf32>
    %31 = tpu.matmul %28, %30, %cst_31 {dimension_numbers = #tpu.dot_dimension_numbers<[1], [0], [0], [1], [0, 0, 1, 1], [], []>} : vector<64x128xbf16>, vector<128x128xbf16>, vector<64x128xf32> -> vector<64x128xf32>
    %32 = arith.addf %26, %31 : vector<64x128xf32>
    %33 = vector.extract_strided_slice %2 {offsets = [1, 2, 0], sizes = [8, 8, 128], strides = [1, 1, 1]} : vector<10x10x128xbf16> to vector<8x8x128xbf16>
    %34 = vector.shape_cast %33 : vector<8x8x128xbf16> to vector<64x128xbf16>
    %c0_32 = arith.constant 0 : index
    %c1_33 = arith.constant 1 : index
    %c2_34 = arith.constant 2 : index
    %c0_35 = arith.constant 0 : index
    %c0_36 = arith.constant 0 : index
    %35 = vector.load %arg5[%c0_32, %c1_33, %c2_34, %c0_35, %c0_36] : memref<3x3x3x128x128xbf16, #tpu.memory_space<vmem>>, vector<1x1x1x128x128xbf16>
    %36 = vector.shape_cast %35 : vector<1x1x1x128x128xbf16> to vector<128x128xbf16>
    %cst_37 = arith.constant dense<0.000000e+00> : vector<64x128xf32>
    %37 = tpu.matmul %34, %36, %cst_37 {dimension_numbers = #tpu.dot_dimension_numbers<[1], [0], [0], [1], [0, 0, 1, 1], [], []>} : vector<64x128xbf16>, vector<128x128xbf16>, vector<64x128xf32> -> vector<64x128xf32>
    %38 = arith.addf %32, %37 : vector<64x128xf32>
    %39 = vector.extract_strided_slice %2 {offsets = [2, 0, 0], sizes = [8, 8, 128], strides = [1, 1, 1]} : vector<10x10x128xbf16> to vector<8x8x128xbf16>
    %40 = vector.shape_cast %39 : vector<8x8x128xbf16> to vector<64x128xbf16>
    %c0_38 = arith.constant 0 : index
    %c2_39 = arith.constant 2 : index
    %c0_40 = arith.constant 0 : index
    %c0_41 = arith.constant 0 : index
    %c0_42 = arith.constant 0 : index
    %41 = vector.load %arg5[%c0_38, %c2_39, %c0_40, %c0_41, %c0_42] : memref<3x3x3x128x128xbf16, #tpu.memory_space<vmem>>, vector<1x1x1x128x128xbf16>
    %42 = vector.shape_cast %41 : vector<1x1x1x128x128xbf16> to vector<128x128xbf16>
    %cst_43 = arith.constant dense<0.000000e+00> : vector<64x128xf32>
    %43 = tpu.matmul %40, %42, %cst_43 {dimension_numbers = #tpu.dot_dimension_numbers<[1], [0], [0], [1], [0, 0, 1, 1], [], []>} : vector<64x128xbf16>, vector<128x128xbf16>, vector<64x128xf32> -> vector<64x128xf32>
    %44 = arith.addf %38, %43 : vector<64x128xf32>
    %45 = vector.extract_strided_slice %2 {offsets = [2, 1, 0], sizes = [8, 8, 128], strides = [1, 1, 1]} : vector<10x10x128xbf16> to vector<8x8x128xbf16>
    %46 = vector.shape_cast %45 : vector<8x8x128xbf16> to vector<64x128xbf16>
    %c0_44 = arith.constant 0 : index
    %c2_45 = arith.constant 2 : index
    %c1_46 = arith.constant 1 : index
    %c0_47 = arith.constant 0 : index
    %c0_48 = arith.constant 0 : index
    %47 = vector.load %arg5[%c0_44, %c2_45, %c1_46, %c0_47, %c0_48] : memref<3x3x3x128x128xbf16, #tpu.memory_space<vmem>>, vector<1x1x1x128x128xbf16>
    %48 = vector.shape_cast %47 : vector<1x1x1x128x128xbf16> to vector<128x128xbf16>
    %cst_49 = arith.constant dense<0.000000e+00> : vector<64x128xf32>
    %49 = tpu.matmul %46, %48, %cst_49 {dimension_numbers = #tpu.dot_dimension_numbers<[1], [0], [0], [1], [0, 0, 1, 1], [], []>} : vector<64x128xbf16>, vector<128x128xbf16>, vector<64x128xf32> -> vector<64x128xf32>
    %50 = arith.addf %44, %49 : vector<64x128xf32>
    %51 = vector.extract_strided_slice %2 {offsets = [2, 2, 0], sizes = [8, 8, 128], strides = [1, 1, 1]} : vector<10x10x128xbf16> to vector<8x8x128xbf16>
    %52 = vector.shape_cast %51 : vector<8x8x128xbf16> to vector<64x128xbf16>
    %c0_50 = arith.constant 0 : index
    %c2_51 = arith.constant 2 : index
    %c2_52 = arith.constant 2 : index
    %c0_53 = arith.constant 0 : index
    %c0_54 = arith.constant 0 : index
    %53 = vector.load %arg5[%c0_50, %c2_51, %c2_52, %c0_53, %c0_54] : memref<3x3x3x128x128xbf16, #tpu.memory_space<vmem>>, vector<1x1x1x128x128xbf16>
    %54 = vector.shape_cast %53 : vector<1x1x1x128x128xbf16> to vector<128x128xbf16>
    %cst_55 = arith.constant dense<0.000000e+00> : vector<64x128xf32>
    %55 = tpu.matmul %52, %54, %cst_55 {dimension_numbers = #tpu.dot_dimension_numbers<[1], [0], [0], [1], [0, 0, 1, 1], [], []>} : vector<64x128xbf16>, vector<128x128xbf16>, vector<64x128xf32> -> vector<64x128xf32>
    %56 = arith.addf %50, %55 : vector<64x128xf32>
    %c0_56 = arith.constant 0 : index
    %c0_57 = arith.constant 0 : index
    %c0_58 = arith.constant 0 : index
    %c0_59 = arith.constant 0 : index
    %c0_60 = arith.constant 0 : index
    %57 = vector.load %arg3[%c0_56, %c0_57, %c0_58, %c0_59, %c0_60] : memref<1x1x10x10x128xbf16, #tpu.memory_space<vmem>>, vector<1x1x10x10x128xbf16>
    %58 = vector.shape_cast %57 : vector<1x1x10x10x128xbf16> to vector<10x10x128xbf16>
    %59 = vector.extract_strided_slice %58 {offsets = [0, 0, 0], sizes = [8, 8, 128], strides = [1, 1, 1]} : vector<10x10x128xbf16> to vector<8x8x128xbf16>
    %60 = vector.shape_cast %59 : vector<8x8x128xbf16> to vector<64x128xbf16>
    %c1_61 = arith.constant 1 : index
    %c0_62 = arith.constant 0 : index
    %c0_63 = arith.constant 0 : index
    %c0_64 = arith.constant 0 : index
    %c0_65 = arith.constant 0 : index
    %61 = vector.load %arg5[%c1_61, %c0_62, %c0_63, %c0_64, %c0_65] : memref<3x3x3x128x128xbf16, #tpu.memory_space<vmem>>, vector<1x1x1x128x128xbf16>
    %62 = vector.shape_cast %61 : vector<1x1x1x128x128xbf16> to vector<128x128xbf16>
    %cst_66 = arith.constant dense<0.000000e+00> : vector<64x128xf32>
    %63 = tpu.matmul %60, %62, %cst_66 {dimension_numbers = #tpu.dot_dimension_numbers<[1], [0], [0], [1], [0, 0, 1, 1], [], []>} : vector<64x128xbf16>, vector<128x128xbf16>, vector<64x128xf32> -> vector<64x128xf32>
    %64 = arith.addf %56, %63 : vector<64x128xf32>
    %65 = vector.extract_strided_slice %58 {offsets = [0, 1, 0], sizes = [8, 8, 128], strides = [1, 1, 1]} : vector<10x10x128xbf16> to vector<8x8x128xbf16>
    %66 = vector.shape_cast %65 : vector<8x8x128xbf16> to vector<64x128xbf16>
    %c1_67 = arith.constant 1 : index
    %c0_68 = arith.constant 0 : index
    %c1_69 = arith.constant 1 : index
    %c0_70 = arith.constant 0 : index
    %c0_71 = arith.constant 0 : index
    %67 = vector.load %arg5[%c1_67, %c0_68, %c1_69, %c0_70, %c0_71] : memref<3x3x3x128x128xbf16, #tpu.memory_space<vmem>>, vector<1x1x1x128x128xbf16>
    %68 = vector.shape_cast %67 : vector<1x1x1x128x128xbf16> to vector<128x128xbf16>
    %cst_72 = arith.constant dense<0.000000e+00> : vector<64x128xf32>
    %69 = tpu.matmul %66, %68, %cst_72 {dimension_numbers = #tpu.dot_dimension_numbers<[1], [0], [0], [1], [0, 0, 1, 1], [], []>} : vector<64x128xbf16>, vector<128x128xbf16>, vector<64x128xf32> -> vector<64x128xf32>
    %70 = arith.addf %64, %69 : vector<64x128xf32>
    %71 = vector.extract_strided_slice %58 {offsets = [0, 2, 0], sizes = [8, 8, 128], strides = [1, 1, 1]} : vector<10x10x128xbf16> to vector<8x8x128xbf16>
    %72 = vector.shape_cast %71 : vector<8x8x128xbf16> to vector<64x128xbf16>
    %c1_73 = arith.constant 1 : index
    %c0_74 = arith.constant 0 : index
    %c2_75 = arith.constant 2 : index
    %c0_76 = arith.constant 0 : index
    %c0_77 = arith.constant 0 : index
    %73 = vector.load %arg5[%c1_73, %c0_74, %c2_75, %c0_76, %c0_77] : memref<3x3x3x128x128xbf16, #tpu.memory_space<vmem>>, vector<1x1x1x128x128xbf16>
    %74 = vector.shape_cast %73 : vector<1x1x1x128x128xbf16> to vector<128x128xbf16>
    %cst_78 = arith.constant dense<0.000000e+00> : vector<64x128xf32>
    %75 = tpu.matmul %72, %74, %cst_78 {dimension_numbers = #tpu.dot_dimension_numbers<[1], [0], [0], [1], [0, 0, 1, 1], [], []>} : vector<64x128xbf16>, vector<128x128xbf16>, vector<64x128xf32> -> vector<64x128xf32>
    %76 = arith.addf %70, %75 : vector<64x128xf32>
    %77 = vector.extract_strided_slice %58 {offsets = [1, 0, 0], sizes = [8, 8, 128], strides = [1, 1, 1]} : vector<10x10x128xbf16> to vector<8x8x128xbf16>
    %78 = vector.shape_cast %77 : vector<8x8x128xbf16> to vector<64x128xbf16>
    %c1_79 = arith.constant 1 : index
    %c1_80 = arith.constant 1 : index
    %c0_81 = arith.constant 0 : index
    %c0_82 = arith.constant 0 : index
    %c0_83 = arith.constant 0 : index
    %79 = vector.load %arg5[%c1_79, %c1_80, %c0_81, %c0_82, %c0_83] : memref<3x3x3x128x128xbf16, #tpu.memory_space<vmem>>, vector<1x1x1x128x128xbf16>
    %80 = vector.shape_cast %79 : vector<1x1x1x128x128xbf16> to vector<128x128xbf16>
    %cst_84 = arith.constant dense<0.000000e+00> : vector<64x128xf32>
    %81 = tpu.matmul %78, %80, %cst_84 {dimension_numbers = #tpu.dot_dimension_numbers<[1], [0], [0], [1], [0, 0, 1, 1], [], []>} : vector<64x128xbf16>, vector<128x128xbf16>, vector<64x128xf32> -> vector<64x128xf32>
    %82 = arith.addf %76, %81 : vector<64x128xf32>
    %83 = vector.extract_strided_slice %58 {offsets = [1, 1, 0], sizes = [8, 8, 128], strides = [1, 1, 1]} : vector<10x10x128xbf16> to vector<8x8x128xbf16>
    %84 = vector.shape_cast %83 : vector<8x8x128xbf16> to vector<64x128xbf16>
    %c1_85 = arith.constant 1 : index
    %c1_86 = arith.constant 1 : index
    %c1_87 = arith.constant 1 : index
    %c0_88 = arith.constant 0 : index
    %c0_89 = arith.constant 0 : index
    %85 = vector.load %arg5[%c1_85, %c1_86, %c1_87, %c0_88, %c0_89] : memref<3x3x3x128x128xbf16, #tpu.memory_space<vmem>>, vector<1x1x1x128x128xbf16>
    %86 = vector.shape_cast %85 : vector<1x1x1x128x128xbf16> to vector<128x128xbf16>
    %cst_90 = arith.constant dense<0.000000e+00> : vector<64x128xf32>
    %87 = tpu.matmul %84, %86, %cst_90 {dimension_numbers = #tpu.dot_dimension_numbers<[1], [0], [0], [1], [0, 0, 1, 1], [], []>} : vector<64x128xbf16>, vector<128x128xbf16>, vector<64x128xf32> -> vector<64x128xf32>
    %88 = arith.addf %82, %87 : vector<64x128xf32>
    %89 = vector.extract_strided_slice %58 {offsets = [1, 2, 0], sizes = [8, 8, 128], strides = [1, 1, 1]} : vector<10x10x128xbf16> to vector<8x8x128xbf16>
    %90 = vector.shape_cast %89 : vector<8x8x128xbf16> to vector<64x128xbf16>
    %c1_91 = arith.constant 1 : index
    %c1_92 = arith.constant 1 : index
    %c2_93 = arith.constant 2 : index
    %c0_94 = arith.constant 0 : index
    %c0_95 = arith.constant 0 : index
    %91 = vector.load %arg5[%c1_91, %c1_92, %c2_93, %c0_94, %c0_95] : memref<3x3x3x128x128xbf16, #tpu.memory_space<vmem>>, vector<1x1x1x128x128xbf16>
    %92 = vector.shape_cast %91 : vector<1x1x1x128x128xbf16> to vector<128x128xbf16>
    %cst_96 = arith.constant dense<0.000000e+00> : vector<64x128xf32>
    %93 = tpu.matmul %90, %92, %cst_96 {dimension_numbers = #tpu.dot_dimension_numbers<[1], [0], [0], [1], [0, 0, 1, 1], [], []>} : vector<64x128xbf16>, vector<128x128xbf16>, vector<64x128xf32> -> vector<64x128xf32>
    %94 = arith.addf %88, %93 : vector<64x128xf32>
    %95 = vector.extract_strided_slice %58 {offsets = [2, 0, 0], sizes = [8, 8, 128], strides = [1, 1, 1]} : vector<10x10x128xbf16> to vector<8x8x128xbf16>
    %96 = vector.shape_cast %95 : vector<8x8x128xbf16> to vector<64x128xbf16>
    %c1_97 = arith.constant 1 : index
    %c2_98 = arith.constant 2 : index
    %c0_99 = arith.constant 0 : index
    %c0_100 = arith.constant 0 : index
    %c0_101 = arith.constant 0 : index
    %97 = vector.load %arg5[%c1_97, %c2_98, %c0_99, %c0_100, %c0_101] : memref<3x3x3x128x128xbf16, #tpu.memory_space<vmem>>, vector<1x1x1x128x128xbf16>
    %98 = vector.shape_cast %97 : vector<1x1x1x128x128xbf16> to vector<128x128xbf16>
    %cst_102 = arith.constant dense<0.000000e+00> : vector<64x128xf32>
    %99 = tpu.matmul %96, %98, %cst_102 {dimension_numbers = #tpu.dot_dimension_numbers<[1], [0], [0], [1], [0, 0, 1, 1], [], []>} : vector<64x128xbf16>, vector<128x128xbf16>, vector<64x128xf32> -> vector<64x128xf32>
    %100 = arith.addf %94, %99 : vector<64x128xf32>
    %101 = vector.extract_strided_slice %58 {offsets = [2, 1, 0], sizes = [8, 8, 128], strides = [1, 1, 1]} : vector<10x10x128xbf16> to vector<8x8x128xbf16>
    %102 = vector.shape_cast %101 : vector<8x8x128xbf16> to vector<64x128xbf16>
    %c1_103 = arith.constant 1 : index
    %c2_104 = arith.constant 2 : index
    %c1_105 = arith.constant 1 : index
    %c0_106 = arith.constant 0 : index
    %c0_107 = arith.constant 0 : index
    %103 = vector.load %arg5[%c1_103, %c2_104, %c1_105, %c0_106, %c0_107] : memref<3x3x3x128x128xbf16, #tpu.memory_space<vmem>>, vector<1x1x1x128x128xbf16>
    %104 = vector.shape_cast %103 : vector<1x1x1x128x128xbf16> to vector<128x128xbf16>
    %cst_108 = arith.constant dense<0.000000e+00> : vector<64x128xf32>
    %105 = tpu.matmul %102, %104, %cst_108 {dimension_numbers = #tpu.dot_dimension_numbers<[1], [0], [0], [1], [0, 0, 1, 1], [], []>} : vector<64x128xbf16>, vector<128x128xbf16>, vector<64x128xf32> -> vector<64x128xf32>
    %106 = arith.addf %100, %105 : vector<64x128xf32>
    %107 = vector.extract_strided_slice %58 {offsets = [2, 2, 0], sizes = [8, 8, 128], strides = [1, 1, 1]} : vector<10x10x128xbf16> to vector<8x8x128xbf16>
    %108 = vector.shape_cast %107 : vector<8x8x128xbf16> to vector<64x128xbf16>
    %c1_109 = arith.constant 1 : index
    %c2_110 = arith.constant 2 : index
    %c2_111 = arith.constant 2 : index
    %c0_112 = arith.constant 0 : index
    %c0_113 = arith.constant 0 : index
    %109 = vector.load %arg5[%c1_109, %c2_110, %c2_111, %c0_112, %c0_113] : memref<3x3x3x128x128xbf16, #tpu.memory_space<vmem>>, vector<1x1x1x128x128xbf16>
    %110 = vector.shape_cast %109 : vector<1x1x1x128x128xbf16> to vector<128x128xbf16>
    %cst_114 = arith.constant dense<0.000000e+00> : vector<64x128xf32>
    %111 = tpu.matmul %108, %110, %cst_114 {dimension_numbers = #tpu.dot_dimension_numbers<[1], [0], [0], [1], [0, 0, 1, 1], [], []>} : vector<64x128xbf16>, vector<128x128xbf16>, vector<64x128xf32> -> vector<64x128xf32>
    %112 = arith.addf %106, %111 : vector<64x128xf32>
    %c0_115 = arith.constant 0 : index
    %c0_116 = arith.constant 0 : index
    %c0_117 = arith.constant 0 : index
    %c0_118 = arith.constant 0 : index
    %c0_119 = arith.constant 0 : index
    %113 = vector.load %arg4[%c0_115, %c0_116, %c0_117, %c0_118, %c0_119] : memref<1x1x10x10x128xbf16, #tpu.memory_space<vmem>>, vector<1x1x10x10x128xbf16>
    %114 = vector.shape_cast %113 : vector<1x1x10x10x128xbf16> to vector<10x10x128xbf16>
    %115 = vector.extract_strided_slice %114 {offsets = [0, 0, 0], sizes = [8, 8, 128], strides = [1, 1, 1]} : vector<10x10x128xbf16> to vector<8x8x128xbf16>
    %116 = vector.shape_cast %115 : vector<8x8x128xbf16> to vector<64x128xbf16>
    %c2_120 = arith.constant 2 : index
    %c0_121 = arith.constant 0 : index
    %c0_122 = arith.constant 0 : index
    %c0_123 = arith.constant 0 : index
    %c0_124 = arith.constant 0 : index
    %117 = vector.load %arg5[%c2_120, %c0_121, %c0_122, %c0_123, %c0_124] : memref<3x3x3x128x128xbf16, #tpu.memory_space<vmem>>, vector<1x1x1x128x128xbf16>
    %118 = vector.shape_cast %117 : vector<1x1x1x128x128xbf16> to vector<128x128xbf16>
    %cst_125 = arith.constant dense<0.000000e+00> : vector<64x128xf32>
    %119 = tpu.matmul %116, %118, %cst_125 {dimension_numbers = #tpu.dot_dimension_numbers<[1], [0], [0], [1], [0, 0, 1, 1], [], []>} : vector<64x128xbf16>, vector<128x128xbf16>, vector<64x128xf32> -> vector<64x128xf32>
    %120 = arith.addf %112, %119 : vector<64x128xf32>
    %121 = vector.extract_strided_slice %114 {offsets = [0, 1, 0], sizes = [8, 8, 128], strides = [1, 1, 1]} : vector<10x10x128xbf16> to vector<8x8x128xbf16>
    %122 = vector.shape_cast %121 : vector<8x8x128xbf16> to vector<64x128xbf16>
    %c2_126 = arith.constant 2 : index
    %c0_127 = arith.constant 0 : index
    %c1_128 = arith.constant 1 : index
    %c0_129 = arith.constant 0 : index
    %c0_130 = arith.constant 0 : index
    %123 = vector.load %arg5[%c2_126, %c0_127, %c1_128, %c0_129, %c0_130] : memref<3x3x3x128x128xbf16, #tpu.memory_space<vmem>>, vector<1x1x1x128x128xbf16>
    %124 = vector.shape_cast %123 : vector<1x1x1x128x128xbf16> to vector<128x128xbf16>
    %cst_131 = arith.constant dense<0.000000e+00> : vector<64x128xf32>
    %125 = tpu.matmul %122, %124, %cst_131 {dimension_numbers = #tpu.dot_dimension_numbers<[1], [0], [0], [1], [0, 0, 1, 1], [], []>} : vector<64x128xbf16>, vector<128x128xbf16>, vector<64x128xf32> -> vector<64x128xf32>
    %126 = arith.addf %120, %125 : vector<64x128xf32>
    %127 = vector.extract_strided_slice %114 {offsets = [0, 2, 0], sizes = [8, 8, 128], strides = [1, 1, 1]} : vector<10x10x128xbf16> to vector<8x8x128xbf16>
    %128 = vector.shape_cast %127 : vector<8x8x128xbf16> to vector<64x128xbf16>
    %c2_132 = arith.constant 2 : index
    %c0_133 = arith.constant 0 : index
    %c2_134 = arith.constant 2 : index
    %c0_135 = arith.constant 0 : index
    %c0_136 = arith.constant 0 : index
    %129 = vector.load %arg5[%c2_132, %c0_133, %c2_134, %c0_135, %c0_136] : memref<3x3x3x128x128xbf16, #tpu.memory_space<vmem>>, vector<1x1x1x128x128xbf16>
    %130 = vector.shape_cast %129 : vector<1x1x1x128x128xbf16> to vector<128x128xbf16>
    %cst_137 = arith.constant dense<0.000000e+00> : vector<64x128xf32>
    %131 = tpu.matmul %128, %130, %cst_137 {dimension_numbers = #tpu.dot_dimension_numbers<[1], [0], [0], [1], [0, 0, 1, 1], [], []>} : vector<64x128xbf16>, vector<128x128xbf16>, vector<64x128xf32> -> vector<64x128xf32>
    %132 = arith.addf %126, %131 : vector<64x128xf32>
    %133 = vector.extract_strided_slice %114 {offsets = [1, 0, 0], sizes = [8, 8, 128], strides = [1, 1, 1]} : vector<10x10x128xbf16> to vector<8x8x128xbf16>
    %134 = vector.shape_cast %133 : vector<8x8x128xbf16> to vector<64x128xbf16>
    %c2_138 = arith.constant 2 : index
    %c1_139 = arith.constant 1 : index
    %c0_140 = arith.constant 0 : index
    %c0_141 = arith.constant 0 : index
    %c0_142 = arith.constant 0 : index
    %135 = vector.load %arg5[%c2_138, %c1_139, %c0_140, %c0_141, %c0_142] : memref<3x3x3x128x128xbf16, #tpu.memory_space<vmem>>, vector<1x1x1x128x128xbf16>
    %136 = vector.shape_cast %135 : vector<1x1x1x128x128xbf16> to vector<128x128xbf16>
    %cst_143 = arith.constant dense<0.000000e+00> : vector<64x128xf32>
    %137 = tpu.matmul %134, %136, %cst_143 {dimension_numbers = #tpu.dot_dimension_numbers<[1], [0], [0], [1], [0, 0, 1, 1], [], []>} : vector<64x128xbf16>, vector<128x128xbf16>, vector<64x128xf32> -> vector<64x128xf32>
    %138 = arith.addf %132, %137 : vector<64x128xf32>
    %139 = vector.extract_strided_slice %114 {offsets = [1, 1, 0], sizes = [8, 8, 128], strides = [1, 1, 1]} : vector<10x10x128xbf16> to vector<8x8x128xbf16>
    %140 = vector.shape_cast %139 : vector<8x8x128xbf16> to vector<64x128xbf16>
    %c2_144 = arith.constant 2 : index
    %c1_145 = arith.constant 1 : index
    %c1_146 = arith.constant 1 : index
    %c0_147 = arith.constant 0 : index
    %c0_148 = arith.constant 0 : index
    %141 = vector.load %arg5[%c2_144, %c1_145, %c1_146, %c0_147, %c0_148] : memref<3x3x3x128x128xbf16, #tpu.memory_space<vmem>>, vector<1x1x1x128x128xbf16>
    %142 = vector.shape_cast %141 : vector<1x1x1x128x128xbf16> to vector<128x128xbf16>
    %cst_149 = arith.constant dense<0.000000e+00> : vector<64x128xf32>
    %143 = tpu.matmul %140, %142, %cst_149 {dimension_numbers = #tpu.dot_dimension_numbers<[1], [0], [0], [1], [0, 0, 1, 1], [], []>} : vector<64x128xbf16>, vector<128x128xbf16>, vector<64x128xf32> -> vector<64x128xf32>
    %144 = arith.addf %138, %143 : vector<64x128xf32>
    %145 = vector.extract_strided_slice %114 {offsets = [1, 2, 0], sizes = [8, 8, 128], strides = [1, 1, 1]} : vector<10x10x128xbf16> to vector<8x8x128xbf16>
    %146 = vector.shape_cast %145 : vector<8x8x128xbf16> to vector<64x128xbf16>
    %c2_150 = arith.constant 2 : index
    %c1_151 = arith.constant 1 : index
    %c2_152 = arith.constant 2 : index
    %c0_153 = arith.constant 0 : index
    %c0_154 = arith.constant 0 : index
    %147 = vector.load %arg5[%c2_150, %c1_151, %c2_152, %c0_153, %c0_154] : memref<3x3x3x128x128xbf16, #tpu.memory_space<vmem>>, vector<1x1x1x128x128xbf16>
    %148 = vector.shape_cast %147 : vector<1x1x1x128x128xbf16> to vector<128x128xbf16>
    %cst_155 = arith.constant dense<0.000000e+00> : vector<64x128xf32>
    %149 = tpu.matmul %146, %148, %cst_155 {dimension_numbers = #tpu.dot_dimension_numbers<[1], [0], [0], [1], [0, 0, 1, 1], [], []>} : vector<64x128xbf16>, vector<128x128xbf16>, vector<64x128xf32> -> vector<64x128xf32>
    %150 = arith.addf %144, %149 : vector<64x128xf32>
    %151 = vector.extract_strided_slice %114 {offsets = [2, 0, 0], sizes = [8, 8, 128], strides = [1, 1, 1]} : vector<10x10x128xbf16> to vector<8x8x128xbf16>
    %152 = vector.shape_cast %151 : vector<8x8x128xbf16> to vector<64x128xbf16>
    %c2_156 = arith.constant 2 : index
    %c2_157 = arith.constant 2 : index
    %c0_158 = arith.constant 0 : index
    %c0_159 = arith.constant 0 : index
    %c0_160 = arith.constant 0 : index
    %153 = vector.load %arg5[%c2_156, %c2_157, %c0_158, %c0_159, %c0_160] : memref<3x3x3x128x128xbf16, #tpu.memory_space<vmem>>, vector<1x1x1x128x128xbf16>
    %154 = vector.shape_cast %153 : vector<1x1x1x128x128xbf16> to vector<128x128xbf16>
    %cst_161 = arith.constant dense<0.000000e+00> : vector<64x128xf32>
    %155 = tpu.matmul %152, %154, %cst_161 {dimension_numbers = #tpu.dot_dimension_numbers<[1], [0], [0], [1], [0, 0, 1, 1], [], []>} : vector<64x128xbf16>, vector<128x128xbf16>, vector<64x128xf32> -> vector<64x128xf32>
    %156 = arith.addf %150, %155 : vector<64x128xf32>
    %157 = vector.extract_strided_slice %114 {offsets = [2, 1, 0], sizes = [8, 8, 128], strides = [1, 1, 1]} : vector<10x10x128xbf16> to vector<8x8x128xbf16>
    %158 = vector.shape_cast %157 : vector<8x8x128xbf16> to vector<64x128xbf16>
    %c2_162 = arith.constant 2 : index
    %c2_163 = arith.constant 2 : index
    %c1_164 = arith.constant 1 : index
    %c0_165 = arith.constant 0 : index
    %c0_166 = arith.constant 0 : index
    %159 = vector.load %arg5[%c2_162, %c2_163, %c1_164, %c0_165, %c0_166] : memref<3x3x3x128x128xbf16, #tpu.memory_space<vmem>>, vector<1x1x1x128x128xbf16>
    %160 = vector.shape_cast %159 : vector<1x1x1x128x128xbf16> to vector<128x128xbf16>
    %cst_167 = arith.constant dense<0.000000e+00> : vector<64x128xf32>
    %161 = tpu.matmul %158, %160, %cst_167 {dimension_numbers = #tpu.dot_dimension_numbers<[1], [0], [0], [1], [0, 0, 1, 1], [], []>} : vector<64x128xbf16>, vector<128x128xbf16>, vector<64x128xf32> -> vector<64x128xf32>
    %162 = arith.addf %156, %161 : vector<64x128xf32>
    %163 = vector.extract_strided_slice %114 {offsets = [2, 2, 0], sizes = [8, 8, 128], strides = [1, 1, 1]} : vector<10x10x128xbf16> to vector<8x8x128xbf16>
    %164 = vector.shape_cast %163 : vector<8x8x128xbf16> to vector<64x128xbf16>
    %c2_168 = arith.constant 2 : index
    %c2_169 = arith.constant 2 : index
    %c2_170 = arith.constant 2 : index
    %c0_171 = arith.constant 0 : index
    %c0_172 = arith.constant 0 : index
    %165 = vector.load %arg5[%c2_168, %c2_169, %c2_170, %c0_171, %c0_172] : memref<3x3x3x128x128xbf16, #tpu.memory_space<vmem>>, vector<1x1x1x128x128xbf16>
    %166 = vector.shape_cast %165 : vector<1x1x1x128x128xbf16> to vector<128x128xbf16>
    %cst_173 = arith.constant dense<0.000000e+00> : vector<64x128xf32>
    %167 = tpu.matmul %164, %166, %cst_173 {dimension_numbers = #tpu.dot_dimension_numbers<[1], [0], [0], [1], [0, 0, 1, 1], [], []>} : vector<64x128xbf16>, vector<128x128xbf16>, vector<64x128xf32> -> vector<64x128xf32>
    %168 = arith.addf %162, %167 : vector<64x128xf32>
    %169 = vector.shape_cast %168 : vector<64x128xf32> to vector<8x8x128xf32>
    %c0_174 = arith.constant 0 : index
    %c0_175 = arith.constant 0 : index
    %c0_176 = arith.constant 0 : index
    %c0_177 = arith.constant 0 : index
    %c0_178 = arith.constant 0 : index
    %170 = vector.load %arg6[%c0_174, %c0_175, %c0_176, %c0_177, %c0_178] : memref<1x1x8x8x128xf32, #tpu.memory_space<vmem>>, vector<1x1x8x8x128xf32>
    %171 = vector.shape_cast %170 : vector<1x1x8x8x128xf32> to vector<8x8x128xf32>
    %172 = vector.shape_cast %169 : vector<8x8x128xf32> to vector<1x1x8x8x128xf32>
    tpu.vector_store %arg6[%c0_174, %c0_175, %c0_176, %c0_177, %c0_178], %172 {strides = array<i32>} : memref<1x1x8x8x128xf32, #tpu.memory_space<vmem>>, vector<1x1x8x8x128xf32>,
    %cst_179 = arith.constant dense<0.000000e+00> : vector<128xf32>
    %173 = vector.multi_reduction <add>, %168, %cst_179 [0] : vector<64x128xf32> to vector<128xf32>
    %174 = vector.shape_cast %173 : vector<128xf32> to vector<1x128xf32>
    %175 = arith.mulf %168, %168 : vector<64x128xf32>
    %cst_180 = arith.constant dense<0.000000e+00> : vector<128xf32>
    %176 = vector.multi_reduction <add>, %175, %cst_180 [0] : vector<64x128xf32> to vector<128xf32>
    %177 = vector.shape_cast %176 : vector<128xf32> to vector<1x128xf32>
    %178 = tpu.iota {dimensions = array<i32: 0>} : vector<8x128xi32>
    %c0_i32 = arith.constant 0 : i32
    %179 = vector.broadcast %c0_i32 : i32 to vector<8x128xi32>
    %180 = arith.cmpi eq, %178, %179 : vector<8x128xi32>
    %c1_i32 = arith.constant 1 : i32
    %181 = vector.broadcast %c1_i32 : i32 to vector<8x128xi32>
    %182 = arith.cmpi eq, %178, %181 : vector<8x128xi32>
    %cst_181 = arith.constant 0.000000e+00 : f32
    %183 = vector.shape_cast %177 : vector<1x128xf32> to vector<1x128xf32>
    %184 = vector.broadcast %183 : vector<1x128xf32> to vector<8x128xf32>
    %185 = vector.broadcast %cst_181 : f32 to vector<8x128xf32>
    %186 = arith.select %182, %184, %185 : vector<8x128xi1>, vector<8x128xf32>
    %187 = vector.shape_cast %174 : vector<1x128xf32> to vector<1x128xf32>
    %188 = vector.broadcast %187 : vector<1x128xf32> to vector<8x128xf32>
    %189 = arith.select %180, %188, %186 : vector<8x128xi1>, vector<8x128xf32>
    %c0_182 = arith.constant 0 : index
    %c0_183 = arith.constant 0 : index
    %c0_184 = arith.constant 0 : index
    %c0_185 = arith.constant 0 : index
    %190 = vector.load %arg7[%c0_182, %c0_183, %c0_184, %c0_185] : memref<1x1x8x128xf32, #tpu.memory_space<vmem>>, vector<1x1x8x128xf32>
    %191 = vector.shape_cast %190 : vector<1x1x8x128xf32> to vector<8x128xf32>
    %192 = vector.shape_cast %189 : vector<8x128xf32> to vector<1x1x8x128xf32>
    tpu.vector_store %arg7[%c0_182, %c0_183, %c0_184, %c0_185], %192 {strides = array<i32>} : memref<1x1x8x128xf32, #tpu.memory_space<vmem>>, vector<1x1x8x128xf32>,
    return
  }
  func.func @transform_0(%arg0: i32, %arg1: i32) -> (i32, i32, i32, i32, i32) {
    %c0_i32 = arith.constant 0 : i32
    %0 = arith.addi %arg1, %c0_i32 : i32
    %c0_i32_0 = arith.constant 0 : i32
    %c0_i32_1 = arith.constant 0 : i32
    %c0_i32_2 = arith.constant 0 : i32
    %c0_i32_3 = arith.constant 0 : i32
    return %arg0, %0, %c0_i32_0, %c0_i32_1, %c0_i32_2 : i32, i32, i32, i32, i32
  }
  func.func @transform_1(%arg0: i32, %arg1: i32) -> (i32, i32, i32, i32, i32) {
    %c1_i32 = arith.constant 1 : i32
    %0 = arith.addi %arg1, %c1_i32 : i32
    %c0_i32 = arith.constant 0 : i32
    %c0_i32_0 = arith.constant 0 : i32
    %c0_i32_1 = arith.constant 0 : i32
    %c0_i32_2 = arith.constant 0 : i32
    return %arg0, %0, %c0_i32, %c0_i32_0, %c0_i32_1 : i32, i32, i32, i32, i32
  }
  func.func @transform_2(%arg0: i32, %arg1: i32) -> (i32, i32, i32, i32, i32) {
    %c2_i32 = arith.constant 2 : i32
    %0 = arith.addi %arg1, %c2_i32 : i32
    %c0_i32 = arith.constant 0 : i32
    %c0_i32_0 = arith.constant 0 : i32
    %c0_i32_1 = arith.constant 0 : i32
    %c0_i32_2 = arith.constant 0 : i32
    return %arg0, %0, %c0_i32, %c0_i32_0, %c0_i32_1 : i32, i32, i32, i32, i32
  }
  func.func @transform_3(%arg0: i32, %arg1: i32) -> (i32, i32, i32, i32, i32) {
    %c0_i32 = arith.constant 0 : i32
    %c0_i32_0 = arith.constant 0 : i32
    %c0_i32_1 = arith.constant 0 : i32
    %c0_i32_2 = arith.constant 0 : i32
    %c0_i32_3 = arith.constant 0 : i32
    %c0_i32_4 = arith.constant 0 : i32
    return %c0_i32, %c0_i32_0, %c0_i32_1, %c0_i32_2, %c0_i32_3 : i32, i32, i32, i32, i32
  }
  func.func @transform_4(%arg0: i32, %arg1: i32) -> (i32, i32, i32, i32, i32) {
    %c0_i32 = arith.constant 0 : i32
    %c0_i32_0 = arith.constant 0 : i32
    %c0_i32_1 = arith.constant 0 : i32
    %c0_i32_2 = arith.constant 0 : i32
    return %arg0, %arg1, %c0_i32, %c0_i32_0, %c0_i32_1 : i32, i32, i32, i32, i32
  }
  func.func @transform_5(%arg0: i32, %arg1: i32) -> (i32, i32, i32, i32) {
    %c0_i32 = arith.constant 0 : i32
    %c0_i32_0 = arith.constant 0 : i32
    %c0_i32_1 = arith.constant 0 : i32
    return %arg0, %arg1, %c0_i32, %c0_i32_0 : i32, i32, i32, i32
  }
}

module attributes {stable_mosaic.version = 11 : i64} {
  func.func @_bn_relu_kernel(%arg0: i32, %arg1: memref<512x128xf32, #tpu.memory_space<vmem>>, %arg2: memref<1x128xf32, #tpu.memory_space<vmem>>, %arg3: memref<1x128xf32, #tpu.memory_space<vmem>>, %arg4: memref<512x128xbf16, #tpu.memory_space<vmem>>) attributes {dimension_semantics = [#tpu.dimension_semantics<parallel>], iteration_bounds = array<i64: 2>, scalar_prefetch = 0 : i64, scratch_operands = 0 : i64, tpu.core_type = #tpu.core_type<tc>, window_params = [{transform_indices = @transform_0, window_bounds = array<i64: 512, 128>}, {pipeline_mode = #tpu.pipeline_mode<synchronous>, transform_indices = @transform_1, window_bounds = array<i64: 1, 128>}, {pipeline_mode = #tpu.pipeline_mode<synchronous>, transform_indices = @transform_2, window_bounds = array<i64: 1, 128>}, {transform_indices = @transform_3, window_bounds = array<i64: 512, 128>}]} {
    %c0 = arith.constant 0 : index
    %c0_0 = arith.constant 0 : index
    %0 = vector.load %arg1[%c0, %c0_0] : memref<512x128xf32, #tpu.memory_space<vmem>>, vector<512x128xf32>
    %c0_1 = arith.constant 0 : index
    %c0_2 = arith.constant 0 : index
    %1 = vector.load %arg2[%c0_1, %c0_2] : memref<1x128xf32, #tpu.memory_space<vmem>>, vector<1x128xf32>
    %2 = vector.broadcast %1 : vector<1x128xf32> to vector<512x128xf32>
    %3 = arith.mulf %0, %2 : vector<512x128xf32>
    %c0_3 = arith.constant 0 : index
    %c0_4 = arith.constant 0 : index
    %4 = vector.load %arg3[%c0_3, %c0_4] : memref<1x128xf32, #tpu.memory_space<vmem>>, vector<1x128xf32>
    %5 = vector.broadcast %4 : vector<1x128xf32> to vector<512x128xf32>
    %6 = arith.addf %3, %5 : vector<512x128xf32>
    %cst = arith.constant 0.000000e+00 : f32
    %7 = vector.broadcast %cst : f32 to vector<512x128xf32>
    %8 = arith.maximumf %6, %7 : vector<512x128xf32>
    %9 = arith.truncf %8 : vector<512x128xf32> to vector<512x128xbf16>
    %c0_5 = arith.constant 0 : index
    %c0_6 = arith.constant 0 : index
    %10 = vector.load %arg4[%c0_5, %c0_6] : memref<512x128xbf16, #tpu.memory_space<vmem>>, vector<512x128xbf16>
    tpu.vector_store %arg4[%c0_5, %c0_6], %9 {strides = array<i32>} : memref<512x128xbf16, #tpu.memory_space<vmem>>, vector<512x128xbf16>,
    return
  }
  func.func @transform_0(%arg0: i32) -> (i32, i32) {
    %c0_i32 = arith.constant 0 : i32
    %c0_i32_0 = arith.constant 0 : i32
    return %arg0, %c0_i32 : i32, i32
  }
  func.func @transform_1(%arg0: i32) -> (i32, i32) {
    %c0_i32 = arith.constant 0 : i32
    %c0_i32_0 = arith.constant 0 : i32
    %c0_i32_1 = arith.constant 0 : i32
    return %c0_i32, %c0_i32_0 : i32, i32
  }
  func.func @transform_2(%arg0: i32) -> (i32, i32) {
    %c0_i32 = arith.constant 0 : i32
    %c0_i32_0 = arith.constant 0 : i32
    %c0_i32_1 = arith.constant 0 : i32
    return %c0_i32, %c0_i32_0 : i32, i32
  }
  func.func @transform_3(%arg0: i32) -> (i32, i32) {
    %c0_i32 = arith.constant 0 : i32
    %c0_i32_0 = arith.constant 0 : i32
    return %arg0, %c0_i32 : i32, i32
  }
}

module attributes {stable_mosaic.version = 11 : i64} {
  func.func @_bn_add_relu_kernel(%arg0: i32, %arg1: memref<512x128xf32, #tpu.memory_space<vmem>>, %arg2: memref<512x128xf32, #tpu.memory_space<vmem>>, %arg3: memref<1x128xf32, #tpu.memory_space<vmem>>, %arg4: memref<1x128xf32, #tpu.memory_space<vmem>>, %arg5: memref<512x128xf32, #tpu.memory_space<vmem>>) attributes {dimension_semantics = [#tpu.dimension_semantics<parallel>], iteration_bounds = array<i64: 2>, scalar_prefetch = 0 : i64, scratch_operands = 0 : i64, tpu.core_type = #tpu.core_type<tc>, window_params = [{transform_indices = @transform_0, window_bounds = array<i64: 512, 128>}, {transform_indices = @transform_1, window_bounds = array<i64: 512, 128>}, {pipeline_mode = #tpu.pipeline_mode<synchronous>, transform_indices = @transform_2, window_bounds = array<i64: 1, 128>}, {pipeline_mode = #tpu.pipeline_mode<synchronous>, transform_indices = @transform_3, window_bounds = array<i64: 1, 128>}, {transform_indices = @transform_4, window_bounds = array<i64: 512, 128>}]} {
    %c0 = arith.constant 0 : index
    %c0_0 = arith.constant 0 : index
    %0 = vector.load %arg1[%c0, %c0_0] : memref<512x128xf32, #tpu.memory_space<vmem>>, vector<512x128xf32>
    %c0_1 = arith.constant 0 : index
    %c0_2 = arith.constant 0 : index
    %1 = vector.load %arg3[%c0_1, %c0_2] : memref<1x128xf32, #tpu.memory_space<vmem>>, vector<1x128xf32>
    %2 = vector.broadcast %1 : vector<1x128xf32> to vector<512x128xf32>
    %3 = arith.mulf %0, %2 : vector<512x128xf32>
    %c0_3 = arith.constant 0 : index
    %c0_4 = arith.constant 0 : index
    %4 = vector.load %arg4[%c0_3, %c0_4] : memref<1x128xf32, #tpu.memory_space<vmem>>, vector<1x128xf32>
    %5 = vector.broadcast %4 : vector<1x128xf32> to vector<512x128xf32>
    %6 = arith.addf %3, %5 : vector<512x128xf32>
    %c0_5 = arith.constant 0 : index
    %c0_6 = arith.constant 0 : index
    %7 = vector.load %arg2[%c0_5, %c0_6] : memref<512x128xf32, #tpu.memory_space<vmem>>, vector<512x128xf32>
    %8 = arith.addf %6, %7 : vector<512x128xf32>
    %cst = arith.constant 0.000000e+00 : f32
    %9 = vector.broadcast %cst : f32 to vector<512x128xf32>
    %10 = arith.maximumf %8, %9 : vector<512x128xf32>
    %c0_7 = arith.constant 0 : index
    %c0_8 = arith.constant 0 : index
    %11 = vector.load %arg5[%c0_7, %c0_8] : memref<512x128xf32, #tpu.memory_space<vmem>>, vector<512x128xf32>
    tpu.vector_store %arg5[%c0_7, %c0_8], %10 {strides = array<i32>} : memref<512x128xf32, #tpu.memory_space<vmem>>, vector<512x128xf32>,
    return
  }
  func.func @transform_0(%arg0: i32) -> (i32, i32) {
    %c0_i32 = arith.constant 0 : i32
    %c0_i32_0 = arith.constant 0 : i32
    return %arg0, %c0_i32 : i32, i32
  }
  func.func @transform_1(%arg0: i32) -> (i32, i32) {
    %c0_i32 = arith.constant 0 : i32
    %c0_i32_0 = arith.constant 0 : i32
    return %arg0, %c0_i32 : i32, i32
  }
  func.func @transform_2(%arg0: i32) -> (i32, i32) {
    %c0_i32 = arith.constant 0 : i32
    %c0_i32_0 = arith.constant 0 : i32
    %c0_i32_1 = arith.constant 0 : i32
    return %c0_i32, %c0_i32_0 : i32, i32
  }
  func.func @transform_3(%arg0: i32) -> (i32, i32) {
    %c0_i32 = arith.constant 0 : i32
    %c0_i32_0 = arith.constant 0 : i32
    %c0_i32_1 = arith.constant 0 : i32
    return %c0_i32, %c0_i32_0 : i32, i32
  }
  func.func @transform_4(%arg0: i32) -> (i32, i32) {
    %c0_i32 = arith.constant 0 : i32
    %c0_i32_0 = arith.constant 0 : i32
    return %arg0, %c0_i32 : i32, i32
  }
}

</mosaic_0001>

<llo_original>
// kernel: basic_block_forward.5
$region0: #{basic_block_forward.5}
  #allocation0 [shape = 'u32[]', space=smem, size = 0x4, offset = 0x4, fixed_abs, tag = 'smem constant byte address 0x4 - core index']
  #allocation1 [shape = 'u32[144,128]{1,0:T(1,128)}', space=vmem, size = 0x12000, scoped, tag = 'internal scratch']
  %s0 = inlined_call_operand.vmem [shape: f32[1024,128], index: 0, kind: input, shape index: {}]
  %s1 = inlined_call_operand.vmem [shape: f32[1,128], index: 1, kind: input, shape index: {}]
  %s2 = inlined_call_operand.vmem [shape: f32[1,128], index: 2, kind: input, shape index: {}]
  %s3 = inlined_call_operand.vmem [shape: bf16[1024,128], index: 3, kind: output, shape index: {}]
  %s4 = sld [smem:[#allocation0]]
  $region45: #{basic_block_forward.5} parent=0
    _
  %s6 = ssub.s32 1, %s4
  %s7 = scalar_select 0, %s6, %s4
  loop: start=0, step=1, limit=4
  $region2: #{basic_block_forward.5} parent=0 // loop_pre_header
    _
  $region3: #{basic_block_forward.5} parent=0 // loop_header
    %s9 = sphi 0, %s13
    %p10 = scmp.ge.s32.totalorder %s9, 4
    %s19 = sphi 0, %s21
    %s22 = sphi 0, %s19
    %s23 = sphi 0, %s22
    %s39 = sphi 0, %s23
    %s43 = sphi 0, %s43
    %s45 = sphi 0, %s43
    %s46 = sphi 0, %s45
    %s60 = sphi 0, %s46
    %s64 = sphi 0, %s64
    %s66 = sphi 0, %s64
    %s67 = sphi 0, %s66
    %s81 = sphi 0, %s67
    %s87 = sphi 0, %s89
    %s90 = sphi 0, %s87
    %s91 = sphi 0, %s90
    %s107 = sphi 0, %s91
  $region4: #{basic_block_forward.5} parent=0 // loop_header_branch
    %12 = sbr.rel (%p10) target = $region8
  $region5: #{basic_block_forward.5} parent=0 // loop_body
    %s14 = ssub.s32 %s9, 1
    %s15 = ssub.s32 %s9, 2
    %s16 = sadd.s32 %s9, 1
    %s17 = ssub.s32 %s9, %s16
    %p18 = scmp.eq.s32.totalorder %s17, 0
    %s20 = sadd.s32 %s19, 1
    %s21 = scalar_select %p18, %s19, %s20
    %p24 = pneg %p18
    %p25 = scmp.eq.s32.totalorder %s9, 1
    %p26 = por %p24, %p25
    %p27 = scmp.ne.s32.totalorder %s19, %s22
    %p28 = scmp.eq.s32.totalorder %s9, 0
    %p29 = por %p27, %p28
    %p30 = scmp.ne.s32.totalorder %s19, %s22
    %p31 = scmp.eq.s32.totalorder %s14, 1
    %p32 = por %p30, %p31
    %p33 = scmp.ne.s32.totalorder %s22, %s23
    %p34 = scmp.eq.s32.totalorder %s14, 0
    %p35 = por %p33, %p34
    %p36 = scmp.ne.s32.totalorder %s22, %s23
    %p37 = scmp.eq.s32.totalorder %s15, 1
    %p38 = por %p36, %p37
    %p40 = scmp.ne.s32.totalorder %s23, %s39
    %p41 = scmp.eq.s32.totalorder %s15, 0
    %p42 = por %p40, %p41
    %s44 = sadd.s32 %s43, 1
    %p47 = scmp.eq.s32.totalorder %s9, 1
    %p48 = scmp.ne.s32.totalorder %s43, %s45
    %p49 = scmp.eq.s32.totalorder %s9, 0
    %p50 = por %p48, %p49
    %p51 = scmp.ne.s32.totalorder %s43, %s45
    %p52 = scmp.eq.s32.totalorder %s14, 1
    %p53 = por %p51, %p52
    %p54 = scmp.ne.s32.totalorder %s45, %s46
    %p55 = scmp.eq.s32.totalorder %s14, 0
    %p56 = por %p54, %p55
    %p57 = scmp.ne.s32.totalorder %s45, %s46
    %p58 = scmp.eq.s32.totalorder %s15, 1
    %p59 = por %p57, %p58
    %p61 = scmp.ne.s32.totalorder %s46, %s60
    %p62 = scmp.eq.s32.totalorder %s15, 0
    %p63 = por %p61, %p62
    %s65 = sadd.s32 %s64, 1
    %p68 = scmp.eq.s32.totalorder %s9, 1
    %p69 = scmp.ne.s32.totalorder %s64, %s66
    %p70 = scmp.eq.s32.totalorder %s9, 0
    %p71 = por %p69, %p70
    %p72 = scmp.ne.s32.totalorder %s64, %s66
    %p73 = scmp.eq.s32.totalorder %s14, 1
    %p74 = por %p72, %p73
    %p75 = scmp.ne.s32.totalorder %s66, %s67
    %p76 = scmp.eq.s32.totalorder %s14, 0
    %p77 = por %p75, %p76
    %p78 = scmp.ne.s32.totalorder %s66, %s67
    %p79 = scmp.eq.s32.totalorder %s15, 1
    %p80 = por %p78, %p79
    %p82 = scmp.ne.s32.totalorder %s67, %s81
    %p83 = scmp.eq.s32.totalorder %s15, 0
    %p84 = por %p82, %p83
    %s85 = ssub.s32 %s9, %s16
    %p86 = scmp.eq.s32.totalorder %s85, 0
    %s88 = sadd.s32 %s87, 1
    %s89 = scalar_select %p86, %s87, %s88
    %p92 = pneg %p86
    %p93 = scmp.eq.s32.totalorder %s9, 1
    %p94 = por %p92, %p93
    %p95 = scmp.ne.s32.totalorder %s87, %s90
    %p96 = scmp.eq.s32.totalorder %s9, 0
    %p97 = por %p95, %p96
    %p98 = scmp.ne.s32.totalorder %s87, %s90
    %p99 = scmp.eq.s32.totalorder %s14, 1
    %p100 = por %p98, %p99
    %p101 = scmp.ne.s32.totalorder %s90, %s91
    %p102 = scmp.eq.s32.totalorder %s14, 0
    %p103 = por %p101, %p102
    %p104 = scmp.ne.s32.totalorder %s90, %s91
    %p105 = scmp.eq.s32.totalorder %s15, 1
    %p106 = por %p104, %p105
    %p108 = scmp.ne.s32.totalorder %s91, %s107
    %p109 = scmp.eq.s32.totalorder %s15, 0
    %p110 = por %p108, %p109
    %p111 = scmp.le.s32.totalorder 1, %s9
    %p112 = scmp.lt.s32.totalorder %s9, 3
    %p113 = pnand %p111, %p112
    %p114 = pneg %p113
    // Predicated region
    $region9: #{basic_block_forward.5} parent=5 // pred_check
      _
    $region10: #{basic_block_forward.5} parent=5 // pred_check_branch
      %116 = sbr.rel (%p113) target = $region12
    $region11: #{basic_block_forward.5} parent=5 // pred_region
      %s117 = ssub.s32 %s9, 1
      // Predicated region
      $region13: #{basic_block_forward.5} parent=11 // pred_check
        %p118 = pneg %p56
      $region14: #{basic_block_forward.5} parent=11 // pred_check_branch
        %120 = sbr.rel (%p118) target = $region16
      $region15: #{basic_block_forward.5} parent=11 // pred_region
        _
      $region16: #{basic_block_forward.5} parent=11 // pred_fallthru
        _
      // Predicated region
      $region17: #{basic_block_forward.5} parent=11 // pred_check
        %p121 = pneg %p77
      $region18: #{basic_block_forward.5} parent=11 // pred_check_branch
        %123 = sbr.rel (%p121) target = $region20
      $region19: #{basic_block_forward.5} parent=11 // pred_region
        _
      $region20: #{basic_block_forward.5} parent=11 // pred_fallthru
        _
    $region12: #{basic_block_forward.5} parent=5 // pred_fallthru
      _
    %p124 = scmp.lt.s32.totalorder %s9, 2
    // Predicated region
    $region21: #{basic_block_forward.5} parent=5 // pred_check
      %p125 = pneg %p124
    $region22: #{basic_block_forward.5} parent=5 // pred_check_branch
      %127 = sbr.rel (%p125) target = $region24
    $region23: #{basic_block_forward.5} parent=5 // pred_region
      // Predicated region
      $region25: #{basic_block_forward.5} parent=23 // pred_check
        %p128 = pneg %p29
      $region26: #{basic_block_forward.5} parent=23 // pred_check_branch
        %130 = sbr.rel (%p128) target = $region28
      $region27: #{basic_block_forward.5} parent=23 // pred_region
        %s131 = smul.u32 64, %s9
        %p132 = scmp.lt.s32.totalorder %s131, 127
        %s133 = scalar_select %p132, %s131, 127
        %s134 = smul.addr %s133, 8
        %s135 = scalar_lea.vmem %s0, %s134
        %s136 = smul.u32 64, %s9
      $region28: #{basic_block_forward.5} parent=23 // pred_fallthru
        _
    $region24: #{basic_block_forward.5} parent=5 // pred_fallthru
      _
    %p137 = scmp.le.s32.totalorder 1, %s9
    %p138 = scmp.lt.s32.totalorder %s9, 3
    %p139 = pnand %p137, %p138
    %p140 = pneg %p139
    // Predicated region
    $region29: #{basic_block_forward.5} parent=5 // pred_check
      _
    $region30: #{basic_block_forward.5} parent=5 // pred_check_branch
      %142 = sbr.rel (%p139) target = $region32
    $region31: #{basic_block_forward.5} parent=5 // pred_region
      %s143 = ssub.s32 %s9, 1
      %s144 = smul.u32 64, %s14
      %p145 = scmp.lt.s32.totalorder %s144, 127
      %s146 = scalar_select %p145, %s144, 127
      %s147 = smul.addr %s146, 8
      %s148 = scalar_lea.vmem %s0, %s147
      %p149 = pneg %p35
      %p150 = pneg %p32
      %p151 = pneg %p56
      %p152 = pneg %p53
      %p153 = pneg %p77
      %p154 = pneg %p74
      %p155 = pneg %p103
      %p156 = pneg %p100
      %s157 = smul.u32 64, %s14
      %p158 = scmp.lt.s32.totalorder %s157, 127
      %s159 = scalar_select %p158, %s157, 127
      %s160 = smul.addr %s159, 4
      %s161 = scalar_lea.vmem %s3, %s160
      %s162 = smul.u32 64, %s14
      %p163 = scmp.lt.s32.totalorder %s162, 127
      %s164 = scalar_select %p163, %s162, 127
      %s165 = smul.addr %s164, 8
      %s166 = scalar_lea.vmem %s0, %s165
      %s167 = smul.u32 64, %s14
      %s168 = smul.u32 64, %s14
      %p169 = scmp.lt.s32.totalorder %s168, 127
      %s170 = scalar_select %p169, %s168, 127
      %s171 = smul.addr %s170, 4
      %s172 = scalar_lea.vmem %s3, %s171
      %s173 = smul.u32 64, %s14
      %v174 = vld [vmem:[%s166] sm:$0xff]
      %v175 = vld [vmem:[%s166 + $0x8] sm:$0xff]
      %v176 = vld [vmem:[%s166 + $0x10] sm:$0xff]
      %v177 = vld [vmem:[%s166 + $0x18] sm:$0xff]
      %v178 = vld [vmem:[%s166 + $0x20] sm:$0xff]
      %v179 = vld [vmem:[%s166 + $0x28] sm:$0xff]
      %v180 = vld [vmem:[%s166 + $0x30] sm:$0xff]
      %v181 = vld [vmem:[%s166 + $0x38] sm:$0xff]
      %v182 = vld [vmem:[%s166 + $0x40] sm:$0xff]
      %v183 = vld [vmem:[%s166 + $0x48] sm:$0xff]
      %v184 = vld [vmem:[%s166 + $0x50] sm:$0xff]
      %v185 = vld [vmem:[%s166 + $0x58] sm:$0xff]
      %v186 = vld [vmem:[%s166 + $0x60] sm:$0xff]
      %v187 = vld [vmem:[%s166 + $0x68] sm:$0xff]
      %v188 = vld [vmem:[%s166 + $0x70] sm:$0xff]
      %v189 = vld [vmem:[%s166 + $0x78] sm:$0xff]
      %v190 = vld [vmem:[%s166 + $0x80] sm:$0xff]
      %v191 = vld [vmem:[%s166 + $0x88] sm:$0xff]
      %v192 = vld [vmem:[%s166 + $0x90] sm:$0xff]
      %v193 = vld [vmem:[%s166 + $0x98] sm:$0xff]
      %v194 = vld [vmem:[%s166 + $0xa0] sm:$0xff]
      %v195 = vld [vmem:[%s166 + $0xa8] sm:$0xff]
      %v196 = vld [vmem:[%s166 + $0xb0] sm:$0xff]
      %v197 = vld [vmem:[%s166 + $0xb8] sm:$0xff]
      %v198 = vld [vmem:[%s166 + $0xc0] sm:$0xff]
      %v199 = vld [vmem:[%s166 + $0xc8] sm:$0xff]
      %v200 = vld [vmem:[%s166 + $0xd0] sm:$0xff]
      %v201 = vld [vmem:[%s166 + $0xd8] sm:$0xff]
      %v202 = vld [vmem:[%s166 + $0xe0] sm:$0xff]
      %v203 = vld [vmem:[%s166 + $0xe8] sm:$0xff]
      %v204 = vld [vmem:[%s166 + $0xf0] sm:$0xff]
      %v205 = vld [vmem:[%s166 + $0xf8] sm:$0xff]
      %v206 = vld [vmem:[%s166 + $0x100] sm:$0xff]
      %v207 = vld [vmem:[%s166 + $0x108] sm:$0xff]
      %v208 = vld [vmem:[%s166 + $0x110] sm:$0xff]
      %v209 = vld [vmem:[%s166 + $0x118] sm:$0xff]
      %v210 = vld [vmem:[%s166 + $0x120] sm:$0xff]
      %v211 = vld [vmem:[%s166 + $0x128] sm:$0xff]
      %v212 = vld [vmem:[%s166 + $0x130] sm:$0xff]
      %v213 = vld [vmem:[%s166 + $0x138] sm:$0xff]
      %v214 = vld [vmem:[%s166 + $0x140] sm:$0xff]
      %v215 = vld [vmem:[%s166 + $0x148] sm:$0xff]
      %v216 = vld [vmem:[%s166 + $0x150] sm:$0xff]
      %v217 = vld [vmem:[%s166 + $0x158] sm:$0xff]
      %v218 = vld [vmem:[%s166 + $0x160] sm:$0xff]
      %v219 = vld [vmem:[%s166 + $0x168] sm:$0xff]
      %v220 = vld [vmem:[%s166 + $0x170] sm:$0xff]
      %v221 = vld [vmem:[%s166 + $0x178] sm:$0xff]
      %v222 = vld [vmem:[%s166 + $0x180] sm:$0xff]
      %v223 = vld [vmem:[%s166 + $0x188] sm:$0xff]
      %v224 = vld [vmem:[%s166 + $0x190] sm:$0xff]
      %v225 = vld [vmem:[%s166 + $0x198] sm:$0xff]
      %v226 = vld [vmem:[%s166 + $0x1a0] sm:$0xff]
      %v227 = vld [vmem:[%s166 + $0x1a8] sm:$0xff]
      %v228 = vld [vmem:[%s166 + $0x1b0] sm:$0xff]
      %v229 = vld [vmem:[%s166 + $0x1b8] sm:$0xff]
      %v230 = vld [vmem:[%s166 + $0x1c0] sm:$0xff]
      %v231 = vld [vmem:[%s166 + $0x1c8] sm:$0xff]
      %v232 = vld [vmem:[%s166 + $0x1d0] sm:$0xff]
      %v233 = vld [vmem:[%s166 + $0x1d8] sm:$0xff]
      %v234 = vld [vmem:[%s166 + $0x1e0] sm:$0xff]
      %v235 = vld [vmem:[%s166 + $0x1e8] sm:$0xff]
      %v236 = vld [vmem:[%s166 + $0x1f0] sm:$0xff]
      %v237 = vld [vmem:[%s166 + $0x1f8] sm:$0xff]
      %v238 = vld [vmem:[%s1] sm:$0x1]
      %v240 = vlaneseq
      %v241 = vshrl.u32 %v240, 7
      %v242 = vsub.s32 0, %v241
      %v243 = vrot.slane %v238, %v242
      %v245 = vmul.f32 %v174, %v243
      %v246 = vmul.f32 %v175, %v243
      %v247 = vmul.f32 %v176, %v243
      %v248 = vmul.f32 %v177, %v243
      %v249 = vmul.f32 %v178, %v243
      %v250 = vmul.f32 %v179, %v243
      %v251 = vmul.f32 %v180, %v243
      %v252 = vmul.f32 %v181, %v243
      %v253 = vmul.f32 %v182, %v243
      %v254 = vmul.f32 %v183, %v243
      %v255 = vmul.f32 %v184, %v243
      %v256 = vmul.f32 %v185, %v243
      %v257 = vmul.f32 %v186, %v243
      %v258 = vmul.f32 %v187, %v243
      %v259 = vmul.f32 %v188, %v243
      %v260 = vmul.f32 %v189, %v243
      %v261 = vmul.f32 %v190, %v243
      %v262 = vmul.f32 %v191, %v243
      %v263 = vmul.f32 %v192, %v243
      %v264 = vmul.f32 %v193, %v243
      %v265 = vmul.f32 %v194, %v243
      %v266 = vmul.f32 %v195, %v243
      %v267 = vmul.f32 %v196, %v243
      %v268 = vmul.f32 %v197, %v243
      %v269 = vmul.f32 %v198, %v243
      %v270 = vmul.f32 %v199, %v243
      %v271 = vmul.f32 %v200, %v243
      %v272 = vmul.f32 %v201, %v243
      %v273 = vmul.f32 %v202, %v243
      %v274 = vmul.f32 %v203, %v243
      %v275 = vmul.f32 %v204, %v243
      %v276 = vmul.f32 %v205, %v243
      %v277 = vmul.f32 %v206, %v243
      %v278 = vmul.f32 %v207, %v243
      %v279 = vmul.f32 %v208, %v243
      %v280 = vmul.f32 %v209, %v243
      %v281 = vmul.f32 %v210, %v243
      %v282 = vmul.f32 %v211, %v243
      %v283 = vmul.f32 %v212, %v243
      %v284 = vmul.f32 %v213, %v243
      %v285 = vmul.f32 %v214, %v243
      %v286 = vmul.f32 %v215, %v243
      %v287 = vmul.f32 %v216, %v243
      %v288 = vmul.f32 %v217, %v243
      %v289 = vmul.f32 %v218, %v243
      %v290 = vmul.f32 %v219, %v243
      %v291 = vmul.f32 %v220, %v243
      %v292 = vmul.f32 %v221, %v243
      %v293 = vmul.f32 %v222, %v243
      %v294 = vmul.f32 %v223, %v243
      %v295 = vmul.f32 %v224, %v243
      %v296 = vmul.f32 %v225, %v243
      %v297 = vmul.f32 %v226, %v243
      %v298 = vmul.f32 %v227, %v243
      %v299 = vmul.f32 %v228, %v243
      %v300 = vmul.f32 %v229, %v243
      %v301 = vmul.f32 %v230, %v243
      %v302 = vmul.f32 %v231, %v243
      %v303 = vmul.f32 %v232, %v243
      %v304 = vmul.f32 %v233, %v243
      %v305 = vmul.f32 %v234, %v243
      %v306 = vmul.f32 %v235, %v243
      %v307 = vmul.f32 %v236, %v243
      %v308 = vmul.f32 %v237, %v243
      %v309 = vld [vmem:[%s2] sm:$0x1]
      %v311 = vlaneseq
      %v312 = vshrl.u32 %v311, 7
      %v313 = vsub.s32 0, %v312
      %v314 = vrot.slane %v309, %v313
      %v316 = vadd.f32 %v245, %v314
      %v317 = vadd.f32 %v246, %v314
      %v318 = vadd.f32 %v247, %v314
      %v319 = vadd.f32 %v248, %v314
      %v320 = vadd.f32 %v249, %v314
      %v321 = vadd.f32 %v250, %v314
      %v322 = vadd.f32 %v251, %v314
      %v323 = vadd.f32 %v252, %v314
      %v324 = vadd.f32 %v253, %v314
      %v325 = vadd.f32 %v254, %v314
      %v326 = vadd.f32 %v255, %v314
      %v327 = vadd.f32 %v256, %v314
      %v328 = vadd.f32 %v257, %v314
      %v329 = vadd.f32 %v258, %v314
      %v330 = vadd.f32 %v259, %v314
      %v331 = vadd.f32 %v260, %v314
      %v332 = vadd.f32 %v261, %v314
      %v333 = vadd.f32 %v262, %v314
      %v334 = vadd.f32 %v263, %v314
      %v335 = vadd.f32 %v264, %v314
      %v336 = vadd.f32 %v265, %v314
      %v337 = vadd.f32 %v266, %v314
      %v338 = vadd.f32 %v267, %v314
      %v339 = vadd.f32 %v268, %v314
      %v340 = vadd.f32 %v269, %v314
      %v341 = vadd.f32 %v270, %v314
      %v342 = vadd.f32 %v271, %v314
      %v343 = vadd.f32 %v272, %v314
      %v344 = vadd.f32 %v273, %v314
      %v345 = vadd.f32 %v274, %v314
      %v346 = vadd.f32 %v275, %v314
      %v347 = vadd.f32 %v276, %v314
      %v348 = vadd.f32 %v277, %v314
      %v349 = vadd.f32 %v278, %v314
      %v350 = vadd.f32 %v279, %v314
      %v351 = vadd.f32 %v280, %v314
      %v352 = vadd.f32 %v281, %v314
      %v353 = vadd.f32 %v282, %v314
      %v354 = vadd.f32 %v283, %v314
      %v355 = vadd.f32 %v284, %v314
      %v356 = vadd.f32 %v285, %v314
      %v357 = vadd.f32 %v286, %v314
      %v358 = vadd.f32 %v287, %v314
      %v359 = vadd.f32 %v288, %v314
      %v360 = vadd.f32 %v289, %v314
      %v361 = vadd.f32 %v290, %v314
      %v362 = vadd.f32 %v291, %v314
      %v363 = vadd.f32 %v292, %v314
      %v364 = vadd.f32 %v293, %v314
      %v365 = vadd.f32 %v294, %v314
      %v366 = vadd.f32 %v295, %v314
      %v367 = vadd.f32 %v296, %v314
      %v368 = vadd.f32 %v297, %v314
      %v369 = vadd.f32 %v298, %v314
      %v370 = vadd.f32 %v299, %v314
      %v371 = vadd.f32 %v300, %v314
      %v372 = vadd.f32 %v301, %v314
      %v373 = vadd.f32 %v302, %v314
      %v374 = vadd.f32 %v303, %v314
      %v375 = vadd.f32 %v304, %v314
      %v376 = vadd.f32 %v305, %v314
      %v377 = vadd.f32 %v306, %v314
      %v378 = vadd.f32 %v307, %v314
      %v379 = vadd.f32 %v308, %v314
      %v380 = vmax.f32 %v316, 0.0
      %v381 = vmax.f32 %v317, 0.0
      %v382 = vmax.f32 %v318, 0.0
      %v383 = vmax.f32 %v319, 0.0
      %v384 = vmax.f32 %v320, 0.0
      %v385 = vmax.f32 %v321, 0.0
      %v386 = vmax.f32 %v322, 0.0
      %v387 = vmax.f32 %v323, 0.0
      %v388 = vmax.f32 %v324, 0.0
      %v389 = vmax.f32 %v325, 0.0
      %v390 = vmax.f32 %v326, 0.0
      %v391 = vmax.f32 %v327, 0.0
      %v392 = vmax.f32 %v328, 0.0
      %v393 = vmax.f32 %v329, 0.0
      %v394 = vmax.f32 %v330, 0.0
      %v395 = vmax.f32 %v331, 0.0
      %v396 = vmax.f32 %v332, 0.0
      %v397 = vmax.f32 %v333, 0.0
      %v398 = vmax.f32 %v334, 0.0
      %v399 = vmax.f32 %v335, 0.0
      %v400 = vmax.f32 %v336, 0.0
      %v401 = vmax.f32 %v337, 0.0
      %v402 = vmax.f32 %v338, 0.0
      %v403 = vmax.f32 %v339, 0.0
      %v404 = vmax.f32 %v340, 0.0
      %v405 = vmax.f32 %v341, 0.0
      %v406 = vmax.f32 %v342, 0.0
      %v407 = vmax.f32 %v343, 0.0
      %v408 = vmax.f32 %v344, 0.0
      %v409 = vmax.f32 %v345, 0.0
      %v410 = vmax.f32 %v346, 0.0
      %v411 = vmax.f32 %v347, 0.0
      %v412 = vmax.f32 %v348, 0.0
      %v413 = vmax.f32 %v349, 0.0
      %v414 = vmax.f32 %v350, 0.0
      %v415 = vmax.f32 %v351, 0.0
      %v416 = vmax.f32 %v352, 0.0
      %v417 = vmax.f32 %v353, 0.0
      %v418 = vmax.f32 %v354, 0.0
      %v419 = vmax.f32 %v355, 0.0
      %v420 = vmax.f32 %v356, 0.0
      %v421 = vmax.f32 %v357, 0.0
      %v422 = vmax.f32 %v358, 0.0
      %v423 = vmax.f32 %v359, 0.0
      %v424 = vmax.f32 %v360, 0.0
      %v425 = vmax.f32 %v361, 0.0
      %v426 = vmax.f32 %v362, 0.0
      %v427 = vmax.f32 %v363, 0.0
      %v428 = vmax.f32 %v364, 0.0
      %v429 = vmax.f32 %v365, 0.0
      %v430 = vmax.f32 %v366, 0.0
      %v431 = vmax.f32 %v367, 0.0
      %v432 = vmax.f32 %v368, 0.0
      %v433 = vmax.f32 %v369, 0.0
      %v434 = vmax.f32 %v370, 0.0
      %v435 = vmax.f32 %v371, 0.0
      %v436 = vmax.f32 %v372, 0.0
      %v437 = vmax.f32 %v373, 0.0
      %v438 = vmax.f32 %v374, 0.0
      %v439 = vmax.f32 %v375, 0.0
      %v440 = vmax.f32 %v376, 0.0
      %v441 = vmax.f32 %v377, 0.0
      %v442 = vmax.f32 %v378, 0.0
      %v443 = vmax.f32 %v379, 0.0
      %v444 = vpack.c.bf16 %v381, %v380
      %v445 = vpack.c.bf16 %v383, %v382
      %v446 = vpack.c.bf16 %v385, %v384
      %v447 = vpack.c.bf16 %v387, %v386
      %v448 = vpack.c.bf16 %v389, %v388
      %v449 = vpack.c.bf16 %v391, %v390
      %v450 = vpack.c.bf16 %v393, %v392
      %v451 = vpack.c.bf16 %v395, %v394
      %v452 = vpack.c.bf16 %v397, %v396
      %v453 = vpack.c.bf16 %v399, %v398
      %v454 = vpack.c.bf16 %v401, %v400
      %v455 = vpack.c.bf16 %v403, %v402
      %v456 = vpack.c.bf16 %v405, %v404
      %v457 = vpack.c.bf16 %v407, %v406
      %v458 = vpack.c.bf16 %v409, %v408
      %v459 = vpack.c.bf16 %v411, %v410
      %v460 = vpack.c.bf16 %v413, %v412
      %v461 = vpack.c.bf16 %v415, %v414
      %v462 = vpack.c.bf16 %v417, %v416
      %v463 = vpack.c.bf16 %v419, %v418
      %v464 = vpack.c.bf16 %v421, %v420
      %v465 = vpack.c.bf16 %v423, %v422
      %v466 = vpack.c.bf16 %v425, %v424
      %v467 = vpack.c.bf16 %v427, %v426
      %v468 = vpack.c.bf16 %v429, %v428
      %v469 = vpack.c.bf16 %v431, %v430
      %v470 = vpack.c.bf16 %v433, %v432
      %v471 = vpack.c.bf16 %v435, %v434
      %v472 = vpack.c.bf16 %v437, %v436
      %v473 = vpack.c.bf16 %v439, %v438
      %v474 = vpack.c.bf16 %v441, %v440
      %v475 = vpack.c.bf16 %v443, %v442
      %v508 = vunpack.c.l.b16 %v444
      %v509 = vunpack.c.h.b16 %v444
      %v510 = vunpack.c.l.b16 %v445
      %v511 = vunpack.c.h.b16 %v445
      %v512 = vunpack.c.l.b16 %v446
      %v513 = vunpack.c.h.b16 %v446
      %v514 = vunpack.c.l.b16 %v447
      %v515 = vunpack.c.h.b16 %v447
      %v516 = vunpack.c.l.b16 %v448
      %v517 = vunpack.c.h.b16 %v448
      %v518 = vunpack.c.l.b16 %v449
      %v519 = vunpack.c.h.b16 %v449
      %v520 = vunpack.c.l.b16 %v450
      %v521 = vunpack.c.h.b16 %v450
      %v522 = vunpack.c.l.b16 %v451
      %v523 = vunpack.c.h.b16 %v451
      %v524 = vunpack.c.l.b16 %v452
      %v525 = vunpack.c.h.b16 %v452
      %v526 = vunpack.c.l.b16 %v453
      %v527 = vunpack.c.h.b16 %v453
      %v528 = vunpack.c.l.b16 %v454
      %v529 = vunpack.c.h.b16 %v454
      %v530 = vunpack.c.l.b16 %v455
      %v531 = vunpack.c.h.b16 %v455
      %v532 = vunpack.c.l.b16 %v456
      %v533 = vunpack.c.h.b16 %v456
      %v534 = vunpack.c.l.b16 %v457
      %v535 = vunpack.c.h.b16 %v457
      %v536 = vunpack.c.l.b16 %v458
      %v537 = vunpack.c.h.b16 %v458
      %v538 = vunpack.c.l.b16 %v459
      %v539 = vunpack.c.h.b16 %v459
      %v540 = vunpack.c.l.b16 %v460
      %v541 = vunpack.c.h.b16 %v460
      %v542 = vunpack.c.l.b16 %v461
      %v543 = vunpack.c.h.b16 %v461
      %v544 = vunpack.c.l.b16 %v462
      %v545 = vunpack.c.h.b16 %v462
      %v546 = vunpack.c.l.b16 %v463
      %v547 = vunpack.c.h.b16 %v463
      %v548 = vunpack.c.l.b16 %v464
      %v549 = vunpack.c.h.b16 %v464
      %v550 = vunpack.c.l.b16 %v465
      %v551 = vunpack.c.h.b16 %v465
      %v552 = vunpack.c.l.b16 %v466
      %v553 = vunpack.c.h.b16 %v466
      %v554 = vunpack.c.l.b16 %v467
      %v555 = vunpack.c.h.b16 %v467
      %v556 = vunpack.c.l.b16 %v468
      %v557 = vunpack.c.h.b16 %v468
      %v558 = vunpack.c.l.b16 %v469
      %v559 = vunpack.c.h.b16 %v469
      %v560 = vunpack.c.l.b16 %v470
      %v561 = vunpack.c.h.b16 %v470
      %v562 = vunpack.c.l.b16 %v471
      %v563 = vunpack.c.h.b16 %v471
      %v564 = vunpack.c.l.b16 %v472
      %v565 = vunpack.c.h.b16 %v472
      %v566 = vunpack.c.l.b16 %v473
      %v567 = vunpack.c.h.b16 %v473
      %v568 = vunpack.c.l.b16 %v474
      %v569 = vunpack.c.h.b16 %v474
      %v570 = vunpack.c.l.b16 %v475
      %v571 = vunpack.c.h.b16 %v475
      %v572 = vpack.c.b16 %v508, %v508
      %v573 = vpack.c.b16 %v509, %v509
      %v574 = vpack.c.b16 %v510, %v510
      %v575 = vpack.c.b16 %v511, %v511
      %v576 = vpack.c.b16 %v512, %v512
      %v577 = vpack.c.b16 %v513, %v513
      %v578 = vpack.c.b16 %v514, %v514
      %v579 = vpack.c.b16 %v515, %v515
      %v580 = vpack.c.b16 %v516, %v516
      %v581 = vpack.c.b16 %v517, %v517
      %v582 = vpack.c.b16 %v518, %v518
      %v583 = vpack.c.b16 %v519, %v519
      %v584 = vpack.c.b16 %v520, %v520
      %v585 = vpack.c.b16 %v521, %v521
      %v586 = vpack.c.b16 %v522, %v522
      %v587 = vpack.c.b16 %v523, %v523
      %v588 = vpack.c.b16 %v524, %v524
      %v589 = vpack.c.b16 %v525, %v525
      %v590 = vpack.c.b16 %v526, %v526
      %v591 = vpack.c.b16 %v527, %v527
      %v592 = vpack.c.b16 %v528, %v528
      %v593 = vpack.c.b16 %v529, %v529
      %v594 = vpack.c.b16 %v530, %v530
      %v595 = vpack.c.b16 %v531, %v531
      %v596 = vpack.c.b16 %v532, %v532
      %v597 = vpack.c.b16 %v533, %v533
      %v598 = vpack.c.b16 %v534, %v534
      %v599 = vpack.c.b16 %v535, %v535
      %v600 = vpack.c.b16 %v536, %v536
      %v601 = vpack.c.b16 %v537, %v537
      %v602 = vpack.c.b16 %v538, %v538
      %v603 = vpack.c.b16 %v539, %v539
      %v604 = vpack.c.b16 %v540, %v540
      %v605 = vpack.c.b16 %v541, %v541
      %v606 = vpack.c.b16 %v542, %v542
      %v607 = vpack.c.b16 %v543, %v543
      %v608 = vpack.c.b16 %v544, %v544
      %v609 = vpack.c.b16 %v545, %v545
      %v610 = vpack.c.b16 %v546, %v546
      %v611 = vpack.c.b16 %v547, %v547
      %v612 = vpack.c.b16 %v548, %v548
      %v613 = vpack.c.b16 %v549, %v549
      %v614 = vpack.c.b16 %v550, %v550
      %v615 = vpack.c.b16 %v551, %v551
      %v616 = vpack.c.b16 %v552, %v552
      %v617 = vpack.c.b16 %v553, %v553
      %v618 = vpack.c.b16 %v554, %v554
      %v619 = vpack.c.b16 %v555, %v555
      %v620 = vpack.c.b16 %v556, %v556
      %v621 = vpack.c.b16 %v557, %v557
      %v622 = vpack.c.b16 %v558, %v558
      %v623 = vpack.c.b16 %v559, %v559
      %v624 = vpack.c.b16 %v560, %v560
      %v625 = vpack.c.b16 %v561, %v561
      %v626 = vpack.c.b16 %v562, %v562
      %v627 = vpack.c.b16 %v563, %v563
      %v628 = vpack.c.b16 %v564, %v564
      %v629 = vpack.c.b16 %v565, %v565
      %v630 = vpack.c.b16 %v566, %v566
      %v631 = vpack.c.b16 %v567, %v567
      %v632 = vpack.c.b16 %v568, %v568
      %v633 = vpack.c.b16 %v569, %v569
      %v634 = vpack.c.b16 %v570, %v570
      %v635 = vpack.c.b16 %v571, %v571
      %700 = vst [vmem:[%s172] sm:$0xf] %v572
      %701 = vst [vmem:[%s172 + $0x4] sm:$0xf] %v573
      %702 = vst [vmem:[%s172 + $0x8] sm:$0xf] %v574
      %703 = vst [vmem:[%s172 + $0xc] sm:$0xf] %v575
      %704 = vst [vmem:[%s172 + $0x10] sm:$0xf] %v576
      %705 = vst [vmem:[%s172 + $0x14] sm:$0xf] %v577
      %706 = vst [vmem:[%s172 + $0x18] sm:$0xf] %v578
      %707 = vst [vmem:[%s172 + $0x1c] sm:$0xf] %v579
      %708 = vst [vmem:[%s172 + $0x20] sm:$0xf] %v580
      %709 = vst [vmem:[%s172 + $0x24] sm:$0xf] %v581
      %710 = vst [vmem:[%s172 + $0x28] sm:$0xf] %v582
      %711 = vst [vmem:[%s172 + $0x2c] sm:$0xf] %v583
      %712 = vst [vmem:[%s172 + $0x30] sm:$0xf] %v584
      %713 = vst [vmem:[%s172 + $0x34] sm:$0xf] %v585
      %714 = vst [vmem:[%s172 + $0x38] sm:$0xf] %v586
      %715 = vst [vmem:[%s172 + $0x3c] sm:$0xf] %v587
      %716 = vst [vmem:[%s172 + $0x40] sm:$0xf] %v588
      %717 = vst [vmem:[%s172 + $0x44] sm:$0xf] %v589
      %718 = vst [vmem:[%s172 + $0x48] sm:$0xf] %v590
      %719 = vst [vmem:[%s172 + $0x4c] sm:$0xf] %v591
      %720 = vst [vmem:[%s172 + $0x50] sm:$0xf] %v592
      %721 = vst [vmem:[%s172 + $0x54] sm:$0xf] %v593
      %722 = vst [vmem:[%s172 + $0x58] sm:$0xf] %v594
      %723 = vst [vmem:[%s172 + $0x5c] sm:$0xf] %v595
      %724 = vst [vmem:[%s172 + $0x60] sm:$0xf] %v596
      %725 = vst [vmem:[%s172 + $0x64] sm:$0xf] %v597
      %726 = vst [vmem:[%s172 + $0x68] sm:$0xf] %v598
      %727 = vst [vmem:[%s172 + $0x6c] sm:$0xf] %v599
      %728 = vst [vmem:[%s172 + $0x70] sm:$0xf] %v600
      %729 = vst [vmem:[%s172 + $0x74] sm:$0xf] %v601
      %730 = vst [vmem:[%s172 + $0x78] sm:$0xf] %v602
      %731 = vst [vmem:[%s172 + $0x7c] sm:$0xf] %v603
      %732 = vst [vmem:[%s172 + $0x80] sm:$0xf] %v604
      %733 = vst [vmem:[%s172 + $0x84] sm:$0xf] %v605
      %734 = vst [vmem:[%s172 + $0x88] sm:$0xf] %v606
      %735 = vst [vmem:[%s172 + $0x8c] sm:$0xf] %v607
      %736 = vst [vmem:[%s172 + $0x90] sm:$0xf] %v608
      %737 = vst [vmem:[%s172 + $0x94] sm:$0xf] %v609
      %738 = vst [vmem:[%s172 + $0x98] sm:$0xf] %v610
      %739 = vst [vmem:[%s172 + $0x9c] sm:$0xf] %v611
      %740 = vst [vmem:[%s172 + $0xa0] sm:$0xf] %v612
      %741 = vst [vmem:[%s172 + $0xa4] sm:$0xf] %v613
      %742 = vst [vmem:[%s172 + $0xa8] sm:$0xf] %v614
      %743 = vst [vmem:[%s172 + $0xac] sm:$0xf] %v615
      %744 = vst [vmem:[%s172 + $0xb0] sm:$0xf] %v616
      %745 = vst [vmem:[%s172 + $0xb4] sm:$0xf] %v617
      %746 = vst [vmem:[%s172 + $0xb8] sm:$0xf] %v618
      %747 = vst [vmem:[%s172 + $0xbc] sm:$0xf] %v619
      %748 = vst [vmem:[%s172 + $0xc0] sm:$0xf] %v620
      %749 = vst [vmem:[%s172 + $0xc4] sm:$0xf] %v621
      %750 = vst [vmem:[%s172 + $0xc8] sm:$0xf] %v622
      %751 = vst [vmem:[%s172 + $0xcc] sm:$0xf] %v623
      %752 = vst [vmem:[%s172 + $0xd0] sm:$0xf] %v624
      %753 = vst [vmem:[%s172 + $0xd4] sm:$0xf] %v625
      %754 = vst [vmem:[%s172 + $0xd8] sm:$0xf] %v626
      %755 = vst [vmem:[%s172 + $0xdc] sm:$0xf] %v627
      %756 = vst [vmem:[%s172 + $0xe0] sm:$0xf] %v628
      %757 = vst [vmem:[%s172 + $0xe4] sm:$0xf] %v629
      %758 = vst [vmem:[%s172 + $0xe8] sm:$0xf] %v630
      %759 = vst [vmem:[%s172 + $0xec] sm:$0xf] %v631
      %760 = vst [vmem:[%s172 + $0xf0] sm:$0xf] %v632
      %761 = vst [vmem:[%s172 + $0xf4] sm:$0xf] %v633
      %762 = vst [vmem:[%s172 + $0xf8] sm:$0xf] %v634
      %763 = vst [vmem:[%s172 + $0xfc] sm:$0xf] %v635
      %s764 = smul.u32 64, %s14
      %p765 = scmp.lt.s32.totalorder %s764, 127
      %s766 = scalar_select %p765, %s764, 127
      %s767 = smul.addr %s766, 4
      %s768 = scalar_lea.vmem %s3, %s767
      // Predicated region
      $region33: #{basic_block_forward.5} parent=31 // pred_check
        %p769 = pneg %p100
      $region34: #{basic_block_forward.5} parent=31 // pred_check_branch
        %771 = sbr.rel (%p769) target = $region36
      $region35: #{basic_block_forward.5} parent=31 // pred_region
        %s772 = smul.u32 64, %s14
      $region36: #{basic_block_forward.5} parent=31 // pred_fallthru
        _
    $region32: #{basic_block_forward.5} parent=5 // pred_fallthru
      _
    %p773 = scmp.le.s32.totalorder 2, %s9
    // Predicated region
    $region37: #{basic_block_forward.5} parent=5 // pred_check
      %p774 = pneg %p773
    $region38: #{basic_block_forward.5} parent=5 // pred_check_branch
      %776 = sbr.rel (%p774) target = $region40
    $region39: #{basic_block_forward.5} parent=5 // pred_region
      %s777 = ssub.s32 %s9, 2
      // Predicated region
      $region41: #{basic_block_forward.5} parent=39 // pred_check
        %p778 = pneg %p106
      $region42: #{basic_block_forward.5} parent=39 // pred_check_branch
        %780 = sbr.rel (%p778) target = $region44
      $region43: #{basic_block_forward.5} parent=39 // pred_region
        %s781 = smul.u32 64, %s15
        %p782 = scmp.lt.s32.totalorder %s781, 127
        %s783 = scalar_select %p782, %s781, 127
        %s784 = smul.addr %s783, 4
        %s785 = scalar_lea.vmem %s3, %s784
      $region44: #{basic_block_forward.5} parent=39 // pred_fallthru
        _
    $region40: #{basic_block_forward.5} parent=5 // pred_fallthru
      _
  $region6: #{basic_block_forward.5} parent=0 // loop_footer
    %s13 = sadd.s32 1, %s9
  $region7: #{basic_block_forward.5} parent=0 // loop_footer_branch
    %8 = sbr.rel target = $region3
  $region8: #{basic_block_forward.5} parent=0 // loop_exit
    _

// kernel: basic_block_forward.7
$region0: #{basic_block_forward.7}
  #allocation0 [shape = 'u32[]', space=smem, size = 0x4, offset = 0x4, fixed_abs, tag = 'smem constant byte address 0x4 - core index']
  #allocation1 [shape = 'u32[144,128]{1,0:T(1,128)}', space=vmem, size = 0x12000, scoped, tag = 'internal scratch']
  %s0 = inlined_call_operand.vmem [shape: f32[1024,128], index: 0, kind: input, shape index: {}]
  %s1 = inlined_call_operand.vmem [shape: f32[1024,128], index: 1, kind: input, shape index: {}]
  %s2 = inlined_call_operand.vmem [shape: f32[1,128], index: 2, kind: input, shape index: {}]
  %s3 = inlined_call_operand.vmem [shape: f32[1,128], index: 3, kind: input, shape index: {}]
  %s4 = inlined_call_operand.vmem [shape: f32[1024,128], index: 4, kind: output, shape index: {}]
  %s5 = sld [smem:[#allocation0]]
  $region49: #{basic_block_forward.7} parent=0
    _
  %s7 = ssub.s32 1, %s5
  %s8 = scalar_select 0, %s7, %s5
  loop: start=0, step=1, limit=4
  $region2: #{basic_block_forward.7} parent=0 // loop_pre_header
    _
  $region3: #{basic_block_forward.7} parent=0 // loop_header
    %s10 = sphi 0, %s14
    %p11 = scmp.ge.s32.totalorder %s10, 4
    %s20 = sphi 0, %s22
    %s23 = sphi 0, %s20
    %s24 = sphi 0, %s23
    %s40 = sphi 0, %s24
    %s46 = sphi 0, %s48
    %s49 = sphi 0, %s46
    %s50 = sphi 0, %s49
    %s66 = sphi 0, %s50
    %s70 = sphi 0, %s70
    %s72 = sphi 0, %s70
    %s73 = sphi 0, %s72
    %s87 = sphi 0, %s73
    %s91 = sphi 0, %s91
    %s93 = sphi 0, %s91
    %s94 = sphi 0, %s93
    %s108 = sphi 0, %s94
    %s114 = sphi 0, %s116
    %s117 = sphi 0, %s114
    %s118 = sphi 0, %s117
    %s134 = sphi 0, %s118
  $region4: #{basic_block_forward.7} parent=0 // loop_header_branch
    %13 = sbr.rel (%p11) target = $region8
  $region5: #{basic_block_forward.7} parent=0 // loop_body
    %s15 = ssub.s32 %s10, 1
    %s16 = ssub.s32 %s10, 2
    %s17 = sadd.s32 %s10, 1
    %s18 = ssub.s32 %s10, %s17
    %p19 = scmp.eq.s32.totalorder %s18, 0
    %s21 = sadd.s32 %s20, 1
    %s22 = scalar_select %p19, %s20, %s21
    %p25 = pneg %p19
    %p26 = scmp.eq.s32.totalorder %s10, 1
    %p27 = por %p25, %p26
    %p28 = scmp.ne.s32.totalorder %s20, %s23
    %p29 = scmp.eq.s32.totalorder %s10, 0
    %p30 = por %p28, %p29
    %p31 = scmp.ne.s32.totalorder %s20, %s23
    %p32 = scmp.eq.s32.totalorder %s15, 1
    %p33 = por %p31, %p32
    %p34 = scmp.ne.s32.totalorder %s23, %s24
    %p35 = scmp.eq.s32.totalorder %s15, 0
    %p36 = por %p34, %p35
    %p37 = scmp.ne.s32.totalorder %s23, %s24
    %p38 = scmp.eq.s32.totalorder %s16, 1
    %p39 = por %p37, %p38
    %p41 = scmp.ne.s32.totalorder %s24, %s40
    %p42 = scmp.eq.s32.totalorder %s16, 0
    %p43 = por %p41, %p42
    %s44 = ssub.s32 %s10, %s17
    %p45 = scmp.eq.s32.totalorder %s44, 0
    %s47 = sadd.s32 %s46, 1
    %s48 = scalar_select %p45, %s46, %s47
    %p51 = pneg %p45
    %p52 = scmp.eq.s32.totalorder %s10, 1
    %p53 = por %p51, %p52
    %p54 = scmp.ne.s32.totalorder %s46, %s49
    %p55 = scmp.eq.s32.totalorder %s10, 0
    %p56 = por %p54, %p55
    %p57 = scmp.ne.s32.totalorder %s46, %s49
    %p58 = scmp.eq.s32.totalorder %s15, 1
    %p59 = por %p57, %p58
    %p60 = scmp.ne.s32.totalorder %s49, %s50
    %p61 = scmp.eq.s32.totalorder %s15, 0
    %p62 = por %p60, %p61
    %p63 = scmp.ne.s32.totalorder %s49, %s50
    %p64 = scmp.eq.s32.totalorder %s16, 1
    %p65 = por %p63, %p64
    %p67 = scmp.ne.s32.totalorder %s50, %s66
    %p68 = scmp.eq.s32.totalorder %s16, 0
    %p69 = por %p67, %p68
    %s71 = sadd.s32 %s70, 1
    %p74 = scmp.eq.s32.totalorder %s10, 1
    %p75 = scmp.ne.s32.totalorder %s70, %s72
    %p76 = scmp.eq.s32.totalorder %s10, 0
    %p77 = por %p75, %p76
    %p78 = scmp.ne.s32.totalorder %s70, %s72
    %p79 = scmp.eq.s32.totalorder %s15, 1
    %p80 = por %p78, %p79
    %p81 = scmp.ne.s32.totalorder %s72, %s73
    %p82 = scmp.eq.s32.totalorder %s15, 0
    %p83 = por %p81, %p82
    %p84 = scmp.ne.s32.totalorder %s72, %s73
    %p85 = scmp.eq.s32.totalorder %s16, 1
    %p86 = por %p84, %p85
    %p88 = scmp.ne.s32.totalorder %s73, %s87
    %p89 = scmp.eq.s32.totalorder %s16, 0
    %p90 = por %p88, %p89
    %s92 = sadd.s32 %s91, 1
    %p95 = scmp.eq.s32.totalorder %s10, 1
    %p96 = scmp.ne.s32.totalorder %s91, %s93
    %p97 = scmp.eq.s32.totalorder %s10, 0
    %p98 = por %p96, %p97
    %p99 = scmp.ne.s32.totalorder %s91, %s93
    %p100 = scmp.eq.s32.totalorder %s15, 1
    %p101 = por %p99, %p100
    %p102 = scmp.ne.s32.totalorder %s93, %s94
    %p103 = scmp.eq.s32.totalorder %s15, 0
    %p104 = por %p102, %p103
    %p105 = scmp.ne.s32.totalorder %s93, %s94
    %p106 = scmp.eq.s32.totalorder %s16, 1
    %p107 = por %p105, %p106
    %p109 = scmp.ne.s32.totalorder %s94, %s108
    %p110 = scmp.eq.s32.totalorder %s16, 0
    %p111 = por %p109, %p110
    %s112 = ssub.s32 %s10, %s17
    %p113 = scmp.eq.s32.totalorder %s112, 0
    %s115 = sadd.s32 %s114, 1
    %s116 = scalar_select %p113, %s114, %s115
    %p119 = pneg %p113
    %p120 = scmp.eq.s32.totalorder %s10, 1
    %p121 = por %p119, %p120
    %p122 = scmp.ne.s32.totalorder %s114, %s117
    %p123 = scmp.eq.s32.totalorder %s10, 0
    %p124 = por %p122, %p123
    %p125 = scmp.ne.s32.totalorder %s114, %s117
    %p126 = scmp.eq.s32.totalorder %s15, 1
    %p127 = por %p125, %p126
    %p128 = scmp.ne.s32.totalorder %s117, %s118
    %p129 = scmp.eq.s32.totalorder %s15, 0
    %p130 = por %p128, %p129
    %p131 = scmp.ne.s32.totalorder %s117, %s118
    %p132 = scmp.eq.s32.totalorder %s16, 1
    %p133 = por %p131, %p132
    %p135 = scmp.ne.s32.totalorder %s118, %s134
    %p136 = scmp.eq.s32.totalorder %s16, 0
    %p137 = por %p135, %p136
    %p138 = scmp.le.s32.totalorder 1, %s10
    %p139 = scmp.lt.s32.totalorder %s10, 3
    %p140 = pnand %p138, %p139
    %p141 = pneg %p140
    // Predicated region
    $region9: #{basic_block_forward.7} parent=5 // pred_check
      _
    $region10: #{basic_block_forward.7} parent=5 // pred_check_branch
      %143 = sbr.rel (%p140) target = $region12
    $region11: #{basic_block_forward.7} parent=5 // pred_region
      %s144 = ssub.s32 %s10, 1
      // Predicated region
      $region13: #{basic_block_forward.7} parent=11 // pred_check
        %p145 = pneg %p83
      $region14: #{basic_block_forward.7} parent=11 // pred_check_branch
        %147 = sbr.rel (%p145) target = $region16
      $region15: #{basic_block_forward.7} parent=11 // pred_region
        _
      $region16: #{basic_block_forward.7} parent=11 // pred_fallthru
        _
      // Predicated region
      $region17: #{basic_block_forward.7} parent=11 // pred_check
        %p148 = pneg %p104
      $region18: #{basic_block_forward.7} parent=11 // pred_check_branch
        %150 = sbr.rel (%p148) target = $region20
      $region19: #{basic_block_forward.7} parent=11 // pred_region
        _
      $region20: #{basic_block_forward.7} parent=11 // pred_fallthru
        _
    $region12: #{basic_block_forward.7} parent=5 // pred_fallthru
      _
    %p151 = scmp.lt.s32.totalorder %s10, 2
    // Predicated region
    $region21: #{basic_block_forward.7} parent=5 // pred_check
      %p152 = pneg %p151
    $region22: #{basic_block_forward.7} parent=5 // pred_check_branch
      %154 = sbr.rel (%p152) target = $region24
    $region23: #{basic_block_forward.7} parent=5 // pred_region
      // Predicated region
      $region25: #{basic_block_forward.7} parent=23 // pred_check
        %p155 = pneg %p30
      $region26: #{basic_block_forward.7} parent=23 // pred_check_branch
        %157 = sbr.rel (%p155) target = $region28
      $region27: #{basic_block_forward.7} parent=23 // pred_region
        %s158 = smul.u32 64, %s10
        %p159 = scmp.lt.s32.totalorder %s158, 127
        %s160 = scalar_select %p159, %s158, 127
        %s161 = smul.addr %s160, 8
        %s162 = scalar_lea.vmem %s0, %s161
        %s163 = smul.u32 64, %s10
      $region28: #{basic_block_forward.7} parent=23 // pred_fallthru
        _
      // Predicated region
      $region29: #{basic_block_forward.7} parent=23 // pred_check
        %p164 = pneg %p56
      $region30: #{basic_block_forward.7} parent=23 // pred_check_branch
        %166 = sbr.rel (%p164) target = $region32
      $region31: #{basic_block_forward.7} parent=23 // pred_region
        %s167 = smul.u32 64, %s10
        %p168 = scmp.lt.s32.totalorder %s167, 127
        %s169 = scalar_select %p168, %s167, 127
        %s170 = smul.addr %s169, 8
        %s171 = scalar_lea.vmem %s1, %s170
        %s172 = smul.u32 64, %s10
      $region32: #{basic_block_forward.7} parent=23 // pred_fallthru
        _
    $region24: #{basic_block_forward.7} parent=5 // pred_fallthru
      _
    %p173 = scmp.le.s32.totalorder 1, %s10
    %p174 = scmp.lt.s32.totalorder %s10, 3
    %p175 = pnand %p173, %p174
    %p176 = pneg %p175
    // Predicated region
    $region33: #{basic_block_forward.7} parent=5 // pred_check
      _
    $region34: #{basic_block_forward.7} parent=5 // pred_check_branch
      %178 = sbr.rel (%p175) target = $region36
    $region35: #{basic_block_forward.7} parent=5 // pred_region
      %s179 = ssub.s32 %s10, 1
      %s180 = smul.u32 64, %s15
      %p181 = scmp.lt.s32.totalorder %s180, 127
      %s182 = scalar_select %p181, %s180, 127
      %s183 = smul.addr %s182, 8
      %s184 = scalar_lea.vmem %s0, %s183
      %p185 = pneg %p36
      %p186 = pneg %p33
      %s187 = smul.u32 64, %s15
      %p188 = scmp.lt.s32.totalorder %s187, 127
      %s189 = scalar_select %p188, %s187, 127
      %s190 = smul.addr %s189, 8
      %s191 = scalar_lea.vmem %s1, %s190
      %p192 = pneg %p62
      %p193 = pneg %p59
      %p194 = pneg %p83
      %p195 = pneg %p80
      %p196 = pneg %p104
      %p197 = pneg %p101
      %p198 = pneg %p130
      %p199 = pneg %p127
      %s200 = smul.u32 64, %s15
      %p201 = scmp.lt.s32.totalorder %s200, 127
      %s202 = scalar_select %p201, %s200, 127
      %s203 = smul.addr %s202, 8
      %s204 = scalar_lea.vmem %s4, %s203
      %s205 = smul.u32 64, %s15
      %p206 = scmp.lt.s32.totalorder %s205, 127
      %s207 = scalar_select %p206, %s205, 127
      %s208 = smul.addr %s207, 8
      %s209 = scalar_lea.vmem %s0, %s208
      %s210 = smul.u32 64, %s15
      %s211 = smul.u32 64, %s15
      %p212 = scmp.lt.s32.totalorder %s211, 127
      %s213 = scalar_select %p212, %s211, 127
      %s214 = smul.addr %s213, 8
      %s215 = scalar_lea.vmem %s1, %s214
      %s216 = smul.u32 64, %s15
      %s217 = smul.u32 64, %s15
      %p218 = scmp.lt.s32.totalorder %s217, 127
      %s219 = scalar_select %p218, %s217, 127
      %s220 = smul.addr %s219, 8
      %s221 = scalar_lea.vmem %s4, %s220
      %s222 = smul.u32 64, %s15
      %v223 = vld [vmem:[%s209] sm:$0xff]
      %v224 = vld [vmem:[%s209 + $0x8] sm:$0xff]
      %v225 = vld [vmem:[%s209 + $0x10] sm:$0xff]
      %v226 = vld [vmem:[%s209 + $0x18] sm:$0xff]
      %v227 = vld [vmem:[%s209 + $0x20] sm:$0xff]
      %v228 = vld [vmem:[%s209 + $0x28] sm:$0xff]
      %v229 = vld [vmem:[%s209 + $0x30] sm:$0xff]
      %v230 = vld [vmem:[%s209 + $0x38] sm:$0xff]
      %v231 = vld [vmem:[%s209 + $0x40] sm:$0xff]
      %v232 = vld [vmem:[%s209 + $0x48] sm:$0xff]
      %v233 = vld [vmem:[%s209 + $0x50] sm:$0xff]
      %v234 = vld [vmem:[%s209 + $0x58] sm:$0xff]
      %v235 = vld [vmem:[%s209 + $0x60] sm:$0xff]
      %v236 = vld [vmem:[%s209 + $0x68] sm:$0xff]
      %v237 = vld [vmem:[%s209 + $0x70] sm:$0xff]
      %v238 = vld [vmem:[%s209 + $0x78] sm:$0xff]
      %v239 = vld [vmem:[%s209 + $0x80] sm:$0xff]
      %v240 = vld [vmem:[%s209 + $0x88] sm:$0xff]
      %v241 = vld [vmem:[%s209 + $0x90] sm:$0xff]
      %v242 = vld [vmem:[%s209 + $0x98] sm:$0xff]
      %v243 = vld [vmem:[%s209 + $0xa0] sm:$0xff]
      %v244 = vld [vmem:[%s209 + $0xa8] sm:$0xff]
      %v245 = vld [vmem:[%s209 + $0xb0] sm:$0xff]
      %v246 = vld [vmem:[%s209 + $0xb8] sm:$0xff]
      %v247 = vld [vmem:[%s209 + $0xc0] sm:$0xff]
      %v248 = vld [vmem:[%s209 + $0xc8] sm:$0xff]
      %v249 = vld [vmem:[%s209 + $0xd0] sm:$0xff]
      %v250 = vld [vmem:[%s209 + $0xd8] sm:$0xff]
      %v251 = vld [vmem:[%s209 + $0xe0] sm:$0xff]
      %v252 = vld [vmem:[%s209 + $0xe8] sm:$0xff]
      %v253 = vld [vmem:[%s209 + $0xf0] sm:$0xff]
      %v254 = vld [vmem:[%s209 + $0xf8] sm:$0xff]
      %v255 = vld [vmem:[%s209 + $0x100] sm:$0xff]
      %v256 = vld [vmem:[%s209 + $0x108] sm:$0xff]
      %v257 = vld [vmem:[%s209 + $0x110] sm:$0xff]
      %v258 = vld [vmem:[%s209 + $0x118] sm:$0xff]
      %v259 = vld [vmem:[%s209 + $0x120] sm:$0xff]
      %v260 = vld [vmem:[%s209 + $0x128] sm:$0xff]
      %v261 = vld [vmem:[%s209 + $0x130] sm:$0xff]
      %v262 = vld [vmem:[%s209 + $0x138] sm:$0xff]
      %v263 = vld [vmem:[%s209 + $0x140] sm:$0xff]
      %v264 = vld [vmem:[%s209 + $0x148] sm:$0xff]
      %v265 = vld [vmem:[%s209 + $0x150] sm:$0xff]
      %v266 = vld [vmem:[%s209 + $0x158] sm:$0xff]
      %v267 = vld [vmem:[%s209 + $0x160] sm:$0xff]
      %v268 = vld [vmem:[%s209 + $0x168] sm:$0xff]
      %v269 = vld [vmem:[%s209 + $0x170] sm:$0xff]
      %v270 = vld [vmem:[%s209 + $0x178] sm:$0xff]
      %v271 = vld [vmem:[%s209 + $0x180] sm:$0xff]
      %v272 = vld [vmem:[%s209 + $0x188] sm:$0xff]
      %v273 = vld [vmem:[%s209 + $0x190] sm:$0xff]
      %v274 = vld [vmem:[%s209 + $0x198] sm:$0xff]
      %v275 = vld [vmem:[%s209 + $0x1a0] sm:$0xff]
      %v276 = vld [vmem:[%s209 + $0x1a8] sm:$0xff]
      %v277 = vld [vmem:[%s209 + $0x1b0] sm:$0xff]
      %v278 = vld [vmem:[%s209 + $0x1b8] sm:$0xff]
      %v279 = vld [vmem:[%s209 + $0x1c0] sm:$0xff]
      %v280 = vld [vmem:[%s209 + $0x1c8] sm:$0xff]
      %v281 = vld [vmem:[%s209 + $0x1d0] sm:$0xff]
      %v282 = vld [vmem:[%s209 + $0x1d8] sm:$0xff]
      %v283 = vld [vmem:[%s209 + $0x1e0] sm:$0xff]
      %v284 = vld [vmem:[%s209 + $0x1e8] sm:$0xff]
      %v285 = vld [vmem:[%s209 + $0x1f0] sm:$0xff]
      %v286 = vld [vmem:[%s209 + $0x1f8] sm:$0xff]
      %v287 = vld [vmem:[%s2] sm:$0x1]
      %v289 = vlaneseq
      %v290 = vshrl.u32 %v289, 7
      %v291 = vsub.s32 0, %v290
      %v292 = vrot.slane %v287, %v291
      %v294 = vmul.f32 %v223, %v292
      %v295 = vmul.f32 %v224, %v292
      %v296 = vmul.f32 %v225, %v292
      %v297 = vmul.f32 %v226, %v292
      %v298 = vmul.f32 %v227, %v292
      %v299 = vmul.f32 %v228, %v292
      %v300 = vmul.f32 %v229, %v292
      %v301 = vmul.f32 %v230, %v292
      %v302 = vmul.f32 %v231, %v292
      %v303 = vmul.f32 %v232, %v292
      %v304 = vmul.f32 %v233, %v292
      %v305 = vmul.f32 %v234, %v292
      %v306 = vmul.f32 %v235, %v292
      %v307 = vmul.f32 %v236, %v292
      %v308 = vmul.f32 %v237, %v292
      %v309 = vmul.f32 %v238, %v292
      %v310 = vmul.f32 %v239, %v292
      %v311 = vmul.f32 %v240, %v292
      %v312 = vmul.f32 %v241, %v292
      %v313 = vmul.f32 %v242, %v292
      %v314 = vmul.f32 %v243, %v292
      %v315 = vmul.f32 %v244, %v292
      %v316 = vmul.f32 %v245, %v292
      %v317 = vmul.f32 %v246, %v292
      %v318 = vmul.f32 %v247, %v292
      %v319 = vmul.f32 %v248, %v292
      %v320 = vmul.f32 %v249, %v292
      %v321 = vmul.f32 %v250, %v292
      %v322 = vmul.f32 %v251, %v292
      %v323 = vmul.f32 %v252, %v292
      %v324 = vmul.f32 %v253, %v292
      %v325 = vmul.f32 %v254, %v292
      %v326 = vmul.f32 %v255, %v292
      %v327 = vmul.f32 %v256, %v292
      %v328 = vmul.f32 %v257, %v292
      %v329 = vmul.f32 %v258, %v292
      %v330 = vmul.f32 %v259, %v292
      %v331 = vmul.f32 %v260, %v292
      %v332 = vmul.f32 %v261, %v292
      %v333 = vmul.f32 %v262, %v292
      %v334 = vmul.f32 %v263, %v292
      %v335 = vmul.f32 %v264, %v292
      %v336 = vmul.f32 %v265, %v292
      %v337 = vmul.f32 %v266, %v292
      %v338 = vmul.f32 %v267, %v292
      %v339 = vmul.f32 %v268, %v292
      %v340 = vmul.f32 %v269, %v292
      %v341 = vmul.f32 %v270, %v292
      %v342 = vmul.f32 %v271, %v292
      %v343 = vmul.f32 %v272, %v292
      %v344 = vmul.f32 %v273, %v292
      %v345 = vmul.f32 %v274, %v292
      %v346 = vmul.f32 %v275, %v292
      %v347 = vmul.f32 %v276, %v292
      %v348 = vmul.f32 %v277, %v292
      %v349 = vmul.f32 %v278, %v292
      %v350 = vmul.f32 %v279, %v292
      %v351 = vmul.f32 %v280, %v292
      %v352 = vmul.f32 %v281, %v292
      %v353 = vmul.f32 %v282, %v292
      %v354 = vmul.f32 %v283, %v292
      %v355 = vmul.f32 %v284, %v292
      %v356 = vmul.f32 %v285, %v292
      %v357 = vmul.f32 %v286, %v292
      %v358 = vld [vmem:[%s3] sm:$0x1]
      %v360 = vlaneseq
      %v361 = vshrl.u32 %v360, 7
      %v362 = vsub.s32 0, %v361
      %v363 = vrot.slane %v358, %v362
      %v365 = vadd.f32 %v294, %v363
      %v366 = vadd.f32 %v295, %v363
      %v367 = vadd.f32 %v296, %v363
      %v368 = vadd.f32 %v297, %v363
      %v369 = vadd.f32 %v298, %v363
      %v370 = vadd.f32 %v299, %v363
      %v371 = vadd.f32 %v300, %v363
      %v372 = vadd.f32 %v301, %v363
      %v373 = vadd.f32 %v302, %v363
      %v374 = vadd.f32 %v303, %v363
      %v375 = vadd.f32 %v304, %v363
      %v376 = vadd.f32 %v305, %v363
      %v377 = vadd.f32 %v306, %v363
      %v378 = vadd.f32 %v307, %v363
      %v379 = vadd.f32 %v308, %v363
      %v380 = vadd.f32 %v309, %v363
      %v381 = vadd.f32 %v310, %v363
      %v382 = vadd.f32 %v311, %v363
      %v383 = vadd.f32 %v312, %v363
      %v384 = vadd.f32 %v313, %v363
      %v385 = vadd.f32 %v314, %v363
      %v386 = vadd.f32 %v315, %v363
      %v387 = vadd.f32 %v316, %v363
      %v388 = vadd.f32 %v317, %v363
      %v389 = vadd.f32 %v318, %v363
      %v390 = vadd.f32 %v319, %v363
      %v391 = vadd.f32 %v320, %v363
      %v392 = vadd.f32 %v321, %v363
      %v393 = vadd.f32 %v322, %v363
      %v394 = vadd.f32 %v323, %v363
      %v395 = vadd.f32 %v324, %v363
      %v396 = vadd.f32 %v325, %v363
      %v397 = vadd.f32 %v326, %v363
      %v398 = vadd.f32 %v327, %v363
      %v399 = vadd.f32 %v328, %v363
      %v400 = vadd.f32 %v329, %v363
      %v401 = vadd.f32 %v330, %v363
      %v402 = vadd.f32 %v331, %v363
      %v403 = vadd.f32 %v332, %v363
      %v404 = vadd.f32 %v333, %v363
      %v405 = vadd.f32 %v334, %v363
      %v406 = vadd.f32 %v335, %v363
      %v407 = vadd.f32 %v336, %v363
      %v408 = vadd.f32 %v337, %v363
      %v409 = vadd.f32 %v338, %v363
      %v410 = vadd.f32 %v339, %v363
      %v411 = vadd.f32 %v340, %v363
      %v412 = vadd.f32 %v341, %v363
      %v413 = vadd.f32 %v342, %v363
      %v414 = vadd.f32 %v343, %v363
      %v415 = vadd.f32 %v344, %v363
      %v416 = vadd.f32 %v345, %v363
      %v417 = vadd.f32 %v346, %v363
      %v418 = vadd.f32 %v347, %v363
      %v419 = vadd.f32 %v348, %v363
      %v420 = vadd.f32 %v349, %v363
      %v421 = vadd.f32 %v350, %v363
      %v422 = vadd.f32 %v351, %v363
      %v423 = vadd.f32 %v352, %v363
      %v424 = vadd.f32 %v353, %v363
      %v425 = vadd.f32 %v354, %v363
      %v426 = vadd.f32 %v355, %v363
      %v427 = vadd.f32 %v356, %v363
      %v428 = vadd.f32 %v357, %v363
      %v429 = vld [vmem:[%s215] sm:$0xff]
      %v430 = vld [vmem:[%s215 + $0x8] sm:$0xff]
      %v431 = vld [vmem:[%s215 + $0x10] sm:$0xff]
      %v432 = vld [vmem:[%s215 + $0x18] sm:$0xff]
      %v433 = vld [vmem:[%s215 + $0x20] sm:$0xff]
      %v434 = vld [vmem:[%s215 + $0x28] sm:$0xff]
      %v435 = vld [vmem:[%s215 + $0x30] sm:$0xff]
      %v436 = vld [vmem:[%s215 + $0x38] sm:$0xff]
      %v437 = vld [vmem:[%s215 + $0x40] sm:$0xff]
      %v438 = vld [vmem:[%s215 + $0x48] sm:$0xff]
      %v439 = vld [vmem:[%s215 + $0x50] sm:$0xff]
      %v440 = vld [vmem:[%s215 + $0x58] sm:$0xff]
      %v441 = vld [vmem:[%s215 + $0x60] sm:$0xff]
      %v442 = vld [vmem:[%s215 + $0x68] sm:$0xff]
      %v443 = vld [vmem:[%s215 + $0x70] sm:$0xff]
      %v444 = vld [vmem:[%s215 + $0x78] sm:$0xff]
      %v445 = vld [vmem:[%s215 + $0x80] sm:$0xff]
      %v446 = vld [vmem:[%s215 + $0x88] sm:$0xff]
      %v447 = vld [vmem:[%s215 + $0x90] sm:$0xff]
      %v448 = vld [vmem:[%s215 + $0x98] sm:$0xff]
      %v449 = vld [vmem:[%s215 + $0xa0] sm:$0xff]
      %v450 = vld [vmem:[%s215 + $0xa8] sm:$0xff]
      %v451 = vld [vmem:[%s215 + $0xb0] sm:$0xff]
      %v452 = vld [vmem:[%s215 + $0xb8] sm:$0xff]
      %v453 = vld [vmem:[%s215 + $0xc0] sm:$0xff]
      %v454 = vld [vmem:[%s215 + $0xc8] sm:$0xff]
      %v455 = vld [vmem:[%s215 + $0xd0] sm:$0xff]
      %v456 = vld [vmem:[%s215 + $0xd8] sm:$0xff]
      %v457 = vld [vmem:[%s215 + $0xe0] sm:$0xff]
      %v458 = vld [vmem:[%s215 + $0xe8] sm:$0xff]
      %v459 = vld [vmem:[%s215 + $0xf0] sm:$0xff]
      %v460 = vld [vmem:[%s215 + $0xf8] sm:$0xff]
      %v461 = vld [vmem:[%s215 + $0x100] sm:$0xff]
      %v462 = vld [vmem:[%s215 + $0x108] sm:$0xff]
      %v463 = vld [vmem:[%s215 + $0x110] sm:$0xff]
      %v464 = vld [vmem:[%s215 + $0x118] sm:$0xff]
      %v465 = vld [vmem:[%s215 + $0x120] sm:$0xff]
      %v466 = vld [vmem:[%s215 + $0x128] sm:$0xff]
      %v467 = vld [vmem:[%s215 + $0x130] sm:$0xff]
      %v468 = vld [vmem:[%s215 + $0x138] sm:$0xff]
      %v469 = vld [vmem:[%s215 + $0x140] sm:$0xff]
      %v470 = vld [vmem:[%s215 + $0x148] sm:$0xff]
      %v471 = vld [vmem:[%s215 + $0x150] sm:$0xff]
      %v472 = vld [vmem:[%s215 + $0x158] sm:$0xff]
      %v473 = vld [vmem:[%s215 + $0x160] sm:$0xff]
      %v474 = vld [vmem:[%s215 + $0x168] sm:$0xff]
      %v475 = vld [vmem:[%s215 + $0x170] sm:$0xff]
      %v476 = vld [vmem:[%s215 + $0x178] sm:$0xff]
      %v477 = vld [vmem:[%s215 + $0x180] sm:$0xff]
      %v478 = vld [vmem:[%s215 + $0x188] sm:$0xff]
      %v479 = vld [vmem:[%s215 + $0x190] sm:$0xff]
      %v480 = vld [vmem:[%s215 + $0x198] sm:$0xff]
      %v481 = vld [vmem:[%s215 + $0x1a0] sm:$0xff]
      %v482 = vld [vmem:[%s215 + $0x1a8] sm:$0xff]
      %v483 = vld [vmem:[%s215 + $0x1b0] sm:$0xff]
      %v484 = vld [vmem:[%s215 + $0x1b8] sm:$0xff]
      %v485 = vld [vmem:[%s215 + $0x1c0] sm:$0xff]
      %v486 = vld [vmem:[%s215 + $0x1c8] sm:$0xff]
      %v487 = vld [vmem:[%s215 + $0x1d0] sm:$0xff]
      %v488 = vld [vmem:[%s215 + $0x1d8] sm:$0xff]
      %v489 = vld [vmem:[%s215 + $0x1e0] sm:$0xff]
      %v490 = vld [vmem:[%s215 + $0x1e8] sm:$0xff]
      %v491 = vld [vmem:[%s215 + $0x1f0] sm:$0xff]
      %v492 = vld [vmem:[%s215 + $0x1f8] sm:$0xff]
      %v493 = vadd.f32 %v365, %v429
      %v494 = vadd.f32 %v366, %v430
      %v495 = vadd.f32 %v367, %v431
      %v496 = vadd.f32 %v368, %v432
      %v497 = vadd.f32 %v369, %v433
      %v498 = vadd.f32 %v370, %v434
      %v499 = vadd.f32 %v371, %v435
      %v500 = vadd.f32 %v372, %v436
      %v501 = vadd.f32 %v373, %v437
      %v502 = vadd.f32 %v374, %v438
      %v503 = vadd.f32 %v375, %v439
      %v504 = vadd.f32 %v376, %v440
      %v505 = vadd.f32 %v377, %v441
      %v506 = vadd.f32 %v378, %v442
      %v507 = vadd.f32 %v379, %v443
      %v508 = vadd.f32 %v380, %v444
      %v509 = vadd.f32 %v381, %v445
      %v510 = vadd.f32 %v382, %v446
      %v511 = vadd.f32 %v383, %v447
      %v512 = vadd.f32 %v384, %v448
      %v513 = vadd.f32 %v385, %v449
      %v514 = vadd.f32 %v386, %v450
      %v515 = vadd.f32 %v387, %v451
      %v516 = vadd.f32 %v388, %v452
      %v517 = vadd.f32 %v389, %v453
      %v518 = vadd.f32 %v390, %v454
      %v519 = vadd.f32 %v391, %v455
      %v520 = vadd.f32 %v392, %v456
      %v521 = vadd.f32 %v393, %v457
      %v522 = vadd.f32 %v394, %v458
      %v523 = vadd.f32 %v395, %v459
      %v524 = vadd.f32 %v396, %v460
      %v525 = vadd.f32 %v397, %v461
      %v526 = vadd.f32 %v398, %v462
      %v527 = vadd.f32 %v399, %v463
      %v528 = vadd.f32 %v400, %v464
      %v529 = vadd.f32 %v401, %v465
      %v530 = vadd.f32 %v402, %v466
      %v531 = vadd.f32 %v403, %v467
      %v532 = vadd.f32 %v404, %v468
      %v533 = vadd.f32 %v405, %v469
      %v534 = vadd.f32 %v406, %v470
      %v535 = vadd.f32 %v407, %v471
      %v536 = vadd.f32 %v408, %v472
      %v537 = vadd.f32 %v409, %v473
      %v538 = vadd.f32 %v410, %v474
      %v539 = vadd.f32 %v411, %v475
      %v540 = vadd.f32 %v412, %v476
      %v541 = vadd.f32 %v413, %v477
      %v542 = vadd.f32 %v414, %v478
      %v543 = vadd.f32 %v415, %v479
      %v544 = vadd.f32 %v416, %v480
      %v545 = vadd.f32 %v417, %v481
      %v546 = vadd.f32 %v418, %v482
      %v547 = vadd.f32 %v419, %v483
      %v548 = vadd.f32 %v420, %v484
      %v549 = vadd.f32 %v421, %v485
      %v550 = vadd.f32 %v422, %v486
      %v551 = vadd.f32 %v423, %v487
      %v552 = vadd.f32 %v424, %v488
      %v553 = vadd.f32 %v425, %v489
      %v554 = vadd.f32 %v426, %v490
      %v555 = vadd.f32 %v427, %v491
      %v556 = vadd.f32 %v428, %v492
      %v557 = vmax.f32 %v493, 0.0
      %v558 = vmax.f32 %v494, 0.0
      %v559 = vmax.f32 %v495, 0.0
      %v560 = vmax.f32 %v496, 0.0
      %v561 = vmax.f32 %v497, 0.0
      %v562 = vmax.f32 %v498, 0.0
      %v563 = vmax.f32 %v499, 0.0
      %v564 = vmax.f32 %v500, 0.0
      %v565 = vmax.f32 %v501, 0.0
      %v566 = vmax.f32 %v502, 0.0
      %v567 = vmax.f32 %v503, 0.0
      %v568 = vmax.f32 %v504, 0.0
      %v569 = vmax.f32 %v505, 0.0
      %v570 = vmax.f32 %v506, 0.0
      %v571 = vmax.f32 %v507, 0.0
      %v572 = vmax.f32 %v508, 0.0
      %v573 = vmax.f32 %v509, 0.0
      %v574 = vmax.f32 %v510, 0.0
      %v575 = vmax.f32 %v511, 0.0
      %v576 = vmax.f32 %v512, 0.0
      %v577 = vmax.f32 %v513, 0.0
      %v578 = vmax.f32 %v514, 0.0
      %v579 = vmax.f32 %v515, 0.0
      %v580 = vmax.f32 %v516, 0.0
      %v581 = vmax.f32 %v517, 0.0
      %v582 = vmax.f32 %v518, 0.0
      %v583 = vmax.f32 %v519, 0.0
      %v584 = vmax.f32 %v520, 0.0
      %v585 = vmax.f32 %v521, 0.0
      %v586 = vmax.f32 %v522, 0.0
      %v587 = vmax.f32 %v523, 0.0
      %v588 = vmax.f32 %v524, 0.0
      %v589 = vmax.f32 %v525, 0.0
      %v590 = vmax.f32 %v526, 0.0
      %v591 = vmax.f32 %v527, 0.0
      %v592 = vmax.f32 %v528, 0.0
      %v593 = vmax.f32 %v529, 0.0
      %v594 = vmax.f32 %v530, 0.0
      %v595 = vmax.f32 %v531, 0.0
      %v596 = vmax.f32 %v532, 0.0
      %v597 = vmax.f32 %v533, 0.0
      %v598 = vmax.f32 %v534, 0.0
      %v599 = vmax.f32 %v535, 0.0
      %v600 = vmax.f32 %v536, 0.0
      %v601 = vmax.f32 %v537, 0.0
      %v602 = vmax.f32 %v538, 0.0
      %v603 = vmax.f32 %v539, 0.0
      %v604 = vmax.f32 %v540, 0.0
      %v605 = vmax.f32 %v541, 0.0
      %v606 = vmax.f32 %v542, 0.0
      %v607 = vmax.f32 %v543, 0.0
      %v608 = vmax.f32 %v544, 0.0
      %v609 = vmax.f32 %v545, 0.0
      %v610 = vmax.f32 %v546, 0.0
      %v611 = vmax.f32 %v547, 0.0
      %v612 = vmax.f32 %v548, 0.0
      %v613 = vmax.f32 %v549, 0.0
      %v614 = vmax.f32 %v550, 0.0
      %v615 = vmax.f32 %v551, 0.0
      %v616 = vmax.f32 %v552, 0.0
      %v617 = vmax.f32 %v553, 0.0
      %v618 = vmax.f32 %v554, 0.0
      %v619 = vmax.f32 %v555, 0.0
      %v620 = vmax.f32 %v556, 0.0
      %621 = vst [vmem:[%s221] sm:$0xff] %v557
      %622 = vst [vmem:[%s221 + $0x8] sm:$0xff] %v558
      %623 = vst [vmem:[%s221 + $0x10] sm:$0xff] %v559
      %624 = vst [vmem:[%s221 + $0x18] sm:$0xff] %v560
      %625 = vst [vmem:[%s221 + $0x20] sm:$0xff] %v561
      %626 = vst [vmem:[%s221 + $0x28] sm:$0xff] %v562
      %627 = vst [vmem:[%s221 + $0x30] sm:$0xff] %v563
      %628 = vst [vmem:[%s221 + $0x38] sm:$0xff] %v564
      %629 = vst [vmem:[%s221 + $0x40] sm:$0xff] %v565
      %630 = vst [vmem:[%s221 + $0x48] sm:$0xff] %v566
      %631 = vst [vmem:[%s221 + $0x50] sm:$0xff] %v567
      %632 = vst [vmem:[%s221 + $0x58] sm:$0xff] %v568
      %633 = vst [vmem:[%s221 + $0x60] sm:$0xff] %v569
      %634 = vst [vmem:[%s221 + $0x68] sm:$0xff] %v570
      %635 = vst [vmem:[%s221 + $0x70] sm:$0xff] %v571
      %636 = vst [vmem:[%s221 + $0x78] sm:$0xff] %v572
      %637 = vst [vmem:[%s221 + $0x80] sm:$0xff] %v573
      %638 = vst [vmem:[%s221 + $0x88] sm:$0xff] %v574
      %639 = vst [vmem:[%s221 + $0x90] sm:$0xff] %v575
      %640 = vst [vmem:[%s221 + $0x98] sm:$0xff] %v576
      %641 = vst [vmem:[%s221 + $0xa0] sm:$0xff] %v577
      %642 = vst [vmem:[%s221 + $0xa8] sm:$0xff] %v578
      %643 = vst [vmem:[%s221 + $0xb0] sm:$0xff] %v579
      %644 = vst [vmem:[%s221 + $0xb8] sm:$0xff] %v580
      %645 = vst [vmem:[%s221 + $0xc0] sm:$0xff] %v581
      %646 = vst [vmem:[%s221 + $0xc8] sm:$0xff] %v582
      %647 = vst [vmem:[%s221 + $0xd0] sm:$0xff] %v583
      %648 = vst [vmem:[%s221 + $0xd8] sm:$0xff] %v584
      %649 = vst [vmem:[%s221 + $0xe0] sm:$0xff] %v585
      %650 = vst [vmem:[%s221 + $0xe8] sm:$0xff] %v586
      %651 = vst [vmem:[%s221 + $0xf0] sm:$0xff] %v587
      %652 = vst [vmem:[%s221 + $0xf8] sm:$0xff] %v588
      %653 = vst [vmem:[%s221 + $0x100] sm:$0xff] %v589
      %654 = vst [vmem:[%s221 + $0x108] sm:$0xff] %v590
      %655 = vst [vmem:[%s221 + $0x110] sm:$0xff] %v591
      %656 = vst [vmem:[%s221 + $0x118] sm:$0xff] %v592
      %657 = vst [vmem:[%s221 + $0x120] sm:$0xff] %v593
      %658 = vst [vmem:[%s221 + $0x128] sm:$0xff] %v594
      %659 = vst [vmem:[%s221 + $0x130] sm:$0xff] %v595
      %660 = vst [vmem:[%s221 + $0x138] sm:$0xff] %v596
      %661 = vst [vmem:[%s221 + $0x140] sm:$0xff] %v597
      %662 = vst [vmem:[%s221 + $0x148] sm:$0xff] %v598
      %663 = vst [vmem:[%s221 + $0x150] sm:$0xff] %v599
      %664 = vst [vmem:[%s221 + $0x158] sm:$0xff] %v600
      %665 = vst [vmem:[%s221 + $0x160] sm:$0xff] %v601
      %666 = vst [vmem:[%s221 + $0x168] sm:$0xff] %v602
      %667 = vst [vmem:[%s221 + $0x170] sm:$0xff] %v603
      %668 = vst [vmem:[%s221 + $0x178] sm:$0xff] %v604
      %669 = vst [vmem:[%s221 + $0x180] sm:$0xff] %v605
      %670 = vst [vmem:[%s221 + $0x188] sm:$0xff] %v606
      %671 = vst [vmem:[%s221 + $0x190] sm:$0xff] %v607
      %672 = vst [vmem:[%s221 + $0x198] sm:$0xff] %v608
      %673 = vst [vmem:[%s221 + $0x1a0] sm:$0xff] %v609
      %674 = vst [vmem:[%s221 + $0x1a8] sm:$0xff] %v610
      %675 = vst [vmem:[%s221 + $0x1b0] sm:$0xff] %v611
      %676 = vst [vmem:[%s221 + $0x1b8] sm:$0xff] %v612
      %677 = vst [vmem:[%s221 + $0x1c0] sm:$0xff] %v613
      %678 = vst [vmem:[%s221 + $0x1c8] sm:$0xff] %v614
      %679 = vst [vmem:[%s221 + $0x1d0] sm:$0xff] %v615
      %680 = vst [vmem:[%s221 + $0x1d8] sm:$0xff] %v616
      %681 = vst [vmem:[%s221 + $0x1e0] sm:$0xff] %v617
      %682 = vst [vmem:[%s221 + $0x1e8] sm:$0xff] %v618
      %683 = vst [vmem:[%s221 + $0x1f0] sm:$0xff] %v619
      %684 = vst [vmem:[%s221 + $0x1f8] sm:$0xff] %v620
      %s685 = smul.u32 64, %s15
      %p686 = scmp.lt.s32.totalorder %s685, 127
      %s687 = scalar_select %p686, %s685, 127
      %s688 = smul.addr %s687, 8
      %s689 = scalar_lea.vmem %s4, %s688
      // Predicated region
      $region37: #{basic_block_forward.7} parent=35 // pred_check
        %p690 = pneg %p127
      $region38: #{basic_block_forward.7} parent=35 // pred_check_branch
        %692 = sbr.rel (%p690) target = $region40
      $region39: #{basic_block_forward.7} parent=35 // pred_region
        %s693 = smul.u32 64, %s15
      $region40: #{basic_block_forward.7} parent=35 // pred_fallthru
        _
    $region36: #{basic_block_forward.7} parent=5 // pred_fallthru
      _
    %p694 = scmp.le.s32.totalorder 2, %s10
    // Predicated region
    $region41: #{basic_block_forward.7} parent=5 // pred_check
      %p695 = pneg %p694
    $region42: #{basic_block_forward.7} parent=5 // pred_check_branch
      %697 = sbr.rel (%p695) target = $region44
    $region43: #{basic_block_forward.7} parent=5 // pred_region
      %s698 = ssub.s32 %s10, 2
      // Predicated region
      $region45: #{basic_block_forward.7} parent=43 // pred_check
        %p699 = pneg %p133
      $region46: #{basic_block_forward.7} parent=43 // pred_check_branch
        %701 = sbr.rel (%p699) target = $region48
      $region47: #{basic_block_forward.7} parent=43 // pred_region
        %s702 = smul.u32 64, %s16
        %p703 = scmp.lt.s32.totalorder %s702, 127
        %s704 = scalar_select %p703, %s702, 127
        %s705 = smul.addr %s704, 8
        %s706 = scalar_lea.vmem %s4, %s705
      $region48: #{basic_block_forward.7} parent=43 // pred_fallthru
        _
    $region44: #{basic_block_forward.7} parent=5 // pred_fallthru
      _
  $region6: #{basic_block_forward.7} parent=0 // loop_footer
    %s14 = sadd.s32 1, %s10
  $region7: #{basic_block_forward.7} parent=0 // loop_footer_branch
    %9 = sbr.rel target = $region3
  $region8: #{basic_block_forward.7} parent=0 // loop_exit
    _

// kernel: basic_block_forward.4
$region0: #{basic_block_forward.4}
  #allocation0 [shape = 'u32[]', space=smem, size = 0x4, offset = 0x4, fixed_abs, tag = 'smem constant byte address 0x4 - core index']
  #allocation1 [shape = 'u32[144,128]{1,0:T(1,128)}', space=vmem, size = 0x12000, scoped, tag = 'internal scratch']
  %s0 = inlined_call_operand.vmem [shape: bf16[2,10,10,10,128], index: 0, kind: input, shape index: {}, may-alias: {0,1,2}]
  %s1 = inlined_call_operand.vmem [shape: bf16[2,10,10,10,128], index: 1, kind: input, shape index: {}, may-alias: {0,1,2}]
  %s2 = inlined_call_operand.vmem [shape: bf16[2,10,10,10,128], index: 2, kind: input, shape index: {}, may-alias: {0,1,2}]
  %s3 = inlined_call_operand.vmem [shape: bf16[3,3,3,128,128], index: 3, kind: input, shape index: {}]
  %s4 = inlined_call_operand.vmem [shape: f32[2,8,8,8,128], index: 4, kind: output, shape index: {0}]
  %s5 = inlined_call_operand.vmem [shape: f32[2,8,8,128], index: 5, kind: output, shape index: {1}]
  %6 = xla_tuple %s4, %s5
  %s7 = sld [smem:[#allocation0]]
  $region57: #{basic_block_forward.4} parent=0
    _
  %s9 = ssub.s32 1, %s7
  %s10 = scalar_select 0, %s9, %s7
  loop: start=0, step=1, limit=18
  $region2: #{basic_block_forward.4} parent=0 // loop_pre_header
    _
  $region3: #{basic_block_forward.4} parent=0 // loop_header
    %s12 = sphi 0, %s16
    %p13 = scmp.ge.s32.totalorder %s12, 18
    %s19 = sphi 0, %s31
    %s20 = sphi 0, %s27
    %s21 = sphi 0, %s19
    %s22 = sphi 0, %s20
    %s23 = sphi 0, %s21
    %s24 = sphi 0, %s22
    %s36 = sphi 0, %s38
    %s39 = sphi 0, %s36
    %s40 = sphi 0, %s39
    %s56 = sphi 0, %s40
    %s66 = sphi 0, %s68
    %s69 = sphi 0, %s66
    %s70 = sphi 0, %s69
    %s86 = sphi 0, %s70
    %s96 = sphi 0, %s98
    %s99 = sphi 0, %s96
    %s100 = sphi 0, %s99
    %s116 = sphi 0, %s100
    %s120 = sphi 0, %s120
    %s122 = sphi 0, %s120
    %s123 = sphi 0, %s122
    %s137 = sphi 0, %s123
    %s145 = sphi 0, %s147
    %s148 = sphi 0, %s145
    %s149 = sphi 0, %s148
    %s165 = sphi 0, %s149
    %s173 = sphi 0, %s175
    %s176 = sphi 0, %s173
    %s177 = sphi 0, %s176
    %s193 = sphi 0, %s177
  $region4: #{basic_block_forward.4} parent=0 // loop_header_branch
    %15 = sbr.rel (%p13) target = $region8
  $region5: #{basic_block_forward.4} parent=0 // loop_body
    %s17 = ssub.s32 %s12, 1
    %s18 = ssub.s32 %s12, 2
    %s25 = sadd.s32 1, %s20
    %p26 = scmp.ge.s32.totalorder %s25, 8
    %s27 = scalar_select %p26, 0, %s25
    %s28 = sadd.s32 1, %s19
    %s29 = scalar_select %p26, %s28, %s19
    %p30 = scmp.ge.s32.totalorder %s29, 2
    %s31 = scalar_select %p30, 0, %s29
    %s32 = ssub.s32 %s19, %s31
    %s33 = ssub.s32 %s20, %s27
    %s34 = sor.u32 %s32, %s33
    %p35 = scmp.eq.s32.totalorder %s34, 0
    %s37 = sadd.s32 %s36, 1
    %s38 = scalar_select %p35, %s36, %s37
    %p41 = pneg %p35
    %p42 = scmp.eq.s32.totalorder %s12, 15
    %p43 = por %p41, %p42
    %p44 = scmp.ne.s32.totalorder %s36, %s39
    %p45 = scmp.eq.s32.totalorder %s12, 0
    %p46 = por %p44, %p45
    %p47 = scmp.ne.s32.totalorder %s36, %s39
    %p48 = scmp.eq.s32.totalorder %s17, 15
    %p49 = por %p47, %p48
    %p50 = scmp.ne.s32.totalorder %s39, %s40
    %p51 = scmp.eq.s32.totalorder %s17, 0
    %p52 = por %p50, %p51
    %p53 = scmp.ne.s32.totalorder %s39, %s40
    %p54 = scmp.eq.s32.totalorder %s18, 15
    %p55 = por %p53, %p54
    %p57 = scmp.ne.s32.totalorder %s40, %s56
    %p58 = scmp.eq.s32.totalorder %s18, 0
    %p59 = por %p57, %p58
    %s60 = sadd.s32 %s20, 1
    %s61 = sadd.s32 %s27, 1
    %s62 = ssub.s32 %s19, %s31
    %s63 = ssub.s32 %s60, %s61
    %s64 = sor.u32 %s62, %s63
    %p65 = scmp.eq.s32.totalorder %s64, 0
    %s67 = sadd.s32 %s66, 1
    %s68 = scalar_select %p65, %s66, %s67
    %p71 = pneg %p65
    %p72 = scmp.eq.s32.totalorder %s12, 15
    %p73 = por %p71, %p72
    %p74 = scmp.ne.s32.totalorder %s66, %s69
    %p75 = scmp.eq.s32.totalorder %s12, 0
    %p76 = por %p74, %p75
    %p77 = scmp.ne.s32.totalorder %s66, %s69
    %p78 = scmp.eq.s32.totalorder %s17, 15
    %p79 = por %p77, %p78
    %p80 = scmp.ne.s32.totalorder %s69, %s70
    %p81 = scmp.eq.s32.totalorder %s17, 0
    %p82 = por %p80, %p81
    %p83 = scmp.ne.s32.totalorder %s69, %s70
    %p84 = scmp.eq.s32.totalorder %s18, 15
    %p85 = por %p83, %p84
    %p87 = scmp.ne.s32.totalorder %s70, %s86
    %p88 = scmp.eq.s32.totalorder %s18, 0
    %p89 = por %p87, %p88
    %s90 = sadd.s32 %s20, 2
    %s91 = sadd.s32 %s27, 2
    %s92 = ssub.s32 %s19, %s31
    %s93 = ssub.s32 %s90, %s91
    %s94 = sor.u32 %s92, %s93
    %p95 = scmp.eq.s32.totalorder %s94, 0
    %s97 = sadd.s32 %s96, 1
    %s98 = scalar_select %p95, %s96, %s97
    %p101 = pneg %p95
    %p102 = scmp.eq.s32.totalorder %s12, 15
    %p103 = por %p101, %p102
    %p104 = scmp.ne.s32.totalorder %s96, %s99
    %p105 = scmp.eq.s32.totalorder %s12, 0
    %p106 = por %p104, %p105
    %p107 = scmp.ne.s32.totalorder %s96, %s99
    %p108 = scmp.eq.s32.totalorder %s17, 15
    %p109 = por %p107, %p108
    %p110 = scmp.ne.s32.totalorder %s99, %s100
    %p111 = scmp.eq.s32.totalorder %s17, 0
    %p112 = por %p110, %p111
    %p113 = scmp.ne.s32.totalorder %s99, %s100
    %p114 = scmp.eq.s32.totalorder %s18, 15
    %p115 = por %p113, %p114
    %p117 = scmp.ne.s32.totalorder %s100, %s116
    %p118 = scmp.eq.s32.totalorder %s18, 0
    %p119 = por %p117, %p118
    %s121 = sadd.s32 %s120, 1
    %p124 = scmp.eq.s32.totalorder %s12, 15
    %p125 = scmp.ne.s32.totalorder %s120, %s122
    %p126 = scmp.eq.s32.totalorder %s12, 0
    %p127 = por %p125, %p126
    %p128 = scmp.ne.s32.totalorder %s120, %s122
    %p129 = scmp.eq.s32.totalorder %s17, 15
    %p130 = por %p128, %p129
    %p131 = scmp.ne.s32.totalorder %s122, %s123
    %p132 = scmp.eq.s32.totalorder %s17, 0
    %p133 = por %p131, %p132
    %p134 = scmp.ne.s32.totalorder %s122, %s123
    %p135 = scmp.eq.s32.totalorder %s18, 15
    %p136 = por %p134, %p135
    %p138 = scmp.ne.s32.totalorder %s123, %s137
    %p139 = scmp.eq.s32.totalorder %s18, 0
    %p140 = por %p138, %p139
    %s141 = ssub.s32 %s19, %s31
    %s142 = ssub.s32 %s20, %s27
    %s143 = sor.u32 %s141, %s142
    %p144 = scmp.eq.s32.totalorder %s143, 0
    %s146 = sadd.s32 %s145, 1
    %s147 = scalar_select %p144, %s145, %s146
    %p150 = pneg %p144
    %p151 = scmp.eq.s32.totalorder %s12, 15
    %p152 = por %p150, %p151
    %p153 = scmp.ne.s32.totalorder %s145, %s148
    %p154 = scmp.eq.s32.totalorder %s12, 0
    %p155 = por %p153, %p154
    %p156 = scmp.ne.s32.totalorder %s145, %s148
    %p157 = scmp.eq.s32.totalorder %s17, 15
    %p158 = por %p156, %p157
    %p159 = scmp.ne.s32.totalorder %s148, %s149
    %p160 = scmp.eq.s32.totalorder %s17, 0
    %p161 = por %p159, %p160
    %p162 = scmp.ne.s32.totalorder %s148, %s149
    %p163 = scmp.eq.s32.totalorder %s18, 15
    %p164 = por %p162, %p163
    %p166 = scmp.ne.s32.totalorder %s149, %s165
    %p167 = scmp.eq.s32.totalorder %s18, 0
    %p168 = por %p166, %p167
    %s169 = ssub.s32 %s19, %s31
    %s170 = ssub.s32 %s20, %s27
    %s171 = sor.u32 %s169, %s170
    %p172 = scmp.eq.s32.totalorder %s171, 0
    %s174 = sadd.s32 %s173, 1
    %s175 = scalar_select %p172, %s173, %s174
    %p178 = pneg %p172
    %p179 = scmp.eq.s32.totalorder %s12, 15
    %p180 = por %p178, %p179
    %p181 = scmp.ne.s32.totalorder %s173, %s176
    %p182 = scmp.eq.s32.totalorder %s12, 0
    %p183 = por %p181, %p182
    %p184 = scmp.ne.s32.totalorder %s173, %s176
    %p185 = scmp.eq.s32.totalorder %s17, 15
    %p186 = por %p184, %p185
    %p187 = scmp.ne.s32.totalorder %s176, %s177
    %p188 = scmp.eq.s32.totalorder %s17, 0
    %p189 = por %p187, %p188
    %p190 = scmp.ne.s32.totalorder %s176, %s177
    %p191 = scmp.eq.s32.totalorder %s18, 15
    %p192 = por %p190, %p191
    %p194 = scmp.ne.s32.totalorder %s177, %s193
    %p195 = scmp.eq.s32.totalorder %s18, 0
    %p196 = por %p194, %p195
    %p197 = scmp.le.s32.totalorder 1, %s12
    %p198 = scmp.lt.s32.totalorder %s12, 17
    %p199 = pnand %p197, %p198
    %p200 = pneg %p199
    // Predicated region
    $region9: #{basic_block_forward.4} parent=5 // pred_check
      _
    $region10: #{basic_block_forward.4} parent=5 // pred_check_branch
      %202 = sbr.rel (%p199) target = $region12
    $region11: #{basic_block_forward.4} parent=5 // pred_region
      %s203 = ssub.s32 %s12, 1
      // Predicated region
      $region13: #{basic_block_forward.4} parent=11 // pred_check
        %p204 = pneg %p133
      $region14: #{basic_block_forward.4} parent=11 // pred_check_branch
        %206 = sbr.rel (%p204) target = $region16
      $region15: #{basic_block_forward.4} parent=11 // pred_region
        _
      $region16: #{basic_block_forward.4} parent=11 // pred_fallthru
        _
    $region12: #{basic_block_forward.4} parent=5 // pred_fallthru
      _
    %p207 = scmp.lt.s32.totalorder %s12, 16
    // Predicated region
    $region17: #{basic_block_forward.4} parent=5 // pred_check
      %p208 = pneg %p207
    $region18: #{basic_block_forward.4} parent=5 // pred_check_branch
      %210 = sbr.rel (%p208) target = $region20
    $region19: #{basic_block_forward.4} parent=5 // pred_region
      // Predicated region
      $region21: #{basic_block_forward.4} parent=19 // pred_check
        %p211 = pneg %p46
      $region22: #{basic_block_forward.4} parent=19 // pred_check_branch
        %213 = sbr.rel (%p211) target = $region24
      $region23: #{basic_block_forward.4} parent=19 // pred_region
        %p214 = scmp.lt.s32.totalorder %s19, 1
        %s215 = scalar_select %p214, %s19, 1
        %p216 = scmp.lt.s32.totalorder %s20, 9
        %s217 = scalar_select %p216, %s20, 9
        %s218 = smul.addr %s217, 20
        %s219 = smul.addr %s215, 200
        %s220 = sadd.s32 %s218, %s219
        %s221 = smul.addr %s220, 4
        %s222 = scalar_lea.vmem %s0, %s221
      $region24: #{basic_block_forward.4} parent=19 // pred_fallthru
        _
      // Predicated region
      $region25: #{basic_block_forward.4} parent=19 // pred_check
        %p223 = pneg %p76
      $region26: #{basic_block_forward.4} parent=19 // pred_check_branch
        %225 = sbr.rel (%p223) target = $region28
      $region27: #{basic_block_forward.4} parent=19 // pred_region
        %s226 = sadd.s32 %s20, 1
        %p227 = scmp.lt.s32.totalorder %s19, 1
        %s228 = scalar_select %p227, %s19, 1
        %p229 = scmp.lt.s32.totalorder %s226, 9
        %s230 = scalar_select %p229, %s226, 9
        %s231 = smul.addr %s230, 20
        %s232 = smul.addr %s228, 200
        %s233 = sadd.s32 %s231, %s232
        %s234 = smul.addr %s233, 4
        %s235 = scalar_lea.vmem %s1, %s234
        %s236 = sadd.s32 %s20, 1
      $region28: #{basic_block_forward.4} parent=19 // pred_fallthru
        _
      // Predicated region
      $region29: #{basic_block_forward.4} parent=19 // pred_check
        %p237 = pneg %p106
      $region30: #{basic_block_forward.4} parent=19 // pred_check_branch
        %239 = sbr.rel (%p237) target = $region32
      $region31: #{basic_block_forward.4} parent=19 // pred_region
        %s240 = sadd.s32 %s20, 2
        %p241 = scmp.lt.s32.totalorder %s19, 1
        %s242 = scalar_select %p241, %s19, 1
        %p243 = scmp.lt.s32.totalorder %s240, 9
        %s244 = scalar_select %p243, %s240, 9
        %s245 = smul.addr %s244, 20
        %s246 = smul.addr %s242, 200
        %s247 = sadd.s32 %s245, %s246
        %s248 = smul.addr %s247, 4
        %s249 = scalar_lea.vmem %s2, %s248
        %s250 = sadd.s32 %s20, 2
      $region32: #{basic_block_forward.4} parent=19 // pred_fallthru
        _
    $region20: #{basic_block_forward.4} parent=5 // pred_fallthru
      _
    %p251 = scmp.le.s32.totalorder 1, %s12
    %p252 = scmp.lt.s32.totalorder %s12, 17
    %p253 = pnand %p251, %p252
    %p254 = pneg %p253
    // Predicated region
    $region33: #{basic_block_forward.4} parent=5 // pred_check
      _
    $region34: #{basic_block_forward.4} parent=5 // pred_check_branch
      %256 = sbr.rel (%p253) target = $region36
    $region35: #{basic_block_forward.4} parent=5 // pred_region
      %s257 = ssub.s32 %s12, 1
      %p258 = scmp.lt.s32.totalorder %s21, 1
      %s259 = scalar_select %p258, %s21, 1
      %p260 = scmp.lt.s32.totalorder %s22, 9
      %s261 = scalar_select %p260, %s22, 9
      %s262 = smul.addr %s261, 20
      %s263 = smul.addr %s259, 200
      %s264 = sadd.s32 %s262, %s263
      %s265 = smul.addr %s264, 4
      %s266 = scalar_lea.vmem %s0, %s265
      %p267 = pneg %p52
      %p268 = pneg %p49
      %s269 = sadd.s32 %s22, 1
      %p270 = scmp.lt.s32.totalorder %s21, 1
      %s271 = scalar_select %p270, %s21, 1
      %p272 = scmp.lt.s32.totalorder %s269, 9
      %s273 = scalar_select %p272, %s269, 9
      %s274 = smul.addr %s273, 20
      %s275 = smul.addr %s271, 200
      %s276 = sadd.s32 %s274, %s275
      %s277 = smul.addr %s276, 4
      %s278 = scalar_lea.vmem %s1, %s277
      %p279 = pneg %p82
      %p280 = pneg %p79
      %s281 = sadd.s32 %s22, 2
      %p282 = scmp.lt.s32.totalorder %s21, 1
      %s283 = scalar_select %p282, %s21, 1
      %p284 = scmp.lt.s32.totalorder %s281, 9
      %s285 = scalar_select %p284, %s281, 9
      %s286 = smul.addr %s285, 20
      %s287 = smul.addr %s283, 200
      %s288 = sadd.s32 %s286, %s287
      %s289 = smul.addr %s288, 4
      %s290 = scalar_lea.vmem %s2, %s289
      %p291 = pneg %p112
      %p292 = pneg %p109
      %p293 = pneg %p133
      %p294 = pneg %p130
      %p295 = pneg %p161
      %p296 = pneg %p158
      %p297 = scmp.lt.s32.totalorder %s21, 1
      %s298 = scalar_select %p297, %s21, 1
      %p299 = scmp.lt.s32.totalorder %s22, 7
      %s300 = scalar_select %p299, %s22, 7
      %s301 = smul.addr %s300, 8
      %s302 = smul.addr %s298, 64
      %s303 = sadd.s32 %s301, %s302
      %s304 = smul.addr %s303, 8
      %s305 = scalar_lea.vmem %s4, %s304
      %p306 = pneg %p189
      %p307 = pneg %p186
      %p308 = scmp.lt.s32.totalorder %s21, 1
      %s309 = scalar_select %p308, %s21, 1
      %p310 = scmp.lt.s32.totalorder %s22, 7
      %s311 = scalar_select %p310, %s22, 7
      %s312 = smul.addr %s309, 8
      %s313 = sadd.s32 %s311, %s312
      %s314 = smul.addr %s313, 8
      %s315 = scalar_lea.vmem %s5, %s314
      %p316 = scmp.lt.s32.totalorder %s21, 1
      %s317 = scalar_select %p316, %s21, 1
      %p318 = scmp.lt.s32.totalorder %s22, 9
      %s319 = scalar_select %p318, %s22, 9
      %s320 = smul.addr %s319, 20
      %s321 = smul.addr %s317, 200
      %s322 = sadd.s32 %s320, %s321
      %s323 = smul.addr %s322, 4
      %s324 = scalar_lea.vmem %s0, %s323
      %s325 = sadd.s32 %s22, 1
      %p326 = scmp.lt.s32.totalorder %s21, 1
      %s327 = scalar_select %p326, %s21, 1
      %p328 = scmp.lt.s32.totalorder %s325, 9
      %s329 = scalar_select %p328, %s325, 9
      %s330 = smul.addr %s329, 20
      %s331 = smul.addr %s327, 200
      %s332 = sadd.s32 %s330, %s331
      %s333 = smul.addr %s332, 4
      %s334 = scalar_lea.vmem %s1, %s333
      %s335 = sadd.s32 %s22, 1
      %s336 = sadd.s32 %s22, 2
      %p337 = scmp.lt.s32.totalorder %s21, 1
      %s338 = scalar_select %p337, %s21, 1
      %p339 = scmp.lt.s32.totalorder %s336, 9
      %s340 = scalar_select %p339, %s336, 9
      %s341 = smul.addr %s340, 20
      %s342 = smul.addr %s338, 200
      %s343 = sadd.s32 %s341, %s342
      %s344 = smul.addr %s343, 4
      %s345 = scalar_lea.vmem %s2, %s344
      %s346 = sadd.s32 %s22, 2
      %p347 = scmp.lt.s32.totalorder %s21, 1
      %s348 = scalar_select %p347, %s21, 1
      %p349 = scmp.lt.s32.totalorder %s22, 7
      %s350 = scalar_select %p349, %s22, 7
      %s351 = smul.addr %s350, 8
      %s352 = smul.addr %s348, 64
      %s353 = sadd.s32 %s351, %s352
      %s354 = smul.addr %s353, 8
      %s355 = scalar_lea.vmem %s4, %s354
      %p356 = scmp.lt.s32.totalorder %s21, 1
      %s357 = scalar_select %p356, %s21, 1
      %p358 = scmp.lt.s32.totalorder %s22, 7
      %s359 = scalar_select %p358, %s22, 7
      %s360 = smul.addr %s357, 8
      %s361 = sadd.s32 %s359, %s360
      %s362 = smul.addr %s361, 8
      %s363 = scalar_lea.vmem %s5, %s362
      %v365 = vld [vmem:[%s324] sm:$0xf]
      %v366 = vld [vmem:[%s324 + $0x4] sm:$0x1]
      %v367 = vld [vmem:[%s324 + $0x8] sm:$0xf]
      %v368 = vld [vmem:[%s324 + $0xc] sm:$0x1]
      %v369 = vld [vmem:[%s324 + $0x10] sm:$0xf]
      %v370 = vld [vmem:[%s324 + $0x14] sm:$0x1]
      %v371 = vld [vmem:[%s324 + $0x18] sm:$0xf]
      %v372 = vld [vmem:[%s324 + $0x1c] sm:$0x1]
      %v373 = vld [vmem:[%s324 + $0x20] sm:$0xf]
      %v374 = vld [vmem:[%s324 + $0x24] sm:$0x1]
      %v375 = vld [vmem:[%s324 + $0x28] sm:$0xf]
      %v376 = vld [vmem:[%s324 + $0x2c] sm:$0x1]
      %v377 = vld [vmem:[%s324 + $0x30] sm:$0xf]
      %v378 = vld [vmem:[%s324 + $0x34] sm:$0x1]
      %v379 = vld [vmem:[%s324 + $0x38] sm:$0xf]
      %v380 = vld [vmem:[%s324 + $0x3c] sm:$0x1]
      %v381 = vld [vmem:[%s324 + $0x40] sm:$0xf]
      %v382 = vld [vmem:[%s324 + $0x44] sm:$0x1]
      %v383 = vld [vmem:[%s324 + $0x48] sm:$0xf]
      %v384 = vld [vmem:[%s324 + $0x4c] sm:$0x1]
      %v385 = vld [vmem:[%s3] sm:$0xf]
      %v386 = vld [vmem:[%s3 + $0x4] sm:$0xf]
      %v387 = vld [vmem:[%s3 + $0x8] sm:$0xf]
      %v388 = vld [vmem:[%s3 + $0xc] sm:$0xf]
      %v389 = vld [vmem:[%s3 + $0x10] sm:$0xf]
      %v390 = vld [vmem:[%s3 + $0x14] sm:$0xf]
      %v391 = vld [vmem:[%s3 + $0x18] sm:$0xf]
      %v392 = vld [vmem:[%s3 + $0x1c] sm:$0xf]
      %v393 = vld [vmem:[%s3 + $0x20] sm:$0xf]
      %v394 = vld [vmem:[%s3 + $0x24] sm:$0xf]
      %v395 = vld [vmem:[%s3 + $0x28] sm:$0xf]
      %v396 = vld [vmem:[%s3 + $0x2c] sm:$0xf]
      %v397 = vld [vmem:[%s3 + $0x30] sm:$0xf]
      %v398 = vld [vmem:[%s3 + $0x34] sm:$0xf]
      %v399 = vld [vmem:[%s3 + $0x38] sm:$0xf]
      %v400 = vld [vmem:[%s3 + $0x3c] sm:$0xf]
      %vm401 = vsmask.f32 3328
      %vm402 = vsmask.f32 7440
      %vm403 = vmor %vm401, %vm402
      %v405 = vshrl.u32 %v365, 16
      %v407 = vrot.slane %v405, 4
      %v408 = vshll.u32 %v365, 16
      %v410 = vrot.slane %v408, 5
      %v411 = vor.u32 %v407, %v410
      %v412 = vrot.slane %v411, 4
      %v414 = vshll.u32 %v366, 16
      %v416 = vrot.slane %v414, 5
      %v417 = vsel %vm403, %v412, %v416
      %v419 = vshrl.u32 %v367, 16
      %v421 = vrot.slane %v419, 4
      %v422 = vshll.u32 %v367, 16
      %v424 = vrot.slane %v422, 5
      %v425 = vor.u32 %v421, %v424
      %v426 = vrot.slane %v425, 4
      %v428 = vshll.u32 %v368, 16
      %v430 = vrot.slane %v428, 5
      %v431 = vsel %vm403, %v426, %v430
      %v433 = vshrl.u32 %v369, 16
      %v435 = vrot.slane %v433, 4
      %v436 = vshll.u32 %v369, 16
      %v438 = vrot.slane %v436, 5
      %v439 = vor.u32 %v435, %v438
      %v440 = vrot.slane %v439, 4
      %v442 = vshll.u32 %v370, 16
      %v444 = vrot.slane %v442, 5
      %v445 = vsel %vm403, %v440, %v444
      %v447 = vshrl.u32 %v371, 16
      %v449 = vrot.slane %v447, 4
      %v450 = vshll.u32 %v371, 16
      %v452 = vrot.slane %v450, 5
      %v453 = vor.u32 %v449, %v452
      %v454 = vrot.slane %v453, 4
      %v456 = vshll.u32 %v372, 16
      %v458 = vrot.slane %v456, 5
      %v459 = vsel %vm403, %v454, %v458
      %v461 = vshrl.u32 %v373, 16
      %v463 = vrot.slane %v461, 4
      %v464 = vshll.u32 %v373, 16
      %v466 = vrot.slane %v464, 5
      %v467 = vor.u32 %v463, %v466
      %v468 = vrot.slane %v467, 4
      %v470 = vshll.u32 %v374, 16
      %v472 = vrot.slane %v470, 5
      %v473 = vsel %vm403, %v468, %v472
      %v475 = vshrl.u32 %v375, 16
      %v477 = vrot.slane %v475, 4
      %v478 = vshll.u32 %v375, 16
      %v480 = vrot.slane %v478, 5
      %v481 = vor.u32 %v477, %v480
      %v482 = vrot.slane %v481, 4
      %v484 = vshll.u32 %v376, 16
      %v486 = vrot.slane %v484, 5
      %v487 = vsel %vm403, %v482, %v486
      %v489 = vshrl.u32 %v377, 16
      %v491 = vrot.slane %v489, 4
      %v492 = vshll.u32 %v377, 16
      %v494 = vrot.slane %v492, 5
      %v495 = vor.u32 %v491, %v494
      %v496 = vrot.slane %v495, 4
      %v498 = vshll.u32 %v378, 16
      %v500 = vrot.slane %v498, 5
      %v501 = vsel %vm403, %v496, %v500
      %v503 = vshrl.u32 %v379, 16
      %v505 = vrot.slane %v503, 4
      %v506 = vshll.u32 %v379, 16
      %v508 = vrot.slane %v506, 5
      %v509 = vor.u32 %v505, %v508
      %v510 = vrot.slane %v509, 4
      %v512 = vshll.u32 %v380, 16
      %v514 = vrot.slane %v512, 5
      %v515 = vsel %vm403, %v510, %v514
      %s516 = scalar_lea.vmem %s3, 64
      %v517 = vld [vmem:[%s516] sm:$0xf]
      %v518 = vld [vmem:[%s516 + $0x4] sm:$0xf]
      %v519 = vld [vmem:[%s516 + $0x8] sm:$0xf]
      %v520 = vld [vmem:[%s516 + $0xc] sm:$0xf]
      %v521 = vld [vmem:[%s516 + $0x10] sm:$0xf]
      %v522 = vld [vmem:[%s516 + $0x14] sm:$0xf]
      %v523 = vld [vmem:[%s516 + $0x18] sm:$0xf]
      %v524 = vld [vmem:[%s516 + $0x1c] sm:$0xf]
      %v525 = vld [vmem:[%s516 + $0x20] sm:$0xf]
      %v526 = vld [vmem:[%s516 + $0x24] sm:$0xf]
      %v527 = vld [vmem:[%s516 + $0x28] sm:$0xf]
      %v528 = vld [vmem:[%s516 + $0x2c] sm:$0xf]
      %v529 = vld [vmem:[%s516 + $0x30] sm:$0xf]
      %v530 = vld [vmem:[%s516 + $0x34] sm:$0xf]
      %v531 = vld [vmem:[%s516 + $0x38] sm:$0xf]
      %v532 = vld [vmem:[%s516 + $0x3c] sm:$0xf]
      %v533 = vunpack.c.l.b16 %v417
      %v534 = vunpack.c.l.b16 %v431
      %v535 = vunpack.c.l.b16 %v445
      %v536 = vunpack.c.l.b16 %v459
      %v537 = vunpack.c.l.b16 %v473
      %v538 = vunpack.c.l.b16 %v487
      %v539 = vunpack.c.l.b16 %v501
      %v540 = vunpack.c.l.b16 %v515
      %v541 = vpack.c.b16 %v534, %v533
      %v542 = vpack.c.b16 %v536, %v535
      %v543 = vpack.c.b16 %v538, %v537
      %v544 = vpack.c.b16 %v540, %v539
      %v565 = vunpack.c.l.b16 %v517
      %v566 = vunpack.c.l.b16 %v518
      %v567 = vunpack.c.l.b16 %v519
      %v568 = vunpack.c.l.b16 %v520
      %v569 = vunpack.c.l.b16 %v521
      %v570 = vunpack.c.l.b16 %v522
      %v571 = vunpack.c.l.b16 %v523
      %v572 = vunpack.c.l.b16 %v524
      %v573 = vunpack.c.l.b16 %v525
      %v574 = vunpack.c.l.b16 %v526
      %v575 = vunpack.c.l.b16 %v527
      %v576 = vunpack.c.l.b16 %v528
      %v577 = vunpack.c.l.b16 %v529
      %v578 = vunpack.c.l.b16 %v530
      %v579 = vunpack.c.l.b16 %v531
      %v580 = vunpack.c.l.b16 %v532
      %v581 = vpack.c.b16 %v566, %v565
      %v582 = vpack.c.b16 %v568, %v567
      %v583 = vpack.c.b16 %v570, %v569
      %v584 = vpack.c.b16 %v572, %v571
      %v585 = vpack.c.b16 %v574, %v573
      %v586 = vpack.c.b16 %v576, %v575
      %v587 = vpack.c.b16 %v578, %v577
      %v588 = vpack.c.b16 %v580, %v579
      %597 = vmatprep.subr.bf16.mxu0 0
      %598 = vmatpush1.bf16.msra.mxu0 %v581
      %599 = vmatprep.subr.bf16.mxu0 0
      %600 = vmatpush1.bf16.msra.mxu0 %v582
      %601 = vmatprep.subr.bf16.mxu0 0
      %602 = vmatpush1.bf16.msra.mxu0 %v583
      %603 = vmatprep.subr.bf16.mxu0 0
      %604 = vmatpush1.bf16.msra.mxu0 %v584
      %605 = vmatprep.subr.bf16.mxu0 0
      %606 = vmatpush1.bf16.msra.mxu0 %v585
      %607 = vmatprep.subr.bf16.mxu0 0
      %608 = vmatpush1.bf16.msra.mxu0 %v586
      %609 = vmatprep.subr.bf16.mxu0 0
      %610 = vmatpush1.bf16.msra.mxu0 %v587
      %611 = vmatprep.subr.bf16.mxu0 0
      %612 = vmatpush1.bf16.msra.mxu0 %v588
      %613 = vmatprep.subr.bf16.mxu0 0
      %614 = vmatpush1.bf16.msra.mxu0 0
      %615 = vmatprep.subr.bf16.mxu0 0
      %616 = vmatpush1.bf16.msra.mxu0 0
      %617 = vmatprep.subr.bf16.mxu0 0
      %618 = vmatpush1.bf16.msra.mxu0 0
      %619 = vmatprep.subr.bf16.mxu0 0
      %620 = vmatpush1.bf16.msra.mxu0 0
      %621 = vmatprep.subr.bf16.mxu0 0
      %622 = vmatpush1.bf16.msra.mxu0 0
      %623 = vmatprep.subr.bf16.mxu0 0
      %624 = vmatpush1.bf16.msra.mxu0 0
      %625 = vmatprep.subr.bf16.mxu0 0
      %626 = vmatpush1.bf16.msra.mxu0 0
      %627 = vmatprep.subr.bf16.mxu0 0
      %628 = vmatpush1.bf16.msra.mxu0 0
      %629 = vmatprep.mubr.bf16.mxu0 0
      %630 = vmatmul.mubr.bf16.gmra.mrb[0].mxu0 %v541
      %v631 = vpop.f32.mrb[0].mxu0
      %v632 = vadd.f32 0.0, %v631
      %v633 = vpop.f32.mrb[0].mxu0
      %v634 = vpop.f32.mrb[0].mxu0
      %v635 = vadd.f32 0.0, %v634
      %v636 = vpop.f32.mrb[0].mxu0
      %637 = vmatprep.mubr.bf16.mxu0 0
      %638 = vmatmul.mubr.bf16.gmra.mrb[0].mxu0 %v542
      %v639 = vpop.f32.mrb[0].mxu0
      %v640 = vadd.f32 0.0, %v639
      %v641 = vpop.f32.mrb[0].mxu0
      %v642 = vpop.f32.mrb[0].mxu0
      %v643 = vadd.f32 0.0, %v642
      %v644 = vpop.f32.mrb[0].mxu0
      %645 = vmatprep.mubr.bf16.mxu0 0
      %646 = vmatmul.mubr.bf16.gmra.mrb[0].mxu0 %v543
      %v647 = vpop.f32.mrb[0].mxu0
      %v648 = vadd.f32 0.0, %v647
      %v649 = vpop.f32.mrb[0].mxu0
      %v650 = vpop.f32.mrb[0].mxu0
      %v651 = vadd.f32 0.0, %v650
      %v652 = vpop.f32.mrb[0].mxu0
      %653 = vmatprep.mubr.bf16.mxu0 0
      %654 = vmatmul.mubr.bf16.gmra.mrb[0].mxu0 %v544
      %v655 = vpop.f32.mrb[0].mxu0
      %v656 = vadd.f32 0.0, %v655
      %v657 = vpop.f32.mrb[0].mxu0
      %v658 = vpop.f32.mrb[0].mxu0
      %v659 = vadd.f32 0.0, %v658
      %v660 = vpop.f32.mrb[0].mxu0
      %661 = vdwg.mxu0
      %v670 = vunpack.c.l.b16 %v365
      %v671 = vunpack.c.l.b16 %v367
      %v672 = vunpack.c.l.b16 %v369
      %v673 = vunpack.c.l.b16 %v371
      %v674 = vunpack.c.l.b16 %v373
      %v675 = vunpack.c.l.b16 %v375
      %v676 = vunpack.c.l.b16 %v377
      %v677 = vunpack.c.l.b16 %v379
      %v678 = vpack.c.b16 %v671, %v670
      %v679 = vpack.c.b16 %v673, %v672
      %v680 = vpack.c.b16 %v675, %v674
      %v681 = vpack.c.b16 %v677, %v676
      %v702 = vunpack.c.l.b16 %v385
      %v703 = vunpack.c.l.b16 %v386
      %v704 = vunpack.c.l.b16 %v387
      %v705 = vunpack.c.l.b16 %v388
      %v706 = vunpack.c.l.b16 %v389
      %v707 = vunpack.c.l.b16 %v390
      %v708 = vunpack.c.l.b16 %v391
      %v709 = vunpack.c.l.b16 %v392
      %v710 = vunpack.c.l.b16 %v393
      %v711 = vunpack.c.l.b16 %v394
      %v712 = vunpack.c.l.b16 %v395
      %v713 = vunpack.c.l.b16 %v396
      %v714 = vunpack.c.l.b16 %v397
      %v715 = vunpack.c.l.b16 %v398
      %v716 = vunpack.c.l.b16 %v399
      %v717 = vunpack.c.l.b16 %v400
      %v718 = vpack.c.b16 %v703, %v702
      %v719 = vpack.c.b16 %v705, %v704
      %v720 = vpack.c.b16 %v707, %v706
      %v721 = vpack.c.b16 %v709, %v708
      %v722 = vpack.c.b16 %v711, %v710
      %v723 = vpack.c.b16 %v713, %v712
      %v724 = vpack.c.b16 %v715, %v714
      %v725 = vpack.c.b16 %v717, %v716
      %734 = vmatprep.subr.bf16.mxu0 0
      %735 = vmatpush1.bf16.msra.mxu0 %v718
      %736 = vmatprep.subr.bf16.mxu0 0
      %737 = vmatpush1.bf16.msra.mxu0 %v719
      %738 = vmatprep.subr.bf16.mxu0 0
      %739 = vmatpush1.bf16.msra.mxu0 %v720
      %740 = vmatprep.subr.bf16.mxu0 0
      %741 = vmatpush1.bf16.msra.mxu0 %v721
      %742 = vmatprep.subr.bf16.mxu0 0
      %743 = vmatpush1.bf16.msra.mxu0 %v722
      %744 = vmatprep.subr.bf16.mxu0 0
      %745 = vmatpush1.bf16.msra.mxu0 %v723
      %746 = vmatprep.subr.bf16.mxu0 0
      %747 = vmatpush1.bf16.msra.mxu0 %v724
      %748 = vmatprep.subr.bf16.mxu0 0
      %749 = vmatpush1.bf16.msra.mxu0 %v725
      %750 = vmatprep.subr.bf16.mxu0 0
      %751 = vmatpush1.bf16.msra.mxu0 0
      %752 = vmatprep.subr.bf16.mxu0 0
      %753 = vmatpush1.bf16.msra.mxu0 0
      %754 = vmatprep.subr.bf16.mxu0 0
      %755 = vmatpush1.bf16.msra.mxu0 0
      %756 = vmatprep.subr.bf16.mxu0 0
      %757 = vmatpush1.bf16.msra.mxu0 0
      %758 = vmatprep.subr.bf16.mxu0 0
      %759 = vmatpush1.bf16.msra.mxu0 0
      %760 = vmatprep.subr.bf16.mxu0 0
      %761 = vmatpush1.bf16.msra.mxu0 0
      %762 = vmatprep.subr.bf16.mxu0 0
      %763 = vmatpush1.bf16.msra.mxu0 0
      %764 = vmatprep.subr.bf16.mxu0 0
      %765 = vmatpush1.bf16.msra.mxu0 0
      %766 = vmatprep.mubr.bf16.mxu0 0
      %767 = vmatmul.mubr.bf16.gmra.mrb[0].mxu0 %v678
      %v768 = vpop.f32.mrb[0].mxu0
      %v769 = vadd.f32 %v632, %v768
      %v770 = vpop.f32.mrb[0].mxu0
      %v771 = vpop.f32.mrb[0].mxu0
      %v772 = vadd.f32 %v635, %v771
      %v773 = vpop.f32.mrb[0].mxu0
      %774 = vmatprep.mubr.bf16.mxu0 0
      %775 = vmatmul.mubr.bf16.gmra.mrb[0].mxu0 %v679
      %v776 = vpop.f32.mrb[0].mxu0
      %v777 = vadd.f32 %v640, %v776
      %v778 = vpop.f32.mrb[0].mxu0
      %v779 = vpop.f32.mrb[0].mxu0
      %v780 = vadd.f32 %v643, %v779
      %v781 = vpop.f32.mrb[0].mxu0
      %782 = vmatprep.mubr.bf16.mxu0 0
      %783 = vmatmul.mubr.bf16.gmra.mrb[0].mxu0 %v680
      %v784 = vpop.f32.mrb[0].mxu0
      %v785 = vadd.f32 %v648, %v784
      %v786 = vpop.f32.mrb[0].mxu0
      %v787 = vpop.f32.mrb[0].mxu0
      %v788 = vadd.f32 %v651, %v787
      %v789 = vpop.f32.mrb[0].mxu0
      %790 = vmatprep.mubr.bf16.mxu0 0
      %791 = vmatmul.mubr.bf16.gmra.mrb[0].mxu0 %v681
      %v792 = vpop.f32.mrb[0].mxu0
      %v793 = vadd.f32 %v656, %v792
      %v794 = vpop.f32.mrb[0].mxu0
      %v795 = vpop.f32.mrb[0].mxu0
      %v796 = vadd.f32 %v659, %v795
      %v797 = vpop.f32.mrb[0].mxu0
      %798 = vdwg.mxu0
      %vm807 = vcmask 1042432
      %vm808 = vcmask 1046532
      %vm809 = vmor %vm807, %vm808
      %v810 = vrot.slane %v365, 5
      %v811 = vrot.slane %v810, 4
      %v812 = vrot.slane %v366, 5
      %v813 = vsel %vm809, %v811, %v812
      %v814 = vrot.slane %v367, 5
      %v815 = vrot.slane %v814, 4
      %v816 = vrot.slane %v368, 5
      %v817 = vsel %vm809, %v815, %v816
      %v818 = vrot.slane %v369, 5
      %v819 = vrot.slane %v818, 4
      %v820 = vrot.slane %v370, 5
      %v821 = vsel %vm809, %v819, %v820
      %v822 = vrot.slane %v371, 5
      %v823 = vrot.slane %v822, 4
      %v824 = vrot.slane %v372, 5
      %v825 = vsel %vm809, %v823, %v824
      %v826 = vrot.slane %v373, 5
      %v827 = vrot.slane %v826, 4
      %v828 = vrot.slane %v374, 5
      %v829 = vsel %vm809, %v827, %v828
      %v830 = vrot.slane %v375, 5
      %v831 = vrot.slane %v830, 4
      %v832 = vrot.slane %v376, 5
      %v833 = vsel %vm809, %v831, %v832
      %v834 = vrot.slane %v377, 5
      %v835 = vrot.slane %v834, 4
      %v836 = vrot.slane %v378, 5
      %v837 = vsel %vm809, %v835, %v836
      %v838 = vrot.slane %v379, 5
      %v839 = vrot.slane %v838, 4
      %v840 = vrot.slane %v380, 5
      %v841 = vsel %vm809, %v839, %v840
      %s842 = scalar_lea.vmem %s3, 128
      %v843 = vld [vmem:[%s842] sm:$0xf]
      %v844 = vld [vmem:[%s842 + $0x4] sm:$0xf]
      %v845 = vld [vmem:[%s842 + $0x8] sm:$0xf]
      %v846 = vld [vmem:[%s842 + $0xc] sm:$0xf]
      %v847 = vld [vmem:[%s842 + $0x10] sm:$0xf]
      %v848 = vld [vmem:[%s842 + $0x14] sm:$0xf]
      %v849 = vld [vmem:[%s842 + $0x18] sm:$0xf]
      %v850 = vld [vmem:[%s842 + $0x1c] sm:$0xf]
      %v851 = vld [vmem:[%s842 + $0x20] sm:$0xf]
      %v852 = vld [vmem:[%s842 + $0x24] sm:$0xf]
      %v853 = vld [vmem:[%s842 + $0x28] sm:$0xf]
      %v854 = vld [vmem:[%s842 + $0x2c] sm:$0xf]
      %v855 = vld [vmem:[%s842 + $0x30] sm:$0xf]
      %v856 = vld [vmem:[%s842 + $0x34] sm:$0xf]
      %v857 = vld [vmem:[%s842 + $0x38] sm:$0xf]
      %v858 = vld [vmem:[%s842 + $0x3c] sm:$0xf]
      %v859 = vunpack.c.l.b16 %v813
      %v860 = vunpack.c.l.b16 %v817
      %v861 = vunpack.c.l.b16 %v821
      %v862 = vunpack.c.l.b16 %v825
      %v863 = vunpack.c.l.b16 %v829
      %v864 = vunpack.c.l.b16 %v833
      %v865 = vunpack.c.l.b16 %v837
      %v866 = vunpack.c.l.b16 %v841
      %v867 = vpack.c.b16 %v860, %v859
      %v868 = vpack.c.b16 %v862, %v861
      %v869 = vpack.c.b16 %v864, %v863
      %v870 = vpack.c.b16 %v866, %v865
      %v891 = vunpack.c.l.b16 %v843
      %v892 = vunpack.c.l.b16 %v844
      %v893 = vunpack.c.l.b16 %v845
      %v894 = vunpack.c.l.b16 %v846
      %v895 = vunpack.c.l.b16 %v847
      %v896 = vunpack.c.l.b16 %v848
      %v897 = vunpack.c.l.b16 %v849
      %v898 = vunpack.c.l.b16 %v850
      %v899 = vunpack.c.l.b16 %v851
      %v900 = vunpack.c.l.b16 %v852
      %v901 = vunpack.c.l.b16 %v853
      %v902 = vunpack.c.l.b16 %v854
      %v903 = vunpack.c.l.b16 %v855
      %v904 = vunpack.c.l.b16 %v856
      %v905 = vunpack.c.l.b16 %v857
      %v906 = vunpack.c.l.b16 %v858
      %v907 = vpack.c.b16 %v892, %v891
      %v908 = vpack.c.b16 %v894, %v893
      %v909 = vpack.c.b16 %v896, %v895
      %v910 = vpack.c.b16 %v898, %v897
      %v911 = vpack.c.b16 %v900, %v899
      %v912 = vpack.c.b16 %v902, %v901
      %v913 = vpack.c.b16 %v904, %v903
      %v914 = vpack.c.b16 %v906, %v905
      %923 = vmatprep.subr.bf16.mxu0 0
      %924 = vmatpush1.bf16.msra.mxu0 %v907
      %925 = vmatprep.subr.bf16.mxu0 0
      %926 = vmatpush1.bf16.msra.mxu0 %v908
      %927 = vmatprep.subr.bf16.mxu0 0
      %928 = vmatpush1.bf16.msra.mxu0 %v909
      %929 = vmatprep.subr.bf16.mxu0 0
      %930 = vmatpush1.bf16.msra.mxu0 %v910
      %931 = vmatprep.subr.bf16.mxu0 0
      %932 = vmatpush1.bf16.msra.mxu0 %v911
      %933 = vmatprep.subr.bf16.mxu0 0
      %934 = vmatpush1.bf16.msra.mxu0 %v912
      %935 = vmatprep.subr.bf16.mxu0 0
      %936 = vmatpush1.bf16.msra.mxu0 %v913
      %937 = vmatprep.subr.bf16.mxu0 0
      %938 = vmatpush1.bf16.msra.mxu0 %v914
      %939 = vmatprep.subr.bf16.mxu0 0
      %940 = vmatpush1.bf16.msra.mxu0 0
      %941 = vmatprep.subr.bf16.mxu0 0
      %942 = vmatpush1.bf16.msra.mxu0 0
      %943 = vmatprep.subr.bf16.mxu0 0
      %944 = vmatpush1.bf16.msra.mxu0 0
      %945 = vmatprep.subr.bf16.mxu0 0
      %946 = vmatpush1.bf16.msra.mxu0 0
      %947 = vmatprep.subr.bf16.mxu0 0
      %948 = vmatpush1.bf16.msra.mxu0 0
      %949 = vmatprep.subr.bf16.mxu0 0
      %950 = vmatpush1.bf16.msra.mxu0 0
      %951 = vmatprep.subr.bf16.mxu0 0
      %952 = vmatpush1.bf16.msra.mxu0 0
      %953 = vmatprep.subr.bf16.mxu0 0
      %954 = vmatpush1.bf16.msra.mxu0 0
      %955 = vmatprep.mubr.bf16.mxu0 0
      %956 = vmatmul.mubr.bf16.gmra.mrb[0].mxu0 %v867
      %v957 = vpop.f32.mrb[0].mxu0
      %v958 = vadd.f32 0.0, %v957
      %v959 = vpop.f32.mrb[0].mxu0
      %v960 = vpop.f32.mrb[0].mxu0
      %v961 = vadd.f32 0.0, %v960
      %v962 = vpop.f32.mrb[0].mxu0
      %963 = vmatprep.mubr.bf16.mxu0 0
      %964 = vmatmul.mubr.bf16.gmra.mrb[0].mxu0 %v868
      %v965 = vpop.f32.mrb[0].mxu0
      %v966 = vadd.f32 0.0, %v965
      %v967 = vpop.f32.mrb[0].mxu0
      %v968 = vpop.f32.mrb[0].mxu0
      %v969 = vadd.f32 0.0, %v968
      %v970 = vpop.f32.mrb[0].mxu0
      %971 = vmatprep.mubr.bf16.mxu0 0
      %972 = vmatmul.mubr.bf16.gmra.mrb[0].mxu0 %v869
      %v973 = vpop.f32.mrb[0].mxu0
      %v974 = vadd.f32 0.0, %v973
      %v975 = vpop.f32.mrb[0].mxu0
      %v976 = vpop.f32.mrb[0].mxu0
      %v977 = vadd.f32 0.0, %v976
      %v978 = vpop.f32.mrb[0].mxu0
      %979 = vmatprep.mubr.bf16.mxu0 0
      %980 = vmatmul.mubr.bf16.gmra.mrb[0].mxu0 %v870
      %v981 = vpop.f32.mrb[0].mxu0
      %v982 = vadd.f32 0.0, %v981
      %v983 = vpop.f32.mrb[0].mxu0
      %v984 = vpop.f32.mrb[0].mxu0
      %v985 = vadd.f32 0.0, %v984
      %v986 = vpop.f32.mrb[0].mxu0
      %987 = vdwg.mxu0
      %v988 = vadd.f32 %v769, %v958
      %v989 = vadd.f32 %v772, %v961
      %v990 = vadd.f32 %v777, %v966
      %v991 = vadd.f32 %v780, %v969
      %v992 = vadd.f32 %v785, %v974
      %v993 = vadd.f32 %v788, %v977
      %v994 = vadd.f32 %v793, %v982
      %v995 = vadd.f32 %v796, %v985
      %s996 = scalar_lea.vmem %s3, 192
      %v997 = vld [vmem:[%s996] sm:$0xf]
      %v998 = vld [vmem:[%s996 + $0x4] sm:$0xf]
      %v999 = vld [vmem:[%s996 + $0x8] sm:$0xf]
      %v1000 = vld [vmem:[%s996 + $0xc] sm:$0xf]
      %v1001 = vld [vmem:[%s996 + $0x10] sm:$0xf]
      %v1002 = vld [vmem:[%s996 + $0x14] sm:$0xf]
      %v1003 = vld [vmem:[%s996 + $0x18] sm:$0xf]
      %v1004 = vld [vmem:[%s996 + $0x1c] sm:$0xf]
      %v1005 = vld [vmem:[%s996 + $0x20] sm:$0xf]
      %v1006 = vld [vmem:[%s996 + $0x24] sm:$0xf]
      %v1007 = vld [vmem:[%s996 + $0x28] sm:$0xf]
      %v1008 = vld [vmem:[%s996 + $0x2c] sm:$0xf]
      %v1009 = vld [vmem:[%s996 + $0x30] sm:$0xf]
      %v1010 = vld [vmem:[%s996 + $0x34] sm:$0xf]
      %v1011 = vld [vmem:[%s996 + $0x38] sm:$0xf]
      %v1012 = vld [vmem:[%s996 + $0x3c] sm:$0xf]
      %v1014 = vunpack.c.l.b16 %v381
      %v1015 = vpack.c.b16 %v672, %v671
      %v1016 = vpack.c.b16 %v674, %v673
      %v1017 = vpack.c.b16 %v676, %v675
      %v1018 = vpack.c.b16 %v1014, %v677
      %v1039 = vunpack.c.l.b16 %v997
      %v1040 = vunpack.c.l.b16 %v998
      %v1041 = vunpack.c.l.b16 %v999
      %v1042 = vunpack.c.l.b16 %v1000
      %v1043 = vunpack.c.l.b16 %v1001
      %v1044 = vunpack.c.l.b16 %v1002
      %v1045 = vunpack.c.l.b16 %v1003
      %v1046 = vunpack.c.l.b16 %v1004
      %v1047 = vunpack.c.l.b16 %v1005
      %v1048 = vunpack.c.l.b16 %v1006
      %v1049 = vunpack.c.l.b16 %v1007
      %v1050 = vunpack.c.l.b16 %v1008
      %v1051 = vunpack.c.l.b16 %v1009
      %v1052 = vunpack.c.l.b16 %v1010
      %v1053 = vunpack.c.l.b16 %v1011
      %v1054 = vunpack.c.l.b16 %v1012
      %v1055 = vpack.c.b16 %v1040, %v1039
      %v1056 = vpack.c.b16 %v1042, %v1041
      %v1057 = vpack.c.b16 %v1044, %v1043
      %v1058 = vpack.c.b16 %v1046, %v1045
      %v1059 = vpack.c.b16 %v1048, %v1047
      %v1060 = vpack.c.b16 %v1050, %v1049
      %v1061 = vpack.c.b16 %v1052, %v1051
      %v1062 = vpack.c.b16 %v1054, %v1053
      %1071 = vmatprep.subr.bf16.mxu0 0
      %1072 = vmatpush1.bf16.msra.mxu0 %v1055
      %1073 = vmatprep.subr.bf16.mxu0 0
      %1074 = vmatpush1.bf16.msra.mxu0 %v1056
      %1075 = vmatprep.subr.bf16.mxu0 0
      %1076 = vmatpush1.bf16.msra.mxu0 %v1057
      %1077 = vmatprep.subr.bf16.mxu0 0
      %1078 = vmatpush1.bf16.msra.mxu0 %v1058
      %1079 = vmatprep.subr.bf16.mxu0 0
      %1080 = vmatpush1.bf16.msra.mxu0 %v1059
      %1081 = vmatprep.subr.bf16.mxu0 0
      %1082 = vmatpush1.bf16.msra.mxu0 %v1060
      %1083 = vmatprep.subr.bf16.mxu0 0
      %1084 = vmatpush1.bf16.msra.mxu0 %v1061
      %1085 = vmatprep.subr.bf16.mxu0 0
      %1086 = vmatpush1.bf16.msra.mxu0 %v1062
      %1087 = vmatprep.subr.bf16.mxu0 0
      %1088 = vmatpush1.bf16.msra.mxu0 0
      %1089 = vmatprep.subr.bf16.mxu0 0
      %1090 = vmatpush1.bf16.msra.mxu0 0
      %1091 = vmatprep.subr.bf16.mxu0 0
      %1092 = vmatpush1.bf16.msra.mxu0 0
      %1093 = vmatprep.subr.bf16.mxu0 0
      %1094 = vmatpush1.bf16.msra.mxu0 0
      %1095 = vmatprep.subr.bf16.mxu0 0
      %1096 = vmatpush1.bf16.msra.mxu0 0
      %1097 = vmatprep.subr.bf16.mxu0 0
      %1098 = vmatpush1.bf16.msra.mxu0 0
      %1099 = vmatprep.subr.bf16.mxu0 0
      %1100 = vmatpush1.bf16.msra.mxu0 0
      %1101 = vmatprep.subr.bf16.mxu0 0
      %1102 = vmatpush1.bf16.msra.mxu0 0
      %1103 = vmatprep.mubr.bf16.mxu0 0
      %1104 = vmatmul.mubr.bf16.gmra.mrb[0].mxu0 %v1015
      %v1105 = vpop.f32.mrb[0].mxu0
      %v1106 = vadd.f32 0.0, %v1105
      %v1107 = vpop.f32.mrb[0].mxu0
      %v1108 = vpop.f32.mrb[0].mxu0
      %v1109 = vadd.f32 0.0, %v1108
      %v1110 = vpop.f32.mrb[0].mxu0
      %1111 = vmatprep.mubr.bf16.mxu0 0
      %1112 = vmatmul.mubr.bf16.gmra.mrb[0].mxu0 %v1016
      %v1113 = vpop.f32.mrb[0].mxu0
      %v1114 = vadd.f32 0.0, %v1113
      %v1115 = vpop.f32.mrb[0].mxu0
      %v1116 = vpop.f32.mrb[0].mxu0
      %v1117 = vadd.f32 0.0, %v1116
      %v1118 = vpop.f32.mrb[0].mxu0
      %1119 = vmatprep.mubr.bf16.mxu0 0
      %1120 = vmatmul.mubr.bf16.gmra.mrb[0].mxu0 %v1017
      %v1121 = vpop.f32.mrb[0].mxu0
      %v1122 = vadd.f32 0.0, %v1121
      %v1123 = vpop.f32.mrb[0].mxu0
      %v1124 = vpop.f32.mrb[0].mxu0
      %v1125 = vadd.f32 0.0, %v1124
      %v1126 = vpop.f32.mrb[0].mxu0
      %1127 = vmatprep.mubr.bf16.mxu0 0
      %1128 = vmatmul.mubr.bf16.gmra.mrb[0].mxu0 %v1018
      %v1129 = vpop.f32.mrb[0].mxu0
      %v1130 = vadd.f32 0.0, %v1129
      %v1131 = vpop.f32.mrb[0].mxu0
      %v1132 = vpop.f32.mrb[0].mxu0
      %v1133 = vadd.f32 0.0, %v1132
      %v1134 = vpop.f32.mrb[0].mxu0
      %1135 = vdwg.mxu0
      %v1136 = vadd.f32 %v988, %v1106
      %v1137 = vadd.f32 %v989, %v1109
      %v1138 = vadd.f32 %v990, %v1114
      %v1139 = vadd.f32 %v991, %v1117
      %v1140 = vadd.f32 %v992, %v1122
      %v1141 = vadd.f32 %v993, %v1125
      %v1142 = vadd.f32 %v994, %v1130
      %v1143 = vadd.f32 %v995, %v1133
      %v1145 = vshrl.u32 %v381, 16
      %v1147 = vrot.slane %v1145, 4
      %v1148 = vshll.u32 %v381, 16
      %v1150 = vrot.slane %v1148, 5
      %v1151 = vor.u32 %v1147, %v1150
      %v1152 = vrot.slane %v1151, 4
      %v1154 = vshll.u32 %v382, 16
      %v1156 = vrot.slane %v1154, 5
      %v1157 = vsel %vm403, %v1152, %v1156
      %s1158 = scalar_lea.vmem %s3, 256
      %v1159 = vld [vmem:[%s1158] sm:$0xf]
      %v1160 = vld [vmem:[%s1158 + $0x4] sm:$0xf]
      %v1161 = vld [vmem:[%s1158 + $0x8] sm:$0xf]
      %v1162 = vld [vmem:[%s1158 + $0xc] sm:$0xf]
      %v1163 = vld [vmem:[%s1158 + $0x10] sm:$0xf]
      %v1164 = vld [vmem:[%s1158 + $0x14] sm:$0xf]
      %v1165 = vld [vmem:[%s1158 + $0x18] sm:$0xf]
      %v1166 = vld [vmem:[%s1158 + $0x1c] sm:$0xf]
      %v1167 = vld [vmem:[%s1158 + $0x20] sm:$0xf]
      %v1168 = vld [vmem:[%s1158 + $0x24] sm:$0xf]
      %v1169 = vld [vmem:[%s1158 + $0x28] sm:$0xf]
      %v1170 = vld [vmem:[%s1158 + $0x2c] sm:$0xf]
      %v1171 = vld [vmem:[%s1158 + $0x30] sm:$0xf]
      %v1172 = vld [vmem:[%s1158 + $0x34] sm:$0xf]
      %v1173 = vld [vmem:[%s1158 + $0x38] sm:$0xf]
      %v1174 = vld [vmem:[%s1158 + $0x3c] sm:$0xf]
      %v1175 = vunpack.c.l.b16 %v1157
      %v1176 = vpack.c.b16 %v535, %v534
      %v1177 = vpack.c.b16 %v537, %v536
      %v1178 = vpack.c.b16 %v539, %v538
      %v1179 = vpack.c.b16 %v1175, %v540
      %v1200 = vunpack.c.l.b16 %v1159
      %v1201 = vunpack.c.l.b16 %v1160
      %v1202 = vunpack.c.l.b16 %v1161
      %v1203 = vunpack.c.l.b16 %v1162
      %v1204 = vunpack.c.l.b16 %v1163
      %v1205 = vunpack.c.l.b16 %v1164
      %v1206 = vunpack.c.l.b16 %v1165
      %v1207 = vunpack.c.l.b16 %v1166
      %v1208 = vunpack.c.l.b16 %v1167
      %v1209 = vunpack.c.l.b16 %v1168
      %v1210 = vunpack.c.l.b16 %v1169
      %v1211 = vunpack.c.l.b16 %v1170
      %v1212 = vunpack.c.l.b16 %v1171
      %v1213 = vunpack.c.l.b16 %v1172
      %v1214 = vunpack.c.l.b16 %v1173
      %v1215 = vunpack.c.l.b16 %v1174
      %v1216 = vpack.c.b16 %v1201, %v1200
      %v1217 = vpack.c.b16 %v1203, %v1202
      %v1218 = vpack.c.b16 %v1205, %v1204
      %v1219 = vpack.c.b16 %v1207, %v1206
      %v1220 = vpack.c.b16 %v1209, %v1208
      %v1221 = vpack.c.b16 %v1211, %v1210
      %v1222 = vpack.c.b16 %v1213, %v1212
      %v1223 = vpack.c.b16 %v1215, %v1214
      %1232 = vmatprep.subr.bf16.mxu0 0
      %1233 = vmatpush1.bf16.msra.mxu0 %v1216
      %1234 = vmatprep.subr.bf16.mxu0 0
      %1235 = vmatpush1.bf16.msra.mxu0 %v1217
      %1236 = vmatprep.subr.bf16.mxu0 0
      %1237 = vmatpush1.bf16.msra.mxu0 %v1218
      %1238 = vmatprep.subr.bf16.mxu0 0
      %1239 = vmatpush1.bf16.msra.mxu0 %v1219
      %1240 = vmatprep.subr.bf16.mxu0 0
      %1241 = vmatpush1.bf16.msra.mxu0 %v1220
      %1242 = vmatprep.subr.bf16.mxu0 0
      %1243 = vmatpush1.bf16.msra.mxu0 %v1221
      %1244 = vmatprep.subr.bf16.mxu0 0
      %1245 = vmatpush1.bf16.msra.mxu0 %v1222
      %1246 = vmatprep.subr.bf16.mxu0 0
      %1247 = vmatpush1.bf16.msra.mxu0 %v1223
      %1248 = vmatprep.subr.bf16.mxu0 0
      %1249 = vmatpush1.bf16.msra.mxu0 0
      %1250 = vmatprep.subr.bf16.mxu0 0
      %1251 = vmatpush1.bf16.msra.mxu0 0
      %1252 = vmatprep.subr.bf16.mxu0 0
      %1253 = vmatpush1.bf16.msra.mxu0 0
      %1254 = vmatprep.subr.bf16.mxu0 0
      %1255 = vmatpush1.bf16.msra.mxu0 0
      %1256 = vmatprep.subr.bf16.mxu0 0
      %1257 = vmatpush1.bf16.msra.mxu0 0
      %1258 = vmatprep.subr.bf16.mxu0 0
      %1259 = vmatpush1.bf16.msra.mxu0 0
      %1260 = vmatprep.subr.bf16.mxu0 0
      %1261 = vmatpush1.bf16.msra.mxu0 0
      %1262 = vmatprep.subr.bf16.mxu0 0
      %1263 = vmatpush1.bf16.msra.mxu0 0
      %1264 = vmatprep.mubr.bf16.mxu0 0
      %1265 = vmatmul.mubr.bf16.gmra.mrb[0].mxu0 %v1176
      %v1266 = vpop.f32.mrb[0].mxu0
      %v1267 = vadd.f32 0.0, %v1266
      %v1268 = vpop.f32.mrb[0].mxu0
      %v1269 = vpop.f32.mrb[0].mxu0
      %v1270 = vadd.f32 0.0, %v1269
      %v1271 = vpop.f32.mrb[0].mxu0
      %1272 = vmatprep.mubr.bf16.mxu0 0
      %1273 = vmatmul.mubr.bf16.gmra.mrb[0].mxu0 %v1177
      %v1274 = vpop.f32.mrb[0].mxu0
      %v1275 = vadd.f32 0.0, %v1274
      %v1276 = vpop.f32.mrb[0].mxu0
      %v1277 = vpop.f32.mrb[0].mxu0
      %v1278 = vadd.f32 0.0, %v1277
      %v1279 = vpop.f32.mrb[0].mxu0
      %1280 = vmatprep.mubr.bf16.mxu0 0
      %1281 = vmatmul.mubr.bf16.gmra.mrb[0].mxu0 %v1178
      %v1282 = vpop.f32.mrb[0].mxu0
      %v1283 = vadd.f32 0.0, %v1282
      %v1284 = vpop.f32.mrb[0].mxu0
      %v1285 = vpop.f32.mrb[0].mxu0
      %v1286 = vadd.f32 0.0, %v1285
      %v1287 = vpop.f32.mrb[0].mxu0
      %1288 = vmatprep.mubr.bf16.mxu0 0
      %1289 = vmatmul.mubr.bf16.gmra.mrb[0].mxu0 %v1179
      %v1290 = vpop.f32.mrb[0].mxu0
      %v1291 = vadd.f32 0.0, %v1290
      %v1292 = vpop.f32.mrb[0].mxu0
      %v1293 = vpop.f32.mrb[0].mxu0
      %v1294 = vadd.f32 0.0, %v1293
      %v1295 = vpop.f32.mrb[0].mxu0
      %1296 = vdwg.mxu0
      %v1297 = vadd.f32 %v1136, %v1267
      %v1298 = vadd.f32 %v1137, %v1270
      %v1299 = vadd.f32 %v1138, %v1275
      %v1300 = vadd.f32 %v1139, %v1278
      %v1301 = vadd.f32 %v1140, %v1283
      %v1302 = vadd.f32 %v1141, %v1286
      %v1303 = vadd.f32 %v1142, %v1291
      %v1304 = vadd.f32 %v1143, %v1294
      %v1306 = vrot.slane %v381, 5
      %v1307 = vrot.slane %v1306, 4
      %v1308 = vrot.slane %v382, 5
      %v1309 = vsel %vm809, %v1307, %v1308
      %s1310 = scalar_lea.vmem %s3, 320
      %v1311 = vld [vmem:[%s1310] sm:$0xf]
      %v1312 = vld [vmem:[%s1310 + $0x4] sm:$0xf]
      %v1313 = vld [vmem:[%s1310 + $0x8] sm:$0xf]
      %v1314 = vld [vmem:[%s1310 + $0xc] sm:$0xf]
      %v1315 = vld [vmem:[%s1310 + $0x10] sm:$0xf]
      %v1316 = vld [vmem:[%s1310 + $0x14] sm:$0xf]
      %v1317 = vld [vmem:[%s1310 + $0x18] sm:$0xf]
      %v1318 = vld [vmem:[%s1310 + $0x1c] sm:$0xf]
      %v1319 = vld [vmem:[%s1310 + $0x20] sm:$0xf]
      %v1320 = vld [vmem:[%s1310 + $0x24] sm:$0xf]
      %v1321 = vld [vmem:[%s1310 + $0x28] sm:$0xf]
      %v1322 = vld [vmem:[%s1310 + $0x2c] sm:$0xf]
      %v1323 = vld [vmem:[%s1310 + $0x30] sm:$0xf]
      %v1324 = vld [vmem:[%s1310 + $0x34] sm:$0xf]
      %v1325 = vld [vmem:[%s1310 + $0x38] sm:$0xf]
      %v1326 = vld [vmem:[%s1310 + $0x3c] sm:$0xf]
      %v1327 = vunpack.c.l.b16 %v1309
      %v1328 = vpack.c.b16 %v861, %v860
      %v1329 = vpack.c.b16 %v863, %v862
      %v1330 = vpack.c.b16 %v865, %v864
      %v1331 = vpack.c.b16 %v1327, %v866
      %v1352 = vunpack.c.l.b16 %v1311
      %v1353 = vunpack.c.l.b16 %v1312
      %v1354 = vunpack.c.l.b16 %v1313
      %v1355 = vunpack.c.l.b16 %v1314
      %v1356 = vunpack.c.l.b16 %v1315
      %v1357 = vunpack.c.l.b16 %v1316
      %v1358 = vunpack.c.l.b16 %v1317
      %v1359 = vunpack.c.l.b16 %v1318
      %v1360 = vunpack.c.l.b16 %v1319
      %v1361 = vunpack.c.l.b16 %v1320
      %v1362 = vunpack.c.l.b16 %v1321
      %v1363 = vunpack.c.l.b16 %v1322
      %v1364 = vunpack.c.l.b16 %v1323
      %v1365 = vunpack.c.l.b16 %v1324
      %v1366 = vunpack.c.l.b16 %v1325
      %v1367 = vunpack.c.l.b16 %v1326
      %v1368 = vpack.c.b16 %v1353, %v1352
      %v1369 = vpack.c.b16 %v1355, %v1354
      %v1370 = vpack.c.b16 %v1357, %v1356
      %v1371 = vpack.c.b16 %v1359, %v1358
      %v1372 = vpack.c.b16 %v1361, %v1360
      %v1373 = vpack.c.b16 %v1363, %v1362
      %v1374 = vpack.c.b16 %v1365, %v1364
      %v1375 = vpack.c.b16 %v1367, %v1366
      %1384 = vmatprep.subr.bf16.mxu0 0
      %1385 = vmatpush1.bf16.msra.mxu0 %v1368
      %1386 = vmatprep.subr.bf16.mxu0 0
      %1387 = vmatpush1.bf16.msra.mxu0 %v1369
      %1388 = vmatprep.subr.bf16.mxu0 0
      %1389 = vmatpush1.bf16.msra.mxu0 %v1370
      %1390 = vmatprep.subr.bf16.mxu0 0
      %1391 = vmatpush1.bf16.msra.mxu0 %v1371
      %1392 = vmatprep.subr.bf16.mxu0 0
      %1393 = vmatpush1.bf16.msra.mxu0 %v1372
      %1394 = vmatprep.subr.bf16.mxu0 0
      %1395 = vmatpush1.bf16.msra.mxu0 %v1373
      %1396 = vmatprep.subr.bf16.mxu0 0
      %1397 = vmatpush1.bf16.msra.mxu0 %v1374
      %1398 = vmatprep.subr.bf16.mxu0 0
      %1399 = vmatpush1.bf16.msra.mxu0 %v1375
      %1400 = vmatprep.subr.bf16.mxu0 0
      %1401 = vmatpush1.bf16.msra.mxu0 0
      %1402 = vmatprep.subr.bf16.mxu0 0
      %1403 = vmatpush1.bf16.msra.mxu0 0
      %1404 = vmatprep.subr.bf16.mxu0 0
      %1405 = vmatpush1.bf16.msra.mxu0 0
      %1406 = vmatprep.subr.bf16.mxu0 0
      %1407 = vmatpush1.bf16.msra.mxu0 0
      %1408 = vmatprep.subr.bf16.mxu0 0
      %1409 = vmatpush1.bf16.msra.mxu0 0
      %1410 = vmatprep.subr.bf16.mxu0 0
      %1411 = vmatpush1.bf16.msra.mxu0 0
      %1412 = vmatprep.subr.bf16.mxu0 0
      %1413 = vmatpush1.bf16.msra.mxu0 0
      %1414 = vmatprep.subr.bf16.mxu0 0
      %1415 = vmatpush1.bf16.msra.mxu0 0
      %1416 = vmatprep.mubr.bf16.mxu0 0
      %1417 = vmatmul.mubr.bf16.gmra.mrb[0].mxu0 %v1328
      %v1418 = vpop.f32.mrb[0].mxu0
      %v1419 = vadd.f32 0.0, %v1418
      %v1420 = vpop.f32.mrb[0].mxu0
      %v1421 = vpop.f32.mrb[0].mxu0
      %v1422 = vadd.f32 0.0, %v1421
      %v1423 = vpop.f32.mrb[0].mxu0
      %1424 = vmatprep.mubr.bf16.mxu0 0
      %1425 = vmatmul.mubr.bf16.gmra.mrb[0].mxu0 %v1329
      %v1426 = vpop.f32.mrb[0].mxu0
      %v1427 = vadd.f32 0.0, %v1426
      %v1428 = vpop.f32.mrb[0].mxu0
      %v1429 = vpop.f32.mrb[0].mxu0
      %v1430 = vadd.f32 0.0, %v1429
      %v1431 = vpop.f32.mrb[0].mxu0
      %1432 = vmatprep.mubr.bf16.mxu0 0
      %1433 = vmatmul.mubr.bf16.gmra.mrb[0].mxu0 %v1330
      %v1434 = vpop.f32.mrb[0].mxu0
      %v1435 = vadd.f32 0.0, %v1434
      %v1436 = vpop.f32.mrb[0].mxu0
      %v1437 = vpop.f32.mrb[0].mxu0
      %v1438 = vadd.f32 0.0, %v1437
      %v1439 = vpop.f32.mrb[0].mxu0
      %1440 = vmatprep.mubr.bf16.mxu0 0
      %1441 = vmatmul.mubr.bf16.gmra.mrb[0].mxu0 %v1331
      %v1442 = vpop.f32.mrb[0].mxu0
      %v1443 = vadd.f32 0.0, %v1442
      %v1444 = vpop.f32.mrb[0].mxu0
      %v1445 = vpop.f32.mrb[0].mxu0
      %v1446 = vadd.f32 0.0, %v1445
      %v1447 = vpop.f32.mrb[0].mxu0
      %1448 = vdwg.mxu0
      %v1449 = vadd.f32 %v1297, %v1419
      %v1450 = vadd.f32 %v1298, %v1422
      %v1451 = vadd.f32 %v1299, %v1427
      %v1452 = vadd.f32 %v1300, %v1430
      %v1453 = vadd.f32 %v1301, %v1435
      %v1454 = vadd.f32 %v1302, %v1438
      %v1455 = vadd.f32 %v1303, %v1443
      %v1456 = vadd.f32 %v1304, %v1446
      %s1457 = scalar_lea.vmem %s3, 384
      %v1458 = vld [vmem:[%s1457] sm:$0xf]
      %v1459 = vld [vmem:[%s1457 + $0x4] sm:$0xf]
      %v1460 = vld [vmem:[%s1457 + $0x8] sm:$0xf]
      %v1461 = vld [vmem:[%s1457 + $0xc] sm:$0xf]
      %v1462 = vld [vmem:[%s1457 + $0x10] sm:$0xf]
      %v1463 = vld [vmem:[%s1457 + $0x14] sm:$0xf]
      %v1464 = vld [vmem:[%s1457 + $0x18] sm:$0xf]
      %v1465 = vld [vmem:[%s1457 + $0x1c] sm:$0xf]
      %v1466 = vld [vmem:[%s1457 + $0x20] sm:$0xf]
      %v1467 = vld [vmem:[%s1457 + $0x24] sm:$0xf]
      %v1468 = vld [vmem:[%s1457 + $0x28] sm:$0xf]
      %v1469 = vld [vmem:[%s1457 + $0x2c] sm:$0xf]
      %v1470 = vld [vmem:[%s1457 + $0x30] sm:$0xf]
      %v1471 = vld [vmem:[%s1457 + $0x34] sm:$0xf]
      %v1472 = vld [vmem:[%s1457 + $0x38] sm:$0xf]
      %v1473 = vld [vmem:[%s1457 + $0x3c] sm:$0xf]
      %v1475 = vunpack.c.l.b16 %v383
      %v1476 = vpack.c.b16 %v1475, %v1014
      %v1494 = vunpack.c.l.b16 %v1458
      %v1495 = vunpack.c.l.b16 %v1459
      %v1496 = vunpack.c.l.b16 %v1460
      %v1497 = vunpack.c.l.b16 %v1461
      %v1498 = vunpack.c.l.b16 %v1462
      %v1499 = vunpack.c.l.b16 %v1463
      %v1500 = vunpack.c.l.b16 %v1464
      %v1501 = vunpack.c.l.b16 %v1465
      %v1502 = vunpack.c.l.b16 %v1466
      %v1503 = vunpack.c.l.b16 %v1467
      %v1504 = vunpack.c.l.b16 %v1468
      %v1505 = vunpack.c.l.b16 %v1469
      %v1506 = vunpack.c.l.b16 %v1470
      %v1507 = vunpack.c.l.b16 %v1471
      %v1508 = vunpack.c.l.b16 %v1472
      %v1509 = vunpack.c.l.b16 %v1473
      %v1510 = vpack.c.b16 %v1495, %v1494
      %v1511 = vpack.c.b16 %v1497, %v1496
      %v1512 = vpack.c.b16 %v1499, %v1498
      %v1513 = vpack.c.b16 %v1501, %v1500
      %v1514 = vpack.c.b16 %v1503, %v1502
      %v1515 = vpack.c.b16 %v1505, %v1504
      %v1516 = vpack.c.b16 %v1507, %v1506
      %v1517 = vpack.c.b16 %v1509, %v1508
      %1526 = vmatprep.subr.bf16.mxu0 0
      %1527 = vmatpush1.bf16.msra.mxu0 %v1510
      %1528 = vmatprep.subr.bf16.mxu0 0
      %1529 = vmatpush1.bf16.msra.mxu0 %v1511
      %1530 = vmatprep.subr.bf16.mxu0 0
      %1531 = vmatpush1.bf16.msra.mxu0 %v1512
      %1532 = vmatprep.subr.bf16.mxu0 0
      %1533 = vmatpush1.bf16.msra.mxu0 %v1513
      %1534 = vmatprep.subr.bf16.mxu0 0
      %1535 = vmatpush1.bf16.msra.mxu0 %v1514
      %1536 = vmatprep.subr.bf16.mxu0 0
      %1537 = vmatpush1.bf16.msra.mxu0 %v1515
      %1538 = vmatprep.subr.bf16.mxu0 0
      %1539 = vmatpush1.bf16.msra.mxu0 %v1516
      %1540 = vmatprep.subr.bf16.mxu0 0
      %1541 = vmatpush1.bf16.msra.mxu0 %v1517
      %1542 = vmatprep.subr.bf16.mxu0 0
      %1543 = vmatpush1.bf16.msra.mxu0 0
      %1544 = vmatprep.subr.bf16.mxu0 0
      %1545 = vmatpush1.bf16.msra.mxu0 0
      %1546 = vmatprep.subr.bf16.mxu0 0
      %1547 = vmatpush1.bf16.msra.mxu0 0
      %1548 = vmatprep.subr.bf16.mxu0 0
      %1549 = vmatpush1.bf16.msra.mxu0 0
      %1550 = vmatprep.subr.bf16.mxu0 0
      %1551 = vmatpush1.bf16.msra.mxu0 0
      %1552 = vmatprep.subr.bf16.mxu0 0
      %1553 = vmatpush1.bf16.msra.mxu0 0
      %1554 = vmatprep.subr.bf16.mxu0 0
      %1555 = vmatpush1.bf16.msra.mxu0 0
      %1556 = vmatprep.subr.bf16.mxu0 0
      %1557 = vmatpush1.bf16.msra.mxu0 0
      %1558 = vmatprep.mubr.bf16.mxu0 0
      %1559 = vmatmul.mubr.bf16.gmra.mrb[0].mxu0 %v679
      %v1560 = vpop.f32.mrb[0].mxu0
      %v1561 = vadd.f32 0.0, %v1560
      %v1562 = vpop.f32.mrb[0].mxu0
      %v1563 = vpop.f32.mrb[0].mxu0
      %v1564 = vadd.f32 0.0, %v1563
      %v1565 = vpop.f32.mrb[0].mxu0
      %1566 = vmatprep.mubr.bf16.mxu0 0
      %1567 = vmatmul.mubr.bf16.gmra.mrb[0].mxu0 %v680
      %v1568 = vpop.f32.mrb[0].mxu0
      %v1569 = vadd.f32 0.0, %v1568
      %v1570 = vpop.f32.mrb[0].mxu0
      %v1571 = vpop.f32.mrb[0].mxu0
      %v1572 = vadd.f32 0.0, %v1571
      %v1573 = vpop.f32.mrb[0].mxu0
      %1574 = vmatprep.mubr.bf16.mxu0 0
      %1575 = vmatmul.mubr.bf16.gmra.mrb[0].mxu0 %v681
      %v1576 = vpop.f32.mrb[0].mxu0
      %v1577 = vadd.f32 0.0, %v1576
      %v1578 = vpop.f32.mrb[0].mxu0
      %v1579 = vpop.f32.mrb[0].mxu0
      %v1580 = vadd.f32 0.0, %v1579
      %v1581 = vpop.f32.mrb[0].mxu0
      %1582 = vmatprep.mubr.bf16.mxu0 0
      %1583 = vmatmul.mubr.bf16.gmra.mrb[0].mxu0 %v1476
      %v1584 = vpop.f32.mrb[0].mxu0
      %v1585 = vadd.f32 0.0, %v1584
      %v1586 = vpop.f32.mrb[0].mxu0
      %v1587 = vpop.f32.mrb[0].mxu0
      %v1588 = vadd.f32 0.0, %v1587
      %v1589 = vpop.f32.mrb[0].mxu0
      %1590 = vdwg.mxu0
      %v1591 = vadd.f32 %v1449, %v1561
      %v1592 = vadd.f32 %v1450, %v1564
      %v1593 = vadd.f32 %v1451, %v1569
      %v1594 = vadd.f32 %v1452, %v1572
      %v1595 = vadd.f32 %v1453, %v1577
      %v1596 = vadd.f32 %v1454, %v1580
      %v1597 = vadd.f32 %v1455, %v1585
      %v1598 = vadd.f32 %v1456, %v1588
      %v1600 = vshrl.u32 %v383, 16
      %v1602 = vrot.slane %v1600, 4
      %v1603 = vshll.u32 %v383, 16
      %v1605 = vrot.slane %v1603, 5
      %v1606 = vor.u32 %v1602, %v1605
      %v1607 = vrot.slane %v1606, 4
      %v1609 = vshll.u32 %v384, 16
      %v1611 = vrot.slane %v1609, 5
      %v1612 = vsel %vm403, %v1607, %v1611
      %s1613 = scalar_lea.vmem %s3, 448
      %v1614 = vld [vmem:[%s1613] sm:$0xf]
      %v1615 = vld [vmem:[%s1613 + $0x4] sm:$0xf]
      %v1616 = vld [vmem:[%s1613 + $0x8] sm:$0xf]
      %v1617 = vld [vmem:[%s1613 + $0xc] sm:$0xf]
      %v1618 = vld [vmem:[%s1613 + $0x10] sm:$0xf]
      %v1619 = vld [vmem:[%s1613 + $0x14] sm:$0xf]
      %v1620 = vld [vmem:[%s1613 + $0x18] sm:$0xf]
      %v1621 = vld [vmem:[%s1613 + $0x1c] sm:$0xf]
      %v1622 = vld [vmem:[%s1613 + $0x20] sm:$0xf]
      %v1623 = vld [vmem:[%s1613 + $0x24] sm:$0xf]
      %v1624 = vld [vmem:[%s1613 + $0x28] sm:$0xf]
      %v1625 = vld [vmem:[%s1613 + $0x2c] sm:$0xf]
      %v1626 = vld [vmem:[%s1613 + $0x30] sm:$0xf]
      %v1627 = vld [vmem:[%s1613 + $0x34] sm:$0xf]
      %v1628 = vld [vmem:[%s1613 + $0x38] sm:$0xf]
      %v1629 = vld [vmem:[%s1613 + $0x3c] sm:$0xf]
      %v1630 = vunpack.c.l.b16 %v1612
      %v1631 = vpack.c.b16 %v1630, %v1175
      %v1649 = vunpack.c.l.b16 %v1614
      %v1650 = vunpack.c.l.b16 %v1615
      %v1651 = vunpack.c.l.b16 %v1616
      %v1652 = vunpack.c.l.b16 %v1617
      %v1653 = vunpack.c.l.b16 %v1618
      %v1654 = vunpack.c.l.b16 %v1619
      %v1655 = vunpack.c.l.b16 %v1620
      %v1656 = vunpack.c.l.b16 %v1621
      %v1657 = vunpack.c.l.b16 %v1622
      %v1658 = vunpack.c.l.b16 %v1623
      %v1659 = vunpack.c.l.b16 %v1624
      %v1660 = vunpack.c.l.b16 %v1625
      %v1661 = vunpack.c.l.b16 %v1626
      %v1662 = vunpack.c.l.b16 %v1627
      %v1663 = vunpack.c.l.b16 %v1628
      %v1664 = vunpack.c.l.b16 %v1629
      %v1665 = vpack.c.b16 %v1650, %v1649
      %v1666 = vpack.c.b16 %v1652, %v1651
      %v1667 = vpack.c.b16 %v1654, %v1653
      %v1668 = vpack.c.b16 %v1656, %v1655
      %v1669 = vpack.c.b16 %v1658, %v1657
      %v1670 = vpack.c.b16 %v1660, %v1659
      %v1671 = vpack.c.b16 %v1662, %v1661
      %v1672 = vpack.c.b16 %v1664, %v1663
      %1681 = vmatprep.subr.bf16.mxu0 0
      %1682 = vmatpush1.bf16.msra.mxu0 %v1665
      %1683 = vmatprep.subr.bf16.mxu0 0
      %1684 = vmatpush1.bf16.msra.mxu0 %v1666
      %1685 = vmatprep.subr.bf16.mxu0 0
      %1686 = vmatpush1.bf16.msra.mxu0 %v1667
      %1687 = vmatprep.subr.bf16.mxu0 0
      %1688 = vmatpush1.bf16.msra.mxu0 %v1668
      %1689 = vmatprep.subr.bf16.mxu0 0
      %1690 = vmatpush1.bf16.msra.mxu0 %v1669
      %1691 = vmatprep.subr.bf16.mxu0 0
      %1692 = vmatpush1.bf16.msra.mxu0 %v1670
      %1693 = vmatprep.subr.bf16.mxu0 0
      %1694 = vmatpush1.bf16.msra.mxu0 %v1671
      %1695 = vmatprep.subr.bf16.mxu0 0
      %1696 = vmatpush1.bf16.msra.mxu0 %v1672
      %1697 = vmatprep.subr.bf16.mxu0 0
      %1698 = vmatpush1.bf16.msra.mxu0 0
      %1699 = vmatprep.subr.bf16.mxu0 0
      %1700 = vmatpush1.bf16.msra.mxu0 0
      %1701 = vmatprep.subr.bf16.mxu0 0
      %1702 = vmatpush1.bf16.msra.mxu0 0
      %1703 = vmatprep.subr.bf16.mxu0 0
      %1704 = vmatpush1.bf16.msra.mxu0 0
      %1705 = vmatprep.subr.bf16.mxu0 0
      %1706 = vmatpush1.bf16.msra.mxu0 0
      %1707 = vmatprep.subr.bf16.mxu0 0
      %1708 = vmatpush1.bf16.msra.mxu0 0
      %1709 = vmatprep.subr.bf16.mxu0 0
      %1710 = vmatpush1.bf16.msra.mxu0 0
      %1711 = vmatprep.subr.bf16.mxu0 0
      %1712 = vmatpush1.bf16.msra.mxu0 0
      %1713 = vmatprep.mubr.bf16.mxu0 0
      %1714 = vmatmul.mubr.bf16.gmra.mrb[0].mxu0 %v542
      %v1715 = vpop.f32.mrb[0].mxu0
      %v1716 = vadd.f32 0.0, %v1715
      %v1717 = vpop.f32.mrb[0].mxu0
      %v1718 = vpop.f32.mrb[0].mxu0
      %v1719 = vadd.f32 0.0, %v1718
      %v1720 = vpop.f32.mrb[0].mxu0
      %1721 = vmatprep.mubr.bf16.mxu0 0
      %1722 = vmatmul.mubr.bf16.gmra.mrb[0].mxu0 %v543
      %v1723 = vpop.f32.mrb[0].mxu0
      %v1724 = vadd.f32 0.0, %v1723
      %v1725 = vpop.f32.mrb[0].mxu0
      %v1726 = vpop.f32.mrb[0].mxu0
      %v1727 = vadd.f32 0.0, %v1726
      %v1728 = vpop.f32.mrb[0].mxu0
      %1729 = vmatprep.mubr.bf16.mxu0 0
      %1730 = vmatmul.mubr.bf16.gmra.mrb[0].mxu0 %v544
      %v1731 = vpop.f32.mrb[0].mxu0
      %v1732 = vadd.f32 0.0, %v1731
      %v1733 = vpop.f32.mrb[0].mxu0
      %v1734 = vpop.f32.mrb[0].mxu0
      %v1735 = vadd.f32 0.0, %v1734
      %v1736 = vpop.f32.mrb[0].mxu0
      %1737 = vmatprep.mubr.bf16.mxu0 0
      %1738 = vmatmul.mubr.bf16.gmra.mrb[0].mxu0 %v1631
      %v1739 = vpop.f32.mrb[0].mxu0
      %v1740 = vadd.f32 0.0, %v1739
      %v1741 = vpop.f32.mrb[0].mxu0
      %v1742 = vpop.f32.mrb[0].mxu0
      %v1743 = vadd.f32 0.0, %v1742
      %v1744 = vpop.f32.mrb[0].mxu0
      %1745 = vdwg.mxu0
      %v1746 = vadd.f32 %v1591, %v1716
      %v1747 = vadd.f32 %v1592, %v1719
      %v1748 = vadd.f32 %v1593, %v1724
      %v1749 = vadd.f32 %v1594, %v1727
      %v1750 = vadd.f32 %v1595, %v1732
      %v1751 = vadd.f32 %v1596, %v1735
      %v1752 = vadd.f32 %v1597, %v1740
      %v1753 = vadd.f32 %v1598, %v1743
      %v1755 = vrot.slane %v383, 5
      %v1756 = vrot.slane %v1755, 4
      %v1757 = vrot.slane %v384, 5
      %v1758 = vsel %vm809, %v1756, %v1757
      %s1759 = scalar_lea.vmem %s3, 512
      %v1760 = vld [vmem:[%s1759] sm:$0xf]
      %v1761 = vld [vmem:[%s1759 + $0x4] sm:$0xf]
      %v1762 = vld [vmem:[%s1759 + $0x8] sm:$0xf]
      %v1763 = vld [vmem:[%s1759 + $0xc] sm:$0xf]
      %v1764 = vld [vmem:[%s1759 + $0x10] sm:$0xf]
      %v1765 = vld [vmem:[%s1759 + $0x14] sm:$0xf]
      %v1766 = vld [vmem:[%s1759 + $0x18] sm:$0xf]
      %v1767 = vld [vmem:[%s1759 + $0x1c] sm:$0xf]
      %v1768 = vld [vmem:[%s1759 + $0x20] sm:$0xf]
      %v1769 = vld [vmem:[%s1759 + $0x24] sm:$0xf]
      %v1770 = vld [vmem:[%s1759 + $0x28] sm:$0xf]
      %v1771 = vld [vmem:[%s1759 + $0x2c] sm:$0xf]
      %v1772 = vld [vmem:[%s1759 + $0x30] sm:$0xf]
      %v1773 = vld [vmem:[%s1759 + $0x34] sm:$0xf]
      %v1774 = vld [vmem:[%s1759 + $0x38] sm:$0xf]
      %v1775 = vld [vmem:[%s1759 + $0x3c] sm:$0xf]
      %v1776 = vunpack.c.l.b16 %v1758
      %v1777 = vpack.c.b16 %v1776, %v1327
      %v1795 = vunpack.c.l.b16 %v1760
      %v1796 = vunpack.c.l.b16 %v1761
      %v1797 = vunpack.c.l.b16 %v1762
      %v1798 = vunpack.c.l.b16 %v1763
      %v1799 = vunpack.c.l.b16 %v1764
      %v1800 = vunpack.c.l.b16 %v1765
      %v1801 = vunpack.c.l.b16 %v1766
      %v1802 = vunpack.c.l.b16 %v1767
      %v1803 = vunpack.c.l.b16 %v1768
      %v1804 = vunpack.c.l.b16 %v1769
      %v1805 = vunpack.c.l.b16 %v1770
      %v1806 = vunpack.c.l.b16 %v1771
      %v1807 = vunpack.c.l.b16 %v1772
      %v1808 = vunpack.c.l.b16 %v1773
      %v1809 = vunpack.c.l.b16 %v1774
      %v1810 = vunpack.c.l.b16 %v1775
      %v1811 = vpack.c.b16 %v1796, %v1795
      %v1812 = vpack.c.b16 %v1798, %v1797
      %v1813 = vpack.c.b16 %v1800, %v1799
      %v1814 = vpack.c.b16 %v1802, %v1801
      %v1815 = vpack.c.b16 %v1804, %v1803
      %v1816 = vpack.c.b16 %v1806, %v1805
      %v1817 = vpack.c.b16 %v1808, %v1807
      %v1818 = vpack.c.b16 %v1810, %v1809
      %1827 = vmatprep.subr.bf16.mxu0 0
      %1828 = vmatpush1.bf16.msra.mxu0 %v1811
      %1829 = vmatprep.subr.bf16.mxu0 0
      %1830 = vmatpush1.bf16.msra.mxu0 %v1812
      %1831 = vmatprep.subr.bf16.mxu0 0
      %1832 = vmatpush1.bf16.msra.mxu0 %v1813
      %1833 = vmatprep.subr.bf16.mxu0 0
      %1834 = vmatpush1.bf16.msra.mxu0 %v1814
      %1835 = vmatprep.subr.bf16.mxu0 0
      %1836 = vmatpush1.bf16.msra.mxu0 %v1815
      %1837 = vmatprep.subr.bf16.mxu0 0
      %1838 = vmatpush1.bf16.msra.mxu0 %v1816
      %1839 = vmatprep.subr.bf16.mxu0 0
      %1840 = vmatpush1.bf16.msra.mxu0 %v1817
      %1841 = vmatprep.subr.bf16.mxu0 0
      %1842 = vmatpush1.bf16.msra.mxu0 %v1818
      %1843 = vmatprep.subr.bf16.mxu0 0
      %1844 = vmatpush1.bf16.msra.mxu0 0
      %1845 = vmatprep.subr.bf16.mxu0 0
      %1846 = vmatpush1.bf16.msra.mxu0 0
      %1847 = vmatprep.subr.bf16.mxu0 0
      %1848 = vmatpush1.bf16.msra.mxu0 0
      %1849 = vmatprep.subr.bf16.mxu0 0
      %1850 = vmatpush1.bf16.msra.mxu0 0
      %1851 = vmatprep.subr.bf16.mxu0 0
      %1852 = vmatpush1.bf16.msra.mxu0 0
      %1853 = vmatprep.subr.bf16.mxu0 0
      %1854 = vmatpush1.bf16.msra.mxu0 0
      %1855 = vmatprep.subr.bf16.mxu0 0
      %1856 = vmatpush1.bf16.msra.mxu0 0
      %1857 = vmatprep.subr.bf16.mxu0 0
      %1858 = vmatpush1.bf16.msra.mxu0 0
      %1859 = vmatprep.mubr.bf16.mxu0 0
      %1860 = vmatmul.mubr.bf16.gmra.mrb[0].mxu0 %v868
      %v1861 = vpop.f32.mrb[0].mxu0
      %v1862 = vadd.f32 0.0, %v1861
      %v1863 = vpop.f32.mrb[0].mxu0
      %v1864 = vpop.f32.mrb[0].mxu0
      %v1865 = vadd.f32 0.0, %v1864
      %v1866 = vpop.f32.mrb[0].mxu0
      %1867 = vmatprep.mubr.bf16.mxu0 0
      %1868 = vmatmul.mubr.bf16.gmra.mrb[0].mxu0 %v869
      %v1869 = vpop.f32.mrb[0].mxu0
      %v1870 = vadd.f32 0.0, %v1869
      %v1871 = vpop.f32.mrb[0].mxu0
      %v1872 = vpop.f32.mrb[0].mxu0
      %v1873 = vadd.f32 0.0, %v1872
      %v1874 = vpop.f32.mrb[0].mxu0
      %1875 = vmatprep.mubr.bf16.mxu0 0
      %1876 = vmatmul.mubr.bf16.gmra.mrb[0].mxu0 %v870
      %v1877 = vpop.f32.mrb[0].mxu0
      %v1878 = vadd.f32 0.0, %v1877
      %v1879 = vpop.f32.mrb[0].mxu0
      %v1880 = vpop.f32.mrb[0].mxu0
      %v1881 = vadd.f32 0.0, %v1880
      %v1882 = vpop.f32.mrb[0].mxu0
      %1883 = vmatprep.mubr.bf16.mxu0 0
      %1884 = vmatmul.mubr.bf16.gmra.mrb[0].mxu0 %v1777
      %v1885 = vpop.f32.mrb[0].mxu0
      %v1886 = vadd.f32 0.0, %v1885
      %v1887 = vpop.f32.mrb[0].mxu0
      %v1888 = vpop.f32.mrb[0].mxu0
      %v1889 = vadd.f32 0.0, %v1888
      %v1890 = vpop.f32.mrb[0].mxu0
      %1891 = vdwg.mxu0
      %v1892 = vadd.f32 %v1746, %v1862
      %v1893 = vadd.f32 %v1747, %v1865
      %v1894 = vadd.f32 %v1748, %v1870
      %v1895 = vadd.f32 %v1749, %v1873
      %v1896 = vadd.f32 %v1750, %v1878
      %v1897 = vadd.f32 %v1751, %v1881
      %v1898 = vadd.f32 %v1752, %v1886
      %v1899 = vadd.f32 %v1753, %v1889
      %v1900 = vld [vmem:[%s334] sm:$0xf]
      %v1901 = vld [vmem:[%s334 + $0x4] sm:$0x1]
      %v1902 = vld [vmem:[%s334 + $0x8] sm:$0xf]
      %v1903 = vld [vmem:[%s334 + $0xc] sm:$0x1]
      %v1904 = vld [vmem:[%s334 + $0x10] sm:$0xf]
      %v1905 = vld [vmem:[%s334 + $0x14] sm:$0x1]
      %v1906 = vld [vmem:[%s334 + $0x18] sm:$0xf]
      %v1907 = vld [vmem:[%s334 + $0x1c] sm:$0x1]
      %v1908 = vld [vmem:[%s334 + $0x20] sm:$0xf]
      %v1909 = vld [vmem:[%s334 + $0x24] sm:$0x1]
      %v1910 = vld [vmem:[%s334 + $0x28] sm:$0xf]
      %v1911 = vld [vmem:[%s334 + $0x2c] sm:$0x1]
      %v1912 = vld [vmem:[%s334 + $0x30] sm:$0xf]
      %v1913 = vld [vmem:[%s334 + $0x34] sm:$0x1]
      %v1914 = vld [vmem:[%s334 + $0x38] sm:$0xf]
      %v1915 = vld [vmem:[%s334 + $0x3c] sm:$0x1]
      %v1916 = vld [vmem:[%s334 + $0x40] sm:$0xf]
      %v1917 = vld [vmem:[%s334 + $0x44] sm:$0x1]
      %v1918 = vld [vmem:[%s334 + $0x48] sm:$0xf]
      %v1919 = vld [vmem:[%s334 + $0x4c] sm:$0x1]
      %s1920 = scalar_lea.vmem %s3, 576
      %v1921 = vld [vmem:[%s1920] sm:$0xf]
      %v1922 = vld [vmem:[%s1920 + $0x4] sm:$0xf]
      %v1923 = vld [vmem:[%s1920 + $0x8] sm:$0xf]
      %v1924 = vld [vmem:[%s1920 + $0xc] sm:$0xf]
      %v1925 = vld [vmem:[%s1920 + $0x10] sm:$0xf]
      %v1926 = vld [vmem:[%s1920 + $0x14] sm:$0xf]
      %v1927 = vld [vmem:[%s1920 + $0x18] sm:$0xf]
      %v1928 = vld [vmem:[%s1920 + $0x1c] sm:$0xf]
      %v1929 = vld [vmem:[%s1920 + $0x20] sm:$0xf]
      %v1930 = vld [vmem:[%s1920 + $0x24] sm:$0xf]
      %v1931 = vld [vmem:[%s1920 + $0x28] sm:$0xf]
      %v1932 = vld [vmem:[%s1920 + $0x2c] sm:$0xf]
      %v1933 = vld [vmem:[%s1920 + $0x30] sm:$0xf]
      %v1934 = vld [vmem:[%s1920 + $0x34] sm:$0xf]
      %v1935 = vld [vmem:[%s1920 + $0x38] sm:$0xf]
      %v1936 = vld [vmem:[%s1920 + $0x3c] sm:$0xf]
      %v1945 = vunpack.c.l.b16 %v1900
      %v1946 = vunpack.c.l.b16 %v1902
      %v1947 = vunpack.c.l.b16 %v1904
      %v1948 = vunpack.c.l.b16 %v1906
      %v1949 = vunpack.c.l.b16 %v1908
      %v1950 = vunpack.c.l.b16 %v1910
      %v1951 = vunpack.c.l.b16 %v1912
      %v1952 = vunpack.c.l.b16 %v1914
      %v1953 = vpack.c.b16 %v1946, %v1945
      %v1954 = vpack.c.b16 %v1948, %v1947
      %v1955 = vpack.c.b16 %v1950, %v1949
      %v1956 = vpack.c.b16 %v1952, %v1951
      %v1977 = vunpack.c.l.b16 %v1921
      %v1978 = vunpack.c.l.b16 %v1922
      %v1979 = vunpack.c.l.b16 %v1923
      %v1980 = vunpack.c.l.b16 %v1924
      %v1981 = vunpack.c.l.b16 %v1925
      %v1982 = vunpack.c.l.b16 %v1926
      %v1983 = vunpack.c.l.b16 %v1927
      %v1984 = vunpack.c.l.b16 %v1928
      %v1985 = vunpack.c.l.b16 %v1929
      %v1986 = vunpack.c.l.b16 %v1930
      %v1987 = vunpack.c.l.b16 %v1931
      %v1988 = vunpack.c.l.b16 %v1932
      %v1989 = vunpack.c.l.b16 %v1933
      %v1990 = vunpack.c.l.b16 %v1934
      %v1991 = vunpack.c.l.b16 %v1935
      %v1992 = vunpack.c.l.b16 %v1936
      %v1993 = vpack.c.b16 %v1978, %v1977
      %v1994 = vpack.c.b16 %v1980, %v1979
      %v1995 = vpack.c.b16 %v1982, %v1981
      %v1996 = vpack.c.b16 %v1984, %v1983
      %v1997 = vpack.c.b16 %v1986, %v1985
      %v1998 = vpack.c.b16 %v1988, %v1987
      %v1999 = vpack.c.b16 %v1990, %v1989
      %v2000 = vpack.c.b16 %v1992, %v1991
      %2009 = vmatprep.subr.bf16.mxu0 0
      %2010 = vmatpush1.bf16.msra.mxu0 %v1993
      %2011 = vmatprep.subr.bf16.mxu0 0
      %2012 = vmatpush1.bf16.msra.mxu0 %v1994
      %2013 = vmatprep.subr.bf16.mxu0 0
      %2014 = vmatpush1.bf16.msra.mxu0 %v1995
      %2015 = vmatprep.subr.bf16.mxu0 0
      %2016 = vmatpush1.bf16.msra.mxu0 %v1996
      %2017 = vmatprep.subr.bf16.mxu0 0
      %2018 = vmatpush1.bf16.msra.mxu0 %v1997
      %2019 = vmatprep.subr.bf16.mxu0 0
      %2020 = vmatpush1.bf16.msra.mxu0 %v1998
      %2021 = vmatprep.subr.bf16.mxu0 0
      %2022 = vmatpush1.bf16.msra.mxu0 %v1999
      %2023 = vmatprep.subr.bf16.mxu0 0
      %2024 = vmatpush1.bf16.msra.mxu0 %v2000
      %2025 = vmatprep.subr.bf16.mxu0 0
      %2026 = vmatpush1.bf16.msra.mxu0 0
      %2027 = vmatprep.subr.bf16.mxu0 0
      %2028 = vmatpush1.bf16.msra.mxu0 0
      %2029 = vmatprep.subr.bf16.mxu0 0
      %2030 = vmatpush1.bf16.msra.mxu0 0
      %2031 = vmatprep.subr.bf16.mxu0 0
      %2032 = vmatpush1.bf16.msra.mxu0 0
      %2033 = vmatprep.subr.bf16.mxu0 0
      %2034 = vmatpush1.bf16.msra.mxu0 0
      %2035 = vmatprep.subr.bf16.mxu0 0
      %2036 = vmatpush1.bf16.msra.mxu0 0
      %2037 = vmatprep.subr.bf16.mxu0 0
      %2038 = vmatpush1.bf16.msra.mxu0 0
      %2039 = vmatprep.subr.bf16.mxu0 0
      %2040 = vmatpush1.bf16.msra.mxu0 0
      %2041 = vmatprep.mubr.bf16.mxu0 0
      %2042 = vmatmul.mubr.bf16.gmra.mrb[0].mxu0 %v1953
      %v2043 = vpop.f32.mrb[0].mxu0
      %v2044 = vadd.f32 0.0, %v2043
      %v2045 = vpop.f32.mrb[0].mxu0
      %v2046 = vpop.f32.mrb[0].mxu0
      %v2047 = vadd.f32 0.0, %v2046
      %v2048 = vpop.f32.mrb[0].mxu0
      %2049 = vmatprep.mubr.bf16.mxu0 0
      %2050 = vmatmul.mubr.bf16.gmra.mrb[0].mxu0 %v1954
      %v2051 = vpop.f32.mrb[0].mxu0
      %v2052 = vadd.f32 0.0, %v2051
      %v2053 = vpop.f32.mrb[0].mxu0
      %v2054 = vpop.f32.mrb[0].mxu0
      %v2055 = vadd.f32 0.0, %v2054
      %v2056 = vpop.f32.mrb[0].mxu0
      %2057 = vmatprep.mubr.bf16.mxu0 0
      %2058 = vmatmul.mubr.bf16.gmra.mrb[0].mxu0 %v1955
      %v2059 = vpop.f32.mrb[0].mxu0
      %v2060 = vadd.f32 0.0, %v2059
      %v2061 = vpop.f32.mrb[0].mxu0
      %v2062 = vpop.f32.mrb[0].mxu0
      %v2063 = vadd.f32 0.0, %v2062
      %v2064 = vpop.f32.mrb[0].mxu0
      %2065 = vmatprep.mubr.bf16.mxu0 0
      %2066 = vmatmul.mubr.bf16.gmra.mrb[0].mxu0 %v1956
      %v2067 = vpop.f32.mrb[0].mxu0
      %v2068 = vadd.f32 0.0, %v2067
      %v2069 = vpop.f32.mrb[0].mxu0
      %v2070 = vpop.f32.mrb[0].mxu0
      %v2071 = vadd.f32 0.0, %v2070
      %v2072 = vpop.f32.mrb[0].mxu0
      %2073 = vdwg.mxu0
      %v2074 = vadd.f32 %v1892, %v2044
      %v2075 = vadd.f32 %v1893, %v2047
      %v2076 = vadd.f32 %v1894, %v2052
      %v2077 = vadd.f32 %v1895, %v2055
      %v2078 = vadd.f32 %v1896, %v2060
      %v2079 = vadd.f32 %v1897, %v2063
      %v2080 = vadd.f32 %v1898, %v2068
      %v2081 = vadd.f32 %v1899, %v2071
      %v2083 = vshrl.u32 %v1900, 16
      %v2085 = vrot.slane %v2083, 4
      %v2086 = vshll.u32 %v1900, 16
      %v2088 = vrot.slane %v2086, 5
      %v2089 = vor.u32 %v2085, %v2088
      %v2090 = vrot.slane %v2089, 4
      %v2092 = vshll.u32 %v1901, 16
      %v2094 = vrot.slane %v2092, 5
      %v2095 = vsel %vm403, %v2090, %v2094
      %v2097 = vshrl.u32 %v1902, 16
      %v2099 = vrot.slane %v2097, 4
      %v2100 = vshll.u32 %v1902, 16
      %v2102 = vrot.slane %v2100, 5
      %v2103 = vor.u32 %v2099, %v2102
      %v2104 = vrot.slane %v2103, 4
      %v2106 = vshll.u32 %v1903, 16
      %v2108 = vrot.slane %v2106, 5
      %v2109 = vsel %vm403, %v2104, %v2108
      %v2111 = vshrl.u32 %v1904, 16
      %v2113 = vrot.slane %v2111, 4
      %v2114 = vshll.u32 %v1904, 16
      %v2116 = vrot.slane %v2114, 5
      %v2117 = vor.u32 %v2113, %v2116
      %v2118 = vrot.slane %v2117, 4
      %v2120 = vshll.u32 %v1905, 16
      %v2122 = vrot.slane %v2120, 5
      %v2123 = vsel %vm403, %v2118, %v2122
      %v2125 = vshrl.u32 %v1906, 16
      %v2127 = vrot.slane %v2125, 4
      %v2128 = vshll.u32 %v1906, 16
      %v2130 = vrot.slane %v2128, 5
      %v2131 = vor.u32 %v2127, %v2130
      %v2132 = vrot.slane %v2131, 4
      %v2134 = vshll.u32 %v1907, 16
      %v2136 = vrot.slane %v2134, 5
      %v2137 = vsel %vm403, %v2132, %v2136
      %v2139 = vshrl.u32 %v1908, 16
      %v2141 = vrot.slane %v2139, 4
      %v2142 = vshll.u32 %v1908, 16
      %v2144 = vrot.slane %v2142, 5
      %v2145 = vor.u32 %v2141, %v2144
      %v2146 = vrot.slane %v2145, 4
      %v2148 = vshll.u32 %v1909, 16
      %v2150 = vrot.slane %v2148, 5
      %v2151 = vsel %vm403, %v2146, %v2150
      %v2153 = vshrl.u32 %v1910, 16
      %v2155 = vrot.slane %v2153, 4
      %v2156 = vshll.u32 %v1910, 16
      %v2158 = vrot.slane %v2156, 5
      %v2159 = vor.u32 %v2155, %v2158
      %v2160 = vrot.slane %v2159, 4
      %v2162 = vshll.u32 %v1911, 16
      %v2164 = vrot.slane %v2162, 5
      %v2165 = vsel %vm403, %v2160, %v2164
      %v2167 = vshrl.u32 %v1912, 16
      %v2169 = vrot.slane %v2167, 4
      %v2170 = vshll.u32 %v1912, 16
      %v2172 = vrot.slane %v2170, 5
      %v2173 = vor.u32 %v2169, %v2172
      %v2174 = vrot.slane %v2173, 4
      %v2176 = vshll.u32 %v1913, 16
      %v2178 = vrot.slane %v2176, 5
      %v2179 = vsel %vm403, %v2174, %v2178
      %v2181 = vshrl.u32 %v1914, 16
      %v2183 = vrot.slane %v2181, 4
      %v2184 = vshll.u32 %v1914, 16
      %v2186 = vrot.slane %v2184, 5
      %v2187 = vor.u32 %v2183, %v2186
      %v2188 = vrot.slane %v2187, 4
      %v2190 = vshll.u32 %v1915, 16
      %v2192 = vrot.slane %v2190, 5
      %v2193 = vsel %vm403, %v2188, %v2192
      %s2194 = scalar_lea.vmem %s3, 640
      %v2195 = vld [vmem:[%s2194] sm:$0xf]
      %v2196 = vld [vmem:[%s2194 + $0x4] sm:$0xf]
      %v2197 = vld [vmem:[%s2194 + $0x8] sm:$0xf]
      %v2198 = vld [vmem:[%s2194 + $0xc] sm:$0xf]
      %v2199 = vld [vmem:[%s2194 + $0x10] sm:$0xf]
      %v2200 = vld [vmem:[%s2194 + $0x14] sm:$0xf]
      %v2201 = vld [vmem:[%s2194 + $0x18] sm:$0xf]
      %v2202 = vld [vmem:[%s2194 + $0x1c] sm:$0xf]
      %v2203 = vld [vmem:[%s2194 + $0x20] sm:$0xf]
      %v2204 = vld [vmem:[%s2194 + $0x24] sm:$0xf]
      %v2205 = vld [vmem:[%s2194 + $0x28] sm:$0xf]
      %v2206 = vld [vmem:[%s2194 + $0x2c] sm:$0xf]
      %v2207 = vld [vmem:[%s2194 + $0x30] sm:$0xf]
      %v2208 = vld [vmem:[%s2194 + $0x34] sm:$0xf]
      %v2209 = vld [vmem:[%s2194 + $0x38] sm:$0xf]
      %v2210 = vld [vmem:[%s2194 + $0x3c] sm:$0xf]
      %v2211 = vunpack.c.l.b16 %v2095
      %v2212 = vunpack.c.l.b16 %v2109
      %v2213 = vunpack.c.l.b16 %v2123
      %v2214 = vunpack.c.l.b16 %v2137
      %v2215 = vunpack.c.l.b16 %v2151
      %v2216 = vunpack.c.l.b16 %v2165
      %v2217 = vunpack.c.l.b16 %v2179
      %v2218 = vunpack.c.l.b16 %v2193
      %v2219 = vpack.c.b16 %v2212, %v2211
      %v2220 = vpack.c.b16 %v2214, %v2213
      %v2221 = vpack.c.b16 %v2216, %v2215
      %v2222 = vpack.c.b16 %v2218, %v2217
      %v2243 = vunpack.c.l.b16 %v2195
      %v2244 = vunpack.c.l.b16 %v2196
      %v2245 = vunpack.c.l.b16 %v2197
      %v2246 = vunpack.c.l.b16 %v2198
      %v2247 = vunpack.c.l.b16 %v2199
      %v2248 = vunpack.c.l.b16 %v2200
      %v2249 = vunpack.c.l.b16 %v2201
      %v2250 = vunpack.c.l.b16 %v2202
      %v2251 = vunpack.c.l.b16 %v2203
      %v2252 = vunpack.c.l.b16 %v2204
      %v2253 = vunpack.c.l.b16 %v2205
      %v2254 = vunpack.c.l.b16 %v2206
      %v2255 = vunpack.c.l.b16 %v2207
      %v2256 = vunpack.c.l.b16 %v2208
      %v2257 = vunpack.c.l.b16 %v2209
      %v2258 = vunpack.c.l.b16 %v2210
      %v2259 = vpack.c.b16 %v2244, %v2243
      %v2260 = vpack.c.b16 %v2246, %v2245
      %v2261 = vpack.c.b16 %v2248, %v2247
      %v2262 = vpack.c.b16 %v2250, %v2249
      %v2263 = vpack.c.b16 %v2252, %v2251
      %v2264 = vpack.c.b16 %v2254, %v2253
      %v2265 = vpack.c.b16 %v2256, %v2255
      %v2266 = vpack.c.b16 %v2258, %v2257
      %2275 = vmatprep.subr.bf16.mxu0 0
      %2276 = vmatpush1.bf16.msra.mxu0 %v2259
      %2277 = vmatprep.subr.bf16.mxu0 0
      %2278 = vmatpush1.bf16.msra.mxu0 %v2260
      %2279 = vmatprep.subr.bf16.mxu0 0
      %2280 = vmatpush1.bf16.msra.mxu0 %v2261
      %2281 = vmatprep.subr.bf16.mxu0 0
      %2282 = vmatpush1.bf16.msra.mxu0 %v2262
      %2283 = vmatprep.subr.bf16.mxu0 0
      %2284 = vmatpush1.bf16.msra.mxu0 %v2263
      %2285 = vmatprep.subr.bf16.mxu0 0
      %2286 = vmatpush1.bf16.msra.mxu0 %v2264
      %2287 = vmatprep.subr.bf16.mxu0 0
      %2288 = vmatpush1.bf16.msra.mxu0 %v2265
      %2289 = vmatprep.subr.bf16.mxu0 0
      %2290 = vmatpush1.bf16.msra.mxu0 %v2266
      %2291 = vmatprep.subr.bf16.mxu0 0
      %2292 = vmatpush1.bf16.msra.mxu0 0
      %2293 = vmatprep.subr.bf16.mxu0 0
      %2294 = vmatpush1.bf16.msra.mxu0 0
      %2295 = vmatprep.subr.bf16.mxu0 0
      %2296 = vmatpush1.bf16.msra.mxu0 0
      %2297 = vmatprep.subr.bf16.mxu0 0
      %2298 = vmatpush1.bf16.msra.mxu0 0
      %2299 = vmatprep.subr.bf16.mxu0 0
      %2300 = vmatpush1.bf16.msra.mxu0 0
      %2301 = vmatprep.subr.bf16.mxu0 0
      %2302 = vmatpush1.bf16.msra.mxu0 0
      %2303 = vmatprep.subr.bf16.mxu0 0
      %2304 = vmatpush1.bf16.msra.mxu0 0
      %2305 = vmatprep.subr.bf16.mxu0 0
      %2306 = vmatpush1.bf16.msra.mxu0 0
      %2307 = vmatprep.mubr.bf16.mxu0 0
      %2308 = vmatmul.mubr.bf16.gmra.mrb[0].mxu0 %v2219
      %v2309 = vpop.f32.mrb[0].mxu0
      %v2310 = vadd.f32 0.0, %v2309
      %v2311 = vpop.f32.mrb[0].mxu0
      %v2312 = vpop.f32.mrb[0].mxu0
      %v2313 = vadd.f32 0.0, %v2312
      %v2314 = vpop.f32.mrb[0].mxu0
      %2315 = vmatprep.mubr.bf16.mxu0 0
      %2316 = vmatmul.mubr.bf16.gmra.mrb[0].mxu0 %v2220
      %v2317 = vpop.f32.mrb[0].mxu0
      %v2318 = vadd.f32 0.0, %v2317
      %v2319 = vpop.f32.mrb[0].mxu0
      %v2320 = vpop.f32.mrb[0].mxu0
      %v2321 = vadd.f32 0.0, %v2320
      %v2322 = vpop.f32.mrb[0].mxu0
      %2323 = vmatprep.mubr.bf16.mxu0 0
      %2324 = vmatmul.mubr.bf16.gmra.mrb[0].mxu0 %v2221
      %v2325 = vpop.f32.mrb[0].mxu0
      %v2326 = vadd.f32 0.0, %v2325
      %v2327 = vpop.f32.mrb[0].mxu0
      %v2328 = vpop.f32.mrb[0].mxu0
      %v2329 = vadd.f32 0.0, %v2328
      %v2330 = vpop.f32.mrb[0].mxu0
      %2331 = vmatprep.mubr.bf16.mxu0 0
      %2332 = vmatmul.mubr.bf16.gmra.mrb[0].mxu0 %v2222
      %v2333 = vpop.f32.mrb[0].mxu0
      %v2334 = vadd.f32 0.0, %v2333
      %v2335 = vpop.f32.mrb[0].mxu0
      %v2336 = vpop.f32.mrb[0].mxu0
      %v2337 = vadd.f32 0.0, %v2336
      %v2338 = vpop.f32.mrb[0].mxu0
      %2339 = vdwg.mxu0
      %v2340 = vadd.f32 %v2074, %v2310
      %v2341 = vadd.f32 %v2075, %v2313
      %v2342 = vadd.f32 %v2076, %v2318
      %v2343 = vadd.f32 %v2077, %v2321
      %v2344 = vadd.f32 %v2078, %v2326
      %v2345 = vadd.f32 %v2079, %v2329
      %v2346 = vadd.f32 %v2080, %v2334
      %v2347 = vadd.f32 %v2081, %v2337
      %v2356 = vrot.slane %v1900, 5
      %v2357 = vrot.slane %v2356, 4
      %v2358 = vrot.slane %v1901, 5
      %v2359 = vsel %vm809, %v2357, %v2358
      %v2360 = vrot.slane %v1902, 5
      %v2361 = vrot.slane %v2360, 4
      %v2362 = vrot.slane %v1903, 5
      %v2363 = vsel %vm809, %v2361, %v2362
      %v2364 = vrot.slane %v1904, 5
      %v2365 = vrot.slane %v2364, 4
      %v2366 = vrot.slane %v1905, 5
      %v2367 = vsel %vm809, %v2365, %v2366
      %v2368 = vrot.slane %v1906, 5
      %v2369 = vrot.slane %v2368, 4
      %v2370 = vrot.slane %v1907, 5
      %v2371 = vsel %vm809, %v2369, %v2370
      %v2372 = vrot.slane %v1908, 5
      %v2373 = vrot.slane %v2372, 4
      %v2374 = vrot.slane %v1909, 5
      %v2375 = vsel %vm809, %v2373, %v2374
      %v2376 = vrot.slane %v1910, 5
      %v2377 = vrot.slane %v2376, 4
      %v2378 = vrot.slane %v1911, 5
      %v2379 = vsel %vm809, %v2377, %v2378
      %v2380 = vrot.slane %v1912, 5
      %v2381 = vrot.slane %v2380, 4
      %v2382 = vrot.slane %v1913, 5
      %v2383 = vsel %vm809, %v2381, %v2382
      %v2384 = vrot.slane %v1914, 5
      %v2385 = vrot.slane %v2384, 4
      %v2386 = vrot.slane %v1915, 5
      %v2387 = vsel %vm809, %v2385, %v2386
      %s2388 = scalar_lea.vmem %s3, 704
      %v2389 = vld [vmem:[%s2388] sm:$0xf]
      %v2390 = vld [vmem:[%s2388 + $0x4] sm:$0xf]
      %v2391 = vld [vmem:[%s2388 + $0x8] sm:$0xf]
      %v2392 = vld [vmem:[%s2388 + $0xc] sm:$0xf]
      %v2393 = vld [vmem:[%s2388 + $0x10] sm:$0xf]
      %v2394 = vld [vmem:[%s2388 + $0x14] sm:$0xf]
      %v2395 = vld [vmem:[%s2388 + $0x18] sm:$0xf]
      %v2396 = vld [vmem:[%s2388 + $0x1c] sm:$0xf]
      %v2397 = vld [vmem:[%s2388 + $0x20] sm:$0xf]
      %v2398 = vld [vmem:[%s2388 + $0x24] sm:$0xf]
      %v2399 = vld [vmem:[%s2388 + $0x28] sm:$0xf]
      %v2400 = vld [vmem:[%s2388 + $0x2c] sm:$0xf]
      %v2401 = vld [vmem:[%s2388 + $0x30] sm:$0xf]
      %v2402 = vld [vmem:[%s2388 + $0x34] sm:$0xf]
      %v2403 = vld [vmem:[%s2388 + $0x38] sm:$0xf]
      %v2404 = vld [vmem:[%s2388 + $0x3c] sm:$0xf]
      %v2405 = vunpack.c.l.b16 %v2359
      %v2406 = vunpack.c.l.b16 %v2363
      %v2407 = vunpack.c.l.b16 %v2367
      %v2408 = vunpack.c.l.b16 %v2371
      %v2409 = vunpack.c.l.b16 %v2375
      %v2410 = vunpack.c.l.b16 %v2379
      %v2411 = vunpack.c.l.b16 %v2383
      %v2412 = vunpack.c.l.b16 %v2387
      %v2413 = vpack.c.b16 %v2406, %v2405
      %v2414 = vpack.c.b16 %v2408, %v2407
      %v2415 = vpack.c.b16 %v2410, %v2409
      %v2416 = vpack.c.b16 %v2412, %v2411
      %v2437 = vunpack.c.l.b16 %v2389
      %v2438 = vunpack.c.l.b16 %v2390
      %v2439 = vunpack.c.l.b16 %v2391
      %v2440 = vunpack.c.l.b16 %v2392
      %v2441 = vunpack.c.l.b16 %v2393
      %v2442 = vunpack.c.l.b16 %v2394
      %v2443 = vunpack.c.l.b16 %v2395
      %v2444 = vunpack.c.l.b16 %v2396
      %v2445 = vunpack.c.l.b16 %v2397
      %v2446 = vunpack.c.l.b16 %v2398
      %v2447 = vunpack.c.l.b16 %v2399
      %v2448 = vunpack.c.l.b16 %v2400
      %v2449 = vunpack.c.l.b16 %v2401
      %v2450 = vunpack.c.l.b16 %v2402
      %v2451 = vunpack.c.l.b16 %v2403
      %v2452 = vunpack.c.l.b16 %v2404
      %v2453 = vpack.c.b16 %v2438, %v2437
      %v2454 = vpack.c.b16 %v2440, %v2439
      %v2455 = vpack.c.b16 %v2442, %v2441
      %v2456 = vpack.c.b16 %v2444, %v2443
      %v2457 = vpack.c.b16 %v2446, %v2445
      %v2458 = vpack.c.b16 %v2448, %v2447
      %v2459 = vpack.c.b16 %v2450, %v2449
      %v2460 = vpack.c.b16 %v2452, %v2451
      %2469 = vmatprep.subr.bf16.mxu0 0
      %2470 = vmatpush1.bf16.msra.mxu0 %v2453
      %2471 = vmatprep.subr.bf16.mxu0 0
      %2472 = vmatpush1.bf16.msra.mxu0 %v2454
      %2473 = vmatprep.subr.bf16.mxu0 0
      %2474 = vmatpush1.bf16.msra.mxu0 %v2455
      %2475 = vmatprep.subr.bf16.mxu0 0
      %2476 = vmatpush1.bf16.msra.mxu0 %v2456
      %2477 = vmatprep.subr.bf16.mxu0 0
      %2478 = vmatpush1.bf16.msra.mxu0 %v2457
      %2479 = vmatprep.subr.bf16.mxu0 0
      %2480 = vmatpush1.bf16.msra.mxu0 %v2458
      %2481 = vmatprep.subr.bf16.mxu0 0
      %2482 = vmatpush1.bf16.msra.mxu0 %v2459
      %2483 = vmatprep.subr.bf16.mxu0 0
      %2484 = vmatpush1.bf16.msra.mxu0 %v2460
      %2485 = vmatprep.subr.bf16.mxu0 0
      %2486 = vmatpush1.bf16.msra.mxu0 0
      %2487 = vmatprep.subr.bf16.mxu0 0
      %2488 = vmatpush1.bf16.msra.mxu0 0
      %2489 = vmatprep.subr.bf16.mxu0 0
      %2490 = vmatpush1.bf16.msra.mxu0 0
      %2491 = vmatprep.subr.bf16.mxu0 0
      %2492 = vmatpush1.bf16.msra.mxu0 0
      %2493 = vmatprep.subr.bf16.mxu0 0
      %2494 = vmatpush1.bf16.msra.mxu0 0
      %2495 = vmatprep.subr.bf16.mxu0 0
      %2496 = vmatpush1.bf16.msra.mxu0 0
      %2497 = vmatprep.subr.bf16.mxu0 0
      %2498 = vmatpush1.bf16.msra.mxu0 0
      %2499 = vmatprep.subr.bf16.mxu0 0
      %2500 = vmatpush1.bf16.msra.mxu0 0
      %2501 = vmatprep.mubr.bf16.mxu0 0
      %2502 = vmatmul.mubr.bf16.gmra.mrb[0].mxu0 %v2413
      %v2503 = vpop.f32.mrb[0].mxu0
      %v2504 = vadd.f32 0.0, %v2503
      %v2505 = vpop.f32.mrb[0].mxu0
      %v2506 = vpop.f32.mrb[0].mxu0
      %v2507 = vadd.f32 0.0, %v2506
      %v2508 = vpop.f32.mrb[0].mxu0
      %2509 = vmatprep.mubr.bf16.mxu0 0
      %2510 = vmatmul.mubr.bf16.gmra.mrb[0].mxu0 %v2414
      %v2511 = vpop.f32.mrb[0].mxu0
      %v2512 = vadd.f32 0.0, %v2511
      %v2513 = vpop.f32.mrb[0].mxu0
      %v2514 = vpop.f32.mrb[0].mxu0
      %v2515 = vadd.f32 0.0, %v2514
      %v2516 = vpop.f32.mrb[0].mxu0
      %2517 = vmatprep.mubr.bf16.mxu0 0
      %2518 = vmatmul.mubr.bf16.gmra.mrb[0].mxu0 %v2415
      %v2519 = vpop.f32.mrb[0].mxu0
      %v2520 = vadd.f32 0.0, %v2519
      %v2521 = vpop.f32.mrb[0].mxu0
      %v2522 = vpop.f32.mrb[0].mxu0
      %v2523 = vadd.f32 0.0, %v2522
      %v2524 = vpop.f32.mrb[0].mxu0
      %2525 = vmatprep.mubr.bf16.mxu0 0
      %2526 = vmatmul.mubr.bf16.gmra.mrb[0].mxu0 %v2416
      %v2527 = vpop.f32.mrb[0].mxu0
      %v2528 = vadd.f32 0.0, %v2527
      %v2529 = vpop.f32.mrb[0].mxu0
      %v2530 = vpop.f32.mrb[0].mxu0
      %v2531 = vadd.f32 0.0, %v2530
      %v2532 = vpop.f32.mrb[0].mxu0
      %2533 = vdwg.mxu0
      %v2534 = vadd.f32 %v2340, %v2504
      %v2535 = vadd.f32 %v2341, %v2507
      %v2536 = vadd.f32 %v2342, %v2512
      %v2537 = vadd.f32 %v2343, %v2515
      %v2538 = vadd.f32 %v2344, %v2520
      %v2539 = vadd.f32 %v2345, %v2523
      %v2540 = vadd.f32 %v2346, %v2528
      %v2541 = vadd.f32 %v2347, %v2531
      %s2542 = scalar_lea.vmem %s3, 768
      %v2543 = vld [vmem:[%s2542] sm:$0xf]
      %v2544 = vld [vmem:[%s2542 + $0x4] sm:$0xf]
      %v2545 = vld [vmem:[%s2542 + $0x8] sm:$0xf]
      %v2546 = vld [vmem:[%s2542 + $0xc] sm:$0xf]
      %v2547 = vld [vmem:[%s2542 + $0x10] sm:$0xf]
      %v2548 = vld [vmem:[%s2542 + $0x14] sm:$0xf]
      %v2549 = vld [vmem:[%s2542 + $0x18] sm:$0xf]
      %v2550 = vld [vmem:[%s2542 + $0x1c] sm:$0xf]
      %v2551 = vld [vmem:[%s2542 + $0x20] sm:$0xf]
      %v2552 = vld [vmem:[%s2542 + $0x24] sm:$0xf]
      %v2553 = vld [vmem:[%s2542 + $0x28] sm:$0xf]
      %v2554 = vld [vmem:[%s2542 + $0x2c] sm:$0xf]
      %v2555 = vld [vmem:[%s2542 + $0x30] sm:$0xf]
      %v2556 = vld [vmem:[%s2542 + $0x34] sm:$0xf]
      %v2557 = vld [vmem:[%s2542 + $0x38] sm:$0xf]
      %v2558 = vld [vmem:[%s2542 + $0x3c] sm:$0xf]
      %v2560 = vunpack.c.l.b16 %v1916
      %v2561 = vpack.c.b16 %v1947, %v1946
      %v2562 = vpack.c.b16 %v1949, %v1948
      %v2563 = vpack.c.b16 %v1951, %v1950
      %v2564 = vpack.c.b16 %v2560, %v1952
      %v2585 = vunpack.c.l.b16 %v2543
      %v2586 = vunpack.c.l.b16 %v2544
      %v2587 = vunpack.c.l.b16 %v2545
      %v2588 = vunpack.c.l.b16 %v2546
      %v2589 = vunpack.c.l.b16 %v2547
      %v2590 = vunpack.c.l.b16 %v2548
      %v2591 = vunpack.c.l.b16 %v2549
      %v2592 = vunpack.c.l.b16 %v2550
      %v2593 = vunpack.c.l.b16 %v2551
      %v2594 = vunpack.c.l.b16 %v2552
      %v2595 = vunpack.c.l.b16 %v2553
      %v2596 = vunpack.c.l.b16 %v2554
      %v2597 = vunpack.c.l.b16 %v2555
      %v2598 = vunpack.c.l.b16 %v2556
      %v2599 = vunpack.c.l.b16 %v2557
      %v2600 = vunpack.c.l.b16 %v2558
      %v2601 = vpack.c.b16 %v2586, %v2585
      %v2602 = vpack.c.b16 %v2588, %v2587
      %v2603 = vpack.c.b16 %v2590, %v2589
      %v2604 = vpack.c.b16 %v2592, %v2591
      %v2605 = vpack.c.b16 %v2594, %v2593
      %v2606 = vpack.c.b16 %v2596, %v2595
      %v2607 = vpack.c.b16 %v2598, %v2597
      %v2608 = vpack.c.b16 %v2600, %v2599
      %2617 = vmatprep.subr.bf16.mxu0 0
      %2618 = vmatpush1.bf16.msra.mxu0 %v2601
      %2619 = vmatprep.subr.bf16.mxu0 0
      %2620 = vmatpush1.bf16.msra.mxu0 %v2602
      %2621 = vmatprep.subr.bf16.mxu0 0
      %2622 = vmatpush1.bf16.msra.mxu0 %v2603
      %2623 = vmatprep.subr.bf16.mxu0 0
      %2624 = vmatpush1.bf16.msra.mxu0 %v2604
      %2625 = vmatprep.subr.bf16.mxu0 0
      %2626 = vmatpush1.bf16.msra.mxu0 %v2605
      %2627 = vmatprep.subr.bf16.mxu0 0
      %2628 = vmatpush1.bf16.msra.mxu0 %v2606
      %2629 = vmatprep.subr.bf16.mxu0 0
      %2630 = vmatpush1.bf16.msra.mxu0 %v2607
      %2631 = vmatprep.subr.bf16.mxu0 0
      %2632 = vmatpush1.bf16.msra.mxu0 %v2608
      %2633 = vmatprep.subr.bf16.mxu0 0
      %2634 = vmatpush1.bf16.msra.mxu0 0
      %2635 = vmatprep.subr.bf16.mxu0 0
      %2636 = vmatpush1.bf16.msra.mxu0 0
      %2637 = vmatprep.subr.bf16.mxu0 0
      %2638 = vmatpush1.bf16.msra.mxu0 0
      %2639 = vmatprep.subr.bf16.mxu0 0
      %2640 = vmatpush1.bf16.msra.mxu0 0
      %2641 = vmatprep.subr.bf16.mxu0 0
      %2642 = vmatpush1.bf16.msra.mxu0 0
      %2643 = vmatprep.subr.bf16.mxu0 0
      %2644 = vmatpush1.bf16.msra.mxu0 0
      %2645 = vmatprep.subr.bf16.mxu0 0
      %2646 = vmatpush1.bf16.msra.mxu0 0
      %2647 = vmatprep.subr.bf16.mxu0 0
      %2648 = vmatpush1.bf16.msra.mxu0 0
      %2649 = vmatprep.mubr.bf16.mxu0 0
      %2650 = vmatmul.mubr.bf16.gmra.mrb[0].mxu0 %v2561
      %v2651 = vpop.f32.mrb[0].mxu0
      %v2652 = vadd.f32 0.0, %v2651
      %v2653 = vpop.f32.mrb[0].mxu0
      %v2654 = vpop.f32.mrb[0].mxu0
      %v2655 = vadd.f32 0.0, %v2654
      %v2656 = vpop.f32.mrb[0].mxu0
      %2657 = vmatprep.mubr.bf16.mxu0 0
      %2658 = vmatmul.mubr.bf16.gmra.mrb[0].mxu0 %v2562
      %v2659 = vpop.f32.mrb[0].mxu0
      %v2660 = vadd.f32 0.0, %v2659
      %v2661 = vpop.f32.mrb[0].mxu0
      %v2662 = vpop.f32.mrb[0].mxu0
      %v2663 = vadd.f32 0.0, %v2662
      %v2664 = vpop.f32.mrb[0].mxu0
      %2665 = vmatprep.mubr.bf16.mxu0 0
      %2666 = vmatmul.mubr.bf16.gmra.mrb[0].mxu0 %v2563
      %v2667 = vpop.f32.mrb[0].mxu0
      %v2668 = vadd.f32 0.0, %v2667
      %v2669 = vpop.f32.mrb[0].mxu0
      %v2670 = vpop.f32.mrb[0].mxu0
      %v2671 = vadd.f32 0.0, %v2670
      %v2672 = vpop.f32.mrb[0].mxu0
      %2673 = vmatprep.mubr.bf16.mxu0 0
      %2674 = vmatmul.mubr.bf16.gmra.mrb[0].mxu0 %v2564
      %v2675 = vpop.f32.mrb[0].mxu0
      %v2676 = vadd.f32 0.0, %v2675
      %v2677 = vpop.f32.mrb[0].mxu0
      %v2678 = vpop.f32.mrb[0].mxu0
      %v2679 = vadd.f32 0.0, %v2678
      %v2680 = vpop.f32.mrb[0].mxu0
      %2681 = vdwg.mxu0
      %v2682 = vadd.f32 %v2534, %v2652
      %v2683 = vadd.f32 %v2535, %v2655
      %v2684 = vadd.f32 %v2536, %v2660
      %v2685 = vadd.f32 %v2537, %v2663
      %v2686 = vadd.f32 %v2538, %v2668
      %v2687 = vadd.f32 %v2539, %v2671
      %v2688 = vadd.f32 %v2540, %v2676
      %v2689 = vadd.f32 %v2541, %v2679
      %v2691 = vshrl.u32 %v1916, 16
      %v2693 = vrot.slane %v2691, 4
      %v2694 = vshll.u32 %v1916, 16
      %v2696 = vrot.slane %v2694, 5
      %v2697 = vor.u32 %v2693, %v2696
      %v2698 = vrot.slane %v2697, 4
      %v2700 = vshll.u32 %v1917, 16
      %v2702 = vrot.slane %v2700, 5
      %v2703 = vsel %vm403, %v2698, %v2702
      %s2704 = scalar_lea.vmem %s3, 832
      %v2705 = vld [vmem:[%s2704] sm:$0xf]
      %v2706 = vld [vmem:[%s2704 + $0x4] sm:$0xf]
      %v2707 = vld [vmem:[%s2704 + $0x8] sm:$0xf]
      %v2708 = vld [vmem:[%s2704 + $0xc] sm:$0xf]
      %v2709 = vld [vmem:[%s2704 + $0x10] sm:$0xf]
      %v2710 = vld [vmem:[%s2704 + $0x14] sm:$0xf]
      %v2711 = vld [vmem:[%s2704 + $0x18] sm:$0xf]
      %v2712 = vld [vmem:[%s2704 + $0x1c] sm:$0xf]
      %v2713 = vld [vmem:[%s2704 + $0x20] sm:$0xf]
      %v2714 = vld [vmem:[%s2704 + $0x24] sm:$0xf]
      %v2715 = vld [vmem:[%s2704 + $0x28] sm:$0xf]
      %v2716 = vld [vmem:[%s2704 + $0x2c] sm:$0xf]
      %v2717 = vld [vmem:[%s2704 + $0x30] sm:$0xf]
      %v2718 = vld [vmem:[%s2704 + $0x34] sm:$0xf]
      %v2719 = vld [vmem:[%s2704 + $0x38] sm:$0xf]
      %v2720 = vld [vmem:[%s2704 + $0x3c] sm:$0xf]
      %v2721 = vunpack.c.l.b16 %v2703
      %v2722 = vpack.c.b16 %v2213, %v2212
      %v2723 = vpack.c.b16 %v2215, %v2214
      %v2724 = vpack.c.b16 %v2217, %v2216
      %v2725 = vpack.c.b16 %v2721, %v2218
      %v2746 = vunpack.c.l.b16 %v2705
      %v2747 = vunpack.c.l.b16 %v2706
      %v2748 = vunpack.c.l.b16 %v2707
      %v2749 = vunpack.c.l.b16 %v2708
      %v2750 = vunpack.c.l.b16 %v2709
      %v2751 = vunpack.c.l.b16 %v2710
      %v2752 = vunpack.c.l.b16 %v2711
      %v2753 = vunpack.c.l.b16 %v2712
      %v2754 = vunpack.c.l.b16 %v2713
      %v2755 = vunpack.c.l.b16 %v2714
      %v2756 = vunpack.c.l.b16 %v2715
      %v2757 = vunpack.c.l.b16 %v2716
      %v2758 = vunpack.c.l.b16 %v2717
      %v2759 = vunpack.c.l.b16 %v2718
      %v2760 = vunpack.c.l.b16 %v2719
      %v2761 = vunpack.c.l.b16 %v2720
      %v2762 = vpack.c.b16 %v2747, %v2746
      %v2763 = vpack.c.b16 %v2749, %v2748
      %v2764 = vpack.c.b16 %v2751, %v2750
      %v2765 = vpack.c.b16 %v2753, %v2752
      %v2766 = vpack.c.b16 %v2755, %v2754
      %v2767 = vpack.c.b16 %v2757, %v2756
      %v2768 = vpack.c.b16 %v2759, %v2758
      %v2769 = vpack.c.b16 %v2761, %v2760
      %2778 = vmatprep.subr.bf16.mxu0 0
      %2779 = vmatpush1.bf16.msra.mxu0 %v2762
      %2780 = vmatprep.subr.bf16.mxu0 0
      %2781 = vmatpush1.bf16.msra.mxu0 %v2763
      %2782 = vmatprep.subr.bf16.mxu0 0
      %2783 = vmatpush1.bf16.msra.mxu0 %v2764
      %2784 = vmatprep.subr.bf16.mxu0 0
      %2785 = vmatpush1.bf16.msra.mxu0 %v2765
      %2786 = vmatprep.subr.bf16.mxu0 0
      %2787 = vmatpush1.bf16.msra.mxu0 %v2766
      %2788 = vmatprep.subr.bf16.mxu0 0
      %2789 = vmatpush1.bf16.msra.mxu0 %v2767
      %2790 = vmatprep.subr.bf16.mxu0 0
      %2791 = vmatpush1.bf16.msra.mxu0 %v2768
      %2792 = vmatprep.subr.bf16.mxu0 0
      %2793 = vmatpush1.bf16.msra.mxu0 %v2769
      %2794 = vmatprep.subr.bf16.mxu0 0
      %2795 = vmatpush1.bf16.msra.mxu0 0
      %2796 = vmatprep.subr.bf16.mxu0 0
      %2797 = vmatpush1.bf16.msra.mxu0 0
      %2798 = vmatprep.subr.bf16.mxu0 0
      %2799 = vmatpush1.bf16.msra.mxu0 0
      %2800 = vmatprep.subr.bf16.mxu0 0
      %2801 = vmatpush1.bf16.msra.mxu0 0
      %2802 = vmatprep.subr.bf16.mxu0 0
      %2803 = vmatpush1.bf16.msra.mxu0 0
      %2804 = vmatprep.subr.bf16.mxu0 0
      %2805 = vmatpush1.bf16.msra.mxu0 0
      %2806 = vmatprep.subr.bf16.mxu0 0
      %2807 = vmatpush1.bf16.msra.mxu0 0
      %2808 = vmatprep.subr.bf16.mxu0 0
      %2809 = vmatpush1.bf16.msra.mxu0 0
      %2810 = vmatprep.mubr.bf16.mxu0 0
      %2811 = vmatmul.mubr.bf16.gmra.mrb[0].mxu0 %v2722
      %v2812 = vpop.f32.mrb[0].mxu0
      %v2813 = vadd.f32 0.0, %v2812
      %v2814 = vpop.f32.mrb[0].mxu0
      %v2815 = vpop.f32.mrb[0].mxu0
      %v2816 = vadd.f32 0.0, %v2815
      %v2817 = vpop.f32.mrb[0].mxu0
      %2818 = vmatprep.mubr.bf16.mxu0 0
      %2819 = vmatmul.mubr.bf16.gmra.mrb[0].mxu0 %v2723
      %v2820 = vpop.f32.mrb[0].mxu0
      %v2821 = vadd.f32 0.0, %v2820
      %v2822 = vpop.f32.mrb[0].mxu0
      %v2823 = vpop.f32.mrb[0].mxu0
      %v2824 = vadd.f32 0.0, %v2823
      %v2825 = vpop.f32.mrb[0].mxu0
      %2826 = vmatprep.mubr.bf16.mxu0 0
      %2827 = vmatmul.mubr.bf16.gmra.mrb[0].mxu0 %v2724
      %v2828 = vpop.f32.mrb[0].mxu0
      %v2829 = vadd.f32 0.0, %v2828
      %v2830 = vpop.f32.mrb[0].mxu0
      %v2831 = vpop.f32.mrb[0].mxu0
      %v2832 = vadd.f32 0.0, %v2831
      %v2833 = vpop.f32.mrb[0].mxu0
      %2834 = vmatprep.mubr.bf16.mxu0 0
      %2835 = vmatmul.mubr.bf16.gmra.mrb[0].mxu0 %v2725
      %v2836 = vpop.f32.mrb[0].mxu0
      %v2837 = vadd.f32 0.0, %v2836
      %v2838 = vpop.f32.mrb[0].mxu0
      %v2839 = vpop.f32.mrb[0].mxu0
      %v2840 = vadd.f32 0.0, %v2839
      %v2841 = vpop.f32.mrb[0].mxu0
      %2842 = vdwg.mxu0
      %v2843 = vadd.f32 %v2682, %v2813
      %v2844 = vadd.f32 %v2683, %v2816
      %v2845 = vadd.f32 %v2684, %v2821
      %v2846 = vadd.f32 %v2685, %v2824
      %v2847 = vadd.f32 %v2686, %v2829
      %v2848 = vadd.f32 %v2687, %v2832
      %v2849 = vadd.f32 %v2688, %v2837
      %v2850 = vadd.f32 %v2689, %v2840
      %v2852 = vrot.slane %v1916, 5
      %v2853 = vrot.slane %v2852, 4
      %v2854 = vrot.slane %v1917, 5
      %v2855 = vsel %vm809, %v2853, %v2854
      %s2856 = scalar_lea.vmem %s3, 896
      %v2857 = vld [vmem:[%s2856] sm:$0xf]
      %v2858 = vld [vmem:[%s2856 + $0x4] sm:$0xf]
      %v2859 = vld [vmem:[%s2856 + $0x8] sm:$0xf]
      %v2860 = vld [vmem:[%s2856 + $0xc] sm:$0xf]
      %v2861 = vld [vmem:[%s2856 + $0x10] sm:$0xf]
      %v2862 = vld [vmem:[%s2856 + $0x14] sm:$0xf]
      %v2863 = vld [vmem:[%s2856 + $0x18] sm:$0xf]
      %v2864 = vld [vmem:[%s2856 + $0x1c] sm:$0xf]
      %v2865 = vld [vmem:[%s2856 + $0x20] sm:$0xf]
      %v2866 = vld [vmem:[%s2856 + $0x24] sm:$0xf]
      %v2867 = vld [vmem:[%s2856 + $0x28] sm:$0xf]
      %v2868 = vld [vmem:[%s2856 + $0x2c] sm:$0xf]
      %v2869 = vld [vmem:[%s2856 + $0x30] sm:$0xf]
      %v2870 = vld [vmem:[%s2856 + $0x34] sm:$0xf]
      %v2871 = vld [vmem:[%s2856 + $0x38] sm:$0xf]
      %v2872 = vld [vmem:[%s2856 + $0x3c] sm:$0xf]
      %v2873 = vunpack.c.l.b16 %v2855
      %v2874 = vpack.c.b16 %v2407, %v2406
      %v2875 = vpack.c.b16 %v2409, %v2408
      %v2876 = vpack.c.b16 %v2411, %v2410
      %v2877 = vpack.c.b16 %v2873, %v2412
      %v2898 = vunpack.c.l.b16 %v2857
      %v2899 = vunpack.c.l.b16 %v2858
      %v2900 = vunpack.c.l.b16 %v2859
      %v2901 = vunpack.c.l.b16 %v2860
      %v2902 = vunpack.c.l.b16 %v2861
      %v2903 = vunpack.c.l.b16 %v2862
      %v2904 = vunpack.c.l.b16 %v2863
      %v2905 = vunpack.c.l.b16 %v2864
      %v2906 = vunpack.c.l.b16 %v2865
      %v2907 = vunpack.c.l.b16 %v2866
      %v2908 = vunpack.c.l.b16 %v2867
      %v2909 = vunpack.c.l.b16 %v2868
      %v2910 = vunpack.c.l.b16 %v2869
      %v2911 = vunpack.c.l.b16 %v2870
      %v2912 = vunpack.c.l.b16 %v2871
      %v2913 = vunpack.c.l.b16 %v2872
      %v2914 = vpack.c.b16 %v2899, %v2898
      %v2915 = vpack.c.b16 %v2901, %v2900
      %v2916 = vpack.c.b16 %v2903, %v2902
      %v2917 = vpack.c.b16 %v2905, %v2904
      %v2918 = vpack.c.b16 %v2907, %v2906
      %v2919 = vpack.c.b16 %v2909, %v2908
      %v2920 = vpack.c.b16 %v2911, %v2910
      %v2921 = vpack.c.b16 %v2913, %v2912
      %2930 = vmatprep.subr.bf16.mxu0 0
      %2931 = vmatpush1.bf16.msra.mxu0 %v2914
      %2932 = vmatprep.subr.bf16.mxu0 0
      %2933 = vmatpush1.bf16.msra.mxu0 %v2915
      %2934 = vmatprep.subr.bf16.mxu0 0
      %2935 = vmatpush1.bf16.msra.mxu0 %v2916
      %2936 = vmatprep.subr.bf16.mxu0 0
      %2937 = vmatpush1.bf16.msra.mxu0 %v2917
      %2938 = vmatprep.subr.bf16.mxu0 0
      %2939 = vmatpush1.bf16.msra.mxu0 %v2918
      %2940 = vmatprep.subr.bf16.mxu0 0
      %2941 = vmatpush1.bf16.msra.mxu0 %v2919
      %2942 = vmatprep.subr.bf16.mxu0 0
      %2943 = vmatpush1.bf16.msra.mxu0 %v2920
      %2944 = vmatprep.subr.bf16.mxu0 0
      %2945 = vmatpush1.bf16.msra.mxu0 %v2921
      %2946 = vmatprep.subr.bf16.mxu0 0
      %2947 = vmatpush1.bf16.msra.mxu0 0
      %2948 = vmatprep.subr.bf16.mxu0 0
      %2949 = vmatpush1.bf16.msra.mxu0 0
      %2950 = vmatprep.subr.bf16.mxu0 0
      %2951 = vmatpush1.bf16.msra.mxu0 0
      %2952 = vmatprep.subr.bf16.mxu0 0
      %2953 = vmatpush1.bf16.msra.mxu0 0
      %2954 = vmatprep.subr.bf16.mxu0 0
      %2955 = vmatpush1.bf16.msra.mxu0 0
      %2956 = vmatprep.subr.bf16.mxu0 0
      %2957 = vmatpush1.bf16.msra.mxu0 0
      %2958 = vmatprep.subr.bf16.mxu0 0
      %2959 = vmatpush1.bf16.msra.mxu0 0
      %2960 = vmatprep.subr.bf16.mxu0 0
      %2961 = vmatpush1.bf16.msra.mxu0 0
      %2962 = vmatprep.mubr.bf16.mxu0 0
      %2963 = vmatmul.mubr.bf16.gmra.mrb[0].mxu0 %v2874
      %v2964 = vpop.f32.mrb[0].mxu0
      %v2965 = vadd.f32 0.0, %v2964
      %v2966 = vpop.f32.mrb[0].mxu0
      %v2967 = vpop.f32.mrb[0].mxu0
      %v2968 = vadd.f32 0.0, %v2967
      %v2969 = vpop.f32.mrb[0].mxu0
      %2970 = vmatprep.mubr.bf16.mxu0 0
      %2971 = vmatmul.mubr.bf16.gmra.mrb[0].mxu0 %v2875
      %v2972 = vpop.f32.mrb[0].mxu0
      %v2973 = vadd.f32 0.0, %v2972
      %v2974 = vpop.f32.mrb[0].mxu0
      %v2975 = vpop.f32.mrb[0].mxu0
      %v2976 = vadd.f32 0.0, %v2975
      %v2977 = vpop.f32.mrb[0].mxu0
      %2978 = vmatprep.mubr.bf16.mxu0 0
      %2979 = vmatmul.mubr.bf16.gmra.mrb[0].mxu0 %v2876
      %v2980 = vpop.f32.mrb[0].mxu0
      %v2981 = vadd.f32 0.0, %v2980
      %v2982 = vpop.f32.mrb[0].mxu0
      %v2983 = vpop.f32.mrb[0].mxu0
      %v2984 = vadd.f32 0.0, %v2983
      %v2985 = vpop.f32.mrb[0].mxu0
      %2986 = vmatprep.mubr.bf16.mxu0 0
      %2987 = vmatmul.mubr.bf16.gmra.mrb[0].mxu0 %v2877
      %v2988 = vpop.f32.mrb[0].mxu0
      %v2989 = vadd.f32 0.0, %v2988
      %v2990 = vpop.f32.mrb[0].mxu0
      %v2991 = vpop.f32.mrb[0].mxu0
      %v2992 = vadd.f32 0.0, %v2991
      %v2993 = vpop.f32.mrb[0].mxu0
      %2994 = vdwg.mxu0
      %v2995 = vadd.f32 %v2843, %v2965
      %v2996 = vadd.f32 %v2844, %v2968
      %v2997 = vadd.f32 %v2845, %v2973
      %v2998 = vadd.f32 %v2846, %v2976
      %v2999 = vadd.f32 %v2847, %v2981
      %v3000 = vadd.f32 %v2848, %v2984
      %v3001 = vadd.f32 %v2849, %v2989
      %v3002 = vadd.f32 %v2850, %v2992
      %s3003 = scalar_lea.vmem %s3, 960
      %v3004 = vld [vmem:[%s3003] sm:$0xf]
      %v3005 = vld [vmem:[%s3003 + $0x4] sm:$0xf]
      %v3006 = vld [vmem:[%s3003 + $0x8] sm:$0xf]
      %v3007 = vld [vmem:[%s3003 + $0xc] sm:$0xf]
      %v3008 = vld [vmem:[%s3003 + $0x10] sm:$0xf]
      %v3009 = vld [vmem:[%s3003 + $0x14] sm:$0xf]
      %v3010 = vld [vmem:[%s3003 + $0x18] sm:$0xf]
      %v3011 = vld [vmem:[%s3003 + $0x1c] sm:$0xf]
      %v3012 = vld [vmem:[%s3003 + $0x20] sm:$0xf]
      %v3013 = vld [vmem:[%s3003 + $0x24] sm:$0xf]
      %v3014 = vld [vmem:[%s3003 + $0x28] sm:$0xf]
      %v3015 = vld [vmem:[%s3003 + $0x2c] sm:$0xf]
      %v3016 = vld [vmem:[%s3003 + $0x30] sm:$0xf]
      %v3017 = vld [vmem:[%s3003 + $0x34] sm:$0xf]
      %v3018 = vld [vmem:[%s3003 + $0x38] sm:$0xf]
      %v3019 = vld [vmem:[%s3003 + $0x3c] sm:$0xf]
      %v3021 = vunpack.c.l.b16 %v1918
      %v3022 = vpack.c.b16 %v3021, %v2560
      %v3040 = vunpack.c.l.b16 %v3004
      %v3041 = vunpack.c.l.b16 %v3005
      %v3042 = vunpack.c.l.b16 %v3006
      %v3043 = vunpack.c.l.b16 %v3007
      %v3044 = vunpack.c.l.b16 %v3008
      %v3045 = vunpack.c.l.b16 %v3009
      %v3046 = vunpack.c.l.b16 %v3010
      %v3047 = vunpack.c.l.b16 %v3011
      %v3048 = vunpack.c.l.b16 %v3012
      %v3049 = vunpack.c.l.b16 %v3013
      %v3050 = vunpack.c.l.b16 %v3014
      %v3051 = vunpack.c.l.b16 %v3015
      %v3052 = vunpack.c.l.b16 %v3016
      %v3053 = vunpack.c.l.b16 %v3017
      %v3054 = vunpack.c.l.b16 %v3018
      %v3055 = vunpack.c.l.b16 %v3019
      %v3056 = vpack.c.b16 %v3041, %v3040
      %v3057 = vpack.c.b16 %v3043, %v3042
      %v3058 = vpack.c.b16 %v3045, %v3044
      %v3059 = vpack.c.b16 %v3047, %v3046
      %v3060 = vpack.c.b16 %v3049, %v3048
      %v3061 = vpack.c.b16 %v3051, %v3050
      %v3062 = vpack.c.b16 %v3053, %v3052
      %v3063 = vpack.c.b16 %v3055, %v3054
      %3072 = vmatprep.subr.bf16.mxu0 0
      %3073 = vmatpush1.bf16.msra.mxu0 %v3056
      %3074 = vmatprep.subr.bf16.mxu0 0
      %3075 = vmatpush1.bf16.msra.mxu0 %v3057
      %3076 = vmatprep.subr.bf16.mxu0 0
      %3077 = vmatpush1.bf16.msra.mxu0 %v3058
      %3078 = vmatprep.subr.bf16.mxu0 0
      %3079 = vmatpush1.bf16.msra.mxu0 %v3059
      %3080 = vmatprep.subr.bf16.mxu0 0
      %3081 = vmatpush1.bf16.msra.mxu0 %v3060
      %3082 = vmatprep.subr.bf16.mxu0 0
      %3083 = vmatpush1.bf16.msra.mxu0 %v3061
      %3084 = vmatprep.subr.bf16.mxu0 0
      %3085 = vmatpush1.bf16.msra.mxu0 %v3062
      %3086 = vmatprep.subr.bf16.mxu0 0
      %3087 = vmatpush1.bf16.msra.mxu0 %v3063
      %3088 = vmatprep.subr.bf16.mxu0 0
      %3089 = vmatpush1.bf16.msra.mxu0 0
      %3090 = vmatprep.subr.bf16.mxu0 0
      %3091 = vmatpush1.bf16.msra.mxu0 0
      %3092 = vmatprep.subr.bf16.mxu0 0
      %3093 = vmatpush1.bf16.msra.mxu0 0
      %3094 = vmatprep.subr.bf16.mxu0 0
      %3095 = vmatpush1.bf16.msra.mxu0 0
      %3096 = vmatprep.subr.bf16.mxu0 0
      %3097 = vmatpush1.bf16.msra.mxu0 0
      %3098 = vmatprep.subr.bf16.mxu0 0
      %3099 = vmatpush1.bf16.msra.mxu0 0
      %3100 = vmatprep.subr.bf16.mxu0 0
      %3101 = vmatpush1.bf16.msra.mxu0 0
      %3102 = vmatprep.subr.bf16.mxu0 0
      %3103 = vmatpush1.bf16.msra.mxu0 0
      %3104 = vmatprep.mubr.bf16.mxu0 0
      %3105 = vmatmul.mubr.bf16.gmra.mrb[0].mxu0 %v1954
      %v3106 = vpop.f32.mrb[0].mxu0
      %v3107 = vadd.f32 0.0, %v3106
      %v3108 = vpop.f32.mrb[0].mxu0
      %v3109 = vpop.f32.mrb[0].mxu0
      %v3110 = vadd.f32 0.0, %v3109
      %v3111 = vpop.f32.mrb[0].mxu0
      %3112 = vmatprep.mubr.bf16.mxu0 0
      %3113 = vmatmul.mubr.bf16.gmra.mrb[0].mxu0 %v1955
      %v3114 = vpop.f32.mrb[0].mxu0
      %v3115 = vadd.f32 0.0, %v3114
      %v3116 = vpop.f32.mrb[0].mxu0
      %v3117 = vpop.f32.mrb[0].mxu0
      %v3118 = vadd.f32 0.0, %v3117
      %v3119 = vpop.f32.mrb[0].mxu0
      %3120 = vmatprep.mubr.bf16.mxu0 0
      %3121 = vmatmul.mubr.bf16.gmra.mrb[0].mxu0 %v1956
      %v3122 = vpop.f32.mrb[0].mxu0
      %v3123 = vadd.f32 0.0, %v3122
      %v3124 = vpop.f32.mrb[0].mxu0
      %v3125 = vpop.f32.mrb[0].mxu0
      %v3126 = vadd.f32 0.0, %v3125
      %v3127 = vpop.f32.mrb[0].mxu0
      %3128 = vmatprep.mubr.bf16.mxu0 0
      %3129 = vmatmul.mubr.bf16.gmra.mrb[0].mxu0 %v3022
      %v3130 = vpop.f32.mrb[0].mxu0
      %v3131 = vadd.f32 0.0, %v3130
      %v3132 = vpop.f32.mrb[0].mxu0
      %v3133 = vpop.f32.mrb[0].mxu0
      %v3134 = vadd.f32 0.0, %v3133
      %v3135 = vpop.f32.mrb[0].mxu0
      %3136 = vdwg.mxu0
      %v3137 = vadd.f32 %v2995, %v3107
      %v3138 = vadd.f32 %v2996, %v3110
      %v3139 = vadd.f32 %v2997, %v3115
      %v3140 = vadd.f32 %v2998, %v3118
      %v3141 = vadd.f32 %v2999, %v3123
      %v3142 = vadd.f32 %v3000, %v3126
      %v3143 = vadd.f32 %v3001, %v3131
      %v3144 = vadd.f32 %v3002, %v3134
      %v3146 = vshrl.u32 %v1918, 16
      %v3148 = vrot.slane %v3146, 4
      %v3149 = vshll.u32 %v1918, 16
      %v3151 = vrot.slane %v3149, 5
      %v3152 = vor.u32 %v3148, %v3151
      %v3153 = vrot.slane %v3152, 4
      %v3155 = vshll.u32 %v1919, 16
      %v3157 = vrot.slane %v3155, 5
      %v3158 = vsel %vm403, %v3153, %v3157
      %s3159 = scalar_lea.vmem %s3, 1024
      %v3160 = vld [vmem:[%s3159] sm:$0xf]
      %v3161 = vld [vmem:[%s3159 + $0x4] sm:$0xf]
      %v3162 = vld [vmem:[%s3159 + $0x8] sm:$0xf]
      %v3163 = vld [vmem:[%s3159 + $0xc] sm:$0xf]
      %v3164 = vld [vmem:[%s3159 + $0x10] sm:$0xf]
      %v3165 = vld [vmem:[%s3159 + $0x14] sm:$0xf]
      %v3166 = vld [vmem:[%s3159 + $0x18] sm:$0xf]
      %v3167 = vld [vmem:[%s3159 + $0x1c] sm:$0xf]
      %v3168 = vld [vmem:[%s3159 + $0x20] sm:$0xf]
      %v3169 = vld [vmem:[%s3159 + $0x24] sm:$0xf]
      %v3170 = vld [vmem:[%s3159 + $0x28] sm:$0xf]
      %v3171 = vld [vmem:[%s3159 + $0x2c] sm:$0xf]
      %v3172 = vld [vmem:[%s3159 + $0x30] sm:$0xf]
      %v3173 = vld [vmem:[%s3159 + $0x34] sm:$0xf]
      %v3174 = vld [vmem:[%s3159 + $0x38] sm:$0xf]
      %v3175 = vld [vmem:[%s3159 + $0x3c] sm:$0xf]
      %v3176 = vunpack.c.l.b16 %v3158
      %v3177 = vpack.c.b16 %v3176, %v2721
      %v3195 = vunpack.c.l.b16 %v3160
      %v3196 = vunpack.c.l.b16 %v3161
      %v3197 = vunpack.c.l.b16 %v3162
      %v3198 = vunpack.c.l.b16 %v3163
      %v3199 = vunpack.c.l.b16 %v3164
      %v3200 = vunpack.c.l.b16 %v3165
      %v3201 = vunpack.c.l.b16 %v3166
      %v3202 = vunpack.c.l.b16 %v3167
      %v3203 = vunpack.c.l.b16 %v3168
      %v3204 = vunpack.c.l.b16 %v3169
      %v3205 = vunpack.c.l.b16 %v3170
      %v3206 = vunpack.c.l.b16 %v3171
      %v3207 = vunpack.c.l.b16 %v3172
      %v3208 = vunpack.c.l.b16 %v3173
      %v3209 = vunpack.c.l.b16 %v3174
      %v3210 = vunpack.c.l.b16 %v3175
      %v3211 = vpack.c.b16 %v3196, %v3195
      %v3212 = vpack.c.b16 %v3198, %v3197
      %v3213 = vpack.c.b16 %v3200, %v3199
      %v3214 = vpack.c.b16 %v3202, %v3201
      %v3215 = vpack.c.b16 %v3204, %v3203
      %v3216 = vpack.c.b16 %v3206, %v3205
      %v3217 = vpack.c.b16 %v3208, %v3207
      %v3218 = vpack.c.b16 %v3210, %v3209
      %3227 = vmatprep.subr.bf16.mxu0 0
      %3228 = vmatpush1.bf16.msra.mxu0 %v3211
      %3229 = vmatprep.subr.bf16.mxu0 0
      %3230 = vmatpush1.bf16.msra.mxu0 %v3212
      %3231 = vmatprep.subr.bf16.mxu0 0
      %3232 = vmatpush1.bf16.msra.mxu0 %v3213
      %3233 = vmatprep.subr.bf16.mxu0 0
      %3234 = vmatpush1.bf16.msra.mxu0 %v3214
      %3235 = vmatprep.subr.bf16.mxu0 0
      %3236 = vmatpush1.bf16.msra.mxu0 %v3215
      %3237 = vmatprep.subr.bf16.mxu0 0
      %3238 = vmatpush1.bf16.msra.mxu0 %v3216
      %3239 = vmatprep.subr.bf16.mxu0 0
      %3240 = vmatpush1.bf16.msra.mxu0 %v3217
      %3241 = vmatprep.subr.bf16.mxu0 0
      %3242 = vmatpush1.bf16.msra.mxu0 %v3218
      %3243 = vmatprep.subr.bf16.mxu0 0
      %3244 = vmatpush1.bf16.msra.mxu0 0
      %3245 = vmatprep.subr.bf16.mxu0 0
      %3246 = vmatpush1.bf16.msra.mxu0 0
      %3247 = vmatprep.subr.bf16.mxu0 0
      %3248 = vmatpush1.bf16.msra.mxu0 0
      %3249 = vmatprep.subr.bf16.mxu0 0
      %3250 = vmatpush1.bf16.msra.mxu0 0
      %3251 = vmatprep.subr.bf16.mxu0 0
      %3252 = vmatpush1.bf16.msra.mxu0 0
      %3253 = vmatprep.subr.bf16.mxu0 0
      %3254 = vmatpush1.bf16.msra.mxu0 0
      %3255 = vmatprep.subr.bf16.mxu0 0
      %3256 = vmatpush1.bf16.msra.mxu0 0
      %3257 = vmatprep.subr.bf16.mxu0 0
      %3258 = vmatpush1.bf16.msra.mxu0 0
      %3259 = vmatprep.mubr.bf16.mxu0 0
      %3260 = vmatmul.mubr.bf16.gmra.mrb[0].mxu0 %v2220
      %v3261 = vpop.f32.mrb[0].mxu0
      %v3262 = vadd.f32 0.0, %v3261
      %v3263 = vpop.f32.mrb[0].mxu0
      %v3264 = vpop.f32.mrb[0].mxu0
      %v3265 = vadd.f32 0.0, %v3264
      %v3266 = vpop.f32.mrb[0].mxu0
      %3267 = vmatprep.mubr.bf16.mxu0 0
      %3268 = vmatmul.mubr.bf16.gmra.mrb[0].mxu0 %v2221
      %v3269 = vpop.f32.mrb[0].mxu0
      %v3270 = vadd.f32 0.0, %v3269
      %v3271 = vpop.f32.mrb[0].mxu0
      %v3272 = vpop.f32.mrb[0].mxu0
      %v3273 = vadd.f32 0.0, %v3272
      %v3274 = vpop.f32.mrb[0].mxu0
      %3275 = vmatprep.mubr.bf16.mxu0 0
      %3276 = vmatmul.mubr.bf16.gmra.mrb[0].mxu0 %v2222
      %v3277 = vpop.f32.mrb[0].mxu0
      %v3278 = vadd.f32 0.0, %v3277
      %v3279 = vpop.f32.mrb[0].mxu0
      %v3280 = vpop.f32.mrb[0].mxu0
      %v3281 = vadd.f32 0.0, %v3280
      %v3282 = vpop.f32.mrb[0].mxu0
      %3283 = vmatprep.mubr.bf16.mxu0 0
      %3284 = vmatmul.mubr.bf16.gmra.mrb[0].mxu0 %v3177
      %v3285 = vpop.f32.mrb[0].mxu0
      %v3286 = vadd.f32 0.0, %v3285
      %v3287 = vpop.f32.mrb[0].mxu0
      %v3288 = vpop.f32.mrb[0].mxu0
      %v3289 = vadd.f32 0.0, %v3288
      %v3290 = vpop.f32.mrb[0].mxu0
      %3291 = vdwg.mxu0
      %v3292 = vadd.f32 %v3137, %v3262
      %v3293 = vadd.f32 %v3138, %v3265
      %v3294 = vadd.f32 %v3139, %v3270
      %v3295 = vadd.f32 %v3140, %v3273
      %v3296 = vadd.f32 %v3141, %v3278
      %v3297 = vadd.f32 %v3142, %v3281
      %v3298 = vadd.f32 %v3143, %v3286
      %v3299 = vadd.f32 %v3144, %v3289
      %v3301 = vrot.slane %v1918, 5
      %v3302 = vrot.slane %v3301, 4
      %v3303 = vrot.slane %v1919, 5
      %v3304 = vsel %vm809, %v3302, %v3303
      %s3305 = scalar_lea.vmem %s3, 1088
      %v3306 = vld [vmem:[%s3305] sm:$0xf]
      %v3307 = vld [vmem:[%s3305 + $0x4] sm:$0xf]
      %v3308 = vld [vmem:[%s3305 + $0x8] sm:$0xf]
      %v3309 = vld [vmem:[%s3305 + $0xc] sm:$0xf]
      %v3310 = vld [vmem:[%s3305 + $0x10] sm:$0xf]
      %v3311 = vld [vmem:[%s3305 + $0x14] sm:$0xf]
      %v3312 = vld [vmem:[%s3305 + $0x18] sm:$0xf]
      %v3313 = vld [vmem:[%s3305 + $0x1c] sm:$0xf]
      %v3314 = vld [vmem:[%s3305 + $0x20] sm:$0xf]
      %v3315 = vld [vmem:[%s3305 + $0x24] sm:$0xf]
      %v3316 = vld [vmem:[%s3305 + $0x28] sm:$0xf]
      %v3317 = vld [vmem:[%s3305 + $0x2c] sm:$0xf]
      %v3318 = vld [vmem:[%s3305 + $0x30] sm:$0xf]
      %v3319 = vld [vmem:[%s3305 + $0x34] sm:$0xf]
      %v3320 = vld [vmem:[%s3305 + $0x38] sm:$0xf]
      %v3321 = vld [vmem:[%s3305 + $0x3c] sm:$0xf]
      %v3322 = vunpack.c.l.b16 %v3304
      %v3323 = vpack.c.b16 %v3322, %v2873
      %v3341 = vunpack.c.l.b16 %v3306
      %v3342 = vunpack.c.l.b16 %v3307
      %v3343 = vunpack.c.l.b16 %v3308
      %v3344 = vunpack.c.l.b16 %v3309
      %v3345 = vunpack.c.l.b16 %v3310
      %v3346 = vunpack.c.l.b16 %v3311
      %v3347 = vunpack.c.l.b16 %v3312
      %v3348 = vunpack.c.l.b16 %v3313
      %v3349 = vunpack.c.l.b16 %v3314
      %v3350 = vunpack.c.l.b16 %v3315
      %v3351 = vunpack.c.l.b16 %v3316
      %v3352 = vunpack.c.l.b16 %v3317
      %v3353 = vunpack.c.l.b16 %v3318
      %v3354 = vunpack.c.l.b16 %v3319
      %v3355 = vunpack.c.l.b16 %v3320
      %v3356 = vunpack.c.l.b16 %v3321
      %v3357 = vpack.c.b16 %v3342, %v3341
      %v3358 = vpack.c.b16 %v3344, %v3343
      %v3359 = vpack.c.b16 %v3346, %v3345
      %v3360 = vpack.c.b16 %v3348, %v3347
      %v3361 = vpack.c.b16 %v3350, %v3349
      %v3362 = vpack.c.b16 %v3352, %v3351
      %v3363 = vpack.c.b16 %v3354, %v3353
      %v3364 = vpack.c.b16 %v3356, %v3355
      %3373 = vmatprep.subr.bf16.mxu0 0
      %3374 = vmatpush1.bf16.msra.mxu0 %v3357
      %3375 = vmatprep.subr.bf16.mxu0 0
      %3376 = vmatpush1.bf16.msra.mxu0 %v3358
      %3377 = vmatprep.subr.bf16.mxu0 0
      %3378 = vmatpush1.bf16.msra.mxu0 %v3359
      %3379 = vmatprep.subr.bf16.mxu0 0
      %3380 = vmatpush1.bf16.msra.mxu0 %v3360
      %3381 = vmatprep.subr.bf16.mxu0 0
      %3382 = vmatpush1.bf16.msra.mxu0 %v3361
      %3383 = vmatprep.subr.bf16.mxu0 0
      %3384 = vmatpush1.bf16.msra.mxu0 %v3362
      %3385 = vmatprep.subr.bf16.mxu0 0
      %3386 = vmatpush1.bf16.msra.mxu0 %v3363
      %3387 = vmatprep.subr.bf16.mxu0 0
      %3388 = vmatpush1.bf16.msra.mxu0 %v3364
      %3389 = vmatprep.subr.bf16.mxu0 0
      %3390 = vmatpush1.bf16.msra.mxu0 0
      %3391 = vmatprep.subr.bf16.mxu0 0
      %3392 = vmatpush1.bf16.msra.mxu0 0
      %3393 = vmatprep.subr.bf16.mxu0 0
      %3394 = vmatpush1.bf16.msra.mxu0 0
      %3395 = vmatprep.subr.bf16.mxu0 0
      %3396 = vmatpush1.bf16.msra.mxu0 0
      %3397 = vmatprep.subr.bf16.mxu0 0
      %3398 = vmatpush1.bf16.msra.mxu0 0
      %3399 = vmatprep.subr.bf16.mxu0 0
      %3400 = vmatpush1.bf16.msra.mxu0 0
      %3401 = vmatprep.subr.bf16.mxu0 0
      %3402 = vmatpush1.bf16.msra.mxu0 0
      %3403 = vmatprep.subr.bf16.mxu0 0
      %3404 = vmatpush1.bf16.msra.mxu0 0
      %3405 = vmatprep.mubr.bf16.mxu0 0
      %3406 = vmatmul.mubr.bf16.gmra.mrb[0].mxu0 %v2414
      %v3407 = vpop.f32.mrb[0].mxu0
      %v3408 = vadd.f32 0.0, %v3407
      %v3409 = vpop.f32.mrb[0].mxu0
      %v3410 = vpop.f32.mrb[0].mxu0
      %v3411 = vadd.f32 0.0, %v3410
      %v3412 = vpop.f32.mrb[0].mxu0
      %3413 = vmatprep.mubr.bf16.mxu0 0
      %3414 = vmatmul.mubr.bf16.gmra.mrb[0].mxu0 %v2415
      %v3415 = vpop.f32.mrb[0].mxu0
      %v3416 = vadd.f32 0.0, %v3415
      %v3417 = vpop.f32.mrb[0].mxu0
      %v3418 = vpop.f32.mrb[0].mxu0
      %v3419 = vadd.f32 0.0, %v3418
      %v3420 = vpop.f32.mrb[0].mxu0
      %3421 = vmatprep.mubr.bf16.mxu0 0
      %3422 = vmatmul.mubr.bf16.gmra.mrb[0].mxu0 %v2416
      %v3423 = vpop.f32.mrb[0].mxu0
      %v3424 = vadd.f32 0.0, %v3423
      %v3425 = vpop.f32.mrb[0].mxu0
      %v3426 = vpop.f32.mrb[0].mxu0
      %v3427 = vadd.f32 0.0, %v3426
      %v3428 = vpop.f32.mrb[0].mxu0
      %3429 = vmatprep.mubr.bf16.mxu0 0
      %3430 = vmatmul.mubr.bf16.gmra.mrb[0].mxu0 %v3323
      %v3431 = vpop.f32.mrb[0].mxu0
      %v3432 = vadd.f32 0.0, %v3431
      %v3433 = vpop.f32.mrb[0].mxu0
      %v3434 = vpop.f32.mrb[0].mxu0
      %v3435 = vadd.f32 0.0, %v3434
      %v3436 = vpop.f32.mrb[0].mxu0
      %3437 = vdwg.mxu0
      %v3438 = vadd.f32 %v3292, %v3408
      %v3439 = vadd.f32 %v3293, %v3411
      %v3440 = vadd.f32 %v3294, %v3416
      %v3441 = vadd.f32 %v3295, %v3419
      %v3442 = vadd.f32 %v3296, %v3424
      %v3443 = vadd.f32 %v3297, %v3427
      %v3444 = vadd.f32 %v3298, %v3432
      %v3445 = vadd.f32 %v3299, %v3435
      %v3446 = vld [vmem:[%s345] sm:$0xf]
      %v3447 = vld [vmem:[%s345 + $0x4] sm:$0x1]
      %v3448 = vld [vmem:[%s345 + $0x8] sm:$0xf]
      %v3449 = vld [vmem:[%s345 + $0xc] sm:$0x1]
      %v3450 = vld [vmem:[%s345 + $0x10] sm:$0xf]
      %v3451 = vld [vmem:[%s345 + $0x14] sm:$0x1]
      %v3452 = vld [vmem:[%s345 + $0x18] sm:$0xf]
      %v3453 = vld [vmem:[%s345 + $0x1c] sm:$0x1]
      %v3454 = vld [vmem:[%s345 + $0x20] sm:$0xf]
      %v3455 = vld [vmem:[%s345 + $0x24] sm:$0x1]
      %v3456 = vld [vmem:[%s345 + $0x28] sm:$0xf]
      %v3457 = vld [vmem:[%s345 + $0x2c] sm:$0x1]
      %v3458 = vld [vmem:[%s345 + $0x30] sm:$0xf]
      %v3459 = vld [vmem:[%s345 + $0x34] sm:$0x1]
      %v3460 = vld [vmem:[%s345 + $0x38] sm:$0xf]
      %v3461 = vld [vmem:[%s345 + $0x3c] sm:$0x1]
      %v3462 = vld [vmem:[%s345 + $0x40] sm:$0xf]
      %v3463 = vld [vmem:[%s345 + $0x44] sm:$0x1]
      %v3464 = vld [vmem:[%s345 + $0x48] sm:$0xf]
      %v3465 = vld [vmem:[%s345 + $0x4c] sm:$0x1]
      %s3466 = scalar_lea.vmem %s3, 1152
      %v3467 = vld [vmem:[%s3466] sm:$0xf]
      %v3468 = vld [vmem:[%s3466 + $0x4] sm:$0xf]
      %v3469 = vld [vmem:[%s3466 + $0x8] sm:$0xf]
      %v3470 = vld [vmem:[%s3466 + $0xc] sm:$0xf]
      %v3471 = vld [vmem:[%s3466 + $0x10] sm:$0xf]
      %v3472 = vld [vmem:[%s3466 + $0x14] sm:$0xf]
      %v3473 = vld [vmem:[%s3466 + $0x18] sm:$0xf]
      %v3474 = vld [vmem:[%s3466 + $0x1c] sm:$0xf]
      %v3475 = vld [vmem:[%s3466 + $0x20] sm:$0xf]
      %v3476 = vld [vmem:[%s3466 + $0x24] sm:$0xf]
      %v3477 = vld [vmem:[%s3466 + $0x28] sm:$0xf]
      %v3478 = vld [vmem:[%s3466 + $0x2c] sm:$0xf]
      %v3479 = vld [vmem:[%s3466 + $0x30] sm:$0xf]
      %v3480 = vld [vmem:[%s3466 + $0x34] sm:$0xf]
      %v3481 = vld [vmem:[%s3466 + $0x38] sm:$0xf]
      %v3482 = vld [vmem:[%s3466 + $0x3c] sm:$0xf]
      %v3491 = vunpack.c.l.b16 %v3446
      %v3492 = vunpack.c.l.b16 %v3448
      %v3493 = vunpack.c.l.b16 %v3450
      %v3494 = vunpack.c.l.b16 %v3452
      %v3495 = vunpack.c.l.b16 %v3454
      %v3496 = vunpack.c.l.b16 %v3456
      %v3497 = vunpack.c.l.b16 %v3458
      %v3498 = vunpack.c.l.b16 %v3460
      %v3499 = vpack.c.b16 %v3492, %v3491
      %v3500 = vpack.c.b16 %v3494, %v3493
      %v3501 = vpack.c.b16 %v3496, %v3495
      %v3502 = vpack.c.b16 %v3498, %v3497
      %v3523 = vunpack.c.l.b16 %v3467
      %v3524 = vunpack.c.l.b16 %v3468
      %v3525 = vunpack.c.l.b16 %v3469
      %v3526 = vunpack.c.l.b16 %v3470
      %v3527 = vunpack.c.l.b16 %v3471
      %v3528 = vunpack.c.l.b16 %v3472
      %v3529 = vunpack.c.l.b16 %v3473
      %v3530 = vunpack.c.l.b16 %v3474
      %v3531 = vunpack.c.l.b16 %v3475
      %v3532 = vunpack.c.l.b16 %v3476
      %v3533 = vunpack.c.l.b16 %v3477
      %v3534 = vunpack.c.l.b16 %v3478
      %v3535 = vunpack.c.l.b16 %v3479
      %v3536 = vunpack.c.l.b16 %v3480
      %v3537 = vunpack.c.l.b16 %v3481
      %v3538 = vunpack.c.l.b16 %v3482
      %v3539 = vpack.c.b16 %v3524, %v3523
      %v3540 = vpack.c.b16 %v3526, %v3525
      %v3541 = vpack.c.b16 %v3528, %v3527
      %v3542 = vpack.c.b16 %v3530, %v3529
      %v3543 = vpack.c.b16 %v3532, %v3531
      %v3544 = vpack.c.b16 %v3534, %v3533
      %v3545 = vpack.c.b16 %v3536, %v3535
      %v3546 = vpack.c.b16 %v3538, %v3537
      %3555 = vmatprep.subr.bf16.mxu0 0
      %3556 = vmatpush1.bf16.msra.mxu0 %v3539
      %3557 = vmatprep.subr.bf16.mxu0 0
      %3558 = vmatpush1.bf16.msra.mxu0 %v3540
      %3559 = vmatprep.subr.bf16.mxu0 0
      %3560 = vmatpush1.bf16.msra.mxu0 %v3541
      %3561 = vmatprep.subr.bf16.mxu0 0
      %3562 = vmatpush1.bf16.msra.mxu0 %v3542
      %3563 = vmatprep.subr.bf16.mxu0 0
      %3564 = vmatpush1.bf16.msra.mxu0 %v3543
      %3565 = vmatprep.subr.bf16.mxu0 0
      %3566 = vmatpush1.bf16.msra.mxu0 %v3544
      %3567 = vmatprep.subr.bf16.mxu0 0
      %3568 = vmatpush1.bf16.msra.mxu0 %v3545
      %3569 = vmatprep.subr.bf16.mxu0 0
      %3570 = vmatpush1.bf16.msra.mxu0 %v3546
      %3571 = vmatprep.subr.bf16.mxu0 0
      %3572 = vmatpush1.bf16.msra.mxu0 0
      %3573 = vmatprep.subr.bf16.mxu0 0
      %3574 = vmatpush1.bf16.msra.mxu0 0
      %3575 = vmatprep.subr.bf16.mxu0 0
      %3576 = vmatpush1.bf16.msra.mxu0 0
      %3577 = vmatprep.subr.bf16.mxu0 0
      %3578 = vmatpush1.bf16.msra.mxu0 0
      %3579 = vmatprep.subr.bf16.mxu0 0
      %3580 = vmatpush1.bf16.msra.mxu0 0
      %3581 = vmatprep.subr.bf16.mxu0 0
      %3582 = vmatpush1.bf16.msra.mxu0 0
      %3583 = vmatprep.subr.bf16.mxu0 0
      %3584 = vmatpush1.bf16.msra.mxu0 0
      %3585 = vmatprep.subr.bf16.mxu0 0
      %3586 = vmatpush1.bf16.msra.mxu0 0
      %3587 = vmatprep.mubr.bf16.mxu0 0
      %3588 = vmatmul.mubr.bf16.gmra.mrb[0].mxu0 %v3499
      %v3589 = vpop.f32.mrb[0].mxu0
      %v3590 = vadd.f32 0.0, %v3589
      %v3591 = vpop.f32.mrb[0].mxu0
      %v3592 = vpop.f32.mrb[0].mxu0
      %v3593 = vadd.f32 0.0, %v3592
      %v3594 = vpop.f32.mrb[0].mxu0
      %3595 = vmatprep.mubr.bf16.mxu0 0
      %3596 = vmatmul.mubr.bf16.gmra.mrb[0].mxu0 %v3500
      %v3597 = vpop.f32.mrb[0].mxu0
      %v3598 = vadd.f32 0.0, %v3597
      %v3599 = vpop.f32.mrb[0].mxu0
      %v3600 = vpop.f32.mrb[0].mxu0
      %v3601 = vadd.f32 0.0, %v3600
      %v3602 = vpop.f32.mrb[0].mxu0
      %3603 = vmatprep.mubr.bf16.mxu0 0
      %3604 = vmatmul.mubr.bf16.gmra.mrb[0].mxu0 %v3501
      %v3605 = vpop.f32.mrb[0].mxu0
      %v3606 = vadd.f32 0.0, %v3605
      %v3607 = vpop.f32.mrb[0].mxu0
      %v3608 = vpop.f32.mrb[0].mxu0
      %v3609 = vadd.f32 0.0, %v3608
      %v3610 = vpop.f32.mrb[0].mxu0
      %3611 = vmatprep.mubr.bf16.mxu0 0
      %3612 = vmatmul.mubr.bf16.gmra.mrb[0].mxu0 %v3502
      %v3613 = vpop.f32.mrb[0].mxu0
      %v3614 = vadd.f32 0.0, %v3613
      %v3615 = vpop.f32.mrb[0].mxu0
      %v3616 = vpop.f32.mrb[0].mxu0
      %v3617 = vadd.f32 0.0, %v3616
      %v3618 = vpop.f32.mrb[0].mxu0
      %3619 = vdwg.mxu0
      %v3620 = vadd.f32 %v3438, %v3590
      %v3621 = vadd.f32 %v3439, %v3593
      %v3622 = vadd.f32 %v3440, %v3598
      %v3623 = vadd.f32 %v3441, %v3601
      %v3624 = vadd.f32 %v3442, %v3606
      %v3625 = vadd.f32 %v3443, %v3609
      %v3626 = vadd.f32 %v3444, %v3614
      %v3627 = vadd.f32 %v3445, %v3617
      %v3629 = vshrl.u32 %v3446, 16
      %v3631 = vrot.slane %v3629, 4
      %v3632 = vshll.u32 %v3446, 16
      %v3634 = vrot.slane %v3632, 5
      %v3635 = vor.u32 %v3631, %v3634
      %v3636 = vrot.slane %v3635, 4
      %v3638 = vshll.u32 %v3447, 16
      %v3640 = vrot.slane %v3638, 5
      %v3641 = vsel %vm403, %v3636, %v3640
      %v3643 = vshrl.u32 %v3448, 16
      %v3645 = vrot.slane %v3643, 4
      %v3646 = vshll.u32 %v3448, 16
      %v3648 = vrot.slane %v3646, 5
      %v3649 = vor.u32 %v3645, %v3648
      %v3650 = vrot.slane %v3649, 4
      %v3652 = vshll.u32 %v3449, 16
      %v3654 = vrot.slane %v3652, 5
      %v3655 = vsel %vm403, %v3650, %v3654
      %v3657 = vshrl.u32 %v3450, 16
      %v3659 = vrot.slane %v3657, 4
      %v3660 = vshll.u32 %v3450, 16
      %v3662 = vrot.slane %v3660, 5
      %v3663 = vor.u32 %v3659, %v3662
      %v3664 = vrot.slane %v3663, 4
      %v3666 = vshll.u32 %v3451, 16
      %v3668 = vrot.slane %v3666, 5
      %v3669 = vsel %vm403, %v3664, %v3668
      %v3671 = vshrl.u32 %v3452, 16
      %v3673 = vrot.slane %v3671, 4
      %v3674 = vshll.u32 %v3452, 16
      %v3676 = vrot.slane %v3674, 5
      %v3677 = vor.u32 %v3673, %v3676
      %v3678 = vrot.slane %v3677, 4
      %v3680 = vshll.u32 %v3453, 16
      %v3682 = vrot.slane %v3680, 5
      %v3683 = vsel %vm403, %v3678, %v3682
      %v3685 = vshrl.u32 %v3454, 16
      %v3687 = vrot.slane %v3685, 4
      %v3688 = vshll.u32 %v3454, 16
      %v3690 = vrot.slane %v3688, 5
      %v3691 = vor.u32 %v3687, %v3690
      %v3692 = vrot.slane %v3691, 4
      %v3694 = vshll.u32 %v3455, 16
      %v3696 = vrot.slane %v3694, 5
      %v3697 = vsel %vm403, %v3692, %v3696
      %v3699 = vshrl.u32 %v3456, 16
      %v3701 = vrot.slane %v3699, 4
      %v3702 = vshll.u32 %v3456, 16
      %v3704 = vrot.slane %v3702, 5
      %v3705 = vor.u32 %v3701, %v3704
      %v3706 = vrot.slane %v3705, 4
      %v3708 = vshll.u32 %v3457, 16
      %v3710 = vrot.slane %v3708, 5
      %v3711 = vsel %vm403, %v3706, %v3710
      %v3713 = vshrl.u32 %v3458, 16
      %v3715 = vrot.slane %v3713, 4
      %v3716 = vshll.u32 %v3458, 16
      %v3718 = vrot.slane %v3716, 5
      %v3719 = vor.u32 %v3715, %v3718
      %v3720 = vrot.slane %v3719, 4
      %v3722 = vshll.u32 %v3459, 16
      %v3724 = vrot.slane %v3722, 5
      %v3725 = vsel %vm403, %v3720, %v3724
      %v3727 = vshrl.u32 %v3460, 16
      %v3729 = vrot.slane %v3727, 4
      %v3730 = vshll.u32 %v3460, 16
      %v3732 = vrot.slane %v3730, 5
      %v3733 = vor.u32 %v3729, %v3732
      %v3734 = vrot.slane %v3733, 4
      %v3736 = vshll.u32 %v3461, 16
      %v3738 = vrot.slane %v3736, 5
      %v3739 = vsel %vm403, %v3734, %v3738
      %s3740 = scalar_lea.vmem %s3, 1216
      %v3741 = vld [vmem:[%s3740] sm:$0xf]
      %v3742 = vld [vmem:[%s3740 + $0x4] sm:$0xf]
      %v3743 = vld [vmem:[%s3740 + $0x8] sm:$0xf]
      %v3744 = vld [vmem:[%s3740 + $0xc] sm:$0xf]
      %v3745 = vld [vmem:[%s3740 + $0x10] sm:$0xf]
      %v3746 = vld [vmem:[%s3740 + $0x14] sm:$0xf]
      %v3747 = vld [vmem:[%s3740 + $0x18] sm:$0xf]
      %v3748 = vld [vmem:[%s3740 + $0x1c] sm:$0xf]
      %v3749 = vld [vmem:[%s3740 + $0x20] sm:$0xf]
      %v3750 = vld [vmem:[%s3740 + $0x24] sm:$0xf]
      %v3751 = vld [vmem:[%s3740 + $0x28] sm:$0xf]
      %v3752 = vld [vmem:[%s3740 + $0x2c] sm:$0xf]
      %v3753 = vld [vmem:[%s3740 + $0x30] sm:$0xf]
      %v3754 = vld [vmem:[%s3740 + $0x34] sm:$0xf]
      %v3755 = vld [vmem:[%s3740 + $0x38] sm:$0xf]
      %v3756 = vld [vmem:[%s3740 + $0x3c] sm:$0xf]
      %v3757 = vunpack.c.l.b16 %v3641
      %v3758 = vunpack.c.l.b16 %v3655
      %v3759 = vunpack.c.l.b16 %v3669
      %v3760 = vunpack.c.l.b16 %v3683
      %v3761 = vunpack.c.l.b16 %v3697
      %v3762 = vunpack.c.l.b16 %v3711
      %v3763 = vunpack.c.l.b16 %v3725
      %v3764 = vunpack.c.l.b16 %v3739
      %v3765 = vpack.c.b16 %v3758, %v3757
      %v3766 = vpack.c.b16 %v3760, %v3759
      %v3767 = vpack.c.b16 %v3762, %v3761
      %v3768 = vpack.c.b16 %v3764, %v3763
      %v3789 = vunpack.c.l.b16 %v3741
      %v3790 = vunpack.c.l.b16 %v3742
      %v3791 = vunpack.c.l.b16 %v3743
      %v3792 = vunpack.c.l.b16 %v3744
      %v3793 = vunpack.c.l.b16 %v3745
      %v3794 = vunpack.c.l.b16 %v3746
      %v3795 = vunpack.c.l.b16 %v3747
      %v3796 = vunpack.c.l.b16 %v3748
      %v3797 = vunpack.c.l.b16 %v3749
      %v3798 = vunpack.c.l.b16 %v3750
      %v3799 = vunpack.c.l.b16 %v3751
      %v3800 = vunpack.c.l.b16 %v3752
      %v3801 = vunpack.c.l.b16 %v3753
      %v3802 = vunpack.c.l.b16 %v3754
      %v3803 = vunpack.c.l.b16 %v3755
      %v3804 = vunpack.c.l.b16 %v3756
      %v3805 = vpack.c.b16 %v3790, %v3789
      %v3806 = vpack.c.b16 %v3792, %v3791
      %v3807 = vpack.c.b16 %v3794, %v3793
      %v3808 = vpack.c.b16 %v3796, %v3795
      %v3809 = vpack.c.b16 %v3798, %v3797
      %v3810 = vpack.c.b16 %v3800, %v3799
      %v3811 = vpack.c.b16 %v3802, %v3801
      %v3812 = vpack.c.b16 %v3804, %v3803
      %3821 = vmatprep.subr.bf16.mxu0 0
      %3822 = vmatpush1.bf16.msra.mxu0 %v3805
      %3823 = vmatprep.subr.bf16.mxu0 0
      %3824 = vmatpush1.bf16.msra.mxu0 %v3806
      %3825 = vmatprep.subr.bf16.mxu0 0
      %3826 = vmatpush1.bf16.msra.mxu0 %v3807
      %3827 = vmatprep.subr.bf16.mxu0 0
      %3828 = vmatpush1.bf16.msra.mxu0 %v3808
      %3829 = vmatprep.subr.bf16.mxu0 0
      %3830 = vmatpush1.bf16.msra.mxu0 %v3809
      %3831 = vmatprep.subr.bf16.mxu0 0
      %3832 = vmatpush1.bf16.msra.mxu0 %v3810
      %3833 = vmatprep.subr.bf16.mxu0 0
      %3834 = vmatpush1.bf16.msra.mxu0 %v3811
      %3835 = vmatprep.subr.bf16.mxu0 0
      %3836 = vmatpush1.bf16.msra.mxu0 %v3812
      %3837 = vmatprep.subr.bf16.mxu0 0
      %3838 = vmatpush1.bf16.msra.mxu0 0
      %3839 = vmatprep.subr.bf16.mxu0 0
      %3840 = vmatpush1.bf16.msra.mxu0 0
      %3841 = vmatprep.subr.bf16.mxu0 0
      %3842 = vmatpush1.bf16.msra.mxu0 0
      %3843 = vmatprep.subr.bf16.mxu0 0
      %3844 = vmatpush1.bf16.msra.mxu0 0
      %3845 = vmatprep.subr.bf16.mxu0 0
      %3846 = vmatpush1.bf16.msra.mxu0 0
      %3847 = vmatprep.subr.bf16.mxu0 0
      %3848 = vmatpush1.bf16.msra.mxu0 0
      %3849 = vmatprep.subr.bf16.mxu0 0
      %3850 = vmatpush1.bf16.msra.mxu0 0
      %3851 = vmatprep.subr.bf16.mxu0 0
      %3852 = vmatpush1.bf16.msra.mxu0 0
      %3853 = vmatprep.mubr.bf16.mxu0 0
      %3854 = vmatmul.mubr.bf16.gmra.mrb[0].mxu0 %v3765
      %v3855 = vpop.f32.mrb[0].mxu0
      %v3856 = vadd.f32 0.0, %v3855
      %v3857 = vpop.f32.mrb[0].mxu0
      %v3858 = vpop.f32.mrb[0].mxu0
      %v3859 = vadd.f32 0.0, %v3858
      %v3860 = vpop.f32.mrb[0].mxu0
      %3861 = vmatprep.mubr.bf16.mxu0 0
      %3862 = vmatmul.mubr.bf16.gmra.mrb[0].mxu0 %v3766
      %v3863 = vpop.f32.mrb[0].mxu0
      %v3864 = vadd.f32 0.0, %v3863
      %v3865 = vpop.f32.mrb[0].mxu0
      %v3866 = vpop.f32.mrb[0].mxu0
      %v3867 = vadd.f32 0.0, %v3866
      %v3868 = vpop.f32.mrb[0].mxu0
      %3869 = vmatprep.mubr.bf16.mxu0 0
      %3870 = vmatmul.mubr.bf16.gmra.mrb[0].mxu0 %v3767
      %v3871 = vpop.f32.mrb[0].mxu0
      %v3872 = vadd.f32 0.0, %v3871
      %v3873 = vpop.f32.mrb[0].mxu0
      %v3874 = vpop.f32.mrb[0].mxu0
      %v3875 = vadd.f32 0.0, %v3874
      %v3876 = vpop.f32.mrb[0].mxu0
      %3877 = vmatprep.mubr.bf16.mxu0 0
      %3878 = vmatmul.mubr.bf16.gmra.mrb[0].mxu0 %v3768
      %v3879 = vpop.f32.mrb[0].mxu0
      %v3880 = vadd.f32 0.0, %v3879
      %v3881 = vpop.f32.mrb[0].mxu0
      %v3882 = vpop.f32.mrb[0].mxu0
      %v3883 = vadd.f32 0.0, %v3882
      %v3884 = vpop.f32.mrb[0].mxu0
      %3885 = vdwg.mxu0
      %v3886 = vadd.f32 %v3620, %v3856
      %v3887 = vadd.f32 %v3621, %v3859
      %v3888 = vadd.f32 %v3622, %v3864
      %v3889 = vadd.f32 %v3623, %v3867
      %v3890 = vadd.f32 %v3624, %v3872
      %v3891 = vadd.f32 %v3625, %v3875
      %v3892 = vadd.f32 %v3626, %v3880
      %v3893 = vadd.f32 %v3627, %v3883
      %v3902 = vrot.slane %v3446, 5
      %v3903 = vrot.slane %v3902, 4
      %v3904 = vrot.slane %v3447, 5
      %v3905 = vsel %vm809, %v3903, %v3904
      %v3906 = vrot.slane %v3448, 5
      %v3907 = vrot.slane %v3906, 4
      %v3908 = vrot.slane %v3449, 5
      %v3909 = vsel %vm809, %v3907, %v3908
      %v3910 = vrot.slane %v3450, 5
      %v3911 = vrot.slane %v3910, 4
      %v3912 = vrot.slane %v3451, 5
      %v3913 = vsel %vm809, %v3911, %v3912
      %v3914 = vrot.slane %v3452, 5
      %v3915 = vrot.slane %v3914, 4
      %v3916 = vrot.slane %v3453, 5
      %v3917 = vsel %vm809, %v3915, %v3916
      %v3918 = vrot.slane %v3454, 5
      %v3919 = vrot.slane %v3918, 4
      %v3920 = vrot.slane %v3455, 5
      %v3921 = vsel %vm809, %v3919, %v3920
      %v3922 = vrot.slane %v3456, 5
      %v3923 = vrot.slane %v3922, 4
      %v3924 = vrot.slane %v3457, 5
      %v3925 = vsel %vm809, %v3923, %v3924
      %v3926 = vrot.slane %v3458, 5
      %v3927 = vrot.slane %v3926, 4
      %v3928 = vrot.slane %v3459, 5
      %v3929 = vsel %vm809, %v3927, %v3928
      %v3930 = vrot.slane %v3460, 5
      %v3931 = vrot.slane %v3930, 4
      %v3932 = vrot.slane %v3461, 5
      %v3933 = vsel %vm809, %v3931, %v3932
      %s3934 = scalar_lea.vmem %s3, 1280
      %v3935 = vld [vmem:[%s3934] sm:$0xf]
      %v3936 = vld [vmem:[%s3934 + $0x4] sm:$0xf]
      %v3937 = vld [vmem:[%s3934 + $0x8] sm:$0xf]
      %v3938 = vld [vmem:[%s3934 + $0xc] sm:$0xf]
      %v3939 = vld [vmem:[%s3934 + $0x10] sm:$0xf]
      %v3940 = vld [vmem:[%s3934 + $0x14] sm:$0xf]
      %v3941 = vld [vmem:[%s3934 + $0x18] sm:$0xf]
      %v3942 = vld [vmem:[%s3934 + $0x1c] sm:$0xf]
      %v3943 = vld [vmem:[%s3934 + $0x20] sm:$0xf]
      %v3944 = vld [vmem:[%s3934 + $0x24] sm:$0xf]
      %v3945 = vld [vmem:[%s3934 + $0x28] sm:$0xf]
      %v3946 = vld [vmem:[%s3934 + $0x2c] sm:$0xf]
      %v3947 = vld [vmem:[%s3934 + $0x30] sm:$0xf]
      %v3948 = vld [vmem:[%s3934 + $0x34] sm:$0xf]
      %v3949 = vld [vmem:[%s3934 + $0x38] sm:$0xf]
      %v3950 = vld [vmem:[%s3934 + $0x3c] sm:$0xf]
      %v3951 = vunpack.c.l.b16 %v3905
      %v3952 = vunpack.c.l.b16 %v3909
      %v3953 = vunpack.c.l.b16 %v3913
      %v3954 = vunpack.c.l.b16 %v3917
      %v3955 = vunpack.c.l.b16 %v3921
      %v3956 = vunpack.c.l.b16 %v3925
      %v3957 = vunpack.c.l.b16 %v3929
      %v3958 = vunpack.c.l.b16 %v3933
      %v3959 = vpack.c.b16 %v3952, %v3951
      %v3960 = vpack.c.b16 %v3954, %v3953
      %v3961 = vpack.c.b16 %v3956, %v3955
      %v3962 = vpack.c.b16 %v3958, %v3957
      %v3983 = vunpack.c.l.b16 %v3935
      %v3984 = vunpack.c.l.b16 %v3936
      %v3985 = vunpack.c.l.b16 %v3937
      %v3986 = vunpack.c.l.b16 %v3938
      %v3987 = vunpack.c.l.b16 %v3939
      %v3988 = vunpack.c.l.b16 %v3940
      %v3989 = vunpack.c.l.b16 %v3941
      %v3990 = vunpack.c.l.b16 %v3942
      %v3991 = vunpack.c.l.b16 %v3943
      %v3992 = vunpack.c.l.b16 %v3944
      %v3993 = vunpack.c.l.b16 %v3945
      %v3994 = vunpack.c.l.b16 %v3946
      %v3995 = vunpack.c.l.b16 %v3947
      %v3996 = vunpack.c.l.b16 %v3948
      %v3997 = vunpack.c.l.b16 %v3949
      %v3998 = vunpack.c.l.b16 %v3950
      %v3999 = vpack.c.b16 %v3984, %v3983
      %v4000 = vpack.c.b16 %v3986, %v3985
      %v4001 = vpack.c.b16 %v3988, %v3987
      %v4002 = vpack.c.b16 %v3990, %v3989
      %v4003 = vpack.c.b16 %v3992, %v3991
      %v4004 = vpack.c.b16 %v3994, %v3993
      %v4005 = vpack.c.b16 %v3996, %v3995
      %v4006 = vpack.c.b16 %v3998, %v3997
      %4015 = vmatprep.subr.bf16.mxu0 0
      %4016 = vmatpush1.bf16.msra.mxu0 %v3999
      %4017 = vmatprep.subr.bf16.mxu0 0
      %4018 = vmatpush1.bf16.msra.mxu0 %v4000
      %4019 = vmatprep.subr.bf16.mxu0 0
      %4020 = vmatpush1.bf16.msra.mxu0 %v4001
      %4021 = vmatprep.subr.bf16.mxu0 0
      %4022 = vmatpush1.bf16.msra.mxu0 %v4002
      %4023 = vmatprep.subr.bf16.mxu0 0
      %4024 = vmatpush1.bf16.msra.mxu0 %v4003
      %4025 = vmatprep.subr.bf16.mxu0 0
      %4026 = vmatpush1.bf16.msra.mxu0 %v4004
      %4027 = vmatprep.subr.bf16.mxu0 0
      %4028 = vmatpush1.bf16.msra.mxu0 %v4005
      %4029 = vmatprep.subr.bf16.mxu0 0
      %4030 = vmatpush1.bf16.msra.mxu0 %v4006
      %4031 = vmatprep.subr.bf16.mxu0 0
      %4032 = vmatpush1.bf16.msra.mxu0 0
      %4033 = vmatprep.subr.bf16.mxu0 0
      %4034 = vmatpush1.bf16.msra.mxu0 0
      %4035 = vmatprep.subr.bf16.mxu0 0
      %4036 = vmatpush1.bf16.msra.mxu0 0
      %4037 = vmatprep.subr.bf16.mxu0 0
      %4038 = vmatpush1.bf16.msra.mxu0 0
      %4039 = vmatprep.subr.bf16.mxu0 0
      %4040 = vmatpush1.bf16.msra.mxu0 0
      %4041 = vmatprep.subr.bf16.mxu0 0
      %4042 = vmatpush1.bf16.msra.mxu0 0
      %4043 = vmatprep.subr.bf16.mxu0 0
      %4044 = vmatpush1.bf16.msra.mxu0 0
      %4045 = vmatprep.subr.bf16.mxu0 0
      %4046 = vmatpush1.bf16.msra.mxu0 0
      %4047 = vmatprep.mubr.bf16.mxu0 0
      %4048 = vmatmul.mubr.bf16.gmra.mrb[0].mxu0 %v3959
      %v4049 = vpop.f32.mrb[0].mxu0
      %v4050 = vadd.f32 0.0, %v4049
      %v4051 = vpop.f32.mrb[0].mxu0
      %v4052 = vpop.f32.mrb[0].mxu0
      %v4053 = vadd.f32 0.0, %v4052
      %v4054 = vpop.f32.mrb[0].mxu0
      %4055 = vmatprep.mubr.bf16.mxu0 0
      %4056 = vmatmul.mubr.bf16.gmra.mrb[0].mxu0 %v3960
      %v4057 = vpop.f32.mrb[0].mxu0
      %v4058 = vadd.f32 0.0, %v4057
      %v4059 = vpop.f32.mrb[0].mxu0
      %v4060 = vpop.f32.mrb[0].mxu0
      %v4061 = vadd.f32 0.0, %v4060
      %v4062 = vpop.f32.mrb[0].mxu0
      %4063 = vmatprep.mubr.bf16.mxu0 0
      %4064 = vmatmul.mubr.bf16.gmra.mrb[0].mxu0 %v3961
      %v4065 = vpop.f32.mrb[0].mxu0
      %v4066 = vadd.f32 0.0, %v4065
      %v4067 = vpop.f32.mrb[0].mxu0
      %v4068 = vpop.f32.mrb[0].mxu0
      %v4069 = vadd.f32 0.0, %v4068
      %v4070 = vpop.f32.mrb[0].mxu0
      %4071 = vmatprep.mubr.bf16.mxu0 0
      %4072 = vmatmul.mubr.bf16.gmra.mrb[0].mxu0 %v3962
      %v4073 = vpop.f32.mrb[0].mxu0
      %v4074 = vadd.f32 0.0, %v4073
      %v4075 = vpop.f32.mrb[0].mxu0
      %v4076 = vpop.f32.mrb[0].mxu0
      %v4077 = vadd.f32 0.0, %v4076
      %v4078 = vpop.f32.mrb[0].mxu0
      %4079 = vdwg.mxu0
      %v4080 = vadd.f32 %v3886, %v4050
      %v4081 = vadd.f32 %v3887, %v4053
      %v4082 = vadd.f32 %v3888, %v4058
      %v4083 = vadd.f32 %v3889, %v4061
      %v4084 = vadd.f32 %v3890, %v4066
      %v4085 = vadd.f32 %v3891, %v4069
      %v4086 = vadd.f32 %v3892, %v4074
      %v4087 = vadd.f32 %v3893, %v4077
      %s4088 = scalar_lea.vmem %s3, 1344
      %v4089 = vld [vmem:[%s4088] sm:$0xf]
      %v4090 = vld [vmem:[%s4088 + $0x4] sm:$0xf]
      %v4091 = vld [vmem:[%s4088 + $0x8] sm:$0xf]
      %v4092 = vld [vmem:[%s4088 + $0xc] sm:$0xf]
      %v4093 = vld [vmem:[%s4088 + $0x10] sm:$0xf]
      %v4094 = vld [vmem:[%s4088 + $0x14] sm:$0xf]
      %v4095 = vld [vmem:[%s4088 + $0x18] sm:$0xf]
      %v4096 = vld [vmem:[%s4088 + $0x1c] sm:$0xf]
      %v4097 = vld [vmem:[%s4088 + $0x20] sm:$0xf]
      %v4098 = vld [vmem:[%s4088 + $0x24] sm:$0xf]
      %v4099 = vld [vmem:[%s4088 + $0x28] sm:$0xf]
      %v4100 = vld [vmem:[%s4088 + $0x2c] sm:$0xf]
      %v4101 = vld [vmem:[%s4088 + $0x30] sm:$0xf]
      %v4102 = vld [vmem:[%s4088 + $0x34] sm:$0xf]
      %v4103 = vld [vmem:[%s4088 + $0x38] sm:$0xf]
      %v4104 = vld [vmem:[%s4088 + $0x3c] sm:$0xf]
      %v4106 = vunpack.c.l.b16 %v3462
      %v4107 = vpack.c.b16 %v3493, %v3492
      %v4108 = vpack.c.b16 %v3495, %v3494
      %v4109 = vpack.c.b16 %v3497, %v3496
      %v4110 = vpack.c.b16 %v4106, %v3498
      %v4131 = vunpack.c.l.b16 %v4089
      %v4132 = vunpack.c.l.b16 %v4090
      %v4133 = vunpack.c.l.b16 %v4091
      %v4134 = vunpack.c.l.b16 %v4092
      %v4135 = vunpack.c.l.b16 %v4093
      %v4136 = vunpack.c.l.b16 %v4094
      %v4137 = vunpack.c.l.b16 %v4095
      %v4138 = vunpack.c.l.b16 %v4096
      %v4139 = vunpack.c.l.b16 %v4097
      %v4140 = vunpack.c.l.b16 %v4098
      %v4141 = vunpack.c.l.b16 %v4099
      %v4142 = vunpack.c.l.b16 %v4100
      %v4143 = vunpack.c.l.b16 %v4101
      %v4144 = vunpack.c.l.b16 %v4102
      %v4145 = vunpack.c.l.b16 %v4103
      %v4146 = vunpack.c.l.b16 %v4104
      %v4147 = vpack.c.b16 %v4132, %v4131
      %v4148 = vpack.c.b16 %v4134, %v4133
      %v4149 = vpack.c.b16 %v4136, %v4135
      %v4150 = vpack.c.b16 %v4138, %v4137
      %v4151 = vpack.c.b16 %v4140, %v4139
      %v4152 = vpack.c.b16 %v4142, %v4141
      %v4153 = vpack.c.b16 %v4144, %v4143
      %v4154 = vpack.c.b16 %v4146, %v4145
      %4163 = vmatprep.subr.bf16.mxu0 0
      %4164 = vmatpush1.bf16.msra.mxu0 %v4147
      %4165 = vmatprep.subr.bf16.mxu0 0
      %4166 = vmatpush1.bf16.msra.mxu0 %v4148
      %4167 = vmatprep.subr.bf16.mxu0 0
      %4168 = vmatpush1.bf16.msra.mxu0 %v4149
      %4169 = vmatprep.subr.bf16.mxu0 0
      %4170 = vmatpush1.bf16.msra.mxu0 %v4150
      %4171 = vmatprep.subr.bf16.mxu0 0
      %4172 = vmatpush1.bf16.msra.mxu0 %v4151
      %4173 = vmatprep.subr.bf16.mxu0 0
      %4174 = vmatpush1.bf16.msra.mxu0 %v4152
      %4175 = vmatprep.subr.bf16.mxu0 0
      %4176 = vmatpush1.bf16.msra.mxu0 %v4153
      %4177 = vmatprep.subr.bf16.mxu0 0
      %4178 = vmatpush1.bf16.msra.mxu0 %v4154
      %4179 = vmatprep.subr.bf16.mxu0 0
      %4180 = vmatpush1.bf16.msra.mxu0 0
      %4181 = vmatprep.subr.bf16.mxu0 0
      %4182 = vmatpush1.bf16.msra.mxu0 0
      %4183 = vmatprep.subr.bf16.mxu0 0
      %4184 = vmatpush1.bf16.msra.mxu0 0
      %4185 = vmatprep.subr.bf16.mxu0 0
      %4186 = vmatpush1.bf16.msra.mxu0 0
      %4187 = vmatprep.subr.bf16.mxu0 0
      %4188 = vmatpush1.bf16.msra.mxu0 0
      %4189 = vmatprep.subr.bf16.mxu0 0
      %4190 = vmatpush1.bf16.msra.mxu0 0
      %4191 = vmatprep.subr.bf16.mxu0 0
      %4192 = vmatpush1.bf16.msra.mxu0 0
      %4193 = vmatprep.subr.bf16.mxu0 0
      %4194 = vmatpush1.bf16.msra.mxu0 0
      %4195 = vmatprep.mubr.bf16.mxu0 0
      %4196 = vmatmul.mubr.bf16.gmra.mrb[0].mxu0 %v4107
      %v4197 = vpop.f32.mrb[0].mxu0
      %v4198 = vadd.f32 0.0, %v4197
      %v4199 = vpop.f32.mrb[0].mxu0
      %v4200 = vpop.f32.mrb[0].mxu0
      %v4201 = vadd.f32 0.0, %v4200
      %v4202 = vpop.f32.mrb[0].mxu0
      %4203 = vmatprep.mubr.bf16.mxu0 0
      %4204 = vmatmul.mubr.bf16.gmra.mrb[0].mxu0 %v4108
      %v4205 = vpop.f32.mrb[0].mxu0
      %v4206 = vadd.f32 0.0, %v4205
      %v4207 = vpop.f32.mrb[0].mxu0
      %v4208 = vpop.f32.mrb[0].mxu0
      %v4209 = vadd.f32 0.0, %v4208
      %v4210 = vpop.f32.mrb[0].mxu0
      %4211 = vmatprep.mubr.bf16.mxu0 0
      %4212 = vmatmul.mubr.bf16.gmra.mrb[0].mxu0 %v4109
      %v4213 = vpop.f32.mrb[0].mxu0
      %v4214 = vadd.f32 0.0, %v4213
      %v4215 = vpop.f32.mrb[0].mxu0
      %v4216 = vpop.f32.mrb[0].mxu0
      %v4217 = vadd.f32 0.0, %v4216
      %v4218 = vpop.f32.mrb[0].mxu0
      %4219 = vmatprep.mubr.bf16.mxu0 0
      %4220 = vmatmul.mubr.bf16.gmra.mrb[0].mxu0 %v4110
      %v4221 = vpop.f32.mrb[0].mxu0
      %v4222 = vadd.f32 0.0, %v4221
      %v4223 = vpop.f32.mrb[0].mxu0
      %v4224 = vpop.f32.mrb[0].mxu0
      %v4225 = vadd.f32 0.0, %v4224
      %v4226 = vpop.f32.mrb[0].mxu0
      %4227 = vdwg.mxu0
      %v4228 = vadd.f32 %v4080, %v4198
      %v4229 = vadd.f32 %v4081, %v4201
      %v4230 = vadd.f32 %v4082, %v4206
      %v4231 = vadd.f32 %v4083, %v4209
      %v4232 = vadd.f32 %v4084, %v4214
      %v4233 = vadd.f32 %v4085, %v4217
      %v4234 = vadd.f32 %v4086, %v4222
      %v4235 = vadd.f32 %v4087, %v4225
      %v4237 = vshrl.u32 %v3462, 16
      %v4239 = vrot.slane %v4237, 4
      %v4240 = vshll.u32 %v3462, 16
      %v4242 = vrot.slane %v4240, 5
      %v4243 = vor.u32 %v4239, %v4242
      %v4244 = vrot.slane %v4243, 4
      %v4246 = vshll.u32 %v3463, 16
      %v4248 = vrot.slane %v4246, 5
      %v4249 = vsel %vm403, %v4244, %v4248
      %s4250 = scalar_lea.vmem %s3, 1408
      %v4251 = vld [vmem:[%s4250] sm:$0xf]
      %v4252 = vld [vmem:[%s4250 + $0x4] sm:$0xf]
      %v4253 = vld [vmem:[%s4250 + $0x8] sm:$0xf]
      %v4254 = vld [vmem:[%s4250 + $0xc] sm:$0xf]
      %v4255 = vld [vmem:[%s4250 + $0x10] sm:$0xf]
      %v4256 = vld [vmem:[%s4250 + $0x14] sm:$0xf]
      %v4257 = vld [vmem:[%s4250 + $0x18] sm:$0xf]
      %v4258 = vld [vmem:[%s4250 + $0x1c] sm:$0xf]
      %v4259 = vld [vmem:[%s4250 + $0x20] sm:$0xf]
      %v4260 = vld [vmem:[%s4250 + $0x24] sm:$0xf]
      %v4261 = vld [vmem:[%s4250 + $0x28] sm:$0xf]
      %v4262 = vld [vmem:[%s4250 + $0x2c] sm:$0xf]
      %v4263 = vld [vmem:[%s4250 + $0x30] sm:$0xf]
      %v4264 = vld [vmem:[%s4250 + $0x34] sm:$0xf]
      %v4265 = vld [vmem:[%s4250 + $0x38] sm:$0xf]
      %v4266 = vld [vmem:[%s4250 + $0x3c] sm:$0xf]
      %v4267 = vunpack.c.l.b16 %v4249
      %v4268 = vpack.c.b16 %v3759, %v3758
      %v4269 = vpack.c.b16 %v3761, %v3760
      %v4270 = vpack.c.b16 %v3763, %v3762
      %v4271 = vpack.c.b16 %v4267, %v3764
      %v4292 = vunpack.c.l.b16 %v4251
      %v4293 = vunpack.c.l.b16 %v4252
      %v4294 = vunpack.c.l.b16 %v4253
      %v4295 = vunpack.c.l.b16 %v4254
      %v4296 = vunpack.c.l.b16 %v4255
      %v4297 = vunpack.c.l.b16 %v4256
      %v4298 = vunpack.c.l.b16 %v4257
      %v4299 = vunpack.c.l.b16 %v4258
      %v4300 = vunpack.c.l.b16 %v4259
      %v4301 = vunpack.c.l.b16 %v4260
      %v4302 = vunpack.c.l.b16 %v4261
      %v4303 = vunpack.c.l.b16 %v4262
      %v4304 = vunpack.c.l.b16 %v4263
      %v4305 = vunpack.c.l.b16 %v4264
      %v4306 = vunpack.c.l.b16 %v4265
      %v4307 = vunpack.c.l.b16 %v4266
      %v4308 = vpack.c.b16 %v4293, %v4292
      %v4309 = vpack.c.b16 %v4295, %v4294
      %v4310 = vpack.c.b16 %v4297, %v4296
      %v4311 = vpack.c.b16 %v4299, %v4298
      %v4312 = vpack.c.b16 %v4301, %v4300
      %v4313 = vpack.c.b16 %v4303, %v4302
      %v4314 = vpack.c.b16 %v4305, %v4304
      %v4315 = vpack.c.b16 %v4307, %v4306
      %4324 = vmatprep.subr.bf16.mxu0 0
      %4325 = vmatpush1.bf16.msra.mxu0 %v4308
      %4326 = vmatprep.subr.bf16.mxu0 0
      %4327 = vmatpush1.bf16.msra.mxu0 %v4309
      %4328 = vmatprep.subr.bf16.mxu0 0
      %4329 = vmatpush1.bf16.msra.mxu0 %v4310
      %4330 = vmatprep.subr.bf16.mxu0 0
      %4331 = vmatpush1.bf16.msra.mxu0 %v4311
      %4332 = vmatprep.subr.bf16.mxu0 0
      %4333 = vmatpush1.bf16.msra.mxu0 %v4312
      %4334 = vmatprep.subr.bf16.mxu0 0
      %4335 = vmatpush1.bf16.msra.mxu0 %v4313
      %4336 = vmatprep.subr.bf16.mxu0 0
      %4337 = vmatpush1.bf16.msra.mxu0 %v4314
      %4338 = vmatprep.subr.bf16.mxu0 0
      %4339 = vmatpush1.bf16.msra.mxu0 %v4315
      %4340 = vmatprep.subr.bf16.mxu0 0
      %4341 = vmatpush1.bf16.msra.mxu0 0
      %4342 = vmatprep.subr.bf16.mxu0 0
      %4343 = vmatpush1.bf16.msra.mxu0 0
      %4344 = vmatprep.subr.bf16.mxu0 0
      %4345 = vmatpush1.bf16.msra.mxu0 0
      %4346 = vmatprep.subr.bf16.mxu0 0
      %4347 = vmatpush1.bf16.msra.mxu0 0
      %4348 = vmatprep.subr.bf16.mxu0 0
      %4349 = vmatpush1.bf16.msra.mxu0 0
      %4350 = vmatprep.subr.bf16.mxu0 0
      %4351 = vmatpush1.bf16.msra.mxu0 0
      %4352 = vmatprep.subr.bf16.mxu0 0
      %4353 = vmatpush1.bf16.msra.mxu0 0
      %4354 = vmatprep.subr.bf16.mxu0 0
      %4355 = vmatpush1.bf16.msra.mxu0 0
      %4356 = vmatprep.mubr.bf16.mxu0 0
      %4357 = vmatmul.mubr.bf16.gmra.mrb[0].mxu0 %v4268
      %v4358 = vpop.f32.mrb[0].mxu0
      %v4359 = vadd.f32 0.0, %v4358
      %v4360 = vpop.f32.mrb[0].mxu0
      %v4361 = vpop.f32.mrb[0].mxu0
      %v4362 = vadd.f32 0.0, %v4361
      %v4363 = vpop.f32.mrb[0].mxu0
      %4364 = vmatprep.mubr.bf16.mxu0 0
      %4365 = vmatmul.mubr.bf16.gmra.mrb[0].mxu0 %v4269
      %v4366 = vpop.f32.mrb[0].mxu0
      %v4367 = vadd.f32 0.0, %v4366
      %v4368 = vpop.f32.mrb[0].mxu0
      %v4369 = vpop.f32.mrb[0].mxu0
      %v4370 = vadd.f32 0.0, %v4369
      %v4371 = vpop.f32.mrb[0].mxu0
      %4372 = vmatprep.mubr.bf16.mxu0 0
      %4373 = vmatmul.mubr.bf16.gmra.mrb[0].mxu0 %v4270
      %v4374 = vpop.f32.mrb[0].mxu0
      %v4375 = vadd.f32 0.0, %v4374
      %v4376 = vpop.f32.mrb[0].mxu0
      %v4377 = vpop.f32.mrb[0].mxu0
      %v4378 = vadd.f32 0.0, %v4377
      %v4379 = vpop.f32.mrb[0].mxu0
      %4380 = vmatprep.mubr.bf16.mxu0 0
      %4381 = vmatmul.mubr.bf16.gmra.mrb[0].mxu0 %v4271
      %v4382 = vpop.f32.mrb[0].mxu0
      %v4383 = vadd.f32 0.0, %v4382
      %v4384 = vpop.f32.mrb[0].mxu0
      %v4385 = vpop.f32.mrb[0].mxu0
      %v4386 = vadd.f32 0.0, %v4385
      %v4387 = vpop.f32.mrb[0].mxu0
      %4388 = vdwg.mxu0
      %v4389 = vadd.f32 %v4228, %v4359
      %v4390 = vadd.f32 %v4229, %v4362
      %v4391 = vadd.f32 %v4230, %v4367
      %v4392 = vadd.f32 %v4231, %v4370
      %v4393 = vadd.f32 %v4232, %v4375
      %v4394 = vadd.f32 %v4233, %v4378
      %v4395 = vadd.f32 %v4234, %v4383
      %v4396 = vadd.f32 %v4235, %v4386
      %v4398 = vrot.slane %v3462, 5
      %v4399 = vrot.slane %v4398, 4
      %v4400 = vrot.slane %v3463, 5
      %v4401 = vsel %vm809, %v4399, %v4400
      %s4402 = scalar_lea.vmem %s3, 1472
      %v4403 = vld [vmem:[%s4402] sm:$0xf]
      %v4404 = vld [vmem:[%s4402 + $0x4] sm:$0xf]
      %v4405 = vld [vmem:[%s4402 + $0x8] sm:$0xf]
      %v4406 = vld [vmem:[%s4402 + $0xc] sm:$0xf]
      %v4407 = vld [vmem:[%s4402 + $0x10] sm:$0xf]
      %v4408 = vld [vmem:[%s4402 + $0x14] sm:$0xf]
      %v4409 = vld [vmem:[%s4402 + $0x18] sm:$0xf]
      %v4410 = vld [vmem:[%s4402 + $0x1c] sm:$0xf]
      %v4411 = vld [vmem:[%s4402 + $0x20] sm:$0xf]
      %v4412 = vld [vmem:[%s4402 + $0x24] sm:$0xf]
      %v4413 = vld [vmem:[%s4402 + $0x28] sm:$0xf]
      %v4414 = vld [vmem:[%s4402 + $0x2c] sm:$0xf]
      %v4415 = vld [vmem:[%s4402 + $0x30] sm:$0xf]
      %v4416 = vld [vmem:[%s4402 + $0x34] sm:$0xf]
      %v4417 = vld [vmem:[%s4402 + $0x38] sm:$0xf]
      %v4418 = vld [vmem:[%s4402 + $0x3c] sm:$0xf]
      %v4419 = vunpack.c.l.b16 %v4401
      %v4420 = vpack.c.b16 %v3953, %v3952
      %v4421 = vpack.c.b16 %v3955, %v3954
      %v4422 = vpack.c.b16 %v3957, %v3956
      %v4423 = vpack.c.b16 %v4419, %v3958
      %v4444 = vunpack.c.l.b16 %v4403
      %v4445 = vunpack.c.l.b16 %v4404
      %v4446 = vunpack.c.l.b16 %v4405
      %v4447 = vunpack.c.l.b16 %v4406
      %v4448 = vunpack.c.l.b16 %v4407
      %v4449 = vunpack.c.l.b16 %v4408
      %v4450 = vunpack.c.l.b16 %v4409
      %v4451 = vunpack.c.l.b16 %v4410
      %v4452 = vunpack.c.l.b16 %v4411
      %v4453 = vunpack.c.l.b16 %v4412
      %v4454 = vunpack.c.l.b16 %v4413
      %v4455 = vunpack.c.l.b16 %v4414
      %v4456 = vunpack.c.l.b16 %v4415
      %v4457 = vunpack.c.l.b16 %v4416
      %v4458 = vunpack.c.l.b16 %v4417
      %v4459 = vunpack.c.l.b16 %v4418
      %v4460 = vpack.c.b16 %v4445, %v4444
      %v4461 = vpack.c.b16 %v4447, %v4446
      %v4462 = vpack.c.b16 %v4449, %v4448
      %v4463 = vpack.c.b16 %v4451, %v4450
      %v4464 = vpack.c.b16 %v4453, %v4452
      %v4465 = vpack.c.b16 %v4455, %v4454
      %v4466 = vpack.c.b16 %v4457, %v4456
      %v4467 = vpack.c.b16 %v4459, %v4458
      %4476 = vmatprep.subr.bf16.mxu0 0
      %4477 = vmatpush1.bf16.msra.mxu0 %v4460
      %4478 = vmatprep.subr.bf16.mxu0 0
      %4479 = vmatpush1.bf16.msra.mxu0 %v4461
      %4480 = vmatprep.subr.bf16.mxu0 0
      %4481 = vmatpush1.bf16.msra.mxu0 %v4462
      %4482 = vmatprep.subr.bf16.mxu0 0
      %4483 = vmatpush1.bf16.msra.mxu0 %v4463
      %4484 = vmatprep.subr.bf16.mxu0 0
      %4485 = vmatpush1.bf16.msra.mxu0 %v4464
      %4486 = vmatprep.subr.bf16.mxu0 0
      %4487 = vmatpush1.bf16.msra.mxu0 %v4465
      %4488 = vmatprep.subr.bf16.mxu0 0
      %4489 = vmatpush1.bf16.msra.mxu0 %v4466
      %4490 = vmatprep.subr.bf16.mxu0 0
      %4491 = vmatpush1.bf16.msra.mxu0 %v4467
      %4492 = vmatprep.subr.bf16.mxu0 0
      %4493 = vmatpush1.bf16.msra.mxu0 0
      %4494 = vmatprep.subr.bf16.mxu0 0
      %4495 = vmatpush1.bf16.msra.mxu0 0
      %4496 = vmatprep.subr.bf16.mxu0 0
      %4497 = vmatpush1.bf16.msra.mxu0 0
      %4498 = vmatprep.subr.bf16.mxu0 0
      %4499 = vmatpush1.bf16.msra.mxu0 0
      %4500 = vmatprep.subr.bf16.mxu0 0
      %4501 = vmatpush1.bf16.msra.mxu0 0
      %4502 = vmatprep.subr.bf16.mxu0 0
      %4503 = vmatpush1.bf16.msra.mxu0 0
      %4504 = vmatprep.subr.bf16.mxu0 0
      %4505 = vmatpush1.bf16.msra.mxu0 0
      %4506 = vmatprep.subr.bf16.mxu0 0
      %4507 = vmatpush1.bf16.msra.mxu0 0
      %4508 = vmatprep.mubr.bf16.mxu0 0
      %4509 = vmatmul.mubr.bf16.gmra.mrb[0].mxu0 %v4420
      %v4510 = vpop.f32.mrb[0].mxu0
      %v4511 = vadd.f32 0.0, %v4510
      %v4512 = vpop.f32.mrb[0].mxu0
      %v4513 = vpop.f32.mrb[0].mxu0
      %v4514 = vadd.f32 0.0, %v4513
      %v4515 = vpop.f32.mrb[0].mxu0
      %4516 = vmatprep.mubr.bf16.mxu0 0
      %4517 = vmatmul.mubr.bf16.gmra.mrb[0].mxu0 %v4421
      %v4518 = vpop.f32.mrb[0].mxu0
      %v4519 = vadd.f32 0.0, %v4518
      %v4520 = vpop.f32.mrb[0].mxu0
      %v4521 = vpop.f32.mrb[0].mxu0
      %v4522 = vadd.f32 0.0, %v4521
      %v4523 = vpop.f32.mrb[0].mxu0
      %4524 = vmatprep.mubr.bf16.mxu0 0
      %4525 = vmatmul.mubr.bf16.gmra.mrb[0].mxu0 %v4422
      %v4526 = vpop.f32.mrb[0].mxu0
      %v4527 = vadd.f32 0.0, %v4526
      %v4528 = vpop.f32.mrb[0].mxu0
      %v4529 = vpop.f32.mrb[0].mxu0
      %v4530 = vadd.f32 0.0, %v4529
      %v4531 = vpop.f32.mrb[0].mxu0
      %4532 = vmatprep.mubr.bf16.mxu0 0
      %4533 = vmatmul.mubr.bf16.gmra.mrb[0].mxu0 %v4423
      %v4534 = vpop.f32.mrb[0].mxu0
      %v4535 = vadd.f32 0.0, %v4534
      %v4536 = vpop.f32.mrb[0].mxu0
      %v4537 = vpop.f32.mrb[0].mxu0
      %v4538 = vadd.f32 0.0, %v4537
      %v4539 = vpop.f32.mrb[0].mxu0
      %4540 = vdwg.mxu0
      %v4541 = vadd.f32 %v4389, %v4511
      %v4542 = vadd.f32 %v4390, %v4514
      %v4543 = vadd.f32 %v4391, %v4519
      %v4544 = vadd.f32 %v4392, %v4522
      %v4545 = vadd.f32 %v4393, %v4527
      %v4546 = vadd.f32 %v4394, %v4530
      %v4547 = vadd.f32 %v4395, %v4535
      %v4548 = vadd.f32 %v4396, %v4538
      %s4549 = scalar_lea.vmem %s3, 1536
      %v4550 = vld [vmem:[%s4549] sm:$0xf]
      %v4551 = vld [vmem:[%s4549 + $0x4] sm:$0xf]
      %v4552 = vld [vmem:[%s4549 + $0x8] sm:$0xf]
      %v4553 = vld [vmem:[%s4549 + $0xc] sm:$0xf]
      %v4554 = vld [vmem:[%s4549 + $0x10] sm:$0xf]
      %v4555 = vld [vmem:[%s4549 + $0x14] sm:$0xf]
      %v4556 = vld [vmem:[%s4549 + $0x18] sm:$0xf]
      %v4557 = vld [vmem:[%s4549 + $0x1c] sm:$0xf]
      %v4558 = vld [vmem:[%s4549 + $0x20] sm:$0xf]
      %v4559 = vld [vmem:[%s4549 + $0x24] sm:$0xf]
      %v4560 = vld [vmem:[%s4549 + $0x28] sm:$0xf]
      %v4561 = vld [vmem:[%s4549 + $0x2c] sm:$0xf]
      %v4562 = vld [vmem:[%s4549 + $0x30] sm:$0xf]
      %v4563 = vld [vmem:[%s4549 + $0x34] sm:$0xf]
      %v4564 = vld [vmem:[%s4549 + $0x38] sm:$0xf]
      %v4565 = vld [vmem:[%s4549 + $0x3c] sm:$0xf]
      %v4567 = vunpack.c.l.b16 %v3464
      %v4568 = vpack.c.b16 %v4567, %v4106
      %v4586 = vunpack.c.l.b16 %v4550
      %v4587 = vunpack.c.l.b16 %v4551
      %v4588 = vunpack.c.l.b16 %v4552
      %v4589 = vunpack.c.l.b16 %v4553
      %v4590 = vunpack.c.l.b16 %v4554
      %v4591 = vunpack.c.l.b16 %v4555
      %v4592 = vunpack.c.l.b16 %v4556
      %v4593 = vunpack.c.l.b16 %v4557
      %v4594 = vunpack.c.l.b16 %v4558
      %v4595 = vunpack.c.l.b16 %v4559
      %v4596 = vunpack.c.l.b16 %v4560
      %v4597 = vunpack.c.l.b16 %v4561
      %v4598 = vunpack.c.l.b16 %v4562
      %v4599 = vunpack.c.l.b16 %v4563
      %v4600 = vunpack.c.l.b16 %v4564
      %v4601 = vunpack.c.l.b16 %v4565
      %v4602 = vpack.c.b16 %v4587, %v4586
      %v4603 = vpack.c.b16 %v4589, %v4588
      %v4604 = vpack.c.b16 %v4591, %v4590
      %v4605 = vpack.c.b16 %v4593, %v4592
      %v4606 = vpack.c.b16 %v4595, %v4594
      %v4607 = vpack.c.b16 %v4597, %v4596
      %v4608 = vpack.c.b16 %v4599, %v4598
      %v4609 = vpack.c.b16 %v4601, %v4600
      %4618 = vmatprep.subr.bf16.mxu0 0
      %4619 = vmatpush1.bf16.msra.mxu0 %v4602
      %4620 = vmatprep.subr.bf16.mxu0 0
      %4621 = vmatpush1.bf16.msra.mxu0 %v4603
      %4622 = vmatprep.subr.bf16.mxu0 0
      %4623 = vmatpush1.bf16.msra.mxu0 %v4604
      %4624 = vmatprep.subr.bf16.mxu0 0
      %4625 = vmatpush1.bf16.msra.mxu0 %v4605
      %4626 = vmatprep.subr.bf16.mxu0 0
      %4627 = vmatpush1.bf16.msra.mxu0 %v4606
      %4628 = vmatprep.subr.bf16.mxu0 0
      %4629 = vmatpush1.bf16.msra.mxu0 %v4607
      %4630 = vmatprep.subr.bf16.mxu0 0
      %4631 = vmatpush1.bf16.msra.mxu0 %v4608
      %4632 = vmatprep.subr.bf16.mxu0 0
      %4633 = vmatpush1.bf16.msra.mxu0 %v4609
      %4634 = vmatprep.subr.bf16.mxu0 0
      %4635 = vmatpush1.bf16.msra.mxu0 0
      %4636 = vmatprep.subr.bf16.mxu0 0
      %4637 = vmatpush1.bf16.msra.mxu0 0
      %4638 = vmatprep.subr.bf16.mxu0 0
      %4639 = vmatpush1.bf16.msra.mxu0 0
      %4640 = vmatprep.subr.bf16.mxu0 0
      %4641 = vmatpush1.bf16.msra.mxu0 0
      %4642 = vmatprep.subr.bf16.mxu0 0
      %4643 = vmatpush1.bf16.msra.mxu0 0
      %4644 = vmatprep.subr.bf16.mxu0 0
      %4645 = vmatpush1.bf16.msra.mxu0 0
      %4646 = vmatprep.subr.bf16.mxu0 0
      %4647 = vmatpush1.bf16.msra.mxu0 0
      %4648 = vmatprep.subr.bf16.mxu0 0
      %4649 = vmatpush1.bf16.msra.mxu0 0
      %4650 = vmatprep.mubr.bf16.mxu0 0
      %4651 = vmatmul.mubr.bf16.gmra.mrb[0].mxu0 %v3500
      %v4652 = vpop.f32.mrb[0].mxu0
      %v4653 = vadd.f32 0.0, %v4652
      %v4654 = vpop.f32.mrb[0].mxu0
      %v4655 = vpop.f32.mrb[0].mxu0
      %v4656 = vadd.f32 0.0, %v4655
      %v4657 = vpop.f32.mrb[0].mxu0
      %4658 = vmatprep.mubr.bf16.mxu0 0
      %4659 = vmatmul.mubr.bf16.gmra.mrb[0].mxu0 %v3501
      %v4660 = vpop.f32.mrb[0].mxu0
      %v4661 = vadd.f32 0.0, %v4660
      %v4662 = vpop.f32.mrb[0].mxu0
      %v4663 = vpop.f32.mrb[0].mxu0
      %v4664 = vadd.f32 0.0, %v4663
      %v4665 = vpop.f32.mrb[0].mxu0
      %4666 = vmatprep.mubr.bf16.mxu0 0
      %4667 = vmatmul.mubr.bf16.gmra.mrb[0].mxu0 %v3502
      %v4668 = vpop.f32.mrb[0].mxu0
      %v4669 = vadd.f32 0.0, %v4668
      %v4670 = vpop.f32.mrb[0].mxu0
      %v4671 = vpop.f32.mrb[0].mxu0
      %v4672 = vadd.f32 0.0, %v4671
      %v4673 = vpop.f32.mrb[0].mxu0
      %4674 = vmatprep.mubr.bf16.mxu0 0
      %4675 = vmatmul.mubr.bf16.gmra.mrb[0].mxu0 %v4568
      %v4676 = vpop.f32.mrb[0].mxu0
      %v4677 = vadd.f32 0.0, %v4676
      %v4678 = vpop.f32.mrb[0].mxu0
      %v4679 = vpop.f32.mrb[0].mxu0
      %v4680 = vadd.f32 0.0, %v4679
      %v4681 = vpop.f32.mrb[0].mxu0
      %4682 = vdwg.mxu0
      %v4683 = vadd.f32 %v4541, %v4653
      %v4684 = vadd.f32 %v4542, %v4656
      %v4685 = vadd.f32 %v4543, %v4661
      %v4686 = vadd.f32 %v4544, %v4664
      %v4687 = vadd.f32 %v4545, %v4669
      %v4688 = vadd.f32 %v4546, %v4672
      %v4689 = vadd.f32 %v4547, %v4677
      %v4690 = vadd.f32 %v4548, %v4680
      %v4692 = vshrl.u32 %v3464, 16
      %v4694 = vrot.slane %v4692, 4
      %v4695 = vshll.u32 %v3464, 16
      %v4697 = vrot.slane %v4695, 5
      %v4698 = vor.u32 %v4694, %v4697
      %v4699 = vrot.slane %v4698, 4
      %v4701 = vshll.u32 %v3465, 16
      %v4703 = vrot.slane %v4701, 5
      %v4704 = vsel %vm403, %v4699, %v4703
      %s4705 = scalar_lea.vmem %s3, 1600
      %v4706 = vld [vmem:[%s4705] sm:$0xf]
      %v4707 = vld [vmem:[%s4705 + $0x4] sm:$0xf]
      %v4708 = vld [vmem:[%s4705 + $0x8] sm:$0xf]
      %v4709 = vld [vmem:[%s4705 + $0xc] sm:$0xf]
      %v4710 = vld [vmem:[%s4705 + $0x10] sm:$0xf]
      %v4711 = vld [vmem:[%s4705 + $0x14] sm:$0xf]
      %v4712 = vld [vmem:[%s4705 + $0x18] sm:$0xf]
      %v4713 = vld [vmem:[%s4705 + $0x1c] sm:$0xf]
      %v4714 = vld [vmem:[%s4705 + $0x20] sm:$0xf]
      %v4715 = vld [vmem:[%s4705 + $0x24] sm:$0xf]
      %v4716 = vld [vmem:[%s4705 + $0x28] sm:$0xf]
      %v4717 = vld [vmem:[%s4705 + $0x2c] sm:$0xf]
      %v4718 = vld [vmem:[%s4705 + $0x30] sm:$0xf]
      %v4719 = vld [vmem:[%s4705 + $0x34] sm:$0xf]
      %v4720 = vld [vmem:[%s4705 + $0x38] sm:$0xf]
      %v4721 = vld [vmem:[%s4705 + $0x3c] sm:$0xf]
      %v4722 = vunpack.c.l.b16 %v4704
      %v4723 = vpack.c.b16 %v4722, %v4267
      %v4741 = vunpack.c.l.b16 %v4706
      %v4742 = vunpack.c.l.b16 %v4707
      %v4743 = vunpack.c.l.b16 %v4708
      %v4744 = vunpack.c.l.b16 %v4709
      %v4745 = vunpack.c.l.b16 %v4710
      %v4746 = vunpack.c.l.b16 %v4711
      %v4747 = vunpack.c.l.b16 %v4712
      %v4748 = vunpack.c.l.b16 %v4713
      %v4749 = vunpack.c.l.b16 %v4714
      %v4750 = vunpack.c.l.b16 %v4715
      %v4751 = vunpack.c.l.b16 %v4716
      %v4752 = vunpack.c.l.b16 %v4717
      %v4753 = vunpack.c.l.b16 %v4718
      %v4754 = vunpack.c.l.b16 %v4719
      %v4755 = vunpack.c.l.b16 %v4720
      %v4756 = vunpack.c.l.b16 %v4721
      %v4757 = vpack.c.b16 %v4742, %v4741
      %v4758 = vpack.c.b16 %v4744, %v4743
      %v4759 = vpack.c.b16 %v4746, %v4745
      %v4760 = vpack.c.b16 %v4748, %v4747
      %v4761 = vpack.c.b16 %v4750, %v4749
      %v4762 = vpack.c.b16 %v4752, %v4751
      %v4763 = vpack.c.b16 %v4754, %v4753
      %v4764 = vpack.c.b16 %v4756, %v4755
      %4773 = vmatprep.subr.bf16.mxu0 0
      %4774 = vmatpush1.bf16.msra.mxu0 %v4757
      %4775 = vmatprep.subr.bf16.mxu0 0
      %4776 = vmatpush1.bf16.msra.mxu0 %v4758
      %4777 = vmatprep.subr.bf16.mxu0 0
      %4778 = vmatpush1.bf16.msra.mxu0 %v4759
      %4779 = vmatprep.subr.bf16.mxu0 0
      %4780 = vmatpush1.bf16.msra.mxu0 %v4760
      %4781 = vmatprep.subr.bf16.mxu0 0
      %4782 = vmatpush1.bf16.msra.mxu0 %v4761
      %4783 = vmatprep.subr.bf16.mxu0 0
      %4784 = vmatpush1.bf16.msra.mxu0 %v4762
      %4785 = vmatprep.subr.bf16.mxu0 0
      %4786 = vmatpush1.bf16.msra.mxu0 %v4763
      %4787 = vmatprep.subr.bf16.mxu0 0
      %4788 = vmatpush1.bf16.msra.mxu0 %v4764
      %4789 = vmatprep.subr.bf16.mxu0 0
      %4790 = vmatpush1.bf16.msra.mxu0 0
      %4791 = vmatprep.subr.bf16.mxu0 0
      %4792 = vmatpush1.bf16.msra.mxu0 0
      %4793 = vmatprep.subr.bf16.mxu0 0
      %4794 = vmatpush1.bf16.msra.mxu0 0
      %4795 = vmatprep.subr.bf16.mxu0 0
      %4796 = vmatpush1.bf16.msra.mxu0 0
      %4797 = vmatprep.subr.bf16.mxu0 0
      %4798 = vmatpush1.bf16.msra.mxu0 0
      %4799 = vmatprep.subr.bf16.mxu0 0
      %4800 = vmatpush1.bf16.msra.mxu0 0
      %4801 = vmatprep.subr.bf16.mxu0 0
      %4802 = vmatpush1.bf16.msra.mxu0 0
      %4803 = vmatprep.subr.bf16.mxu0 0
      %4804 = vmatpush1.bf16.msra.mxu0 0
      %4805 = vmatprep.mubr.bf16.mxu0 0
      %4806 = vmatmul.mubr.bf16.gmra.mrb[0].mxu0 %v3766
      %v4807 = vpop.f32.mrb[0].mxu0
      %v4808 = vadd.f32 0.0, %v4807
      %v4809 = vpop.f32.mrb[0].mxu0
      %v4810 = vpop.f32.mrb[0].mxu0
      %v4811 = vadd.f32 0.0, %v4810
      %v4812 = vpop.f32.mrb[0].mxu0
      %4813 = vmatprep.mubr.bf16.mxu0 0
      %4814 = vmatmul.mubr.bf16.gmra.mrb[0].mxu0 %v3767
      %v4815 = vpop.f32.mrb[0].mxu0
      %v4816 = vadd.f32 0.0, %v4815
      %v4817 = vpop.f32.mrb[0].mxu0
      %v4818 = vpop.f32.mrb[0].mxu0
      %v4819 = vadd.f32 0.0, %v4818
      %v4820 = vpop.f32.mrb[0].mxu0
      %4821 = vmatprep.mubr.bf16.mxu0 0
      %4822 = vmatmul.mubr.bf16.gmra.mrb[0].mxu0 %v3768
      %v4823 = vpop.f32.mrb[0].mxu0
      %v4824 = vadd.f32 0.0, %v4823
      %v4825 = vpop.f32.mrb[0].mxu0
      %v4826 = vpop.f32.mrb[0].mxu0
      %v4827 = vadd.f32 0.0, %v4826
      %v4828 = vpop.f32.mrb[0].mxu0
      %4829 = vmatprep.mubr.bf16.mxu0 0
      %4830 = vmatmul.mubr.bf16.gmra.mrb[0].mxu0 %v4723
      %v4831 = vpop.f32.mrb[0].mxu0
      %v4832 = vadd.f32 0.0, %v4831
      %v4833 = vpop.f32.mrb[0].mxu0
      %v4834 = vpop.f32.mrb[0].mxu0
      %v4835 = vadd.f32 0.0, %v4834
      %v4836 = vpop.f32.mrb[0].mxu0
      %4837 = vdwg.mxu0
      %v4838 = vadd.f32 %v4683, %v4808
      %v4839 = vadd.f32 %v4684, %v4811
      %v4840 = vadd.f32 %v4685, %v4816
      %v4841 = vadd.f32 %v4686, %v4819
      %v4842 = vadd.f32 %v4687, %v4824
      %v4843 = vadd.f32 %v4688, %v4827
      %v4844 = vadd.f32 %v4689, %v4832
      %v4845 = vadd.f32 %v4690, %v4835
      %v4847 = vrot.slane %v3464, 5
      %v4848 = vrot.slane %v4847, 4
      %v4849 = vrot.slane %v3465, 5
      %v4850 = vsel %vm809, %v4848, %v4849
      %s4851 = scalar_lea.vmem %s3, 1664
      %v4852 = vld [vmem:[%s4851] sm:$0xf]
      %v4853 = vld [vmem:[%s4851 + $0x4] sm:$0xf]
      %v4854 = vld [vmem:[%s4851 + $0x8] sm:$0xf]
      %v4855 = vld [vmem:[%s4851 + $0xc] sm:$0xf]
      %v4856 = vld [vmem:[%s4851 + $0x10] sm:$0xf]
      %v4857 = vld [vmem:[%s4851 + $0x14] sm:$0xf]
      %v4858 = vld [vmem:[%s4851 + $0x18] sm:$0xf]
      %v4859 = vld [vmem:[%s4851 + $0x1c] sm:$0xf]
      %v4860 = vld [vmem:[%s4851 + $0x20] sm:$0xf]
      %v4861 = vld [vmem:[%s4851 + $0x24] sm:$0xf]
      %v4862 = vld [vmem:[%s4851 + $0x28] sm:$0xf]
      %v4863 = vld [vmem:[%s4851 + $0x2c] sm:$0xf]
      %v4864 = vld [vmem:[%s4851 + $0x30] sm:$0xf]
      %v4865 = vld [vmem:[%s4851 + $0x34] sm:$0xf]
      %v4866 = vld [vmem:[%s4851 + $0x38] sm:$0xf]
      %v4867 = vld [vmem:[%s4851 + $0x3c] sm:$0xf]
      %v4868 = vunpack.c.l.b16 %v4850
      %v4869 = vpack.c.b16 %v4868, %v4419
      %v4887 = vunpack.c.l.b16 %v4852
      %v4888 = vunpack.c.l.b16 %v4853
      %v4889 = vunpack.c.l.b16 %v4854
      %v4890 = vunpack.c.l.b16 %v4855
      %v4891 = vunpack.c.l.b16 %v4856
      %v4892 = vunpack.c.l.b16 %v4857
      %v4893 = vunpack.c.l.b16 %v4858
      %v4894 = vunpack.c.l.b16 %v4859
      %v4895 = vunpack.c.l.b16 %v4860
      %v4896 = vunpack.c.l.b16 %v4861
      %v4897 = vunpack.c.l.b16 %v4862
      %v4898 = vunpack.c.l.b16 %v4863
      %v4899 = vunpack.c.l.b16 %v4864
      %v4900 = vunpack.c.l.b16 %v4865
      %v4901 = vunpack.c.l.b16 %v4866
      %v4902 = vunpack.c.l.b16 %v4867
      %v4903 = vpack.c.b16 %v4888, %v4887
      %v4904 = vpack.c.b16 %v4890, %v4889
      %v4905 = vpack.c.b16 %v4892, %v4891
      %v4906 = vpack.c.b16 %v4894, %v4893
      %v4907 = vpack.c.b16 %v4896, %v4895
      %v4908 = vpack.c.b16 %v4898, %v4897
      %v4909 = vpack.c.b16 %v4900, %v4899
      %v4910 = vpack.c.b16 %v4902, %v4901
      %4919 = vmatprep.subr.bf16.mxu0 0
      %4920 = vmatpush1.bf16.msra.mxu0 %v4903
      %4921 = vmatprep.subr.bf16.mxu0 0
      %4922 = vmatpush1.bf16.msra.mxu0 %v4904
      %4923 = vmatprep.subr.bf16.mxu0 0
      %4924 = vmatpush1.bf16.msra.mxu0 %v4905
      %4925 = vmatprep.subr.bf16.mxu0 0
      %4926 = vmatpush1.bf16.msra.mxu0 %v4906
      %4927 = vmatprep.subr.bf16.mxu0 0
      %4928 = vmatpush1.bf16.msra.mxu0 %v4907
      %4929 = vmatprep.subr.bf16.mxu0 0
      %4930 = vmatpush1.bf16.msra.mxu0 %v4908
      %4931 = vmatprep.subr.bf16.mxu0 0
      %4932 = vmatpush1.bf16.msra.mxu0 %v4909
      %4933 = vmatprep.subr.bf16.mxu0 0
      %4934 = vmatpush1.bf16.msra.mxu0 %v4910
      %4935 = vmatprep.subr.bf16.mxu0 0
      %4936 = vmatpush1.bf16.msra.mxu0 0
      %4937 = vmatprep.subr.bf16.mxu0 0
      %4938 = vmatpush1.bf16.msra.mxu0 0
      %4939 = vmatprep.subr.bf16.mxu0 0
      %4940 = vmatpush1.bf16.msra.mxu0 0
      %4941 = vmatprep.subr.bf16.mxu0 0
      %4942 = vmatpush1.bf16.msra.mxu0 0
      %4943 = vmatprep.subr.bf16.mxu0 0
      %4944 = vmatpush1.bf16.msra.mxu0 0
      %4945 = vmatprep.subr.bf16.mxu0 0
      %4946 = vmatpush1.bf16.msra.mxu0 0
      %4947 = vmatprep.subr.bf16.mxu0 0
      %4948 = vmatpush1.bf16.msra.mxu0 0
      %4949 = vmatprep.subr.bf16.mxu0 0
      %4950 = vmatpush1.bf16.msra.mxu0 0
      %4951 = vmatprep.mubr.bf16.mxu0 0
      %4952 = vmatmul.mubr.bf16.gmra.mrb[0].mxu0 %v3960
      %v4953 = vpop.f32.mrb[0].mxu0
      %v4954 = vadd.f32 0.0, %v4953
      %v4955 = vpop.f32.mrb[0].mxu0
      %v4956 = vpop.f32.mrb[0].mxu0
      %v4957 = vadd.f32 0.0, %v4956
      %v4958 = vpop.f32.mrb[0].mxu0
      %4959 = vmatprep.mubr.bf16.mxu0 0
      %4960 = vmatmul.mubr.bf16.gmra.mrb[0].mxu0 %v3961
      %v4961 = vpop.f32.mrb[0].mxu0
      %v4962 = vadd.f32 0.0, %v4961
      %v4963 = vpop.f32.mrb[0].mxu0
      %v4964 = vpop.f32.mrb[0].mxu0
      %v4965 = vadd.f32 0.0, %v4964
      %v4966 = vpop.f32.mrb[0].mxu0
      %4967 = vmatprep.mubr.bf16.mxu0 0
      %4968 = vmatmul.mubr.bf16.gmra.mrb[0].mxu0 %v3962
      %v4969 = vpop.f32.mrb[0].mxu0
      %v4970 = vadd.f32 0.0, %v4969
      %v4971 = vpop.f32.mrb[0].mxu0
      %v4972 = vpop.f32.mrb[0].mxu0
      %v4973 = vadd.f32 0.0, %v4972
      %v4974 = vpop.f32.mrb[0].mxu0
      %4975 = vmatprep.mubr.bf16.mxu0 0
      %4976 = vmatmul.mubr.bf16.gmra.mrb[0].mxu0 %v4869
      %v4977 = vpop.f32.mrb[0].mxu0
      %v4978 = vadd.f32 0.0, %v4977
      %v4979 = vpop.f32.mrb[0].mxu0
      %v4980 = vpop.f32.mrb[0].mxu0
      %v4981 = vadd.f32 0.0, %v4980
      %v4982 = vpop.f32.mrb[0].mxu0
      %4983 = vdwg.mxu0
      %v4984 = vadd.f32 %v4838, %v4954
      %v4985 = vadd.f32 %v4839, %v4957
      %v4986 = vadd.f32 %v4840, %v4962
      %v4987 = vadd.f32 %v4841, %v4965
      %v4988 = vadd.f32 %v4842, %v4970
      %v4989 = vadd.f32 %v4843, %v4973
      %v4990 = vadd.f32 %v4844, %v4978
      %v4991 = vadd.f32 %v4845, %v4981
      %4992 = vst [vmem:[%s355] sm:$0xff] %v4984
      %4993 = vst [vmem:[%s355 + $0x8] sm:$0xff] %v4985
      %4994 = vst [vmem:[%s355 + $0x10] sm:$0xff] %v4986
      %4995 = vst [vmem:[%s355 + $0x18] sm:$0xff] %v4987
      %4996 = vst [vmem:[%s355 + $0x20] sm:$0xff] %v4988
      %4997 = vst [vmem:[%s355 + $0x28] sm:$0xff] %v4989
      %4998 = vst [vmem:[%s355 + $0x30] sm:$0xff] %v4990
      %4999 = vst [vmem:[%s355 + $0x38] sm:$0xff] %v4991
      %v5000 = vadd.f32 %v4984, %v4985
      %v5001 = vadd.f32 %v5000, %v4986
      %v5002 = vadd.f32 %v5001, %v4987
      %v5003 = vadd.f32 %v5002, %v4988
      %v5004 = vadd.f32 %v5003, %v4989
      %v5005 = vadd.f32 %v5004, %v4990
      %v5006 = vadd.f32 %v5005, %v4991
      %v5007 = vrot.slane %v5006, 4
      %v5008 = vadd.f32 %v5006, %v5007
      %v5009 = vrot.slane %v5008, 2
      %v5010 = vadd.f32 %v5008, %v5009
      %v5011 = vrot.slane %v5010, 1
      %v5012 = vadd.f32 %v5010, %v5011
      %v5013 = vmul.f32 %v4984, %v4984
      %v5014 = vmul.f32 %v4985, %v4985
      %v5015 = vmul.f32 %v4986, %v4986
      %v5016 = vmul.f32 %v4987, %v4987
      %v5017 = vmul.f32 %v4988, %v4988
      %v5018 = vmul.f32 %v4989, %v4989
      %v5019 = vmul.f32 %v4990, %v4990
      %v5020 = vmul.f32 %v4991, %v4991
      %v5021 = vadd.f32 %v5013, %v5014
      %v5022 = vadd.f32 %v5021, %v5015
      %v5023 = vadd.f32 %v5022, %v5016
      %v5024 = vadd.f32 %v5023, %v5017
      %v5025 = vadd.f32 %v5024, %v5018
      %v5026 = vadd.f32 %v5025, %v5019
      %v5027 = vadd.f32 %v5026, %v5020
      %v5028 = vrot.slane %v5027, 4
      %v5029 = vadd.f32 %v5027, %v5028
      %v5030 = vrot.slane %v5029, 2
      %v5031 = vadd.f32 %v5029, %v5030
      %v5032 = vrot.slane %v5031, 1
      %v5033 = vadd.f32 %v5031, %v5032
      %v5034 = vlaneseq
      %v5035 = vshrl.u32 %v5034, 7
      %vm5036 = vcmp.eq.s32.totalorder %v5035, 0
      %vm5037 = vcmp.eq.s32.totalorder %v5035, 1
      %v5038 = vsel %vm5037, %v5033, 0.0
      %v5039 = vsel %vm5036, %v5012, %v5038
      %5040 = vst [vmem:[%s363] sm:$0xff] %v5039
      %p5041 = scmp.lt.s32.totalorder %s21, 1
      %s5042 = scalar_select %p5041, %s21, 1
      %p5043 = scmp.lt.s32.totalorder %s22, 7
      %s5044 = scalar_select %p5043, %s22, 7
      %s5045 = smul.addr %s5044, 8
      %s5046 = smul.addr %s5042, 64
      %s5047 = sadd.s32 %s5045, %s5046
      %s5048 = smul.addr %s5047, 8
      %s5049 = scalar_lea.vmem %s4, %s5048
      %p5050 = scmp.lt.s32.totalorder %s21, 1
      %s5051 = scalar_select %p5050, %s21, 1
      %p5052 = scmp.lt.s32.totalorder %s22, 7
      %s5053 = scalar_select %p5052, %s22, 7
      %s5054 = smul.addr %s5051, 8
      %s5055 = sadd.s32 %s5053, %s5054
      %s5056 = smul.addr %s5055, 8
      %s5057 = scalar_lea.vmem %s5, %s5056
      // Predicated region
      $region37: #{basic_block_forward.4} parent=35 // pred_check
        %p5058 = pneg %p158
      $region38: #{basic_block_forward.4} parent=35 // pred_check_branch
        %5060 = sbr.rel (%p5058) target = $region40
      $region39: #{basic_block_forward.4} parent=35 // pred_region
        _
      $region40: #{basic_block_forward.4} parent=35 // pred_fallthru
        _
      // Predicated region
      $region41: #{basic_block_forward.4} parent=35 // pred_check
        %p5061 = pneg %p186
      $region42: #{basic_block_forward.4} parent=35 // pred_check_branch
        %5063 = sbr.rel (%p5061) target = $region44
      $region43: #{basic_block_forward.4} parent=35 // pred_region
        _
      $region44: #{basic_block_forward.4} parent=35 // pred_fallthru
        _
    $region36: #{basic_block_forward.4} parent=5 // pred_fallthru
      _
    %p5064 = scmp.le.s32.totalorder 2, %s12
    // Predicated region
    $region45: #{basic_block_forward.4} parent=5 // pred_check
      %p5065 = pneg %p5064
    $region46: #{basic_block_forward.4} parent=5 // pred_check_branch
      %5067 = sbr.rel (%p5065) target = $region48
    $region47: #{basic_block_forward.4} parent=5 // pred_region
      %s5068 = ssub.s32 %s12, 2
      // Predicated region
      $region49: #{basic_block_forward.4} parent=47 // pred_check
        %p5069 = pneg %p164
      $region50: #{basic_block_forward.4} parent=47 // pred_check_branch
        %5071 = sbr.rel (%p5069) target = $region52
      $region51: #{basic_block_forward.4} parent=47 // pred_region
        %p5072 = scmp.lt.s32.totalorder %s23, 1
        %s5073 = scalar_select %p5072, %s23, 1
        %p5074 = scmp.lt.s32.totalorder %s24, 7
        %s5075 = scalar_select %p5074, %s24, 7
        %s5076 = smul.addr %s5075, 8
        %s5077 = smul.addr %s5073, 64
        %s5078 = sadd.s32 %s5076, %s5077
        %s5079 = smul.addr %s5078, 8
        %s5080 = scalar_lea.vmem %s4, %s5079
      $region52: #{basic_block_forward.4} parent=47 // pred_fallthru
        _
      // Predicated region
      $region53: #{basic_block_forward.4} parent=47 // pred_check
        %p5081 = pneg %p192
      $region54: #{basic_block_forward.4} parent=47 // pred_check_branch
        %5083 = sbr.rel (%p5081) target = $region56
      $region55: #{basic_block_forward.4} parent=47 // pred_region
        %p5084 = scmp.lt.s32.totalorder %s23, 1
        %s5085 = scalar_select %p5084, %s23, 1
        %p5086 = scmp.lt.s32.totalorder %s24, 7
        %s5087 = scalar_select %p5086, %s24, 7
        %s5088 = smul.addr %s5085, 8
        %s5089 = sadd.s32 %s5087, %s5088
        %s5090 = smul.addr %s5089, 8
        %s5091 = scalar_lea.vmem %s5, %s5090
      $region56: #{basic_block_forward.4} parent=47 // pred_fallthru
        _
    $region48: #{basic_block_forward.4} parent=5 // pred_fallthru
      _
  $region6: #{basic_block_forward.4} parent=0 // loop_footer
    %s16 = sadd.s32 1, %s12
  $region7: #{basic_block_forward.4} parent=0 // loop_footer_branch
    %11 = sbr.rel target = $region3
  $region8: #{basic_block_forward.4} parent=0 // loop_exit
    _

</llo_original>
